<compile_context>
chip_gen: v6e
topology: v6e:2x2x1
jax: 0.10.0
libtpu: 0.0.40
codegen_flags: <defaults>
</compile_context>

<pallas_src>
import functools

import jax
import jax.numpy as jnp
from jax.experimental import pallas as pl
from jax.experimental.pallas import tpu as pltpu


# ---------------------------------------------------------------------------
# Fused Pallas kernel: (deconv-as-conv + bias + ReLU) -> (3x3 conv + bias)
# Data layout inside the kernel: planar rows, i.e. (channels, H*W) slabs with
# the flattened spatial axis on lanes.  A shifted 3x3 tap is then a contiguous
# lane-slice of length Ho*Wp ("full-width" trick); the per-row junk columns
# (w >= Wo) are masked out / cropped on the host.
# ---------------------------------------------------------------------------
def _fused_kernel(x_ref, w1_ref, b1_ref, w2_ref, b2_ref, o_ref, s_ref, *,
                  kh, kw, Wp, Wo, W2p, L1, L2, Cout, lead, off):
    x = x_ref[0]                                         # (Cin, Lx) planar rows

    # ---- stage 1: ConvTranspose2d as stride-1 conv over the dilated frame ----
    acc1 = jnp.zeros((Cout, L1), jnp.float32)
    for t in range(kh * kw):
        i, j = divmod(t, kw)
        xs = x[:, i * Wp + j: i * Wp + j + L1]           # contiguous shifted window
        acc1 = acc1 + jnp.dot(w1_ref[t], xs, preferred_element_type=jnp.float32)
    y1 = jnp.maximum(acc1 + b1_ref[...], 0.0)            # bias + fused ReLU

    # zero the per-row junk columns (w >= Wo) so they land as zeros inside the
    # zero-padded stage-2 frame
    col = jax.lax.broadcasted_iota(jnp.int32, (1, L1), 1)
    y1 = jnp.where(col % Wp < Wo, y1, 0.0)

    # ---- VMEM hand-off: place y1 inside a zero border (Conv2d padding=1) ----
    # frame index f maps to scratch column off + f; the stored block starts at a
    # 128-aligned column (`lead`) so the store needs no lane rotate.
    s_ref[...] = jnp.zeros(s_ref.shape, s_ref.dtype)
    s_ref[:, lead: lead + L1] = y1

    # ---- stage 2: kxk conv, stride 1 (frame is already zero-padded) ----------
    s = s_ref[...]
    acc2 = jnp.zeros((Cout, L2), jnp.float32)
    for t in range(kh * kw):
        i, j = divmod(t, kw)
        ss = s[:, off + i * W2p + j: off + i * W2p + j + L2]
        acc2 = acc2 + jnp.dot(w2_ref[t], ss, preferred_element_type=jnp.float32)
    o_ref[0] = acc2 + b2_ref[...]


def _fused_call(x_flat, w1, b1, w2, b2, *, kh, kw, Wp, Ho, Wo, H2p, W2p,
                Ho2, Wo2, Cout):
    N, Cin, Lx = x_flat.shape
    KK = kh * kw
    L1 = Ho * Wp            # stage-1 full-width rows (valid cols: w < Wo)
    L2 = Ho2 * W2p          # stage-2 full-width rows (valid cols: w < Wo2)

    LEAD = 128                         # 128-aligned start of the stored rows
    OFF = LEAD - (W2p + 1)             # frame-index -> scratch-column offset
    assert OFF >= 0
    Ls = OFF + H2p * W2p + (kw - 1)    # scratch length (frame + tail columns)

    kernel = functools.partial(
        _fused_kernel, kh=kh, kw=kw, Wp=Wp, Wo=Wo, W2p=W2p,
        L1=L1, L2=L2, Cout=Cout, lead=LEAD, off=OFF)

    return pl.pallas_call(
        kernel,
        out_shape=jax.ShapeDtypeStruct((N, Cout, L2), jnp.float32),
        grid_spec=pltpu.PrefetchScalarGridSpec(
            num_scalar_prefetch=0,
            grid=(N,),
            in_specs=[
                pl.BlockSpec((1, Cin, Lx), lambda b: (b, 0, 0)),
                pl.BlockSpec((KK, Cout, Cin), lambda b: (0, 0, 0)),
                pl.BlockSpec((Cout, 1), lambda b: (0, 0)),
                pl.BlockSpec((KK, Cout, Cout), lambda b: (0, 0, 0)),
                pl.BlockSpec((Cout, 1), lambda b: (0, 0)),
            ],
            out_specs=pl.BlockSpec((1, Cout, L2), lambda b: (b, 0, 0)),
            scratch_shapes=[pltpu.VMEM((Cout, Ls), jnp.float32)],
        ),
        compiler_params=pltpu.CompilerParams(
            dimension_semantics=("parallel",)),
    )(x_flat, w1, b1, w2, b2)


# ---------------------------------------------------------------------------
# one-time weight preparation (hoisted out of the per-call path)
# ---------------------------------------------------------------------------
def prepare_params(params):
    wd = params["deconv_w"]            # (Cin, Cout, kh, kw)  ConvTranspose2d
    wc = params["conv_w"]              # (Cout, Cout, kh, kw) Conv2d
    Cin, Cout, kh, kw = wd.shape
    # equivalent stride-1 conv weight for the transposed conv: flip spatially
    w_eq = jnp.flip(wd, axis=(2, 3))
    w1 = jnp.transpose(w_eq, (2, 3, 1, 0)).reshape(kh * kw, Cout, Cin)
    w2 = jnp.transpose(wc, (2, 3, 0, 1)).reshape(kh * kw, wc.shape[0], wc.shape[1])
    b1 = params["deconv_b"].reshape(Cout, 1)
    b2 = params["conv_b"].reshape(wc.shape[0], 1)
    return {"w1": w1.astype(jnp.float32), "b1": b1.astype(jnp.float32),
            "w2": w2.astype(jnp.float32), "b2": b2.astype(jnp.float32)}


# ---------------------------------------------------------------------------
# forward pass
# ---------------------------------------------------------------------------
@functools.partial(jax.jit,
                   static_argnames=("kernel_size", "stride", "padding",
                                    "output_padding"))
def basic_deconv_block(x, prep, *, kernel_size, stride, padding,
                       output_padding=1):
    N, Cin, H, W = x.shape
    kh = kw = kernel_size
    Cout = prep["w1"].shape[1]

    # ConvTranspose2d -> equivalent stride-1 conv: dilate + pad in planar NCHW
    Hd, Wd = (H - 1) * stride + 1, (W - 1) * stride + 1
    xd = jnp.zeros((N, Cin, Hd, Wd), x.dtype).at[:, :, ::stride, ::stride].set(x)
    pt, pb = kh - 1 - padding, kh - 1 - padding + output_padding
    pl_, pr = kw - 1 - padding, kw - 1 - padding + output_padding
    xp = jnp.pad(xd, ((0, 0), (0, 0),
                      (max(pt, 0), max(pb, 0)), (max(pl_, 0), max(pr, 0))))
    # crop instead of (illegal) negative padding when padding > kernel_size - 1
    ct, cb = max(-pt, 0), max(-pb, 0)
    cl, cr = max(-pl_, 0), max(-pr, 0)
    xp = xp[:, :, ct:xp.shape[2] - cb, cl:xp.shape[3] - cr]

    Hp, Wp = xp.shape[2], xp.shape[3]
    Ho, Wo = Hp - kh + 1, Wp - kw + 1          # deconv output spatial dims
    H2p, W2p = Ho + 2, Wo + 2                  # stage-2 frame (Conv2d padding=1)
    Ho2, Wo2 = H2p - kh + 1, W2p - kw + 1      # final output spatial dims

    # the single-store VMEM hand-off needs matching row strides (true for the
    # module's kernel_size=3 / Conv2d padding=1 configuration)
    assert Wp == W2p, "fused path requires kernel_size=3 with Conv2d padding=1"

    # planar rows + (kw-1) tail columns so every shifted slice is in-bounds
    x_flat = jnp.pad(xp.reshape(N, Cin, Hp * Wp).astype(jnp.float32),
                     ((0, 0), (0, 0), (0, kw - 1)))

    out = _fused_call(x_flat, prep["w1"], prep["b1"], prep["w2"], prep["b2"],
                      kh=kh, kw=kw, Wp=Wp, Ho=Ho, Wo=Wo, H2p=H2p, W2p=W2p,
                      Ho2=Ho2, Wo2=Wo2, Cout=Cout)
    # (N, Cout, Ho2*W2p) full-width rows -> crop junk columns -> NCHW
    return out.reshape(N, Cout, Ho2, W2p)[:, :, :, :Wo2]


# ---------------------------------------------------------------------------
# pure-JAX reference (XLA convolutions) for correctness checking
# ---------------------------------------------------------------------------
def reference(x, params, stride, padding):
    dn = ("NCHW", "OIHW", "NCHW")
    w = params["deconv_w"]
    kh, kw = w.shape[2], w.shape[3]
    w_eq = jnp.transpose(jnp.flip(w, (2, 3)), (1, 0, 2, 3))
    pad = [(kh - 1 - padding, kh - 1 - padding + 1),
           (kw - 1 - padding, kw - 1 - padding + 1)]
    y = jax.lax.conv_general_dilated(x, w_eq, (1, 1), pad,
                                     lhs_dilation=(stride, stride),
                                     dimension_numbers=dn)
    y = y + params["deconv_b"][None, :, None, None]
    y = jnp.maximum(y, 0.0)
    y = jax.lax.conv_general_dilated(y, params["conv_w"], (1, 1),
                                     [(1, 1), (1, 1)], dimension_numbers=dn)
    y = y + params["conv_b"][None, :, None, None]
    return y


if __name__ == "__main__":
    in_channel, out_channel = 4, 8
    kernel_size, stride, padding = 3, 2, 1
    N, H, W = 2, 16, 16

    key = jax.random.PRNGKey(0)
    k1, k2, k3, k4, k5 = jax.random.split(key, 5)

    x = jax.random.normal(k1, (N, in_channel, H, W), jnp.float32)
    params = {
        # ConvTranspose2d weight: (in_channel, out_channel, kh, kw)
        "deconv_w": 0.1 * jax.random.normal(
            k2, (in_channel, out_channel, kernel_size, kernel_size), jnp.float32),
        "deconv_b": 0.1 * jax.random.normal(k3, (out_channel,), jnp.float32),
        # Conv2d weight: (out_channel, out_channel, kh, kw)
        "conv_w": 0.1 * jax.random.normal(
            k4, (out_channel, out_channel, kernel_size, kernel_size), jnp.float32),
        "conv_b": 0.1 * jax.random.normal(k5, (out_channel,), jnp.float32),
    }

    prep = prepare_params(params)   # weight prep hoisted out of the hot path

    y = basic_deconv_block(x, prep, kernel_size=kernel_size, stride=stride,
                           padding=padding)
    y = jax.block_until_ready(y)

    y_ref = jax.block_until_ready(reference(x, params, stride, padding))
    assert y.shape == (N, out_channel, 2 * H, 2 * W), y.shape
    assert jnp.allclose(y, y_ref, rtol=1e-4, atol=1e-4), \
        float(jnp.max(jnp.abs(y - y_ref)))

    print("KERNEL_OK")
</pallas_src>

<mosaic_0001>
module attributes {stable_mosaic.version = 11 : i64} {
  func.func @_fused_kernel(%arg0: i32, %arg1: memref<1x4x1158xf32, #tpu.memory_space<vmem>>, %arg2: memref<9x8x4xf32, #tpu.memory_space<vmem>>, %arg3: memref<8x1xf32, #tpu.memory_space<vmem>>, %arg4: memref<9x8x8xf32, #tpu.memory_space<vmem>>, %arg5: memref<8x1xf32, #tpu.memory_space<vmem>>, %arg6: memref<1x8x1088xf32, #tpu.memory_space<vmem>>, %arg7: memref<8x1251xf32, #tpu.memory_space<vmem>>) attributes {dimension_semantics = [#tpu.dimension_semantics<parallel>], iteration_bounds = array<i64: 2>, scalar_prefetch = 0 : i64, scratch_operands = 1 : i64, tpu.core_type = #tpu.core_type<tc>, window_params = [{transform_indices = @transform_0, window_bounds = array<i64: 1, 4, 1158>}, {pipeline_mode = #tpu.pipeline_mode<synchronous>, transform_indices = @transform_1, window_bounds = array<i64: 9, 8, 4>}, {pipeline_mode = #tpu.pipeline_mode<synchronous>, transform_indices = @transform_2, window_bounds = array<i64: 8, 1>}, {pipeline_mode = #tpu.pipeline_mode<synchronous>, transform_indices = @transform_3, window_bounds = array<i64: 9, 8, 8>}, {pipeline_mode = #tpu.pipeline_mode<synchronous>, transform_indices = @transform_4, window_bounds = array<i64: 8, 1>}, {transform_indices = @transform_5, window_bounds = array<i64: 1, 8, 1088>}]} {
    %c0 = arith.constant 0 : index
    %c0_0 = arith.constant 0 : index
    %c0_1 = arith.constant 0 : index
    %0 = vector.load %arg1[%c0, %c0_0, %c0_1] : memref<1x4x1158xf32, #tpu.memory_space<vmem>>, vector<1x4x1158xf32>
    %1 = vector.shape_cast %0 : vector<1x4x1158xf32> to vector<4x1158xf32>
    %cst = arith.constant 0.000000e+00 : f32
    %2 = vector.broadcast %cst : f32 to vector<8x1088xf32>
    %3 = vector.extract_strided_slice %1 {offsets = [0, 0], sizes = [4, 1088], strides = [1, 1]} : vector<4x1158xf32> to vector<4x1088xf32>
    %c0_2 = arith.constant 0 : index
    %c0_3 = arith.constant 0 : index
    %c0_4 = arith.constant 0 : index
    %4 = vector.load %arg2[%c0_2, %c0_3, %c0_4] : memref<9x8x4xf32, #tpu.memory_space<vmem>>, vector<1x8x4xf32>
    %5 = vector.shape_cast %4 : vector<1x8x4xf32> to vector<8x4xf32>
    %cst_5 = arith.constant dense<0.000000e+00> : vector<8x1088xf32>
    %6 = tpu.matmul %5, %3, %cst_5 {dimension_numbers = #tpu.dot_dimension_numbers<[1], [0], [0], [1], [0, 0, 1, 1], [], []>} : vector<8x4xf32>, vector<4x1088xf32>, vector<8x1088xf32> -> vector<8x1088xf32>
    %7 = arith.addf %2, %6 : vector<8x1088xf32>
    %8 = vector.extract_strided_slice %1 {offsets = [0, 1], sizes = [4, 1088], strides = [1, 1]} : vector<4x1158xf32> to vector<4x1088xf32>
    %c1 = arith.constant 1 : index
    %c0_6 = arith.constant 0 : index
    %c0_7 = arith.constant 0 : index
    %9 = vector.load %arg2[%c1, %c0_6, %c0_7] : memref<9x8x4xf32, #tpu.memory_space<vmem>>, vector<1x8x4xf32>
    %10 = vector.shape_cast %9 : vector<1x8x4xf32> to vector<8x4xf32>
    %cst_8 = arith.constant dense<0.000000e+00> : vector<8x1088xf32>
    %11 = tpu.matmul %10, %8, %cst_8 {dimension_numbers = #tpu.dot_dimension_numbers<[1], [0], [0], [1], [0, 0, 1, 1], [], []>} : vector<8x4xf32>, vector<4x1088xf32>, vector<8x1088xf32> -> vector<8x1088xf32>
    %12 = arith.addf %7, %11 : vector<8x1088xf32>
    %13 = vector.extract_strided_slice %1 {offsets = [0, 2], sizes = [4, 1088], strides = [1, 1]} : vector<4x1158xf32> to vector<4x1088xf32>
    %c2 = arith.constant 2 : index
    %c0_9 = arith.constant 0 : index
    %c0_10 = arith.constant 0 : index
    %14 = vector.load %arg2[%c2, %c0_9, %c0_10] : memref<9x8x4xf32, #tpu.memory_space<vmem>>, vector<1x8x4xf32>
    %15 = vector.shape_cast %14 : vector<1x8x4xf32> to vector<8x4xf32>
    %cst_11 = arith.constant dense<0.000000e+00> : vector<8x1088xf32>
    %16 = tpu.matmul %15, %13, %cst_11 {dimension_numbers = #tpu.dot_dimension_numbers<[1], [0], [0], [1], [0, 0, 1, 1], [], []>} : vector<8x4xf32>, vector<4x1088xf32>, vector<8x1088xf32> -> vector<8x1088xf32>
    %17 = arith.addf %12, %16 : vector<8x1088xf32>
    %18 = vector.extract_strided_slice %1 {offsets = [0, 34], sizes = [4, 1088], strides = [1, 1]} : vector<4x1158xf32> to vector<4x1088xf32>
    %c3 = arith.constant 3 : index
    %c0_12 = arith.constant 0 : index
    %c0_13 = arith.constant 0 : index
    %19 = vector.load %arg2[%c3, %c0_12, %c0_13] : memref<9x8x4xf32, #tpu.memory_space<vmem>>, vector<1x8x4xf32>
    %20 = vector.shape_cast %19 : vector<1x8x4xf32> to vector<8x4xf32>
    %cst_14 = arith.constant dense<0.000000e+00> : vector<8x1088xf32>
    %21 = tpu.matmul %20, %18, %cst_14 {dimension_numbers = #tpu.dot_dimension_numbers<[1], [0], [0], [1], [0, 0, 1, 1], [], []>} : vector<8x4xf32>, vector<4x1088xf32>, vector<8x1088xf32> -> vector<8x1088xf32>
    %22 = arith.addf %17, %21 : vector<8x1088xf32>
    %23 = vector.extract_strided_slice %1 {offsets = [0, 35], sizes = [4, 1088], strides = [1, 1]} : vector<4x1158xf32> to vector<4x1088xf32>
    %c4 = arith.constant 4 : index
    %c0_15 = arith.constant 0 : index
    %c0_16 = arith.constant 0 : index
    %24 = vector.load %arg2[%c4, %c0_15, %c0_16] : memref<9x8x4xf32, #tpu.memory_space<vmem>>, vector<1x8x4xf32>
    %25 = vector.shape_cast %24 : vector<1x8x4xf32> to vector<8x4xf32>
    %cst_17 = arith.constant dense<0.000000e+00> : vector<8x1088xf32>
    %26 = tpu.matmul %25, %23, %cst_17 {dimension_numbers = #tpu.dot_dimension_numbers<[1], [0], [0], [1], [0, 0, 1, 1], [], []>} : vector<8x4xf32>, vector<4x1088xf32>, vector<8x1088xf32> -> vector<8x1088xf32>
    %27 = arith.addf %22, %26 : vector<8x1088xf32>
    %28 = vector.extract_strided_slice %1 {offsets = [0, 36], sizes = [4, 1088], strides = [1, 1]} : vector<4x1158xf32> to vector<4x1088xf32>
    %c5 = arith.constant 5 : index
    %c0_18 = arith.constant 0 : index
    %c0_19 = arith.constant 0 : index
    %29 = vector.load %arg2[%c5, %c0_18, %c0_19] : memref<9x8x4xf32, #tpu.memory_space<vmem>>, vector<1x8x4xf32>
    %30 = vector.shape_cast %29 : vector<1x8x4xf32> to vector<8x4xf32>
    %cst_20 = arith.constant dense<0.000000e+00> : vector<8x1088xf32>
    %31 = tpu.matmul %30, %28, %cst_20 {dimension_numbers = #tpu.dot_dimension_numbers<[1], [0], [0], [1], [0, 0, 1, 1], [], []>} : vector<8x4xf32>, vector<4x1088xf32>, vector<8x1088xf32> -> vector<8x1088xf32>
    %32 = arith.addf %27, %31 : vector<8x1088xf32>
    %33 = vector.extract_strided_slice %1 {offsets = [0, 68], sizes = [4, 1088], strides = [1, 1]} : vector<4x1158xf32> to vector<4x1088xf32>
    %c6 = arith.constant 6 : index
    %c0_21 = arith.constant 0 : index
    %c0_22 = arith.constant 0 : index
    %34 = vector.load %arg2[%c6, %c0_21, %c0_22] : memref<9x8x4xf32, #tpu.memory_space<vmem>>, vector<1x8x4xf32>
    %35 = vector.shape_cast %34 : vector<1x8x4xf32> to vector<8x4xf32>
    %cst_23 = arith.constant dense<0.000000e+00> : vector<8x1088xf32>
    %36 = tpu.matmul %35, %33, %cst_23 {dimension_numbers = #tpu.dot_dimension_numbers<[1], [0], [0], [1], [0, 0, 1, 1], [], []>} : vector<8x4xf32>, vector<4x1088xf32>, vector<8x1088xf32> -> vector<8x1088xf32>
    %37 = arith.addf %32, %36 : vector<8x1088xf32>
    %38 = vector.extract_strided_slice %1 {offsets = [0, 69], sizes = [4, 1088], strides = [1, 1]} : vector<4x1158xf32> to vector<4x1088xf32>
    %c7 = arith.constant 7 : index
    %c0_24 = arith.constant 0 : index
    %c0_25 = arith.constant 0 : index
    %39 = vector.load %arg2[%c7, %c0_24, %c0_25] : memref<9x8x4xf32, #tpu.memory_space<vmem>>, vector<1x8x4xf32>
    %40 = vector.shape_cast %39 : vector<1x8x4xf32> to vector<8x4xf32>
    %cst_26 = arith.constant dense<0.000000e+00> : vector<8x1088xf32>
    %41 = tpu.matmul %40, %38, %cst_26 {dimension_numbers = #tpu.dot_dimension_numbers<[1], [0], [0], [1], [0, 0, 1, 1], [], []>} : vector<8x4xf32>, vector<4x1088xf32>, vector<8x1088xf32> -> vector<8x1088xf32>
    %42 = arith.addf %37, %41 : vector<8x1088xf32>
    %43 = vector.extract_strided_slice %1 {offsets = [0, 70], sizes = [4, 1088], strides = [1, 1]} : vector<4x1158xf32> to vector<4x1088xf32>
    %c8 = arith.constant 8 : index
    %c0_27 = arith.constant 0 : index
    %c0_28 = arith.constant 0 : index
    %44 = vector.load %arg2[%c8, %c0_27, %c0_28] : memref<9x8x4xf32, #tpu.memory_space<vmem>>, vector<1x8x4xf32>
    %45 = vector.shape_cast %44 : vector<1x8x4xf32> to vector<8x4xf32>
    %cst_29 = arith.constant dense<0.000000e+00> : vector<8x1088xf32>
    %46 = tpu.matmul %45, %43, %cst_29 {dimension_numbers = #tpu.dot_dimension_numbers<[1], [0], [0], [1], [0, 0, 1, 1], [], []>} : vector<8x4xf32>, vector<4x1088xf32>, vector<8x1088xf32> -> vector<8x1088xf32>
    %47 = arith.addf %42, %46 : vector<8x1088xf32>
    %c0_30 = arith.constant 0 : index
    %c0_31 = arith.constant 0 : index
    %48 = vector.load %arg3[%c0_30, %c0_31] : memref<8x1xf32, #tpu.memory_space<vmem>>, vector<8x1xf32>
    %49 = vector.broadcast %48 : vector<8x1xf32> to vector<8x1088xf32>
    %50 = arith.addf %47, %49 : vector<8x1088xf32>
    %cst_32 = arith.constant 0.000000e+00 : f32
    %51 = vector.broadcast %cst_32 : f32 to vector<8x1088xf32>
    %52 = arith.maximumf %50, %51 : vector<8x1088xf32>
    %53 = tpu.iota {dimensions = array<i32: 1>} : vector<1x1088xi32>
    %c34_i32 = arith.constant 34 : i32
    %c0_i32 = arith.constant 0 : i32
    %54 = arith.cmpi eq, %c34_i32, %c0_i32 : i32
    %c1_i32 = arith.constant 1 : i32
    %55 = arith.select %54, %c1_i32, %c34_i32 : i32
    %56 = vector.broadcast %55 : i32 to vector<1x1088xi32>
    %57 = arith.remsi %53, %56 : vector<1x1088xi32>
    %c0_i32_33 = arith.constant 0 : i32
    %58 = vector.broadcast %c0_i32_33 : i32 to vector<1x1088xi32>
    %59 = arith.cmpi ne, %57, %58 : vector<1x1088xi32>
    %c0_i32_34 = arith.constant 0 : i32
    %60 = vector.broadcast %c0_i32_34 : i32 to vector<1x1088xi32>
    %61 = arith.cmpi slt, %57, %60 : vector<1x1088xi32>
    %c0_i32_35 = arith.constant 0 : i32
    %62 = arith.cmpi slt, %55, %c0_i32_35 : i32
    %63 = vector.broadcast %62 : i1 to vector<1x1088xi1>
    %64 = vector.broadcast %63 : vector<1x1088xi1> to vector<1x1088xi1>
    %65 = arith.xori %61, %64 : vector<1x1088xi1>
    %66 = arith.andi %65, %59 : vector<1x1088xi1>
    %67 = vector.broadcast %55 : i32 to vector<1x1088xi32>
    %68 = arith.addi %57, %67 : vector<1x1088xi32>
    %69 = arith.select %66, %68, %57 : vector<1x1088xi1>, vector<1x1088xi32>
    %c32_i32 = arith.constant 32 : i32
    %70 = vector.broadcast %c32_i32 : i32 to vector<1x1088xi32>
    %71 = arith.cmpi slt, %69, %70 : vector<1x1088xi32>
    %cst_36 = arith.constant 0.000000e+00 : f32
    %72 = vector.shape_cast %71 : vector<1x1088xi1> to vector<1x1088xi1>
    %73 = vector.broadcast %72 : vector<1x1088xi1> to vector<8x1088xi1>
    %74 = vector.broadcast %cst_36 : f32 to vector<8x1088xf32>
    %75 = arith.select %73, %52, %74 : vector<8x1088xi1>, vector<8x1088xf32>
    %cst_37 = arith.constant 0.000000e+00 : f32
    %76 = vector.broadcast %cst_37 : f32 to vector<8x1251xf32>
    %c0_38 = arith.constant 0 : index
    %c0_39 = arith.constant 0 : index
    %77 = vector.load %arg7[%c0_38, %c0_39] : memref<8x1251xf32, #tpu.memory_space<vmem>>, vector<8x1251xf32>
    tpu.vector_store %arg7[%c0_38, %c0_39], %76 {strides = array<i32>} : memref<8x1251xf32, #tpu.memory_space<vmem>>, vector<8x1251xf32>,
    %c0_40 = arith.constant 0 : index
    %c128 = arith.constant 128 : index
    %78 = vector.load %arg7[%c0_40, %c128] : memref<8x1251xf32, #tpu.memory_space<vmem>>, vector<8x1088xf32>
    tpu.vector_store %arg7[%c0_40, %c128], %75 {strides = array<i32>} : memref<8x1251xf32, #tpu.memory_space<vmem>>, vector<8x1088xf32>,
    %c0_41 = arith.constant 0 : index
    %c0_42 = arith.constant 0 : index
    %79 = vector.load %arg7[%c0_41, %c0_42] : memref<8x1251xf32, #tpu.memory_space<vmem>>, vector<8x1251xf32>
    %cst_43 = arith.constant 0.000000e+00 : f32
    %80 = vector.broadcast %cst_43 : f32 to vector<8x1088xf32>
    %81 = vector.extract_strided_slice %79 {offsets = [0, 93], sizes = [8, 1088], strides = [1, 1]} : vector<8x1251xf32> to vector<8x1088xf32>
    %c0_44 = arith.constant 0 : index
    %c0_45 = arith.constant 0 : index
    %c0_46 = arith.constant 0 : index
    %82 = vector.load %arg4[%c0_44, %c0_45, %c0_46] : memref<9x8x8xf32, #tpu.memory_space<vmem>>, vector<1x8x8xf32>
    %83 = vector.shape_cast %82 : vector<1x8x8xf32> to vector<8x8xf32>
    %cst_47 = arith.constant dense<0.000000e+00> : vector<8x1088xf32>
    %84 = tpu.matmul %83, %81, %cst_47 {dimension_numbers = #tpu.dot_dimension_numbers<[1], [0], [0], [1], [0, 0, 1, 1], [], []>} : vector<8x8xf32>, vector<8x1088xf32>, vector<8x1088xf32> -> vector<8x1088xf32>
    %85 = arith.addf %80, %84 : vector<8x1088xf32>
    %86 = vector.extract_strided_slice %79 {offsets = [0, 94], sizes = [8, 1088], strides = [1, 1]} : vector<8x1251xf32> to vector<8x1088xf32>
    %c1_48 = arith.constant 1 : index
    %c0_49 = arith.constant 0 : index
    %c0_50 = arith.constant 0 : index
    %87 = vector.load %arg4[%c1_48, %c0_49, %c0_50] : memref<9x8x8xf32, #tpu.memory_space<vmem>>, vector<1x8x8xf32>
    %88 = vector.shape_cast %87 : vector<1x8x8xf32> to vector<8x8xf32>
    %cst_51 = arith.constant dense<0.000000e+00> : vector<8x1088xf32>
    %89 = tpu.matmul %88, %86, %cst_51 {dimension_numbers = #tpu.dot_dimension_numbers<[1], [0], [0], [1], [0, 0, 1, 1], [], []>} : vector<8x8xf32>, vector<8x1088xf32>, vector<8x1088xf32> -> vector<8x1088xf32>
    %90 = arith.addf %85, %89 : vector<8x1088xf32>
    %91 = vector.extract_strided_slice %79 {offsets = [0, 95], sizes = [8, 1088], strides = [1, 1]} : vector<8x1251xf32> to vector<8x1088xf32>
    %c2_52 = arith.constant 2 : index
    %c0_53 = arith.constant 0 : index
    %c0_54 = arith.constant 0 : index
    %92 = vector.load %arg4[%c2_52, %c0_53, %c0_54] : memref<9x8x8xf32, #tpu.memory_space<vmem>>, vector<1x8x8xf32>
    %93 = vector.shape_cast %92 : vector<1x8x8xf32> to vector<8x8xf32>
    %cst_55 = arith.constant dense<0.000000e+00> : vector<8x1088xf32>
    %94 = tpu.matmul %93, %91, %cst_55 {dimension_numbers = #tpu.dot_dimension_numbers<[1], [0], [0], [1], [0, 0, 1, 1], [], []>} : vector<8x8xf32>, vector<8x1088xf32>, vector<8x1088xf32> -> vector<8x1088xf32>
    %95 = arith.addf %90, %94 : vector<8x1088xf32>
    %96 = vector.extract_strided_slice %79 {offsets = [0, 127], sizes = [8, 1088], strides = [1, 1]} : vector<8x1251xf32> to vector<8x1088xf32>
    %c3_56 = arith.constant 3 : index
    %c0_57 = arith.constant 0 : index
    %c0_58 = arith.constant 0 : index
    %97 = vector.load %arg4[%c3_56, %c0_57, %c0_58] : memref<9x8x8xf32, #tpu.memory_space<vmem>>, vector<1x8x8xf32>
    %98 = vector.shape_cast %97 : vector<1x8x8xf32> to vector<8x8xf32>
    %cst_59 = arith.constant dense<0.000000e+00> : vector<8x1088xf32>
    %99 = tpu.matmul %98, %96, %cst_59 {dimension_numbers = #tpu.dot_dimension_numbers<[1], [0], [0], [1], [0, 0, 1, 1], [], []>} : vector<8x8xf32>, vector<8x1088xf32>, vector<8x1088xf32> -> vector<8x1088xf32>
    %100 = arith.addf %95, %99 : vector<8x1088xf32>
    %101 = vector.extract_strided_slice %79 {offsets = [0, 128], sizes = [8, 1088], strides = [1, 1]} : vector<8x1251xf32> to vector<8x1088xf32>
    %c4_60 = arith.constant 4 : index
    %c0_61 = arith.constant 0 : index
    %c0_62 = arith.constant 0 : index
    %102 = vector.load %arg4[%c4_60, %c0_61, %c0_62] : memref<9x8x8xf32, #tpu.memory_space<vmem>>, vector<1x8x8xf32>
    %103 = vector.shape_cast %102 : vector<1x8x8xf32> to vector<8x8xf32>
    %cst_63 = arith.constant dense<0.000000e+00> : vector<8x1088xf32>
    %104 = tpu.matmul %103, %101, %cst_63 {dimension_numbers = #tpu.dot_dimension_numbers<[1], [0], [0], [1], [0, 0, 1, 1], [], []>} : vector<8x8xf32>, vector<8x1088xf32>, vector<8x1088xf32> -> vector<8x1088xf32>
    %105 = arith.addf %100, %104 : vector<8x1088xf32>
    %106 = vector.extract_strided_slice %79 {offsets = [0, 129], sizes = [8, 1088], strides = [1, 1]} : vector<8x1251xf32> to vector<8x1088xf32>
    %c5_64 = arith.constant 5 : index
    %c0_65 = arith.constant 0 : index
    %c0_66 = arith.constant 0 : index
    %107 = vector.load %arg4[%c5_64, %c0_65, %c0_66] : memref<9x8x8xf32, #tpu.memory_space<vmem>>, vector<1x8x8xf32>
    %108 = vector.shape_cast %107 : vector<1x8x8xf32> to vector<8x8xf32>
    %cst_67 = arith.constant dense<0.000000e+00> : vector<8x1088xf32>
    %109 = tpu.matmul %108, %106, %cst_67 {dimension_numbers = #tpu.dot_dimension_numbers<[1], [0], [0], [1], [0, 0, 1, 1], [], []>} : vector<8x8xf32>, vector<8x1088xf32>, vector<8x1088xf32> -> vector<8x1088xf32>
    %110 = arith.addf %105, %109 : vector<8x1088xf32>
    %111 = vector.extract_strided_slice %79 {offsets = [0, 161], sizes = [8, 1088], strides = [1, 1]} : vector<8x1251xf32> to vector<8x1088xf32>
    %c6_68 = arith.constant 6 : index
    %c0_69 = arith.constant 0 : index
    %c0_70 = arith.constant 0 : index
    %112 = vector.load %arg4[%c6_68, %c0_69, %c0_70] : memref<9x8x8xf32, #tpu.memory_space<vmem>>, vector<1x8x8xf32>
    %113 = vector.shape_cast %112 : vector<1x8x8xf32> to vector<8x8xf32>
    %cst_71 = arith.constant dense<0.000000e+00> : vector<8x1088xf32>
    %114 = tpu.matmul %113, %111, %cst_71 {dimension_numbers = #tpu.dot_dimension_numbers<[1], [0], [0], [1], [0, 0, 1, 1], [], []>} : vector<8x8xf32>, vector<8x1088xf32>, vector<8x1088xf32> -> vector<8x1088xf32>
    %115 = arith.addf %110, %114 : vector<8x1088xf32>
    %116 = vector.extract_strided_slice %79 {offsets = [0, 162], sizes = [8, 1088], strides = [1, 1]} : vector<8x1251xf32> to vector<8x1088xf32>
    %c7_72 = arith.constant 7 : index
    %c0_73 = arith.constant 0 : index
    %c0_74 = arith.constant 0 : index
    %117 = vector.load %arg4[%c7_72, %c0_73, %c0_74] : memref<9x8x8xf32, #tpu.memory_space<vmem>>, vector<1x8x8xf32>
    %118 = vector.shape_cast %117 : vector<1x8x8xf32> to vector<8x8xf32>
    %cst_75 = arith.constant dense<0.000000e+00> : vector<8x1088xf32>
    %119 = tpu.matmul %118, %116, %cst_75 {dimension_numbers = #tpu.dot_dimension_numbers<[1], [0], [0], [1], [0, 0, 1, 1], [], []>} : vector<8x8xf32>, vector<8x1088xf32>, vector<8x1088xf32> -> vector<8x1088xf32>
    %120 = arith.addf %115, %119 : vector<8x1088xf32>
    %121 = vector.extract_strided_slice %79 {offsets = [0, 163], sizes = [8, 1088], strides = [1, 1]} : vector<8x1251xf32> to vector<8x1088xf32>
    %c8_76 = arith.constant 8 : index
    %c0_77 = arith.constant 0 : index
    %c0_78 = arith.constant 0 : index
    %122 = vector.load %arg4[%c8_76, %c0_77, %c0_78] : memref<9x8x8xf32, #tpu.memory_space<vmem>>, vector<1x8x8xf32>
    %123 = vector.shape_cast %122 : vector<1x8x8xf32> to vector<8x8xf32>
    %cst_79 = arith.constant dense<0.000000e+00> : vector<8x1088xf32>
    %124 = tpu.matmul %123, %121, %cst_79 {dimension_numbers = #tpu.dot_dimension_numbers<[1], [0], [0], [1], [0, 0, 1, 1], [], []>} : vector<8x8xf32>, vector<8x1088xf32>, vector<8x1088xf32> -> vector<8x1088xf32>
    %125 = arith.addf %120, %124 : vector<8x1088xf32>
    %c0_80 = arith.constant 0 : index
    %c0_81 = arith.constant 0 : index
    %126 = vector.load %arg5[%c0_80, %c0_81] : memref<8x1xf32, #tpu.memory_space<vmem>>, vector<8x1xf32>
    %127 = vector.broadcast %126 : vector<8x1xf32> to vector<8x1088xf32>
    %128 = arith.addf %125, %127 : vector<8x1088xf32>
    %c0_82 = arith.constant 0 : index
    %c0_83 = arith.constant 0 : index
    %c0_84 = arith.constant 0 : index
    %129 = vector.load %arg6[%c0_82, %c0_83, %c0_84] : memref<1x8x1088xf32, #tpu.memory_space<vmem>>, vector<1x8x1088xf32>
    %130 = vector.shape_cast %129 : vector<1x8x1088xf32> to vector<8x1088xf32>
    %131 = vector.shape_cast %128 : vector<8x1088xf32> to vector<1x8x1088xf32>
    tpu.vector_store %arg6[%c0_82, %c0_83, %c0_84], %131 {strides = array<i32>} : memref<1x8x1088xf32, #tpu.memory_space<vmem>>, vector<1x8x1088xf32>,
    return
  }
  func.func @transform_0(%arg0: i32) -> (i32, i32, i32) {
    %c0_i32 = arith.constant 0 : i32
    %c0_i32_0 = arith.constant 0 : i32
    %c0_i32_1 = arith.constant 0 : i32
    return %arg0, %c0_i32, %c0_i32_0 : i32, i32, i32
  }
  func.func @transform_1(%arg0: i32) -> (i32, i32, i32) {
    %c0_i32 = arith.constant 0 : i32
    %c0_i32_0 = arith.constant 0 : i32
    %c0_i32_1 = arith.constant 0 : i32
    %c0_i32_2 = arith.constant 0 : i32
    return %c0_i32, %c0_i32_0, %c0_i32_1 : i32, i32, i32
  }
  func.func @transform_2(%arg0: i32) -> (i32, i32) {
    %c0_i32 = arith.constant 0 : i32
    %c0_i32_0 = arith.constant 0 : i32
    %c0_i32_1 = arith.constant 0 : i32
    return %c0_i32, %c0_i32_0 : i32, i32
  }
  func.func @transform_3(%arg0: i32) -> (i32, i32, i32) {
    %c0_i32 = arith.constant 0 : i32
    %c0_i32_0 = arith.constant 0 : i32
    %c0_i32_1 = arith.constant 0 : i32
    %c0_i32_2 = arith.constant 0 : i32
    return %c0_i32, %c0_i32_0, %c0_i32_1 : i32, i32, i32
  }
  func.func @transform_4(%arg0: i32) -> (i32, i32) {
    %c0_i32 = arith.constant 0 : i32
    %c0_i32_0 = arith.constant 0 : i32
    %c0_i32_1 = arith.constant 0 : i32
    return %c0_i32, %c0_i32_0 : i32, i32
  }
  func.func @transform_5(%arg0: i32) -> (i32, i32, i32) {
    %c0_i32 = arith.constant 0 : i32
    %c0_i32_0 = arith.constant 0 : i32
    %c0_i32_1 = arith.constant 0 : i32
    return %arg0, %c0_i32, %c0_i32_0 : i32, i32, i32
  }
}

</mosaic_0001>

<llo_original>
// kernel: basic_deconv_block.1
$region0: #{basic_deconv_block.1}
  #allocation0 [shape = 'u32[]', space=smem, size = 0x4, offset = 0x4, fixed_abs, tag = 'smem constant byte address 0x4 - core index']
  #allocation1 [shape = 'u32[144,128]{1,0:T(1,128)}', space=vmem, size = 0x12000, scoped, tag = 'internal scratch']
  #allocation2 [shape = 'f32[8,1251]{1,0:T(8,128)}', space=vmem, size = 0xa000, scoped, tag = 'scratch operand']
  %s0 = inlined_call_operand.vmem [shape: f32[2,4,1158], index: 0, kind: input, shape index: {}]
  %s1 = inlined_call_operand.vmem [shape: f32[9,8,4], index: 1, kind: input, shape index: {}]
  %s2 = inlined_call_operand.vmem [shape: f32[8,1], index: 2, kind: input, shape index: {}]
  %s3 = inlined_call_operand.vmem [shape: f32[9,8,8], index: 3, kind: input, shape index: {}]
  %s4 = inlined_call_operand.vmem [shape: f32[8,1], index: 4, kind: input, shape index: {}]
  %s5 = inlined_call_operand.vmem [shape: f32[2,8,1088], index: 5, kind: output, shape index: {}]
  %s6 = sld [smem:[#allocation0]]
  $region53: #{basic_deconv_block.1} parent=0
    _
  %s8 = ssub.s32 1, %s6
  %s9 = scalar_select 0, %s8, %s6
  loop: start=0, step=1, limit=4
  $region2: #{basic_deconv_block.1} parent=0 // loop_pre_header
    _
  $region3: #{basic_deconv_block.1} parent=0 // loop_header
    %s11 = sphi 0, %s15
    %p12 = scmp.ge.s32.totalorder %s11, 4
    %s21 = sphi 0, %s23
    %s24 = sphi 0, %s21
    %s25 = sphi 0, %s24
    %s41 = sphi 0, %s25
    %s45 = sphi 0, %s45
    %s47 = sphi 0, %s45
    %s48 = sphi 0, %s47
    %s62 = sphi 0, %s48
    %s66 = sphi 0, %s66
    %s68 = sphi 0, %s66
    %s69 = sphi 0, %s68
    %s83 = sphi 0, %s69
    %s87 = sphi 0, %s87
    %s89 = sphi 0, %s87
    %s90 = sphi 0, %s89
    %s104 = sphi 0, %s90
    %s108 = sphi 0, %s108
    %s110 = sphi 0, %s108
    %s111 = sphi 0, %s110
    %s125 = sphi 0, %s111
    %s131 = sphi 0, %s133
    %s134 = sphi 0, %s131
    %s135 = sphi 0, %s134
    %s151 = sphi 0, %s135
  $region4: #{basic_deconv_block.1} parent=0 // loop_header_branch
    %14 = sbr.rel (%p12) target = $region8
  $region5: #{basic_deconv_block.1} parent=0 // loop_body
    %s16 = ssub.s32 %s11, 1
    %s17 = ssub.s32 %s11, 2
    %s18 = sadd.s32 %s11, 1
    %s19 = ssub.s32 %s11, %s18
    %p20 = scmp.eq.s32.totalorder %s19, 0
    %s22 = sadd.s32 %s21, 1
    %s23 = scalar_select %p20, %s21, %s22
    %p26 = pneg %p20
    %p27 = scmp.eq.s32.totalorder %s11, 1
    %p28 = por %p26, %p27
    %p29 = scmp.ne.s32.totalorder %s21, %s24
    %p30 = scmp.eq.s32.totalorder %s11, 0
    %p31 = por %p29, %p30
    %p32 = scmp.ne.s32.totalorder %s21, %s24
    %p33 = scmp.eq.s32.totalorder %s16, 1
    %p34 = por %p32, %p33
    %p35 = scmp.ne.s32.totalorder %s24, %s25
    %p36 = scmp.eq.s32.totalorder %s16, 0
    %p37 = por %p35, %p36
    %p38 = scmp.ne.s32.totalorder %s24, %s25
    %p39 = scmp.eq.s32.totalorder %s17, 1
    %p40 = por %p38, %p39
    %p42 = scmp.ne.s32.totalorder %s25, %s41
    %p43 = scmp.eq.s32.totalorder %s17, 0
    %p44 = por %p42, %p43
    %s46 = sadd.s32 %s45, 1
    %p49 = scmp.eq.s32.totalorder %s11, 1
    %p50 = scmp.ne.s32.totalorder %s45, %s47
    %p51 = scmp.eq.s32.totalorder %s11, 0
    %p52 = por %p50, %p51
    %p53 = scmp.ne.s32.totalorder %s45, %s47
    %p54 = scmp.eq.s32.totalorder %s16, 1
    %p55 = por %p53, %p54
    %p56 = scmp.ne.s32.totalorder %s47, %s48
    %p57 = scmp.eq.s32.totalorder %s16, 0
    %p58 = por %p56, %p57
    %p59 = scmp.ne.s32.totalorder %s47, %s48
    %p60 = scmp.eq.s32.totalorder %s17, 1
    %p61 = por %p59, %p60
    %p63 = scmp.ne.s32.totalorder %s48, %s62
    %p64 = scmp.eq.s32.totalorder %s17, 0
    %p65 = por %p63, %p64
    %s67 = sadd.s32 %s66, 1
    %p70 = scmp.eq.s32.totalorder %s11, 1
    %p71 = scmp.ne.s32.totalorder %s66, %s68
    %p72 = scmp.eq.s32.totalorder %s11, 0
    %p73 = por %p71, %p72
    %p74 = scmp.ne.s32.totalorder %s66, %s68
    %p75 = scmp.eq.s32.totalorder %s16, 1
    %p76 = por %p74, %p75
    %p77 = scmp.ne.s32.totalorder %s68, %s69
    %p78 = scmp.eq.s32.totalorder %s16, 0
    %p79 = por %p77, %p78
    %p80 = scmp.ne.s32.totalorder %s68, %s69
    %p81 = scmp.eq.s32.totalorder %s17, 1
    %p82 = por %p80, %p81
    %p84 = scmp.ne.s32.totalorder %s69, %s83
    %p85 = scmp.eq.s32.totalorder %s17, 0
    %p86 = por %p84, %p85
    %s88 = sadd.s32 %s87, 1
    %p91 = scmp.eq.s32.totalorder %s11, 1
    %p92 = scmp.ne.s32.totalorder %s87, %s89
    %p93 = scmp.eq.s32.totalorder %s11, 0
    %p94 = por %p92, %p93
    %p95 = scmp.ne.s32.totalorder %s87, %s89
    %p96 = scmp.eq.s32.totalorder %s16, 1
    %p97 = por %p95, %p96
    %p98 = scmp.ne.s32.totalorder %s89, %s90
    %p99 = scmp.eq.s32.totalorder %s16, 0
    %p100 = por %p98, %p99
    %p101 = scmp.ne.s32.totalorder %s89, %s90
    %p102 = scmp.eq.s32.totalorder %s17, 1
    %p103 = por %p101, %p102
    %p105 = scmp.ne.s32.totalorder %s90, %s104
    %p106 = scmp.eq.s32.totalorder %s17, 0
    %p107 = por %p105, %p106
    %s109 = sadd.s32 %s108, 1
    %p112 = scmp.eq.s32.totalorder %s11, 1
    %p113 = scmp.ne.s32.totalorder %s108, %s110
    %p114 = scmp.eq.s32.totalorder %s11, 0
    %p115 = por %p113, %p114
    %p116 = scmp.ne.s32.totalorder %s108, %s110
    %p117 = scmp.eq.s32.totalorder %s16, 1
    %p118 = por %p116, %p117
    %p119 = scmp.ne.s32.totalorder %s110, %s111
    %p120 = scmp.eq.s32.totalorder %s16, 0
    %p121 = por %p119, %p120
    %p122 = scmp.ne.s32.totalorder %s110, %s111
    %p123 = scmp.eq.s32.totalorder %s17, 1
    %p124 = por %p122, %p123
    %p126 = scmp.ne.s32.totalorder %s111, %s125
    %p127 = scmp.eq.s32.totalorder %s17, 0
    %p128 = por %p126, %p127
    %s129 = ssub.s32 %s11, %s18
    %p130 = scmp.eq.s32.totalorder %s129, 0
    %s132 = sadd.s32 %s131, 1
    %s133 = scalar_select %p130, %s131, %s132
    %p136 = pneg %p130
    %p137 = scmp.eq.s32.totalorder %s11, 1
    %p138 = por %p136, %p137
    %p139 = scmp.ne.s32.totalorder %s131, %s134
    %p140 = scmp.eq.s32.totalorder %s11, 0
    %p141 = por %p139, %p140
    %p142 = scmp.ne.s32.totalorder %s131, %s134
    %p143 = scmp.eq.s32.totalorder %s16, 1
    %p144 = por %p142, %p143
    %p145 = scmp.ne.s32.totalorder %s134, %s135
    %p146 = scmp.eq.s32.totalorder %s16, 0
    %p147 = por %p145, %p146
    %p148 = scmp.ne.s32.totalorder %s134, %s135
    %p149 = scmp.eq.s32.totalorder %s17, 1
    %p150 = por %p148, %p149
    %p152 = scmp.ne.s32.totalorder %s135, %s151
    %p153 = scmp.eq.s32.totalorder %s17, 0
    %p154 = por %p152, %p153
    %p155 = scmp.le.s32.totalorder 1, %s11
    %p156 = scmp.lt.s32.totalorder %s11, 3
    %p157 = pnand %p155, %p156
    %p158 = pneg %p157
    // Predicated region
    $region9: #{basic_deconv_block.1} parent=5 // pred_check
      _
    $region10: #{basic_deconv_block.1} parent=5 // pred_check_branch
      %160 = sbr.rel (%p157) target = $region12
    $region11: #{basic_deconv_block.1} parent=5 // pred_region
      %s161 = ssub.s32 %s11, 1
      // Predicated region
      $region13: #{basic_deconv_block.1} parent=11 // pred_check
        %p162 = pneg %p58
      $region14: #{basic_deconv_block.1} parent=11 // pred_check_branch
        %164 = sbr.rel (%p162) target = $region16
      $region15: #{basic_deconv_block.1} parent=11 // pred_region
        _
      $region16: #{basic_deconv_block.1} parent=11 // pred_fallthru
        _
      // Predicated region
      $region17: #{basic_deconv_block.1} parent=11 // pred_check
        %p165 = pneg %p79
      $region18: #{basic_deconv_block.1} parent=11 // pred_check_branch
        %167 = sbr.rel (%p165) target = $region20
      $region19: #{basic_deconv_block.1} parent=11 // pred_region
        _
      $region20: #{basic_deconv_block.1} parent=11 // pred_fallthru
        _
      // Predicated region
      $region21: #{basic_deconv_block.1} parent=11 // pred_check
        %p168 = pneg %p100
      $region22: #{basic_deconv_block.1} parent=11 // pred_check_branch
        %170 = sbr.rel (%p168) target = $region24
      $region23: #{basic_deconv_block.1} parent=11 // pred_region
        _
      $region24: #{basic_deconv_block.1} parent=11 // pred_fallthru
        _
      // Predicated region
      $region25: #{basic_deconv_block.1} parent=11 // pred_check
        %p171 = pneg %p121
      $region26: #{basic_deconv_block.1} parent=11 // pred_check_branch
        %173 = sbr.rel (%p171) target = $region28
      $region27: #{basic_deconv_block.1} parent=11 // pred_region
        _
      $region28: #{basic_deconv_block.1} parent=11 // pred_fallthru
        _
    $region12: #{basic_deconv_block.1} parent=5 // pred_fallthru
      _
    %p174 = scmp.lt.s32.totalorder %s11, 2
    // Predicated region
    $region29: #{basic_deconv_block.1} parent=5 // pred_check
      %p175 = pneg %p174
    $region30: #{basic_deconv_block.1} parent=5 // pred_check_branch
      %177 = sbr.rel (%p175) target = $region32
    $region31: #{basic_deconv_block.1} parent=5 // pred_region
      // Predicated region
      $region33: #{basic_deconv_block.1} parent=31 // pred_check
        %p178 = pneg %p31
      $region34: #{basic_deconv_block.1} parent=31 // pred_check_branch
        %180 = sbr.rel (%p178) target = $region36
      $region35: #{basic_deconv_block.1} parent=31 // pred_region
        %p181 = scmp.lt.s32.totalorder %s11, 1
        %s182 = scalar_select %p181, %s11, 1
        %s183 = smul.addr %s182, 10
        %s184 = smul.addr %s183, 4
        %s185 = scalar_lea.vmem %s0, %s184
      $region36: #{basic_deconv_block.1} parent=31 // pred_fallthru
        _
    $region32: #{basic_deconv_block.1} parent=5 // pred_fallthru
      _
    %p186 = scmp.le.s32.totalorder 1, %s11
    %p187 = scmp.lt.s32.totalorder %s11, 3
    %p188 = pnand %p186, %p187
    %p189 = pneg %p188
    // Predicated region
    $region37: #{basic_deconv_block.1} parent=5 // pred_check
      _
    $region38: #{basic_deconv_block.1} parent=5 // pred_check_branch
      %191 = sbr.rel (%p188) target = $region40
    $region39: #{basic_deconv_block.1} parent=5 // pred_region
      %s192 = ssub.s32 %s11, 1
      %p193 = scmp.lt.s32.totalorder %s16, 1
      %s194 = scalar_select %p193, %s16, 1
      %s195 = smul.addr %s194, 10
      %s196 = smul.addr %s195, 4
      %s197 = scalar_lea.vmem %s0, %s196
      %p198 = pneg %p37
      %p199 = pneg %p34
      %p200 = pneg %p58
      %p201 = pneg %p55
      %p202 = pneg %p79
      %p203 = pneg %p76
      %p204 = pneg %p100
      %p205 = pneg %p97
      %p206 = pneg %p121
      %p207 = pneg %p118
      %p208 = pneg %p147
      %p209 = pneg %p144
      %p210 = scmp.lt.s32.totalorder %s16, 1
      %s211 = scalar_select %p210, %s16, 1
      %s212 = smul.addr %s211, 9
      %s213 = smul.addr %s212, 8
      %s214 = scalar_lea.vmem %s5, %s213
      %p215 = scmp.lt.s32.totalorder %s16, 1
      %s216 = scalar_select %p215, %s16, 1
      %s217 = smul.addr %s216, 10
      %s218 = smul.addr %s217, 4
      %s219 = scalar_lea.vmem %s0, %s218
      %p220 = scmp.lt.s32.totalorder %s16, 1
      %s221 = scalar_select %p220, %s16, 1
      %s222 = smul.addr %s221, 9
      %s223 = smul.addr %s222, 8
      %s224 = scalar_lea.vmem %s5, %s223
      %v225 = vld [vmem:[%s219] sm:$0xff]
      %v226 = vld [vmem:[%s219 + $0x8] sm:$0xff]
      %v227 = vld [vmem:[%s219 + $0x10] sm:$0xff]
      %v228 = vld [vmem:[%s219 + $0x18] sm:$0xff]
      %v229 = vld [vmem:[%s219 + $0x20] sm:$0xff]
      %v230 = vld [vmem:[%s1] sm:$0xff]
      %s231 = scalar_lea.vmem %s1, 8
      %v232 = vld [vmem:[%s231] sm:$0xff]
      %v238 = vcombine.high %v225, %v225
      %v239 = vcombine.high %v226, %v226
      %v240 = vcombine.high %v227, %v227
      %v241 = vcombine.high %v228, %v228
      %242 = vrot.lane.b32.xlu0 %v225, 127
      %v243 = vpop.permute.xlu0 %242
      %244 = vrot.lane.b32.xlu0 %v238, 127
      %v245 = vpop.permute.xlu0 %244
      %246 = vrot.lane.b32.xlu0 %v226, 127
      %v247 = vpop.permute.xlu0 %246
      %248 = vrot.lane.b32.xlu0 %v239, 127
      %v249 = vpop.permute.xlu0 %248
      %250 = vrot.lane.b32.xlu0 %v227, 127
      %v251 = vpop.permute.xlu0 %250
      %252 = vrot.lane.b32.xlu0 %v240, 127
      %v253 = vpop.permute.xlu0 %252
      %254 = vrot.lane.b32.xlu0 %v228, 127
      %v255 = vpop.permute.xlu0 %254
      %256 = vrot.lane.b32.xlu0 %v241, 127
      %v257 = vpop.permute.xlu0 %256
      %258 = vrot.lane.b32.xlu0 %v229, 127
      %v259 = vpop.permute.xlu0 %258
      %vm260 = vcmask 1039360
      %v261 = vsel %vm260, %v243, %v245
      %v262 = vsel %vm260, %v245, %v247
      %v263 = vsel %vm260, %v247, %v249
      %v264 = vsel %vm260, %v249, %v251
      %v265 = vsel %vm260, %v251, %v253
      %v266 = vsel %vm260, %v253, %v255
      %v267 = vsel %vm260, %v255, %v257
      %v268 = vsel %vm260, %v257, %v259
      %vm269 = vcmask 31744
      %v271 = vsel %vm269, %v232, 0
      %vm273 = vcmask 1043456
      %v274 = vsel %vm273, %v261, 0
      %v276 = vsel %vm273, %v262, 0
      %v278 = vsel %vm273, %v263, 0
      %v280 = vsel %vm273, %v264, 0
      %v282 = vsel %vm273, %v265, 0
      %v284 = vsel %vm273, %v266, 0
      %v286 = vsel %vm273, %v267, 0
      %v288 = vsel %vm273, %v268, 0
      %v290 = vsel %vm273, %v259, 0
      %292 = vmatprep.subr.mxu0 0.0
      %293 = vmatpush1.msra.mxu0 0.0
      %294 = vmatprep.subr.mxu0 0.0
      %295 = vmatpush1.msra.mxu0 0.0
      %296 = vmatprep.subr.mxu0 0.0
      %297 = vmatpush1.msra.mxu0 0.0
      %298 = vmatprep.subr.mxu0 0.0
      %299 = vmatpush1.msra.mxu0 0.0
      %300 = vmatprep.subr.mxu0 0.0
      %301 = vmatpush1.msra.mxu0 0.0
      %302 = vmatprep.subr.mxu0 0.0
      %303 = vmatpush1.msra.mxu0 0.0
      %304 = vmatprep.subr.mxu0 0.0
      %305 = vmatpush1.msra.mxu0 0.0
      %306 = vmatprep.subr.mxu0 0.0
      %307 = vmatpush1.msra.mxu0 0.0
      %308 = vmatprep.subr.mxu0 0.0
      %309 = vmatpush1.msra.mxu0 0.0
      %310 = vmatprep.subr.mxu0 0.0
      %311 = vmatpush1.msra.mxu0 0.0
      %312 = vmatprep.subr.mxu0 0.0
      %313 = vmatpush1.msra.mxu0 0.0
      %314 = vmatprep.subr.mxu0 0.0
      %315 = vmatpush1.msra.mxu0 0.0
      %316 = vmatprep.subr.mxu0 0.0
      %317 = vmatpush1.msra.mxu0 0.0
      %318 = vmatprep.subr.mxu0 0.0
      %319 = vmatpush1.msra.mxu0 0.0
      %320 = vmatprep.subr.mxu0 0.0
      %321 = vmatpush1.msra.mxu0 0.0
      %322 = vmatprep.subr.mxu0 %v276
      %323 = vmatpush1.msra.mxu0 %v274
      %324 = vmatprep.subr.mxu0 0.0
      %325 = vmatpush2.msra.mxu0 0.0
      %326 = vmatprep.subr.mxu0 0.0
      %327 = vmatpush2.msra.mxu0 0.0
      %328 = vmatprep.subr.mxu0 0.0
      %329 = vmatpush2.msra.mxu0 0.0
      %330 = vmatprep.subr.mxu0 0.0
      %331 = vmatpush2.msra.mxu0 0.0
      %332 = vmatprep.subr.mxu0 0.0
      %333 = vmatpush2.msra.mxu0 0.0
      %334 = vmatprep.subr.mxu0 0.0
      %335 = vmatpush2.msra.mxu0 0.0
      %336 = vmatprep.subr.mxu0 0.0
      %337 = vmatpush2.msra.mxu0 0.0
      %338 = vmatprep.subr.mxu0 0.0
      %339 = vmatpush2.msra.mxu0 0.0
      %340 = vmatprep.subr.mxu0 0.0
      %341 = vmatpush2.msra.mxu0 0.0
      %342 = vmatprep.subr.mxu0 0.0
      %343 = vmatpush2.msra.mxu0 0.0
      %344 = vmatprep.subr.mxu0 0.0
      %345 = vmatpush2.msra.mxu0 0.0
      %346 = vmatprep.subr.mxu0 0.0
      %347 = vmatpush2.msra.mxu0 0.0
      %348 = vmatprep.subr.mxu0 0.0
      %349 = vmatpush2.msra.mxu0 0.0
      %350 = vmatprep.subr.mxu0 0.0
      %351 = vmatpush2.msra.mxu0 0.0
      %352 = vmatprep.subr.mxu0 0.0
      %353 = vmatpush2.msra.mxu0 0.0
      %354 = vmatprep.subr.mxu0 0.0
      %355 = vmatpush2.msra.mxu0 0.0
      %356 = vmatprep.mubr.f32.mxu0 0.0
      %357 = vmatmul.mubr.f32.gmra.mxu0 %v271
      %v358 = vpop.f32.mrf.mxu0
      %v359 = vadd.f32 0.0, %v358
      %v360 = vpop.f32.mrf.mxu0
      %v361 = vadd.f32 0.0, %v360
      %362 = vdwg.mxu0
      %363 = vmatprep.subr.mxu0 0.0
      %364 = vmatpush1.msra.mxu0 0.0
      %365 = vmatprep.subr.mxu0 0.0
      %366 = vmatpush1.msra.mxu0 0.0
      %367 = vmatprep.subr.mxu0 0.0
      %368 = vmatpush1.msra.mxu0 0.0
      %369 = vmatprep.subr.mxu0 0.0
      %370 = vmatpush1.msra.mxu0 0.0
      %371 = vmatprep.subr.mxu0 0.0
      %372 = vmatpush1.msra.mxu0 0.0
      %373 = vmatprep.subr.mxu0 0.0
      %374 = vmatpush1.msra.mxu0 0.0
      %375 = vmatprep.subr.mxu0 0.0
      %376 = vmatpush1.msra.mxu0 0.0
      %377 = vmatprep.subr.mxu0 0.0
      %378 = vmatpush1.msra.mxu0 0.0
      %379 = vmatprep.subr.mxu0 0.0
      %380 = vmatpush1.msra.mxu0 0.0
      %381 = vmatprep.subr.mxu0 0.0
      %382 = vmatpush1.msra.mxu0 0.0
      %383 = vmatprep.subr.mxu0 0.0
      %384 = vmatpush1.msra.mxu0 0.0
      %385 = vmatprep.subr.mxu0 0.0
      %386 = vmatpush1.msra.mxu0 0.0
      %387 = vmatprep.subr.mxu0 0.0
      %388 = vmatpush1.msra.mxu0 0.0
      %389 = vmatprep.subr.mxu0 0.0
      %390 = vmatpush1.msra.mxu0 0.0
      %391 = vmatprep.subr.mxu0 0.0
      %392 = vmatpush1.msra.mxu0 0.0
      %393 = vmatprep.subr.mxu0 %v280
      %394 = vmatpush1.msra.mxu0 %v278
      %395 = vmatprep.subr.mxu0 0.0
      %396 = vmatpush2.msra.mxu0 0.0
      %397 = vmatprep.subr.mxu0 0.0
      %398 = vmatpush2.msra.mxu0 0.0
      %399 = vmatprep.subr.mxu0 0.0
      %400 = vmatpush2.msra.mxu0 0.0
      %401 = vmatprep.subr.mxu0 0.0
      %402 = vmatpush2.msra.mxu0 0.0
      %403 = vmatprep.subr.mxu0 0.0
      %404 = vmatpush2.msra.mxu0 0.0
      %405 = vmatprep.subr.mxu0 0.0
      %406 = vmatpush2.msra.mxu0 0.0
      %407 = vmatprep.subr.mxu0 0.0
      %408 = vmatpush2.msra.mxu0 0.0
      %409 = vmatprep.subr.mxu0 0.0
      %410 = vmatpush2.msra.mxu0 0.0
      %411 = vmatprep.subr.mxu0 0.0
      %412 = vmatpush2.msra.mxu0 0.0
      %413 = vmatprep.subr.mxu0 0.0
      %414 = vmatpush2.msra.mxu0 0.0
      %415 = vmatprep.subr.mxu0 0.0
      %416 = vmatpush2.msra.mxu0 0.0
      %417 = vmatprep.subr.mxu0 0.0
      %418 = vmatpush2.msra.mxu0 0.0
      %419 = vmatprep.subr.mxu0 0.0
      %420 = vmatpush2.msra.mxu0 0.0
      %421 = vmatprep.subr.mxu0 0.0
      %422 = vmatpush2.msra.mxu0 0.0
      %423 = vmatprep.subr.mxu0 0.0
      %424 = vmatpush2.msra.mxu0 0.0
      %425 = vmatprep.subr.mxu0 0.0
      %426 = vmatpush2.msra.mxu0 0.0
      %427 = vmatprep.mubr.f32.mxu0 0.0
      %428 = vmatmul.mubr.f32.gmra.mxu0 %v271
      %v429 = vpop.f32.mrf.mxu0
      %v430 = vadd.f32 0.0, %v429
      %v431 = vpop.f32.mrf.mxu0
      %v432 = vadd.f32 0.0, %v431
      %433 = vdwg.mxu0
      %434 = vmatprep.subr.mxu0 0.0
      %435 = vmatpush1.msra.mxu0 0.0
      %436 = vmatprep.subr.mxu0 0.0
      %437 = vmatpush1.msra.mxu0 0.0
      %438 = vmatprep.subr.mxu0 0.0
      %439 = vmatpush1.msra.mxu0 0.0
      %440 = vmatprep.subr.mxu0 0.0
      %441 = vmatpush1.msra.mxu0 0.0
      %442 = vmatprep.subr.mxu0 0.0
      %443 = vmatpush1.msra.mxu0 0.0
      %444 = vmatprep.subr.mxu0 0.0
      %445 = vmatpush1.msra.mxu0 0.0
      %446 = vmatprep.subr.mxu0 0.0
      %447 = vmatpush1.msra.mxu0 0.0
      %448 = vmatprep.subr.mxu0 0.0
      %449 = vmatpush1.msra.mxu0 0.0
      %450 = vmatprep.subr.mxu0 0.0
      %451 = vmatpush1.msra.mxu0 0.0
      %452 = vmatprep.subr.mxu0 0.0
      %453 = vmatpush1.msra.mxu0 0.0
      %454 = vmatprep.subr.mxu0 0.0
      %455 = vmatpush1.msra.mxu0 0.0
      %456 = vmatprep.subr.mxu0 0.0
      %457 = vmatpush1.msra.mxu0 0.0
      %458 = vmatprep.subr.mxu0 0.0
      %459 = vmatpush1.msra.mxu0 0.0
      %460 = vmatprep.subr.mxu0 0.0
      %461 = vmatpush1.msra.mxu0 0.0
      %462 = vmatprep.subr.mxu0 0.0
      %463 = vmatpush1.msra.mxu0 0.0
      %464 = vmatprep.subr.mxu0 %v284
      %465 = vmatpush1.msra.mxu0 %v282
      %466 = vmatprep.subr.mxu0 0.0
      %467 = vmatpush2.msra.mxu0 0.0
      %468 = vmatprep.subr.mxu0 0.0
      %469 = vmatpush2.msra.mxu0 0.0
      %470 = vmatprep.subr.mxu0 0.0
      %471 = vmatpush2.msra.mxu0 0.0
      %472 = vmatprep.subr.mxu0 0.0
      %473 = vmatpush2.msra.mxu0 0.0
      %474 = vmatprep.subr.mxu0 0.0
      %475 = vmatpush2.msra.mxu0 0.0
      %476 = vmatprep.subr.mxu0 0.0
      %477 = vmatpush2.msra.mxu0 0.0
      %478 = vmatprep.subr.mxu0 0.0
      %479 = vmatpush2.msra.mxu0 0.0
      %480 = vmatprep.subr.mxu0 0.0
      %481 = vmatpush2.msra.mxu0 0.0
      %482 = vmatprep.subr.mxu0 0.0
      %483 = vmatpush2.msra.mxu0 0.0
      %484 = vmatprep.subr.mxu0 0.0
      %485 = vmatpush2.msra.mxu0 0.0
      %486 = vmatprep.subr.mxu0 0.0
      %487 = vmatpush2.msra.mxu0 0.0
      %488 = vmatprep.subr.mxu0 0.0
      %489 = vmatpush2.msra.mxu0 0.0
      %490 = vmatprep.subr.mxu0 0.0
      %491 = vmatpush2.msra.mxu0 0.0
      %492 = vmatprep.subr.mxu0 0.0
      %493 = vmatpush2.msra.mxu0 0.0
      %494 = vmatprep.subr.mxu0 0.0
      %495 = vmatpush2.msra.mxu0 0.0
      %496 = vmatprep.subr.mxu0 0.0
      %497 = vmatpush2.msra.mxu0 0.0
      %498 = vmatprep.mubr.f32.mxu0 0.0
      %499 = vmatmul.mubr.f32.gmra.mxu0 %v271
      %v500 = vpop.f32.mrf.mxu0
      %v501 = vadd.f32 0.0, %v500
      %v502 = vpop.f32.mrf.mxu0
      %v503 = vadd.f32 0.0, %v502
      %504 = vdwg.mxu0
      %505 = vmatprep.subr.mxu0 0.0
      %506 = vmatpush1.msra.mxu0 0.0
      %507 = vmatprep.subr.mxu0 0.0
      %508 = vmatpush1.msra.mxu0 0.0
      %509 = vmatprep.subr.mxu0 0.0
      %510 = vmatpush1.msra.mxu0 0.0
      %511 = vmatprep.subr.mxu0 0.0
      %512 = vmatpush1.msra.mxu0 0.0
      %513 = vmatprep.subr.mxu0 0.0
      %514 = vmatpush1.msra.mxu0 0.0
      %515 = vmatprep.subr.mxu0 0.0
      %516 = vmatpush1.msra.mxu0 0.0
      %517 = vmatprep.subr.mxu0 0.0
      %518 = vmatpush1.msra.mxu0 0.0
      %519 = vmatprep.subr.mxu0 0.0
      %520 = vmatpush1.msra.mxu0 0.0
      %521 = vmatprep.subr.mxu0 0.0
      %522 = vmatpush1.msra.mxu0 0.0
      %523 = vmatprep.subr.mxu0 0.0
      %524 = vmatpush1.msra.mxu0 0.0
      %525 = vmatprep.subr.mxu0 0.0
      %526 = vmatpush1.msra.mxu0 0.0
      %527 = vmatprep.subr.mxu0 0.0
      %528 = vmatpush1.msra.mxu0 0.0
      %529 = vmatprep.subr.mxu0 0.0
      %530 = vmatpush1.msra.mxu0 0.0
      %531 = vmatprep.subr.mxu0 0.0
      %532 = vmatpush1.msra.mxu0 0.0
      %533 = vmatprep.subr.mxu0 0.0
      %534 = vmatpush1.msra.mxu0 0.0
      %535 = vmatprep.subr.mxu0 %v288
      %536 = vmatpush1.msra.mxu0 %v286
      %537 = vmatprep.subr.mxu0 0.0
      %538 = vmatpush2.msra.mxu0 0.0
      %539 = vmatprep.subr.mxu0 0.0
      %540 = vmatpush2.msra.mxu0 0.0
      %541 = vmatprep.subr.mxu0 0.0
      %542 = vmatpush2.msra.mxu0 0.0
      %543 = vmatprep.subr.mxu0 0.0
      %544 = vmatpush2.msra.mxu0 0.0
      %545 = vmatprep.subr.mxu0 0.0
      %546 = vmatpush2.msra.mxu0 0.0
      %547 = vmatprep.subr.mxu0 0.0
      %548 = vmatpush2.msra.mxu0 0.0
      %549 = vmatprep.subr.mxu0 0.0
      %550 = vmatpush2.msra.mxu0 0.0
      %551 = vmatprep.subr.mxu0 0.0
      %552 = vmatpush2.msra.mxu0 0.0
      %553 = vmatprep.subr.mxu0 0.0
      %554 = vmatpush2.msra.mxu0 0.0
      %555 = vmatprep.subr.mxu0 0.0
      %556 = vmatpush2.msra.mxu0 0.0
      %557 = vmatprep.subr.mxu0 0.0
      %558 = vmatpush2.msra.mxu0 0.0
      %559 = vmatprep.subr.mxu0 0.0
      %560 = vmatpush2.msra.mxu0 0.0
      %561 = vmatprep.subr.mxu0 0.0
      %562 = vmatpush2.msra.mxu0 0.0
      %563 = vmatprep.subr.mxu0 0.0
      %564 = vmatpush2.msra.mxu0 0.0
      %565 = vmatprep.subr.mxu0 0.0
      %566 = vmatpush2.msra.mxu0 0.0
      %567 = vmatprep.subr.mxu0 0.0
      %568 = vmatpush2.msra.mxu0 0.0
      %569 = vmatprep.mubr.f32.mxu0 0.0
      %570 = vmatmul.mubr.f32.gmra.mxu0 %v271
      %v571 = vpop.f32.mrf.mxu0
      %v572 = vadd.f32 0.0, %v571
      %v573 = vpop.f32.mrf.mxu0
      %v574 = vadd.f32 0.0, %v573
      %575 = vdwg.mxu0
      %576 = vmatprep.subr.mxu0 0.0
      %577 = vmatpush1.msra.mxu0 0.0
      %578 = vmatprep.subr.mxu0 0.0
      %579 = vmatpush1.msra.mxu0 0.0
      %580 = vmatprep.subr.mxu0 0.0
      %581 = vmatpush1.msra.mxu0 0.0
      %582 = vmatprep.subr.mxu0 0.0
      %583 = vmatpush1.msra.mxu0 0.0
      %584 = vmatprep.subr.mxu0 0.0
      %585 = vmatpush1.msra.mxu0 0.0
      %586 = vmatprep.subr.mxu0 0.0
      %587 = vmatpush1.msra.mxu0 0.0
      %588 = vmatprep.subr.mxu0 0.0
      %589 = vmatpush1.msra.mxu0 0.0
      %590 = vmatprep.subr.mxu0 0.0
      %591 = vmatpush1.msra.mxu0 0.0
      %592 = vmatprep.subr.mxu0 0.0
      %593 = vmatpush1.msra.mxu0 0.0
      %594 = vmatprep.subr.mxu0 0.0
      %595 = vmatpush1.msra.mxu0 0.0
      %596 = vmatprep.subr.mxu0 0.0
      %597 = vmatpush1.msra.mxu0 0.0
      %598 = vmatprep.subr.mxu0 0.0
      %599 = vmatpush1.msra.mxu0 0.0
      %600 = vmatprep.subr.mxu0 0.0
      %601 = vmatpush1.msra.mxu0 0.0
      %602 = vmatprep.subr.mxu0 0.0
      %603 = vmatpush1.msra.mxu0 0.0
      %604 = vmatprep.subr.mxu0 0.0
      %605 = vmatpush1.msra.mxu0 0.0
      %606 = vmatprep.subr.mxu0 0.0
      %607 = vmatpush1.msra.mxu0 %v290
      %608 = vmatprep.subr.mxu0 0.0
      %609 = vmatpush2.msra.mxu0 0.0
      %610 = vmatprep.subr.mxu0 0.0
      %611 = vmatpush2.msra.mxu0 0.0
      %612 = vmatprep.subr.mxu0 0.0
      %613 = vmatpush2.msra.mxu0 0.0
      %614 = vmatprep.subr.mxu0 0.0
      %615 = vmatpush2.msra.mxu0 0.0
      %616 = vmatprep.subr.mxu0 0.0
      %617 = vmatpush2.msra.mxu0 0.0
      %618 = vmatprep.subr.mxu0 0.0
      %619 = vmatpush2.msra.mxu0 0.0
      %620 = vmatprep.subr.mxu0 0.0
      %621 = vmatpush2.msra.mxu0 0.0
      %622 = vmatprep.subr.mxu0 0.0
      %623 = vmatpush2.msra.mxu0 0.0
      %624 = vmatprep.subr.mxu0 0.0
      %625 = vmatpush2.msra.mxu0 0.0
      %626 = vmatprep.subr.mxu0 0.0
      %627 = vmatpush2.msra.mxu0 0.0
      %628 = vmatprep.subr.mxu0 0.0
      %629 = vmatpush2.msra.mxu0 0.0
      %630 = vmatprep.subr.mxu0 0.0
      %631 = vmatpush2.msra.mxu0 0.0
      %632 = vmatprep.subr.mxu0 0.0
      %633 = vmatpush2.msra.mxu0 0.0
      %634 = vmatprep.subr.mxu0 0.0
      %635 = vmatpush2.msra.mxu0 0.0
      %636 = vmatprep.subr.mxu0 0.0
      %637 = vmatpush2.msra.mxu0 0.0
      %638 = vmatprep.subr.mxu0 0.0
      %639 = vmatpush2.msra.mxu0 0.0
      %640 = vmatprep.mubr.f32.mxu0 0.0
      %641 = vmatmul.mubr.f32.gmra.mxu0 %v271
      %v642 = vpop.f32.mrf.mxu0
      %v643 = vadd.f32 0.0, %v642
      %v644 = vpop.f32.mrf.mxu0
      %645 = vdwg.mxu0
      %v647 = vsel %vm269, %v230, 0
      %v649 = vsel %vm273, %v225, 0
      %v651 = vsel %vm273, %v238, 0
      %v653 = vsel %vm273, %v226, 0
      %v655 = vsel %vm273, %v239, 0
      %v657 = vsel %vm273, %v227, 0
      %v659 = vsel %vm273, %v240, 0
      %v661 = vsel %vm273, %v228, 0
      %v663 = vsel %vm273, %v241, 0
      %v665 = vsel %vm273, %v229, 0
      %667 = vmatprep.subr.mxu0 0.0
      %668 = vmatpush1.msra.mxu0 0.0
      %669 = vmatprep.subr.mxu0 0.0
      %670 = vmatpush1.msra.mxu0 0.0
      %671 = vmatprep.subr.mxu0 0.0
      %672 = vmatpush1.msra.mxu0 0.0
      %673 = vmatprep.subr.mxu0 0.0
      %674 = vmatpush1.msra.mxu0 0.0
      %675 = vmatprep.subr.mxu0 0.0
      %676 = vmatpush1.msra.mxu0 0.0
      %677 = vmatprep.subr.mxu0 0.0
      %678 = vmatpush1.msra.mxu0 0.0
      %679 = vmatprep.subr.mxu0 0.0
      %680 = vmatpush1.msra.mxu0 0.0
      %681 = vmatprep.subr.mxu0 0.0
      %682 = vmatpush1.msra.mxu0 0.0
      %683 = vmatprep.subr.mxu0 0.0
      %684 = vmatpush1.msra.mxu0 0.0
      %685 = vmatprep.subr.mxu0 0.0
      %686 = vmatpush1.msra.mxu0 0.0
      %687 = vmatprep.subr.mxu0 0.0
      %688 = vmatpush1.msra.mxu0 0.0
      %689 = vmatprep.subr.mxu0 0.0
      %690 = vmatpush1.msra.mxu0 0.0
      %691 = vmatprep.subr.mxu0 0.0
      %692 = vmatpush1.msra.mxu0 0.0
      %693 = vmatprep.subr.mxu0 0.0
      %694 = vmatpush1.msra.mxu0 0.0
      %695 = vmatprep.subr.mxu0 0.0
      %696 = vmatpush1.msra.mxu0 0.0
      %697 = vmatprep.subr.mxu0 %v651
      %698 = vmatpush1.msra.mxu0 %v649
      %699 = vmatprep.subr.mxu0 0.0
      %700 = vmatpush2.msra.mxu0 0.0
      %701 = vmatprep.subr.mxu0 0.0
      %702 = vmatpush2.msra.mxu0 0.0
      %703 = vmatprep.subr.mxu0 0.0
      %704 = vmatpush2.msra.mxu0 0.0
      %705 = vmatprep.subr.mxu0 0.0
      %706 = vmatpush2.msra.mxu0 0.0
      %707 = vmatprep.subr.mxu0 0.0
      %708 = vmatpush2.msra.mxu0 0.0
      %709 = vmatprep.subr.mxu0 0.0
      %710 = vmatpush2.msra.mxu0 0.0
      %711 = vmatprep.subr.mxu0 0.0
      %712 = vmatpush2.msra.mxu0 0.0
      %713 = vmatprep.subr.mxu0 0.0
      %714 = vmatpush2.msra.mxu0 0.0
      %715 = vmatprep.subr.mxu0 0.0
      %716 = vmatpush2.msra.mxu0 0.0
      %717 = vmatprep.subr.mxu0 0.0
      %718 = vmatpush2.msra.mxu0 0.0
      %719 = vmatprep.subr.mxu0 0.0
      %720 = vmatpush2.msra.mxu0 0.0
      %721 = vmatprep.subr.mxu0 0.0
      %722 = vmatpush2.msra.mxu0 0.0
      %723 = vmatprep.subr.mxu0 0.0
      %724 = vmatpush2.msra.mxu0 0.0
      %725 = vmatprep.subr.mxu0 0.0
      %726 = vmatpush2.msra.mxu0 0.0
      %727 = vmatprep.subr.mxu0 0.0
      %728 = vmatpush2.msra.mxu0 0.0
      %729 = vmatprep.subr.mxu0 0.0
      %730 = vmatpush2.msra.mxu0 0.0
      %731 = vmatprep.mubr.f32.mxu0 0.0
      %732 = vmatmul.mubr.f32.gmra.mxu0 %v647
      %v733 = vpop.f32.mrf.mxu0
      %v734 = vadd.f32 %v359, %v733
      %v735 = vpop.f32.mrf.mxu0
      %v736 = vadd.f32 %v361, %v735
      %737 = vdwg.mxu0
      %738 = vmatprep.subr.mxu0 0.0
      %739 = vmatpush1.msra.mxu0 0.0
      %740 = vmatprep.subr.mxu0 0.0
      %741 = vmatpush1.msra.mxu0 0.0
      %742 = vmatprep.subr.mxu0 0.0
      %743 = vmatpush1.msra.mxu0 0.0
      %744 = vmatprep.subr.mxu0 0.0
      %745 = vmatpush1.msra.mxu0 0.0
      %746 = vmatprep.subr.mxu0 0.0
      %747 = vmatpush1.msra.mxu0 0.0
      %748 = vmatprep.subr.mxu0 0.0
      %749 = vmatpush1.msra.mxu0 0.0
      %750 = vmatprep.subr.mxu0 0.0
      %751 = vmatpush1.msra.mxu0 0.0
      %752 = vmatprep.subr.mxu0 0.0
      %753 = vmatpush1.msra.mxu0 0.0
      %754 = vmatprep.subr.mxu0 0.0
      %755 = vmatpush1.msra.mxu0 0.0
      %756 = vmatprep.subr.mxu0 0.0
      %757 = vmatpush1.msra.mxu0 0.0
      %758 = vmatprep.subr.mxu0 0.0
      %759 = vmatpush1.msra.mxu0 0.0
      %760 = vmatprep.subr.mxu0 0.0
      %761 = vmatpush1.msra.mxu0 0.0
      %762 = vmatprep.subr.mxu0 0.0
      %763 = vmatpush1.msra.mxu0 0.0
      %764 = vmatprep.subr.mxu0 0.0
      %765 = vmatpush1.msra.mxu0 0.0
      %766 = vmatprep.subr.mxu0 0.0
      %767 = vmatpush1.msra.mxu0 0.0
      %768 = vmatprep.subr.mxu0 %v655
      %769 = vmatpush1.msra.mxu0 %v653
      %770 = vmatprep.subr.mxu0 0.0
      %771 = vmatpush2.msra.mxu0 0.0
      %772 = vmatprep.subr.mxu0 0.0
      %773 = vmatpush2.msra.mxu0 0.0
      %774 = vmatprep.subr.mxu0 0.0
      %775 = vmatpush2.msra.mxu0 0.0
      %776 = vmatprep.subr.mxu0 0.0
      %777 = vmatpush2.msra.mxu0 0.0
      %778 = vmatprep.subr.mxu0 0.0
      %779 = vmatpush2.msra.mxu0 0.0
      %780 = vmatprep.subr.mxu0 0.0
      %781 = vmatpush2.msra.mxu0 0.0
      %782 = vmatprep.subr.mxu0 0.0
      %783 = vmatpush2.msra.mxu0 0.0
      %784 = vmatprep.subr.mxu0 0.0
      %785 = vmatpush2.msra.mxu0 0.0
      %786 = vmatprep.subr.mxu0 0.0
      %787 = vmatpush2.msra.mxu0 0.0
      %788 = vmatprep.subr.mxu0 0.0
      %789 = vmatpush2.msra.mxu0 0.0
      %790 = vmatprep.subr.mxu0 0.0
      %791 = vmatpush2.msra.mxu0 0.0
      %792 = vmatprep.subr.mxu0 0.0
      %793 = vmatpush2.msra.mxu0 0.0
      %794 = vmatprep.subr.mxu0 0.0
      %795 = vmatpush2.msra.mxu0 0.0
      %796 = vmatprep.subr.mxu0 0.0
      %797 = vmatpush2.msra.mxu0 0.0
      %798 = vmatprep.subr.mxu0 0.0
      %799 = vmatpush2.msra.mxu0 0.0
      %800 = vmatprep.subr.mxu0 0.0
      %801 = vmatpush2.msra.mxu0 0.0
      %802 = vmatprep.mubr.f32.mxu0 0.0
      %803 = vmatmul.mubr.f32.gmra.mxu0 %v647
      %v804 = vpop.f32.mrf.mxu0
      %v805 = vadd.f32 %v430, %v804
      %v806 = vpop.f32.mrf.mxu0
      %v807 = vadd.f32 %v432, %v806
      %808 = vdwg.mxu0
      %809 = vmatprep.subr.mxu0 0.0
      %810 = vmatpush1.msra.mxu0 0.0
      %811 = vmatprep.subr.mxu0 0.0
      %812 = vmatpush1.msra.mxu0 0.0
      %813 = vmatprep.subr.mxu0 0.0
      %814 = vmatpush1.msra.mxu0 0.0
      %815 = vmatprep.subr.mxu0 0.0
      %816 = vmatpush1.msra.mxu0 0.0
      %817 = vmatprep.subr.mxu0 0.0
      %818 = vmatpush1.msra.mxu0 0.0
      %819 = vmatprep.subr.mxu0 0.0
      %820 = vmatpush1.msra.mxu0 0.0
      %821 = vmatprep.subr.mxu0 0.0
      %822 = vmatpush1.msra.mxu0 0.0
      %823 = vmatprep.subr.mxu0 0.0
      %824 = vmatpush1.msra.mxu0 0.0
      %825 = vmatprep.subr.mxu0 0.0
      %826 = vmatpush1.msra.mxu0 0.0
      %827 = vmatprep.subr.mxu0 0.0
      %828 = vmatpush1.msra.mxu0 0.0
      %829 = vmatprep.subr.mxu0 0.0
      %830 = vmatpush1.msra.mxu0 0.0
      %831 = vmatprep.subr.mxu0 0.0
      %832 = vmatpush1.msra.mxu0 0.0
      %833 = vmatprep.subr.mxu0 0.0
      %834 = vmatpush1.msra.mxu0 0.0
      %835 = vmatprep.subr.mxu0 0.0
      %836 = vmatpush1.msra.mxu0 0.0
      %837 = vmatprep.subr.mxu0 0.0
      %838 = vmatpush1.msra.mxu0 0.0
      %839 = vmatprep.subr.mxu0 %v659
      %840 = vmatpush1.msra.mxu0 %v657
      %841 = vmatprep.subr.mxu0 0.0
      %842 = vmatpush2.msra.mxu0 0.0
      %843 = vmatprep.subr.mxu0 0.0
      %844 = vmatpush2.msra.mxu0 0.0
      %845 = vmatprep.subr.mxu0 0.0
      %846 = vmatpush2.msra.mxu0 0.0
      %847 = vmatprep.subr.mxu0 0.0
      %848 = vmatpush2.msra.mxu0 0.0
      %849 = vmatprep.subr.mxu0 0.0
      %850 = vmatpush2.msra.mxu0 0.0
      %851 = vmatprep.subr.mxu0 0.0
      %852 = vmatpush2.msra.mxu0 0.0
      %853 = vmatprep.subr.mxu0 0.0
      %854 = vmatpush2.msra.mxu0 0.0
      %855 = vmatprep.subr.mxu0 0.0
      %856 = vmatpush2.msra.mxu0 0.0
      %857 = vmatprep.subr.mxu0 0.0
      %858 = vmatpush2.msra.mxu0 0.0
      %859 = vmatprep.subr.mxu0 0.0
      %860 = vmatpush2.msra.mxu0 0.0
      %861 = vmatprep.subr.mxu0 0.0
      %862 = vmatpush2.msra.mxu0 0.0
      %863 = vmatprep.subr.mxu0 0.0
      %864 = vmatpush2.msra.mxu0 0.0
      %865 = vmatprep.subr.mxu0 0.0
      %866 = vmatpush2.msra.mxu0 0.0
      %867 = vmatprep.subr.mxu0 0.0
      %868 = vmatpush2.msra.mxu0 0.0
      %869 = vmatprep.subr.mxu0 0.0
      %870 = vmatpush2.msra.mxu0 0.0
      %871 = vmatprep.subr.mxu0 0.0
      %872 = vmatpush2.msra.mxu0 0.0
      %873 = vmatprep.mubr.f32.mxu0 0.0
      %874 = vmatmul.mubr.f32.gmra.mxu0 %v647
      %v875 = vpop.f32.mrf.mxu0
      %v876 = vadd.f32 %v501, %v875
      %v877 = vpop.f32.mrf.mxu0
      %v878 = vadd.f32 %v503, %v877
      %879 = vdwg.mxu0
      %880 = vmatprep.subr.mxu0 0.0
      %881 = vmatpush1.msra.mxu0 0.0
      %882 = vmatprep.subr.mxu0 0.0
      %883 = vmatpush1.msra.mxu0 0.0
      %884 = vmatprep.subr.mxu0 0.0
      %885 = vmatpush1.msra.mxu0 0.0
      %886 = vmatprep.subr.mxu0 0.0
      %887 = vmatpush1.msra.mxu0 0.0
      %888 = vmatprep.subr.mxu0 0.0
      %889 = vmatpush1.msra.mxu0 0.0
      %890 = vmatprep.subr.mxu0 0.0
      %891 = vmatpush1.msra.mxu0 0.0
      %892 = vmatprep.subr.mxu0 0.0
      %893 = vmatpush1.msra.mxu0 0.0
      %894 = vmatprep.subr.mxu0 0.0
      %895 = vmatpush1.msra.mxu0 0.0
      %896 = vmatprep.subr.mxu0 0.0
      %897 = vmatpush1.msra.mxu0 0.0
      %898 = vmatprep.subr.mxu0 0.0
      %899 = vmatpush1.msra.mxu0 0.0
      %900 = vmatprep.subr.mxu0 0.0
      %901 = vmatpush1.msra.mxu0 0.0
      %902 = vmatprep.subr.mxu0 0.0
      %903 = vmatpush1.msra.mxu0 0.0
      %904 = vmatprep.subr.mxu0 0.0
      %905 = vmatpush1.msra.mxu0 0.0
      %906 = vmatprep.subr.mxu0 0.0
      %907 = vmatpush1.msra.mxu0 0.0
      %908 = vmatprep.subr.mxu0 0.0
      %909 = vmatpush1.msra.mxu0 0.0
      %910 = vmatprep.subr.mxu0 %v663
      %911 = vmatpush1.msra.mxu0 %v661
      %912 = vmatprep.subr.mxu0 0.0
      %913 = vmatpush2.msra.mxu0 0.0
      %914 = vmatprep.subr.mxu0 0.0
      %915 = vmatpush2.msra.mxu0 0.0
      %916 = vmatprep.subr.mxu0 0.0
      %917 = vmatpush2.msra.mxu0 0.0
      %918 = vmatprep.subr.mxu0 0.0
      %919 = vmatpush2.msra.mxu0 0.0
      %920 = vmatprep.subr.mxu0 0.0
      %921 = vmatpush2.msra.mxu0 0.0
      %922 = vmatprep.subr.mxu0 0.0
      %923 = vmatpush2.msra.mxu0 0.0
      %924 = vmatprep.subr.mxu0 0.0
      %925 = vmatpush2.msra.mxu0 0.0
      %926 = vmatprep.subr.mxu0 0.0
      %927 = vmatpush2.msra.mxu0 0.0
      %928 = vmatprep.subr.mxu0 0.0
      %929 = vmatpush2.msra.mxu0 0.0
      %930 = vmatprep.subr.mxu0 0.0
      %931 = vmatpush2.msra.mxu0 0.0
      %932 = vmatprep.subr.mxu0 0.0
      %933 = vmatpush2.msra.mxu0 0.0
      %934 = vmatprep.subr.mxu0 0.0
      %935 = vmatpush2.msra.mxu0 0.0
      %936 = vmatprep.subr.mxu0 0.0
      %937 = vmatpush2.msra.mxu0 0.0
      %938 = vmatprep.subr.mxu0 0.0
      %939 = vmatpush2.msra.mxu0 0.0
      %940 = vmatprep.subr.mxu0 0.0
      %941 = vmatpush2.msra.mxu0 0.0
      %942 = vmatprep.subr.mxu0 0.0
      %943 = vmatpush2.msra.mxu0 0.0
      %944 = vmatprep.mubr.f32.mxu0 0.0
      %945 = vmatmul.mubr.f32.gmra.mxu0 %v647
      %v946 = vpop.f32.mrf.mxu0
      %v947 = vadd.f32 %v572, %v946
      %v948 = vpop.f32.mrf.mxu0
      %v949 = vadd.f32 %v574, %v948
      %950 = vdwg.mxu0
      %951 = vmatprep.subr.mxu0 0.0
      %952 = vmatpush1.msra.mxu0 0.0
      %953 = vmatprep.subr.mxu0 0.0
      %954 = vmatpush1.msra.mxu0 0.0
      %955 = vmatprep.subr.mxu0 0.0
      %956 = vmatpush1.msra.mxu0 0.0
      %957 = vmatprep.subr.mxu0 0.0
      %958 = vmatpush1.msra.mxu0 0.0
      %959 = vmatprep.subr.mxu0 0.0
      %960 = vmatpush1.msra.mxu0 0.0
      %961 = vmatprep.subr.mxu0 0.0
      %962 = vmatpush1.msra.mxu0 0.0
      %963 = vmatprep.subr.mxu0 0.0
      %964 = vmatpush1.msra.mxu0 0.0
      %965 = vmatprep.subr.mxu0 0.0
      %966 = vmatpush1.msra.mxu0 0.0
      %967 = vmatprep.subr.mxu0 0.0
      %968 = vmatpush1.msra.mxu0 0.0
      %969 = vmatprep.subr.mxu0 0.0
      %970 = vmatpush1.msra.mxu0 0.0
      %971 = vmatprep.subr.mxu0 0.0
      %972 = vmatpush1.msra.mxu0 0.0
      %973 = vmatprep.subr.mxu0 0.0
      %974 = vmatpush1.msra.mxu0 0.0
      %975 = vmatprep.subr.mxu0 0.0
      %976 = vmatpush1.msra.mxu0 0.0
      %977 = vmatprep.subr.mxu0 0.0
      %978 = vmatpush1.msra.mxu0 0.0
      %979 = vmatprep.subr.mxu0 0.0
      %980 = vmatpush1.msra.mxu0 0.0
      %981 = vmatprep.subr.mxu0 0.0
      %982 = vmatpush1.msra.mxu0 %v665
      %983 = vmatprep.subr.mxu0 0.0
      %984 = vmatpush2.msra.mxu0 0.0
      %985 = vmatprep.subr.mxu0 0.0
      %986 = vmatpush2.msra.mxu0 0.0
      %987 = vmatprep.subr.mxu0 0.0
      %988 = vmatpush2.msra.mxu0 0.0
      %989 = vmatprep.subr.mxu0 0.0
      %990 = vmatpush2.msra.mxu0 0.0
      %991 = vmatprep.subr.mxu0 0.0
      %992 = vmatpush2.msra.mxu0 0.0
      %993 = vmatprep.subr.mxu0 0.0
      %994 = vmatpush2.msra.mxu0 0.0
      %995 = vmatprep.subr.mxu0 0.0
      %996 = vmatpush2.msra.mxu0 0.0
      %997 = vmatprep.subr.mxu0 0.0
      %998 = vmatpush2.msra.mxu0 0.0
      %999 = vmatprep.subr.mxu0 0.0
      %1000 = vmatpush2.msra.mxu0 0.0
      %1001 = vmatprep.subr.mxu0 0.0
      %1002 = vmatpush2.msra.mxu0 0.0
      %1003 = vmatprep.subr.mxu0 0.0
      %1004 = vmatpush2.msra.mxu0 0.0
      %1005 = vmatprep.subr.mxu0 0.0
      %1006 = vmatpush2.msra.mxu0 0.0
      %1007 = vmatprep.subr.mxu0 0.0
      %1008 = vmatpush2.msra.mxu0 0.0
      %1009 = vmatprep.subr.mxu0 0.0
      %1010 = vmatpush2.msra.mxu0 0.0
      %1011 = vmatprep.subr.mxu0 0.0
      %1012 = vmatpush2.msra.mxu0 0.0
      %1013 = vmatprep.subr.mxu0 0.0
      %1014 = vmatpush2.msra.mxu0 0.0
      %1015 = vmatprep.mubr.f32.mxu0 0.0
      %1016 = vmatmul.mubr.f32.gmra.mxu0 %v647
      %v1017 = vpop.f32.mrf.mxu0
      %v1018 = vadd.f32 %v643, %v1017
      %v1019 = vpop.f32.mrf.mxu0
      %1020 = vdwg.mxu0
      %s1021 = scalar_lea.vmem %s1, 16
      %v1022 = vld [vmem:[%s1021] sm:$0xff]
      %1023 = vrot.lane.b32.xlu0 %v225, 126
      %v1024 = vpop.permute.xlu0 %1023
      %1025 = vrot.lane.b32.xlu0 %v238, 126
      %v1026 = vpop.permute.xlu0 %1025
      %1027 = vrot.lane.b32.xlu0 %v226, 126
      %v1028 = vpop.permute.xlu0 %1027
      %1029 = vrot.lane.b32.xlu0 %v239, 126
      %v1030 = vpop.permute.xlu0 %1029
      %1031 = vrot.lane.b32.xlu0 %v227, 126
      %v1032 = vpop.permute.xlu0 %1031
      %1033 = vrot.lane.b32.xlu0 %v240, 126
      %v1034 = vpop.permute.xlu0 %1033
      %1035 = vrot.lane.b32.xlu0 %v228, 126
      %v1036 = vpop.permute.xlu0 %1035
      %1037 = vrot.lane.b32.xlu0 %v241, 126
      %v1038 = vpop.permute.xlu0 %1037
      %1039 = vrot.lane.b32.xlu0 %v229, 126
      %v1040 = vpop.permute.xlu0 %1039
      %vm1041 = vcmask 1031168
      %v1042 = vsel %vm1041, %v1024, %v1026
      %v1043 = vsel %vm1041, %v1026, %v1028
      %v1044 = vsel %vm1041, %v1028, %v1030
      %v1045 = vsel %vm1041, %v1030, %v1032
      %v1046 = vsel %vm1041, %v1032, %v1034
      %v1047 = vsel %vm1041, %v1034, %v1036
      %v1048 = vsel %vm1041, %v1036, %v1038
      %v1049 = vsel %vm1041, %v1038, %v1040
      %v1051 = vsel %vm269, %v1022, 0
      %v1053 = vsel %vm273, %v1042, 0
      %v1055 = vsel %vm273, %v1043, 0
      %v1057 = vsel %vm273, %v1044, 0
      %v1059 = vsel %vm273, %v1045, 0
      %v1061 = vsel %vm273, %v1046, 0
      %v1063 = vsel %vm273, %v1047, 0
      %v1065 = vsel %vm273, %v1048, 0
      %v1067 = vsel %vm273, %v1049, 0
      %v1069 = vsel %vm273, %v1040, 0
      %1071 = vmatprep.subr.mxu0 0.0
      %1072 = vmatpush1.msra.mxu0 0.0
      %1073 = vmatprep.subr.mxu0 0.0
      %1074 = vmatpush1.msra.mxu0 0.0
      %1075 = vmatprep.subr.mxu0 0.0
      %1076 = vmatpush1.msra.mxu0 0.0
      %1077 = vmatprep.subr.mxu0 0.0
      %1078 = vmatpush1.msra.mxu0 0.0
      %1079 = vmatprep.subr.mxu0 0.0
      %1080 = vmatpush1.msra.mxu0 0.0
      %1081 = vmatprep.subr.mxu0 0.0
      %1082 = vmatpush1.msra.mxu0 0.0
      %1083 = vmatprep.subr.mxu0 0.0
      %1084 = vmatpush1.msra.mxu0 0.0
      %1085 = vmatprep.subr.mxu0 0.0
      %1086 = vmatpush1.msra.mxu0 0.0
      %1087 = vmatprep.subr.mxu0 0.0
      %1088 = vmatpush1.msra.mxu0 0.0
      %1089 = vmatprep.subr.mxu0 0.0
      %1090 = vmatpush1.msra.mxu0 0.0
      %1091 = vmatprep.subr.mxu0 0.0
      %1092 = vmatpush1.msra.mxu0 0.0
      %1093 = vmatprep.subr.mxu0 0.0
      %1094 = vmatpush1.msra.mxu0 0.0
      %1095 = vmatprep.subr.mxu0 0.0
      %1096 = vmatpush1.msra.mxu0 0.0
      %1097 = vmatprep.subr.mxu0 0.0
      %1098 = vmatpush1.msra.mxu0 0.0
      %1099 = vmatprep.subr.mxu0 0.0
      %1100 = vmatpush1.msra.mxu0 0.0
      %1101 = vmatprep.subr.mxu0 %v1055
      %1102 = vmatpush1.msra.mxu0 %v1053
      %1103 = vmatprep.subr.mxu0 0.0
      %1104 = vmatpush2.msra.mxu0 0.0
      %1105 = vmatprep.subr.mxu0 0.0
      %1106 = vmatpush2.msra.mxu0 0.0
      %1107 = vmatprep.subr.mxu0 0.0
      %1108 = vmatpush2.msra.mxu0 0.0
      %1109 = vmatprep.subr.mxu0 0.0
      %1110 = vmatpush2.msra.mxu0 0.0
      %1111 = vmatprep.subr.mxu0 0.0
      %1112 = vmatpush2.msra.mxu0 0.0
      %1113 = vmatprep.subr.mxu0 0.0
      %1114 = vmatpush2.msra.mxu0 0.0
      %1115 = vmatprep.subr.mxu0 0.0
      %1116 = vmatpush2.msra.mxu0 0.0
      %1117 = vmatprep.subr.mxu0 0.0
      %1118 = vmatpush2.msra.mxu0 0.0
      %1119 = vmatprep.subr.mxu0 0.0
      %1120 = vmatpush2.msra.mxu0 0.0
      %1121 = vmatprep.subr.mxu0 0.0
      %1122 = vmatpush2.msra.mxu0 0.0
      %1123 = vmatprep.subr.mxu0 0.0
      %1124 = vmatpush2.msra.mxu0 0.0
      %1125 = vmatprep.subr.mxu0 0.0
      %1126 = vmatpush2.msra.mxu0 0.0
      %1127 = vmatprep.subr.mxu0 0.0
      %1128 = vmatpush2.msra.mxu0 0.0
      %1129 = vmatprep.subr.mxu0 0.0
      %1130 = vmatpush2.msra.mxu0 0.0
      %1131 = vmatprep.subr.mxu0 0.0
      %1132 = vmatpush2.msra.mxu0 0.0
      %1133 = vmatprep.subr.mxu0 0.0
      %1134 = vmatpush2.msra.mxu0 0.0
      %1135 = vmatprep.mubr.f32.mxu0 0.0
      %1136 = vmatmul.mubr.f32.gmra.mxu0 %v1051
      %v1137 = vpop.f32.mrf.mxu0
      %v1138 = vadd.f32 0.0, %v1137
      %v1139 = vpop.f32.mrf.mxu0
      %v1140 = vadd.f32 0.0, %v1139
      %1141 = vdwg.mxu0
      %1142 = vmatprep.subr.mxu0 0.0
      %1143 = vmatpush1.msra.mxu0 0.0
      %1144 = vmatprep.subr.mxu0 0.0
      %1145 = vmatpush1.msra.mxu0 0.0
      %1146 = vmatprep.subr.mxu0 0.0
      %1147 = vmatpush1.msra.mxu0 0.0
      %1148 = vmatprep.subr.mxu0 0.0
      %1149 = vmatpush1.msra.mxu0 0.0
      %1150 = vmatprep.subr.mxu0 0.0
      %1151 = vmatpush1.msra.mxu0 0.0
      %1152 = vmatprep.subr.mxu0 0.0
      %1153 = vmatpush1.msra.mxu0 0.0
      %1154 = vmatprep.subr.mxu0 0.0
      %1155 = vmatpush1.msra.mxu0 0.0
      %1156 = vmatprep.subr.mxu0 0.0
      %1157 = vmatpush1.msra.mxu0 0.0
      %1158 = vmatprep.subr.mxu0 0.0
      %1159 = vmatpush1.msra.mxu0 0.0
      %1160 = vmatprep.subr.mxu0 0.0
      %1161 = vmatpush1.msra.mxu0 0.0
      %1162 = vmatprep.subr.mxu0 0.0
      %1163 = vmatpush1.msra.mxu0 0.0
      %1164 = vmatprep.subr.mxu0 0.0
      %1165 = vmatpush1.msra.mxu0 0.0
      %1166 = vmatprep.subr.mxu0 0.0
      %1167 = vmatpush1.msra.mxu0 0.0
      %1168 = vmatprep.subr.mxu0 0.0
      %1169 = vmatpush1.msra.mxu0 0.0
      %1170 = vmatprep.subr.mxu0 0.0
      %1171 = vmatpush1.msra.mxu0 0.0
      %1172 = vmatprep.subr.mxu0 %v1059
      %1173 = vmatpush1.msra.mxu0 %v1057
      %1174 = vmatprep.subr.mxu0 0.0
      %1175 = vmatpush2.msra.mxu0 0.0
      %1176 = vmatprep.subr.mxu0 0.0
      %1177 = vmatpush2.msra.mxu0 0.0
      %1178 = vmatprep.subr.mxu0 0.0
      %1179 = vmatpush2.msra.mxu0 0.0
      %1180 = vmatprep.subr.mxu0 0.0
      %1181 = vmatpush2.msra.mxu0 0.0
      %1182 = vmatprep.subr.mxu0 0.0
      %1183 = vmatpush2.msra.mxu0 0.0
      %1184 = vmatprep.subr.mxu0 0.0
      %1185 = vmatpush2.msra.mxu0 0.0
      %1186 = vmatprep.subr.mxu0 0.0
      %1187 = vmatpush2.msra.mxu0 0.0
      %1188 = vmatprep.subr.mxu0 0.0
      %1189 = vmatpush2.msra.mxu0 0.0
      %1190 = vmatprep.subr.mxu0 0.0
      %1191 = vmatpush2.msra.mxu0 0.0
      %1192 = vmatprep.subr.mxu0 0.0
      %1193 = vmatpush2.msra.mxu0 0.0
      %1194 = vmatprep.subr.mxu0 0.0
      %1195 = vmatpush2.msra.mxu0 0.0
      %1196 = vmatprep.subr.mxu0 0.0
      %1197 = vmatpush2.msra.mxu0 0.0
      %1198 = vmatprep.subr.mxu0 0.0
      %1199 = vmatpush2.msra.mxu0 0.0
      %1200 = vmatprep.subr.mxu0 0.0
      %1201 = vmatpush2.msra.mxu0 0.0
      %1202 = vmatprep.subr.mxu0 0.0
      %1203 = vmatpush2.msra.mxu0 0.0
      %1204 = vmatprep.subr.mxu0 0.0
      %1205 = vmatpush2.msra.mxu0 0.0
      %1206 = vmatprep.mubr.f32.mxu0 0.0
      %1207 = vmatmul.mubr.f32.gmra.mxu0 %v1051
      %v1208 = vpop.f32.mrf.mxu0
      %v1209 = vadd.f32 0.0, %v1208
      %v1210 = vpop.f32.mrf.mxu0
      %v1211 = vadd.f32 0.0, %v1210
      %1212 = vdwg.mxu0
      %1213 = vmatprep.subr.mxu0 0.0
      %1214 = vmatpush1.msra.mxu0 0.0
      %1215 = vmatprep.subr.mxu0 0.0
      %1216 = vmatpush1.msra.mxu0 0.0
      %1217 = vmatprep.subr.mxu0 0.0
      %1218 = vmatpush1.msra.mxu0 0.0
      %1219 = vmatprep.subr.mxu0 0.0
      %1220 = vmatpush1.msra.mxu0 0.0
      %1221 = vmatprep.subr.mxu0 0.0
      %1222 = vmatpush1.msra.mxu0 0.0
      %1223 = vmatprep.subr.mxu0 0.0
      %1224 = vmatpush1.msra.mxu0 0.0
      %1225 = vmatprep.subr.mxu0 0.0
      %1226 = vmatpush1.msra.mxu0 0.0
      %1227 = vmatprep.subr.mxu0 0.0
      %1228 = vmatpush1.msra.mxu0 0.0
      %1229 = vmatprep.subr.mxu0 0.0
      %1230 = vmatpush1.msra.mxu0 0.0
      %1231 = vmatprep.subr.mxu0 0.0
      %1232 = vmatpush1.msra.mxu0 0.0
      %1233 = vmatprep.subr.mxu0 0.0
      %1234 = vmatpush1.msra.mxu0 0.0
      %1235 = vmatprep.subr.mxu0 0.0
      %1236 = vmatpush1.msra.mxu0 0.0
      %1237 = vmatprep.subr.mxu0 0.0
      %1238 = vmatpush1.msra.mxu0 0.0
      %1239 = vmatprep.subr.mxu0 0.0
      %1240 = vmatpush1.msra.mxu0 0.0
      %1241 = vmatprep.subr.mxu0 0.0
      %1242 = vmatpush1.msra.mxu0 0.0
      %1243 = vmatprep.subr.mxu0 %v1063
      %1244 = vmatpush1.msra.mxu0 %v1061
      %1245 = vmatprep.subr.mxu0 0.0
      %1246 = vmatpush2.msra.mxu0 0.0
      %1247 = vmatprep.subr.mxu0 0.0
      %1248 = vmatpush2.msra.mxu0 0.0
      %1249 = vmatprep.subr.mxu0 0.0
      %1250 = vmatpush2.msra.mxu0 0.0
      %1251 = vmatprep.subr.mxu0 0.0
      %1252 = vmatpush2.msra.mxu0 0.0
      %1253 = vmatprep.subr.mxu0 0.0
      %1254 = vmatpush2.msra.mxu0 0.0
      %1255 = vmatprep.subr.mxu0 0.0
      %1256 = vmatpush2.msra.mxu0 0.0
      %1257 = vmatprep.subr.mxu0 0.0
      %1258 = vmatpush2.msra.mxu0 0.0
      %1259 = vmatprep.subr.mxu0 0.0
      %1260 = vmatpush2.msra.mxu0 0.0
      %1261 = vmatprep.subr.mxu0 0.0
      %1262 = vmatpush2.msra.mxu0 0.0
      %1263 = vmatprep.subr.mxu0 0.0
      %1264 = vmatpush2.msra.mxu0 0.0
      %1265 = vmatprep.subr.mxu0 0.0
      %1266 = vmatpush2.msra.mxu0 0.0
      %1267 = vmatprep.subr.mxu0 0.0
      %1268 = vmatpush2.msra.mxu0 0.0
      %1269 = vmatprep.subr.mxu0 0.0
      %1270 = vmatpush2.msra.mxu0 0.0
      %1271 = vmatprep.subr.mxu0 0.0
      %1272 = vmatpush2.msra.mxu0 0.0
      %1273 = vmatprep.subr.mxu0 0.0
      %1274 = vmatpush2.msra.mxu0 0.0
      %1275 = vmatprep.subr.mxu0 0.0
      %1276 = vmatpush2.msra.mxu0 0.0
      %1277 = vmatprep.mubr.f32.mxu0 0.0
      %1278 = vmatmul.mubr.f32.gmra.mxu0 %v1051
      %v1279 = vpop.f32.mrf.mxu0
      %v1280 = vadd.f32 0.0, %v1279
      %v1281 = vpop.f32.mrf.mxu0
      %v1282 = vadd.f32 0.0, %v1281
      %1283 = vdwg.mxu0
      %1284 = vmatprep.subr.mxu0 0.0
      %1285 = vmatpush1.msra.mxu0 0.0
      %1286 = vmatprep.subr.mxu0 0.0
      %1287 = vmatpush1.msra.mxu0 0.0
      %1288 = vmatprep.subr.mxu0 0.0
      %1289 = vmatpush1.msra.mxu0 0.0
      %1290 = vmatprep.subr.mxu0 0.0
      %1291 = vmatpush1.msra.mxu0 0.0
      %1292 = vmatprep.subr.mxu0 0.0
      %1293 = vmatpush1.msra.mxu0 0.0
      %1294 = vmatprep.subr.mxu0 0.0
      %1295 = vmatpush1.msra.mxu0 0.0
      %1296 = vmatprep.subr.mxu0 0.0
      %1297 = vmatpush1.msra.mxu0 0.0
      %1298 = vmatprep.subr.mxu0 0.0
      %1299 = vmatpush1.msra.mxu0 0.0
      %1300 = vmatprep.subr.mxu0 0.0
      %1301 = vmatpush1.msra.mxu0 0.0
      %1302 = vmatprep.subr.mxu0 0.0
      %1303 = vmatpush1.msra.mxu0 0.0
      %1304 = vmatprep.subr.mxu0 0.0
      %1305 = vmatpush1.msra.mxu0 0.0
      %1306 = vmatprep.subr.mxu0 0.0
      %1307 = vmatpush1.msra.mxu0 0.0
      %1308 = vmatprep.subr.mxu0 0.0
      %1309 = vmatpush1.msra.mxu0 0.0
      %1310 = vmatprep.subr.mxu0 0.0
      %1311 = vmatpush1.msra.mxu0 0.0
      %1312 = vmatprep.subr.mxu0 0.0
      %1313 = vmatpush1.msra.mxu0 0.0
      %1314 = vmatprep.subr.mxu0 %v1067
      %1315 = vmatpush1.msra.mxu0 %v1065
      %1316 = vmatprep.subr.mxu0 0.0
      %1317 = vmatpush2.msra.mxu0 0.0
      %1318 = vmatprep.subr.mxu0 0.0
      %1319 = vmatpush2.msra.mxu0 0.0
      %1320 = vmatprep.subr.mxu0 0.0
      %1321 = vmatpush2.msra.mxu0 0.0
      %1322 = vmatprep.subr.mxu0 0.0
      %1323 = vmatpush2.msra.mxu0 0.0
      %1324 = vmatprep.subr.mxu0 0.0
      %1325 = vmatpush2.msra.mxu0 0.0
      %1326 = vmatprep.subr.mxu0 0.0
      %1327 = vmatpush2.msra.mxu0 0.0
      %1328 = vmatprep.subr.mxu0 0.0
      %1329 = vmatpush2.msra.mxu0 0.0
      %1330 = vmatprep.subr.mxu0 0.0
      %1331 = vmatpush2.msra.mxu0 0.0
      %1332 = vmatprep.subr.mxu0 0.0
      %1333 = vmatpush2.msra.mxu0 0.0
      %1334 = vmatprep.subr.mxu0 0.0
      %1335 = vmatpush2.msra.mxu0 0.0
      %1336 = vmatprep.subr.mxu0 0.0
      %1337 = vmatpush2.msra.mxu0 0.0
      %1338 = vmatprep.subr.mxu0 0.0
      %1339 = vmatpush2.msra.mxu0 0.0
      %1340 = vmatprep.subr.mxu0 0.0
      %1341 = vmatpush2.msra.mxu0 0.0
      %1342 = vmatprep.subr.mxu0 0.0
      %1343 = vmatpush2.msra.mxu0 0.0
      %1344 = vmatprep.subr.mxu0 0.0
      %1345 = vmatpush2.msra.mxu0 0.0
      %1346 = vmatprep.subr.mxu0 0.0
      %1347 = vmatpush2.msra.mxu0 0.0
      %1348 = vmatprep.mubr.f32.mxu0 0.0
      %1349 = vmatmul.mubr.f32.gmra.mxu0 %v1051
      %v1350 = vpop.f32.mrf.mxu0
      %v1351 = vadd.f32 0.0, %v1350
      %v1352 = vpop.f32.mrf.mxu0
      %v1353 = vadd.f32 0.0, %v1352
      %1354 = vdwg.mxu0
      %1355 = vmatprep.subr.mxu0 0.0
      %1356 = vmatpush1.msra.mxu0 0.0
      %1357 = vmatprep.subr.mxu0 0.0
      %1358 = vmatpush1.msra.mxu0 0.0
      %1359 = vmatprep.subr.mxu0 0.0
      %1360 = vmatpush1.msra.mxu0 0.0
      %1361 = vmatprep.subr.mxu0 0.0
      %1362 = vmatpush1.msra.mxu0 0.0
      %1363 = vmatprep.subr.mxu0 0.0
      %1364 = vmatpush1.msra.mxu0 0.0
      %1365 = vmatprep.subr.mxu0 0.0
      %1366 = vmatpush1.msra.mxu0 0.0
      %1367 = vmatprep.subr.mxu0 0.0
      %1368 = vmatpush1.msra.mxu0 0.0
      %1369 = vmatprep.subr.mxu0 0.0
      %1370 = vmatpush1.msra.mxu0 0.0
      %1371 = vmatprep.subr.mxu0 0.0
      %1372 = vmatpush1.msra.mxu0 0.0
      %1373 = vmatprep.subr.mxu0 0.0
      %1374 = vmatpush1.msra.mxu0 0.0
      %1375 = vmatprep.subr.mxu0 0.0
      %1376 = vmatpush1.msra.mxu0 0.0
      %1377 = vmatprep.subr.mxu0 0.0
      %1378 = vmatpush1.msra.mxu0 0.0
      %1379 = vmatprep.subr.mxu0 0.0
      %1380 = vmatpush1.msra.mxu0 0.0
      %1381 = vmatprep.subr.mxu0 0.0
      %1382 = vmatpush1.msra.mxu0 0.0
      %1383 = vmatprep.subr.mxu0 0.0
      %1384 = vmatpush1.msra.mxu0 0.0
      %1385 = vmatprep.subr.mxu0 0.0
      %1386 = vmatpush1.msra.mxu0 %v1069
      %1387 = vmatprep.subr.mxu0 0.0
      %1388 = vmatpush2.msra.mxu0 0.0
      %1389 = vmatprep.subr.mxu0 0.0
      %1390 = vmatpush2.msra.mxu0 0.0
      %1391 = vmatprep.subr.mxu0 0.0
      %1392 = vmatpush2.msra.mxu0 0.0
      %1393 = vmatprep.subr.mxu0 0.0
      %1394 = vmatpush2.msra.mxu0 0.0
      %1395 = vmatprep.subr.mxu0 0.0
      %1396 = vmatpush2.msra.mxu0 0.0
      %1397 = vmatprep.subr.mxu0 0.0
      %1398 = vmatpush2.msra.mxu0 0.0
      %1399 = vmatprep.subr.mxu0 0.0
      %1400 = vmatpush2.msra.mxu0 0.0
      %1401 = vmatprep.subr.mxu0 0.0
      %1402 = vmatpush2.msra.mxu0 0.0
      %1403 = vmatprep.subr.mxu0 0.0
      %1404 = vmatpush2.msra.mxu0 0.0
      %1405 = vmatprep.subr.mxu0 0.0
      %1406 = vmatpush2.msra.mxu0 0.0
      %1407 = vmatprep.subr.mxu0 0.0
      %1408 = vmatpush2.msra.mxu0 0.0
      %1409 = vmatprep.subr.mxu0 0.0
      %1410 = vmatpush2.msra.mxu0 0.0
      %1411 = vmatprep.subr.mxu0 0.0
      %1412 = vmatpush2.msra.mxu0 0.0
      %1413 = vmatprep.subr.mxu0 0.0
      %1414 = vmatpush2.msra.mxu0 0.0
      %1415 = vmatprep.subr.mxu0 0.0
      %1416 = vmatpush2.msra.mxu0 0.0
      %1417 = vmatprep.subr.mxu0 0.0
      %1418 = vmatpush2.msra.mxu0 0.0
      %1419 = vmatprep.mubr.f32.mxu0 0.0
      %1420 = vmatmul.mubr.f32.gmra.mxu0 %v1051
      %v1421 = vpop.f32.mrf.mxu0
      %v1422 = vadd.f32 0.0, %v1421
      %v1423 = vpop.f32.mrf.mxu0
      %1424 = vdwg.mxu0
      %v1425 = vadd.f32 %v734, %v1138
      %v1426 = vadd.f32 %v736, %v1140
      %v1427 = vadd.f32 %v805, %v1209
      %v1428 = vadd.f32 %v807, %v1211
      %v1429 = vadd.f32 %v876, %v1280
      %v1430 = vadd.f32 %v878, %v1282
      %v1431 = vadd.f32 %v947, %v1351
      %v1432 = vadd.f32 %v949, %v1353
      %v1433 = vadd.f32 %v1018, %v1422
      %s1434 = scalar_lea.vmem %s1, 24
      %v1435 = vld [vmem:[%s1434] sm:$0xff]
      %1436 = vrot.lane.b32.xlu0 %v225, 94
      %v1437 = vpop.permute.xlu0 %1436
      %1438 = vrot.lane.b32.xlu0 %v238, 94
      %v1439 = vpop.permute.xlu0 %1438
      %1440 = vrot.lane.b32.xlu0 %v226, 94
      %v1441 = vpop.permute.xlu0 %1440
      %1442 = vrot.lane.b32.xlu0 %v239, 94
      %v1443 = vpop.permute.xlu0 %1442
      %1444 = vrot.lane.b32.xlu0 %v227, 94
      %v1445 = vpop.permute.xlu0 %1444
      %1446 = vrot.lane.b32.xlu0 %v240, 94
      %v1447 = vpop.permute.xlu0 %1446
      %1448 = vrot.lane.b32.xlu0 %v228, 94
      %v1449 = vpop.permute.xlu0 %1448
      %1450 = vrot.lane.b32.xlu0 %v241, 94
      %v1451 = vpop.permute.xlu0 %1450
      %1452 = vrot.lane.b32.xlu0 %v229, 94
      %v1453 = vpop.permute.xlu0 %1452
      %vm1454 = vcmask 769024
      %v1455 = vsel %vm1454, %v1437, %v1439
      %v1456 = vsel %vm1454, %v1439, %v1441
      %v1457 = vsel %vm1454, %v1441, %v1443
      %v1458 = vsel %vm1454, %v1443, %v1445
      %v1459 = vsel %vm1454, %v1445, %v1447
      %v1460 = vsel %vm1454, %v1447, %v1449
      %v1461 = vsel %vm1454, %v1449, %v1451
      %v1462 = vsel %vm1454, %v1451, %v1453
      %v1464 = vsel %vm269, %v1435, 0
      %v1466 = vsel %vm273, %v1455, 0
      %v1468 = vsel %vm273, %v1456, 0
      %v1470 = vsel %vm273, %v1457, 0
      %v1472 = vsel %vm273, %v1458, 0
      %v1474 = vsel %vm273, %v1459, 0
      %v1476 = vsel %vm273, %v1460, 0
      %v1478 = vsel %vm273, %v1461, 0
      %v1480 = vsel %vm273, %v1462, 0
      %v1482 = vsel %vm273, %v1453, 0
      %1484 = vmatprep.subr.mxu0 0.0
      %1485 = vmatpush1.msra.mxu0 0.0
      %1486 = vmatprep.subr.mxu0 0.0
      %1487 = vmatpush1.msra.mxu0 0.0
      %1488 = vmatprep.subr.mxu0 0.0
      %1489 = vmatpush1.msra.mxu0 0.0
      %1490 = vmatprep.subr.mxu0 0.0
      %1491 = vmatpush1.msra.mxu0 0.0
      %1492 = vmatprep.subr.mxu0 0.0
      %1493 = vmatpush1.msra.mxu0 0.0
      %1494 = vmatprep.subr.mxu0 0.0
      %1495 = vmatpush1.msra.mxu0 0.0
      %1496 = vmatprep.subr.mxu0 0.0
      %1497 = vmatpush1.msra.mxu0 0.0
      %1498 = vmatprep.subr.mxu0 0.0
      %1499 = vmatpush1.msra.mxu0 0.0
      %1500 = vmatprep.subr.mxu0 0.0
      %1501 = vmatpush1.msra.mxu0 0.0
      %1502 = vmatprep.subr.mxu0 0.0
      %1503 = vmatpush1.msra.mxu0 0.0
      %1504 = vmatprep.subr.mxu0 0.0
      %1505 = vmatpush1.msra.mxu0 0.0
      %1506 = vmatprep.subr.mxu0 0.0
      %1507 = vmatpush1.msra.mxu0 0.0
      %1508 = vmatprep.subr.mxu0 0.0
      %1509 = vmatpush1.msra.mxu0 0.0
      %1510 = vmatprep.subr.mxu0 0.0
      %1511 = vmatpush1.msra.mxu0 0.0
      %1512 = vmatprep.subr.mxu0 0.0
      %1513 = vmatpush1.msra.mxu0 0.0
      %1514 = vmatprep.subr.mxu0 %v1468
      %1515 = vmatpush1.msra.mxu0 %v1466
      %1516 = vmatprep.subr.mxu0 0.0
      %1517 = vmatpush2.msra.mxu0 0.0
      %1518 = vmatprep.subr.mxu0 0.0
      %1519 = vmatpush2.msra.mxu0 0.0
      %1520 = vmatprep.subr.mxu0 0.0
      %1521 = vmatpush2.msra.mxu0 0.0
      %1522 = vmatprep.subr.mxu0 0.0
      %1523 = vmatpush2.msra.mxu0 0.0
      %1524 = vmatprep.subr.mxu0 0.0
      %1525 = vmatpush2.msra.mxu0 0.0
      %1526 = vmatprep.subr.mxu0 0.0
      %1527 = vmatpush2.msra.mxu0 0.0
      %1528 = vmatprep.subr.mxu0 0.0
      %1529 = vmatpush2.msra.mxu0 0.0
      %1530 = vmatprep.subr.mxu0 0.0
      %1531 = vmatpush2.msra.mxu0 0.0
      %1532 = vmatprep.subr.mxu0 0.0
      %1533 = vmatpush2.msra.mxu0 0.0
      %1534 = vmatprep.subr.mxu0 0.0
      %1535 = vmatpush2.msra.mxu0 0.0
      %1536 = vmatprep.subr.mxu0 0.0
      %1537 = vmatpush2.msra.mxu0 0.0
      %1538 = vmatprep.subr.mxu0 0.0
      %1539 = vmatpush2.msra.mxu0 0.0
      %1540 = vmatprep.subr.mxu0 0.0
      %1541 = vmatpush2.msra.mxu0 0.0
      %1542 = vmatprep.subr.mxu0 0.0
      %1543 = vmatpush2.msra.mxu0 0.0
      %1544 = vmatprep.subr.mxu0 0.0
      %1545 = vmatpush2.msra.mxu0 0.0
      %1546 = vmatprep.subr.mxu0 0.0
      %1547 = vmatpush2.msra.mxu0 0.0
      %1548 = vmatprep.mubr.f32.mxu0 0.0
      %1549 = vmatmul.mubr.f32.gmra.mxu0 %v1464
      %v1550 = vpop.f32.mrf.mxu0
      %v1551 = vadd.f32 0.0, %v1550
      %v1552 = vpop.f32.mrf.mxu0
      %v1553 = vadd.f32 0.0, %v1552
      %1554 = vdwg.mxu0
      %1555 = vmatprep.subr.mxu0 0.0
      %1556 = vmatpush1.msra.mxu0 0.0
      %1557 = vmatprep.subr.mxu0 0.0
      %1558 = vmatpush1.msra.mxu0 0.0
      %1559 = vmatprep.subr.mxu0 0.0
      %1560 = vmatpush1.msra.mxu0 0.0
      %1561 = vmatprep.subr.mxu0 0.0
      %1562 = vmatpush1.msra.mxu0 0.0
      %1563 = vmatprep.subr.mxu0 0.0
      %1564 = vmatpush1.msra.mxu0 0.0
      %1565 = vmatprep.subr.mxu0 0.0
      %1566 = vmatpush1.msra.mxu0 0.0
      %1567 = vmatprep.subr.mxu0 0.0
      %1568 = vmatpush1.msra.mxu0 0.0
      %1569 = vmatprep.subr.mxu0 0.0
      %1570 = vmatpush1.msra.mxu0 0.0
      %1571 = vmatprep.subr.mxu0 0.0
      %1572 = vmatpush1.msra.mxu0 0.0
      %1573 = vmatprep.subr.mxu0 0.0
      %1574 = vmatpush1.msra.mxu0 0.0
      %1575 = vmatprep.subr.mxu0 0.0
      %1576 = vmatpush1.msra.mxu0 0.0
      %1577 = vmatprep.subr.mxu0 0.0
      %1578 = vmatpush1.msra.mxu0 0.0
      %1579 = vmatprep.subr.mxu0 0.0
      %1580 = vmatpush1.msra.mxu0 0.0
      %1581 = vmatprep.subr.mxu0 0.0
      %1582 = vmatpush1.msra.mxu0 0.0
      %1583 = vmatprep.subr.mxu0 0.0
      %1584 = vmatpush1.msra.mxu0 0.0
      %1585 = vmatprep.subr.mxu0 %v1472
      %1586 = vmatpush1.msra.mxu0 %v1470
      %1587 = vmatprep.subr.mxu0 0.0
      %1588 = vmatpush2.msra.mxu0 0.0
      %1589 = vmatprep.subr.mxu0 0.0
      %1590 = vmatpush2.msra.mxu0 0.0
      %1591 = vmatprep.subr.mxu0 0.0
      %1592 = vmatpush2.msra.mxu0 0.0
      %1593 = vmatprep.subr.mxu0 0.0
      %1594 = vmatpush2.msra.mxu0 0.0
      %1595 = vmatprep.subr.mxu0 0.0
      %1596 = vmatpush2.msra.mxu0 0.0
      %1597 = vmatprep.subr.mxu0 0.0
      %1598 = vmatpush2.msra.mxu0 0.0
      %1599 = vmatprep.subr.mxu0 0.0
      %1600 = vmatpush2.msra.mxu0 0.0
      %1601 = vmatprep.subr.mxu0 0.0
      %1602 = vmatpush2.msra.mxu0 0.0
      %1603 = vmatprep.subr.mxu0 0.0
      %1604 = vmatpush2.msra.mxu0 0.0
      %1605 = vmatprep.subr.mxu0 0.0
      %1606 = vmatpush2.msra.mxu0 0.0
      %1607 = vmatprep.subr.mxu0 0.0
      %1608 = vmatpush2.msra.mxu0 0.0
      %1609 = vmatprep.subr.mxu0 0.0
      %1610 = vmatpush2.msra.mxu0 0.0
      %1611 = vmatprep.subr.mxu0 0.0
      %1612 = vmatpush2.msra.mxu0 0.0
      %1613 = vmatprep.subr.mxu0 0.0
      %1614 = vmatpush2.msra.mxu0 0.0
      %1615 = vmatprep.subr.mxu0 0.0
      %1616 = vmatpush2.msra.mxu0 0.0
      %1617 = vmatprep.subr.mxu0 0.0
      %1618 = vmatpush2.msra.mxu0 0.0
      %1619 = vmatprep.mubr.f32.mxu0 0.0
      %1620 = vmatmul.mubr.f32.gmra.mxu0 %v1464
      %v1621 = vpop.f32.mrf.mxu0
      %v1622 = vadd.f32 0.0, %v1621
      %v1623 = vpop.f32.mrf.mxu0
      %v1624 = vadd.f32 0.0, %v1623
      %1625 = vdwg.mxu0
      %1626 = vmatprep.subr.mxu0 0.0
      %1627 = vmatpush1.msra.mxu0 0.0
      %1628 = vmatprep.subr.mxu0 0.0
      %1629 = vmatpush1.msra.mxu0 0.0
      %1630 = vmatprep.subr.mxu0 0.0
      %1631 = vmatpush1.msra.mxu0 0.0
      %1632 = vmatprep.subr.mxu0 0.0
      %1633 = vmatpush1.msra.mxu0 0.0
      %1634 = vmatprep.subr.mxu0 0.0
      %1635 = vmatpush1.msra.mxu0 0.0
      %1636 = vmatprep.subr.mxu0 0.0
      %1637 = vmatpush1.msra.mxu0 0.0
      %1638 = vmatprep.subr.mxu0 0.0
      %1639 = vmatpush1.msra.mxu0 0.0
      %1640 = vmatprep.subr.mxu0 0.0
      %1641 = vmatpush1.msra.mxu0 0.0
      %1642 = vmatprep.subr.mxu0 0.0
      %1643 = vmatpush1.msra.mxu0 0.0
      %1644 = vmatprep.subr.mxu0 0.0
      %1645 = vmatpush1.msra.mxu0 0.0
      %1646 = vmatprep.subr.mxu0 0.0
      %1647 = vmatpush1.msra.mxu0 0.0
      %1648 = vmatprep.subr.mxu0 0.0
      %1649 = vmatpush1.msra.mxu0 0.0
      %1650 = vmatprep.subr.mxu0 0.0
      %1651 = vmatpush1.msra.mxu0 0.0
      %1652 = vmatprep.subr.mxu0 0.0
      %1653 = vmatpush1.msra.mxu0 0.0
      %1654 = vmatprep.subr.mxu0 0.0
      %1655 = vmatpush1.msra.mxu0 0.0
      %1656 = vmatprep.subr.mxu0 %v1476
      %1657 = vmatpush1.msra.mxu0 %v1474
      %1658 = vmatprep.subr.mxu0 0.0
      %1659 = vmatpush2.msra.mxu0 0.0
      %1660 = vmatprep.subr.mxu0 0.0
      %1661 = vmatpush2.msra.mxu0 0.0
      %1662 = vmatprep.subr.mxu0 0.0
      %1663 = vmatpush2.msra.mxu0 0.0
      %1664 = vmatprep.subr.mxu0 0.0
      %1665 = vmatpush2.msra.mxu0 0.0
      %1666 = vmatprep.subr.mxu0 0.0
      %1667 = vmatpush2.msra.mxu0 0.0
      %1668 = vmatprep.subr.mxu0 0.0
      %1669 = vmatpush2.msra.mxu0 0.0
      %1670 = vmatprep.subr.mxu0 0.0
      %1671 = vmatpush2.msra.mxu0 0.0
      %1672 = vmatprep.subr.mxu0 0.0
      %1673 = vmatpush2.msra.mxu0 0.0
      %1674 = vmatprep.subr.mxu0 0.0
      %1675 = vmatpush2.msra.mxu0 0.0
      %1676 = vmatprep.subr.mxu0 0.0
      %1677 = vmatpush2.msra.mxu0 0.0
      %1678 = vmatprep.subr.mxu0 0.0
      %1679 = vmatpush2.msra.mxu0 0.0
      %1680 = vmatprep.subr.mxu0 0.0
      %1681 = vmatpush2.msra.mxu0 0.0
      %1682 = vmatprep.subr.mxu0 0.0
      %1683 = vmatpush2.msra.mxu0 0.0
      %1684 = vmatprep.subr.mxu0 0.0
      %1685 = vmatpush2.msra.mxu0 0.0
      %1686 = vmatprep.subr.mxu0 0.0
      %1687 = vmatpush2.msra.mxu0 0.0
      %1688 = vmatprep.subr.mxu0 0.0
      %1689 = vmatpush2.msra.mxu0 0.0
      %1690 = vmatprep.mubr.f32.mxu0 0.0
      %1691 = vmatmul.mubr.f32.gmra.mxu0 %v1464
      %v1692 = vpop.f32.mrf.mxu0
      %v1693 = vadd.f32 0.0, %v1692
      %v1694 = vpop.f32.mrf.mxu0
      %v1695 = vadd.f32 0.0, %v1694
      %1696 = vdwg.mxu0
      %1697 = vmatprep.subr.mxu0 0.0
      %1698 = vmatpush1.msra.mxu0 0.0
      %1699 = vmatprep.subr.mxu0 0.0
      %1700 = vmatpush1.msra.mxu0 0.0
      %1701 = vmatprep.subr.mxu0 0.0
      %1702 = vmatpush1.msra.mxu0 0.0
      %1703 = vmatprep.subr.mxu0 0.0
      %1704 = vmatpush1.msra.mxu0 0.0
      %1705 = vmatprep.subr.mxu0 0.0
      %1706 = vmatpush1.msra.mxu0 0.0
      %1707 = vmatprep.subr.mxu0 0.0
      %1708 = vmatpush1.msra.mxu0 0.0
      %1709 = vmatprep.subr.mxu0 0.0
      %1710 = vmatpush1.msra.mxu0 0.0
      %1711 = vmatprep.subr.mxu0 0.0
      %1712 = vmatpush1.msra.mxu0 0.0
      %1713 = vmatprep.subr.mxu0 0.0
      %1714 = vmatpush1.msra.mxu0 0.0
      %1715 = vmatprep.subr.mxu0 0.0
      %1716 = vmatpush1.msra.mxu0 0.0
      %1717 = vmatprep.subr.mxu0 0.0
      %1718 = vmatpush1.msra.mxu0 0.0
      %1719 = vmatprep.subr.mxu0 0.0
      %1720 = vmatpush1.msra.mxu0 0.0
      %1721 = vmatprep.subr.mxu0 0.0
      %1722 = vmatpush1.msra.mxu0 0.0
      %1723 = vmatprep.subr.mxu0 0.0
      %1724 = vmatpush1.msra.mxu0 0.0
      %1725 = vmatprep.subr.mxu0 0.0
      %1726 = vmatpush1.msra.mxu0 0.0
      %1727 = vmatprep.subr.mxu0 %v1480
      %1728 = vmatpush1.msra.mxu0 %v1478
      %1729 = vmatprep.subr.mxu0 0.0
      %1730 = vmatpush2.msra.mxu0 0.0
      %1731 = vmatprep.subr.mxu0 0.0
      %1732 = vmatpush2.msra.mxu0 0.0
      %1733 = vmatprep.subr.mxu0 0.0
      %1734 = vmatpush2.msra.mxu0 0.0
      %1735 = vmatprep.subr.mxu0 0.0
      %1736 = vmatpush2.msra.mxu0 0.0
      %1737 = vmatprep.subr.mxu0 0.0
      %1738 = vmatpush2.msra.mxu0 0.0
      %1739 = vmatprep.subr.mxu0 0.0
      %1740 = vmatpush2.msra.mxu0 0.0
      %1741 = vmatprep.subr.mxu0 0.0
      %1742 = vmatpush2.msra.mxu0 0.0
      %1743 = vmatprep.subr.mxu0 0.0
      %1744 = vmatpush2.msra.mxu0 0.0
      %1745 = vmatprep.subr.mxu0 0.0
      %1746 = vmatpush2.msra.mxu0 0.0
      %1747 = vmatprep.subr.mxu0 0.0
      %1748 = vmatpush2.msra.mxu0 0.0
      %1749 = vmatprep.subr.mxu0 0.0
      %1750 = vmatpush2.msra.mxu0 0.0
      %1751 = vmatprep.subr.mxu0 0.0
      %1752 = vmatpush2.msra.mxu0 0.0
      %1753 = vmatprep.subr.mxu0 0.0
      %1754 = vmatpush2.msra.mxu0 0.0
      %1755 = vmatprep.subr.mxu0 0.0
      %1756 = vmatpush2.msra.mxu0 0.0
      %1757 = vmatprep.subr.mxu0 0.0
      %1758 = vmatpush2.msra.mxu0 0.0
      %1759 = vmatprep.subr.mxu0 0.0
      %1760 = vmatpush2.msra.mxu0 0.0
      %1761 = vmatprep.mubr.f32.mxu0 0.0
      %1762 = vmatmul.mubr.f32.gmra.mxu0 %v1464
      %v1763 = vpop.f32.mrf.mxu0
      %v1764 = vadd.f32 0.0, %v1763
      %v1765 = vpop.f32.mrf.mxu0
      %v1766 = vadd.f32 0.0, %v1765
      %1767 = vdwg.mxu0
      %1768 = vmatprep.subr.mxu0 0.0
      %1769 = vmatpush1.msra.mxu0 0.0
      %1770 = vmatprep.subr.mxu0 0.0
      %1771 = vmatpush1.msra.mxu0 0.0
      %1772 = vmatprep.subr.mxu0 0.0
      %1773 = vmatpush1.msra.mxu0 0.0
      %1774 = vmatprep.subr.mxu0 0.0
      %1775 = vmatpush1.msra.mxu0 0.0
      %1776 = vmatprep.subr.mxu0 0.0
      %1777 = vmatpush1.msra.mxu0 0.0
      %1778 = vmatprep.subr.mxu0 0.0
      %1779 = vmatpush1.msra.mxu0 0.0
      %1780 = vmatprep.subr.mxu0 0.0
      %1781 = vmatpush1.msra.mxu0 0.0
      %1782 = vmatprep.subr.mxu0 0.0
      %1783 = vmatpush1.msra.mxu0 0.0
      %1784 = vmatprep.subr.mxu0 0.0
      %1785 = vmatpush1.msra.mxu0 0.0
      %1786 = vmatprep.subr.mxu0 0.0
      %1787 = vmatpush1.msra.mxu0 0.0
      %1788 = vmatprep.subr.mxu0 0.0
      %1789 = vmatpush1.msra.mxu0 0.0
      %1790 = vmatprep.subr.mxu0 0.0
      %1791 = vmatpush1.msra.mxu0 0.0
      %1792 = vmatprep.subr.mxu0 0.0
      %1793 = vmatpush1.msra.mxu0 0.0
      %1794 = vmatprep.subr.mxu0 0.0
      %1795 = vmatpush1.msra.mxu0 0.0
      %1796 = vmatprep.subr.mxu0 0.0
      %1797 = vmatpush1.msra.mxu0 0.0
      %1798 = vmatprep.subr.mxu0 0.0
      %1799 = vmatpush1.msra.mxu0 %v1482
      %1800 = vmatprep.subr.mxu0 0.0
      %1801 = vmatpush2.msra.mxu0 0.0
      %1802 = vmatprep.subr.mxu0 0.0
      %1803 = vmatpush2.msra.mxu0 0.0
      %1804 = vmatprep.subr.mxu0 0.0
      %1805 = vmatpush2.msra.mxu0 0.0
      %1806 = vmatprep.subr.mxu0 0.0
      %1807 = vmatpush2.msra.mxu0 0.0
      %1808 = vmatprep.subr.mxu0 0.0
      %1809 = vmatpush2.msra.mxu0 0.0
      %1810 = vmatprep.subr.mxu0 0.0
      %1811 = vmatpush2.msra.mxu0 0.0
      %1812 = vmatprep.subr.mxu0 0.0
      %1813 = vmatpush2.msra.mxu0 0.0
      %1814 = vmatprep.subr.mxu0 0.0
      %1815 = vmatpush2.msra.mxu0 0.0
      %1816 = vmatprep.subr.mxu0 0.0
      %1817 = vmatpush2.msra.mxu0 0.0
      %1818 = vmatprep.subr.mxu0 0.0
      %1819 = vmatpush2.msra.mxu0 0.0
      %1820 = vmatprep.subr.mxu0 0.0
      %1821 = vmatpush2.msra.mxu0 0.0
      %1822 = vmatprep.subr.mxu0 0.0
      %1823 = vmatpush2.msra.mxu0 0.0
      %1824 = vmatprep.subr.mxu0 0.0
      %1825 = vmatpush2.msra.mxu0 0.0
      %1826 = vmatprep.subr.mxu0 0.0
      %1827 = vmatpush2.msra.mxu0 0.0
      %1828 = vmatprep.subr.mxu0 0.0
      %1829 = vmatpush2.msra.mxu0 0.0
      %1830 = vmatprep.subr.mxu0 0.0
      %1831 = vmatpush2.msra.mxu0 0.0
      %1832 = vmatprep.mubr.f32.mxu0 0.0
      %1833 = vmatmul.mubr.f32.gmra.mxu0 %v1464
      %v1834 = vpop.f32.mrf.mxu0
      %v1835 = vadd.f32 0.0, %v1834
      %v1836 = vpop.f32.mrf.mxu0
      %1837 = vdwg.mxu0
      %v1838 = vadd.f32 %v1425, %v1551
      %v1839 = vadd.f32 %v1426, %v1553
      %v1840 = vadd.f32 %v1427, %v1622
      %v1841 = vadd.f32 %v1428, %v1624
      %v1842 = vadd.f32 %v1429, %v1693
      %v1843 = vadd.f32 %v1430, %v1695
      %v1844 = vadd.f32 %v1431, %v1764
      %v1845 = vadd.f32 %v1432, %v1766
      %v1846 = vadd.f32 %v1433, %v1835
      %s1847 = scalar_lea.vmem %s1, 32
      %v1848 = vld [vmem:[%s1847] sm:$0xff]
      %1849 = vrot.lane.b32.xlu0 %v225, 93
      %v1850 = vpop.permute.xlu0 %1849
      %1851 = vrot.lane.b32.xlu0 %v238, 93
      %v1852 = vpop.permute.xlu0 %1851
      %1853 = vrot.lane.b32.xlu0 %v226, 93
      %v1854 = vpop.permute.xlu0 %1853
      %1855 = vrot.lane.b32.xlu0 %v239, 93
      %v1856 = vpop.permute.xlu0 %1855
      %1857 = vrot.lane.b32.xlu0 %v227, 93
      %v1858 = vpop.permute.xlu0 %1857
      %1859 = vrot.lane.b32.xlu0 %v240, 93
      %v1860 = vpop.permute.xlu0 %1859
      %1861 = vrot.lane.b32.xlu0 %v228, 93
      %v1862 = vpop.permute.xlu0 %1861
      %1863 = vrot.lane.b32.xlu0 %v241, 93
      %v1864 = vpop.permute.xlu0 %1863
      %1865 = vrot.lane.b32.xlu0 %v229, 93
      %v1866 = vpop.permute.xlu0 %1865
      %vm1867 = vcmask 760832
      %v1868 = vsel %vm1867, %v1850, %v1852
      %v1869 = vsel %vm1867, %v1852, %v1854
      %v1870 = vsel %vm1867, %v1854, %v1856
      %v1871 = vsel %vm1867, %v1856, %v1858
      %v1872 = vsel %vm1867, %v1858, %v1860
      %v1873 = vsel %vm1867, %v1860, %v1862
      %v1874 = vsel %vm1867, %v1862, %v1864
      %v1875 = vsel %vm1867, %v1864, %v1866
      %v1877 = vsel %vm269, %v1848, 0
      %v1879 = vsel %vm273, %v1868, 0
      %v1881 = vsel %vm273, %v1869, 0
      %v1883 = vsel %vm273, %v1870, 0
      %v1885 = vsel %vm273, %v1871, 0
      %v1887 = vsel %vm273, %v1872, 0
      %v1889 = vsel %vm273, %v1873, 0
      %v1891 = vsel %vm273, %v1874, 0
      %v1893 = vsel %vm273, %v1875, 0
      %v1895 = vsel %vm273, %v1866, 0
      %1897 = vmatprep.subr.mxu0 0.0
      %1898 = vmatpush1.msra.mxu0 0.0
      %1899 = vmatprep.subr.mxu0 0.0
      %1900 = vmatpush1.msra.mxu0 0.0
      %1901 = vmatprep.subr.mxu0 0.0
      %1902 = vmatpush1.msra.mxu0 0.0
      %1903 = vmatprep.subr.mxu0 0.0
      %1904 = vmatpush1.msra.mxu0 0.0
      %1905 = vmatprep.subr.mxu0 0.0
      %1906 = vmatpush1.msra.mxu0 0.0
      %1907 = vmatprep.subr.mxu0 0.0
      %1908 = vmatpush1.msra.mxu0 0.0
      %1909 = vmatprep.subr.mxu0 0.0
      %1910 = vmatpush1.msra.mxu0 0.0
      %1911 = vmatprep.subr.mxu0 0.0
      %1912 = vmatpush1.msra.mxu0 0.0
      %1913 = vmatprep.subr.mxu0 0.0
      %1914 = vmatpush1.msra.mxu0 0.0
      %1915 = vmatprep.subr.mxu0 0.0
      %1916 = vmatpush1.msra.mxu0 0.0
      %1917 = vmatprep.subr.mxu0 0.0
      %1918 = vmatpush1.msra.mxu0 0.0
      %1919 = vmatprep.subr.mxu0 0.0
      %1920 = vmatpush1.msra.mxu0 0.0
      %1921 = vmatprep.subr.mxu0 0.0
      %1922 = vmatpush1.msra.mxu0 0.0
      %1923 = vmatprep.subr.mxu0 0.0
      %1924 = vmatpush1.msra.mxu0 0.0
      %1925 = vmatprep.subr.mxu0 0.0
      %1926 = vmatpush1.msra.mxu0 0.0
      %1927 = vmatprep.subr.mxu0 %v1881
      %1928 = vmatpush1.msra.mxu0 %v1879
      %1929 = vmatprep.subr.mxu0 0.0
      %1930 = vmatpush2.msra.mxu0 0.0
      %1931 = vmatprep.subr.mxu0 0.0
      %1932 = vmatpush2.msra.mxu0 0.0
      %1933 = vmatprep.subr.mxu0 0.0
      %1934 = vmatpush2.msra.mxu0 0.0
      %1935 = vmatprep.subr.mxu0 0.0
      %1936 = vmatpush2.msra.mxu0 0.0
      %1937 = vmatprep.subr.mxu0 0.0
      %1938 = vmatpush2.msra.mxu0 0.0
      %1939 = vmatprep.subr.mxu0 0.0
      %1940 = vmatpush2.msra.mxu0 0.0
      %1941 = vmatprep.subr.mxu0 0.0
      %1942 = vmatpush2.msra.mxu0 0.0
      %1943 = vmatprep.subr.mxu0 0.0
      %1944 = vmatpush2.msra.mxu0 0.0
      %1945 = vmatprep.subr.mxu0 0.0
      %1946 = vmatpush2.msra.mxu0 0.0
      %1947 = vmatprep.subr.mxu0 0.0
      %1948 = vmatpush2.msra.mxu0 0.0
      %1949 = vmatprep.subr.mxu0 0.0
      %1950 = vmatpush2.msra.mxu0 0.0
      %1951 = vmatprep.subr.mxu0 0.0
      %1952 = vmatpush2.msra.mxu0 0.0
      %1953 = vmatprep.subr.mxu0 0.0
      %1954 = vmatpush2.msra.mxu0 0.0
      %1955 = vmatprep.subr.mxu0 0.0
      %1956 = vmatpush2.msra.mxu0 0.0
      %1957 = vmatprep.subr.mxu0 0.0
      %1958 = vmatpush2.msra.mxu0 0.0
      %1959 = vmatprep.subr.mxu0 0.0
      %1960 = vmatpush2.msra.mxu0 0.0
      %1961 = vmatprep.mubr.f32.mxu0 0.0
      %1962 = vmatmul.mubr.f32.gmra.mxu0 %v1877
      %v1963 = vpop.f32.mrf.mxu0
      %v1964 = vadd.f32 0.0, %v1963
      %v1965 = vpop.f32.mrf.mxu0
      %v1966 = vadd.f32 0.0, %v1965
      %1967 = vdwg.mxu0
      %1968 = vmatprep.subr.mxu0 0.0
      %1969 = vmatpush1.msra.mxu0 0.0
      %1970 = vmatprep.subr.mxu0 0.0
      %1971 = vmatpush1.msra.mxu0 0.0
      %1972 = vmatprep.subr.mxu0 0.0
      %1973 = vmatpush1.msra.mxu0 0.0
      %1974 = vmatprep.subr.mxu0 0.0
      %1975 = vmatpush1.msra.mxu0 0.0
      %1976 = vmatprep.subr.mxu0 0.0
      %1977 = vmatpush1.msra.mxu0 0.0
      %1978 = vmatprep.subr.mxu0 0.0
      %1979 = vmatpush1.msra.mxu0 0.0
      %1980 = vmatprep.subr.mxu0 0.0
      %1981 = vmatpush1.msra.mxu0 0.0
      %1982 = vmatprep.subr.mxu0 0.0
      %1983 = vmatpush1.msra.mxu0 0.0
      %1984 = vmatprep.subr.mxu0 0.0
      %1985 = vmatpush1.msra.mxu0 0.0
      %1986 = vmatprep.subr.mxu0 0.0
      %1987 = vmatpush1.msra.mxu0 0.0
      %1988 = vmatprep.subr.mxu0 0.0
      %1989 = vmatpush1.msra.mxu0 0.0
      %1990 = vmatprep.subr.mxu0 0.0
      %1991 = vmatpush1.msra.mxu0 0.0
      %1992 = vmatprep.subr.mxu0 0.0
      %1993 = vmatpush1.msra.mxu0 0.0
      %1994 = vmatprep.subr.mxu0 0.0
      %1995 = vmatpush1.msra.mxu0 0.0
      %1996 = vmatprep.subr.mxu0 0.0
      %1997 = vmatpush1.msra.mxu0 0.0
      %1998 = vmatprep.subr.mxu0 %v1885
      %1999 = vmatpush1.msra.mxu0 %v1883
      %2000 = vmatprep.subr.mxu0 0.0
      %2001 = vmatpush2.msra.mxu0 0.0
      %2002 = vmatprep.subr.mxu0 0.0
      %2003 = vmatpush2.msra.mxu0 0.0
      %2004 = vmatprep.subr.mxu0 0.0
      %2005 = vmatpush2.msra.mxu0 0.0
      %2006 = vmatprep.subr.mxu0 0.0
      %2007 = vmatpush2.msra.mxu0 0.0
      %2008 = vmatprep.subr.mxu0 0.0
      %2009 = vmatpush2.msra.mxu0 0.0
      %2010 = vmatprep.subr.mxu0 0.0
      %2011 = vmatpush2.msra.mxu0 0.0
      %2012 = vmatprep.subr.mxu0 0.0
      %2013 = vmatpush2.msra.mxu0 0.0
      %2014 = vmatprep.subr.mxu0 0.0
      %2015 = vmatpush2.msra.mxu0 0.0
      %2016 = vmatprep.subr.mxu0 0.0
      %2017 = vmatpush2.msra.mxu0 0.0
      %2018 = vmatprep.subr.mxu0 0.0
      %2019 = vmatpush2.msra.mxu0 0.0
      %2020 = vmatprep.subr.mxu0 0.0
      %2021 = vmatpush2.msra.mxu0 0.0
      %2022 = vmatprep.subr.mxu0 0.0
      %2023 = vmatpush2.msra.mxu0 0.0
      %2024 = vmatprep.subr.mxu0 0.0
      %2025 = vmatpush2.msra.mxu0 0.0
      %2026 = vmatprep.subr.mxu0 0.0
      %2027 = vmatpush2.msra.mxu0 0.0
      %2028 = vmatprep.subr.mxu0 0.0
      %2029 = vmatpush2.msra.mxu0 0.0
      %2030 = vmatprep.subr.mxu0 0.0
      %2031 = vmatpush2.msra.mxu0 0.0
      %2032 = vmatprep.mubr.f32.mxu0 0.0
      %2033 = vmatmul.mubr.f32.gmra.mxu0 %v1877
      %v2034 = vpop.f32.mrf.mxu0
      %v2035 = vadd.f32 0.0, %v2034
      %v2036 = vpop.f32.mrf.mxu0
      %v2037 = vadd.f32 0.0, %v2036
      %2038 = vdwg.mxu0
      %2039 = vmatprep.subr.mxu0 0.0
      %2040 = vmatpush1.msra.mxu0 0.0
      %2041 = vmatprep.subr.mxu0 0.0
      %2042 = vmatpush1.msra.mxu0 0.0
      %2043 = vmatprep.subr.mxu0 0.0
      %2044 = vmatpush1.msra.mxu0 0.0
      %2045 = vmatprep.subr.mxu0 0.0
      %2046 = vmatpush1.msra.mxu0 0.0
      %2047 = vmatprep.subr.mxu0 0.0
      %2048 = vmatpush1.msra.mxu0 0.0
      %2049 = vmatprep.subr.mxu0 0.0
      %2050 = vmatpush1.msra.mxu0 0.0
      %2051 = vmatprep.subr.mxu0 0.0
      %2052 = vmatpush1.msra.mxu0 0.0
      %2053 = vmatprep.subr.mxu0 0.0
      %2054 = vmatpush1.msra.mxu0 0.0
      %2055 = vmatprep.subr.mxu0 0.0
      %2056 = vmatpush1.msra.mxu0 0.0
      %2057 = vmatprep.subr.mxu0 0.0
      %2058 = vmatpush1.msra.mxu0 0.0
      %2059 = vmatprep.subr.mxu0 0.0
      %2060 = vmatpush1.msra.mxu0 0.0
      %2061 = vmatprep.subr.mxu0 0.0
      %2062 = vmatpush1.msra.mxu0 0.0
      %2063 = vmatprep.subr.mxu0 0.0
      %2064 = vmatpush1.msra.mxu0 0.0
      %2065 = vmatprep.subr.mxu0 0.0
      %2066 = vmatpush1.msra.mxu0 0.0
      %2067 = vmatprep.subr.mxu0 0.0
      %2068 = vmatpush1.msra.mxu0 0.0
      %2069 = vmatprep.subr.mxu0 %v1889
      %2070 = vmatpush1.msra.mxu0 %v1887
      %2071 = vmatprep.subr.mxu0 0.0
      %2072 = vmatpush2.msra.mxu0 0.0
      %2073 = vmatprep.subr.mxu0 0.0
      %2074 = vmatpush2.msra.mxu0 0.0
      %2075 = vmatprep.subr.mxu0 0.0
      %2076 = vmatpush2.msra.mxu0 0.0
      %2077 = vmatprep.subr.mxu0 0.0
      %2078 = vmatpush2.msra.mxu0 0.0
      %2079 = vmatprep.subr.mxu0 0.0
      %2080 = vmatpush2.msra.mxu0 0.0
      %2081 = vmatprep.subr.mxu0 0.0
      %2082 = vmatpush2.msra.mxu0 0.0
      %2083 = vmatprep.subr.mxu0 0.0
      %2084 = vmatpush2.msra.mxu0 0.0
      %2085 = vmatprep.subr.mxu0 0.0
      %2086 = vmatpush2.msra.mxu0 0.0
      %2087 = vmatprep.subr.mxu0 0.0
      %2088 = vmatpush2.msra.mxu0 0.0
      %2089 = vmatprep.subr.mxu0 0.0
      %2090 = vmatpush2.msra.mxu0 0.0
      %2091 = vmatprep.subr.mxu0 0.0
      %2092 = vmatpush2.msra.mxu0 0.0
      %2093 = vmatprep.subr.mxu0 0.0
      %2094 = vmatpush2.msra.mxu0 0.0
      %2095 = vmatprep.subr.mxu0 0.0
      %2096 = vmatpush2.msra.mxu0 0.0
      %2097 = vmatprep.subr.mxu0 0.0
      %2098 = vmatpush2.msra.mxu0 0.0
      %2099 = vmatprep.subr.mxu0 0.0
      %2100 = vmatpush2.msra.mxu0 0.0
      %2101 = vmatprep.subr.mxu0 0.0
      %2102 = vmatpush2.msra.mxu0 0.0
      %2103 = vmatprep.mubr.f32.mxu0 0.0
      %2104 = vmatmul.mubr.f32.gmra.mxu0 %v1877
      %v2105 = vpop.f32.mrf.mxu0
      %v2106 = vadd.f32 0.0, %v2105
      %v2107 = vpop.f32.mrf.mxu0
      %v2108 = vadd.f32 0.0, %v2107
      %2109 = vdwg.mxu0
      %2110 = vmatprep.subr.mxu0 0.0
      %2111 = vmatpush1.msra.mxu0 0.0
      %2112 = vmatprep.subr.mxu0 0.0
      %2113 = vmatpush1.msra.mxu0 0.0
      %2114 = vmatprep.subr.mxu0 0.0
      %2115 = vmatpush1.msra.mxu0 0.0
      %2116 = vmatprep.subr.mxu0 0.0
      %2117 = vmatpush1.msra.mxu0 0.0
      %2118 = vmatprep.subr.mxu0 0.0
      %2119 = vmatpush1.msra.mxu0 0.0
      %2120 = vmatprep.subr.mxu0 0.0
      %2121 = vmatpush1.msra.mxu0 0.0
      %2122 = vmatprep.subr.mxu0 0.0
      %2123 = vmatpush1.msra.mxu0 0.0
      %2124 = vmatprep.subr.mxu0 0.0
      %2125 = vmatpush1.msra.mxu0 0.0
      %2126 = vmatprep.subr.mxu0 0.0
      %2127 = vmatpush1.msra.mxu0 0.0
      %2128 = vmatprep.subr.mxu0 0.0
      %2129 = vmatpush1.msra.mxu0 0.0
      %2130 = vmatprep.subr.mxu0 0.0
      %2131 = vmatpush1.msra.mxu0 0.0
      %2132 = vmatprep.subr.mxu0 0.0
      %2133 = vmatpush1.msra.mxu0 0.0
      %2134 = vmatprep.subr.mxu0 0.0
      %2135 = vmatpush1.msra.mxu0 0.0
      %2136 = vmatprep.subr.mxu0 0.0
      %2137 = vmatpush1.msra.mxu0 0.0
      %2138 = vmatprep.subr.mxu0 0.0
      %2139 = vmatpush1.msra.mxu0 0.0
      %2140 = vmatprep.subr.mxu0 %v1893
      %2141 = vmatpush1.msra.mxu0 %v1891
      %2142 = vmatprep.subr.mxu0 0.0
      %2143 = vmatpush2.msra.mxu0 0.0
      %2144 = vmatprep.subr.mxu0 0.0
      %2145 = vmatpush2.msra.mxu0 0.0
      %2146 = vmatprep.subr.mxu0 0.0
      %2147 = vmatpush2.msra.mxu0 0.0
      %2148 = vmatprep.subr.mxu0 0.0
      %2149 = vmatpush2.msra.mxu0 0.0
      %2150 = vmatprep.subr.mxu0 0.0
      %2151 = vmatpush2.msra.mxu0 0.0
      %2152 = vmatprep.subr.mxu0 0.0
      %2153 = vmatpush2.msra.mxu0 0.0
      %2154 = vmatprep.subr.mxu0 0.0
      %2155 = vmatpush2.msra.mxu0 0.0
      %2156 = vmatprep.subr.mxu0 0.0
      %2157 = vmatpush2.msra.mxu0 0.0
      %2158 = vmatprep.subr.mxu0 0.0
      %2159 = vmatpush2.msra.mxu0 0.0
      %2160 = vmatprep.subr.mxu0 0.0
      %2161 = vmatpush2.msra.mxu0 0.0
      %2162 = vmatprep.subr.mxu0 0.0
      %2163 = vmatpush2.msra.mxu0 0.0
      %2164 = vmatprep.subr.mxu0 0.0
      %2165 = vmatpush2.msra.mxu0 0.0
      %2166 = vmatprep.subr.mxu0 0.0
      %2167 = vmatpush2.msra.mxu0 0.0
      %2168 = vmatprep.subr.mxu0 0.0
      %2169 = vmatpush2.msra.mxu0 0.0
      %2170 = vmatprep.subr.mxu0 0.0
      %2171 = vmatpush2.msra.mxu0 0.0
      %2172 = vmatprep.subr.mxu0 0.0
      %2173 = vmatpush2.msra.mxu0 0.0
      %2174 = vmatprep.mubr.f32.mxu0 0.0
      %2175 = vmatmul.mubr.f32.gmra.mxu0 %v1877
      %v2176 = vpop.f32.mrf.mxu0
      %v2177 = vadd.f32 0.0, %v2176
      %v2178 = vpop.f32.mrf.mxu0
      %v2179 = vadd.f32 0.0, %v2178
      %2180 = vdwg.mxu0
      %2181 = vmatprep.subr.mxu0 0.0
      %2182 = vmatpush1.msra.mxu0 0.0
      %2183 = vmatprep.subr.mxu0 0.0
      %2184 = vmatpush1.msra.mxu0 0.0
      %2185 = vmatprep.subr.mxu0 0.0
      %2186 = vmatpush1.msra.mxu0 0.0
      %2187 = vmatprep.subr.mxu0 0.0
      %2188 = vmatpush1.msra.mxu0 0.0
      %2189 = vmatprep.subr.mxu0 0.0
      %2190 = vmatpush1.msra.mxu0 0.0
      %2191 = vmatprep.subr.mxu0 0.0
      %2192 = vmatpush1.msra.mxu0 0.0
      %2193 = vmatprep.subr.mxu0 0.0
      %2194 = vmatpush1.msra.mxu0 0.0
      %2195 = vmatprep.subr.mxu0 0.0
      %2196 = vmatpush1.msra.mxu0 0.0
      %2197 = vmatprep.subr.mxu0 0.0
      %2198 = vmatpush1.msra.mxu0 0.0
      %2199 = vmatprep.subr.mxu0 0.0
      %2200 = vmatpush1.msra.mxu0 0.0
      %2201 = vmatprep.subr.mxu0 0.0
      %2202 = vmatpush1.msra.mxu0 0.0
      %2203 = vmatprep.subr.mxu0 0.0
      %2204 = vmatpush1.msra.mxu0 0.0
      %2205 = vmatprep.subr.mxu0 0.0
      %2206 = vmatpush1.msra.mxu0 0.0
      %2207 = vmatprep.subr.mxu0 0.0
      %2208 = vmatpush1.msra.mxu0 0.0
      %2209 = vmatprep.subr.mxu0 0.0
      %2210 = vmatpush1.msra.mxu0 0.0
      %2211 = vmatprep.subr.mxu0 0.0
      %2212 = vmatpush1.msra.mxu0 %v1895
      %2213 = vmatprep.subr.mxu0 0.0
      %2214 = vmatpush2.msra.mxu0 0.0
      %2215 = vmatprep.subr.mxu0 0.0
      %2216 = vmatpush2.msra.mxu0 0.0
      %2217 = vmatprep.subr.mxu0 0.0
      %2218 = vmatpush2.msra.mxu0 0.0
      %2219 = vmatprep.subr.mxu0 0.0
      %2220 = vmatpush2.msra.mxu0 0.0
      %2221 = vmatprep.subr.mxu0 0.0
      %2222 = vmatpush2.msra.mxu0 0.0
      %2223 = vmatprep.subr.mxu0 0.0
      %2224 = vmatpush2.msra.mxu0 0.0
      %2225 = vmatprep.subr.mxu0 0.0
      %2226 = vmatpush2.msra.mxu0 0.0
      %2227 = vmatprep.subr.mxu0 0.0
      %2228 = vmatpush2.msra.mxu0 0.0
      %2229 = vmatprep.subr.mxu0 0.0
      %2230 = vmatpush2.msra.mxu0 0.0
      %2231 = vmatprep.subr.mxu0 0.0
      %2232 = vmatpush2.msra.mxu0 0.0
      %2233 = vmatprep.subr.mxu0 0.0
      %2234 = vmatpush2.msra.mxu0 0.0
      %2235 = vmatprep.subr.mxu0 0.0
      %2236 = vmatpush2.msra.mxu0 0.0
      %2237 = vmatprep.subr.mxu0 0.0
      %2238 = vmatpush2.msra.mxu0 0.0
      %2239 = vmatprep.subr.mxu0 0.0
      %2240 = vmatpush2.msra.mxu0 0.0
      %2241 = vmatprep.subr.mxu0 0.0
      %2242 = vmatpush2.msra.mxu0 0.0
      %2243 = vmatprep.subr.mxu0 0.0
      %2244 = vmatpush2.msra.mxu0 0.0
      %2245 = vmatprep.mubr.f32.mxu0 0.0
      %2246 = vmatmul.mubr.f32.gmra.mxu0 %v1877
      %v2247 = vpop.f32.mrf.mxu0
      %v2248 = vadd.f32 0.0, %v2247
      %v2249 = vpop.f32.mrf.mxu0
      %2250 = vdwg.mxu0
      %v2251 = vadd.f32 %v1838, %v1964
      %v2252 = vadd.f32 %v1839, %v1966
      %v2253 = vadd.f32 %v1840, %v2035
      %v2254 = vadd.f32 %v1841, %v2037
      %v2255 = vadd.f32 %v1842, %v2106
      %v2256 = vadd.f32 %v1843, %v2108
      %v2257 = vadd.f32 %v1844, %v2177
      %v2258 = vadd.f32 %v1845, %v2179
      %v2259 = vadd.f32 %v1846, %v2248
      %s2260 = scalar_lea.vmem %s1, 40
      %v2261 = vld [vmem:[%s2260] sm:$0xff]
      %2262 = vrot.lane.b32.xlu0 %v225, 92
      %v2263 = vpop.permute.xlu0 %2262
      %2264 = vrot.lane.b32.xlu0 %v238, 92
      %v2265 = vpop.permute.xlu0 %2264
      %2266 = vrot.lane.b32.xlu0 %v226, 92
      %v2267 = vpop.permute.xlu0 %2266
      %2268 = vrot.lane.b32.xlu0 %v239, 92
      %v2269 = vpop.permute.xlu0 %2268
      %2270 = vrot.lane.b32.xlu0 %v227, 92
      %v2271 = vpop.permute.xlu0 %2270
      %2272 = vrot.lane.b32.xlu0 %v240, 92
      %v2273 = vpop.permute.xlu0 %2272
      %2274 = vrot.lane.b32.xlu0 %v228, 92
      %v2275 = vpop.permute.xlu0 %2274
      %2276 = vrot.lane.b32.xlu0 %v241, 92
      %v2277 = vpop.permute.xlu0 %2276
      %2278 = vrot.lane.b32.xlu0 %v229, 92
      %v2279 = vpop.permute.xlu0 %2278
      %vm2280 = vcmask 752640
      %v2281 = vsel %vm2280, %v2263, %v2265
      %v2282 = vsel %vm2280, %v2265, %v2267
      %v2283 = vsel %vm2280, %v2267, %v2269
      %v2284 = vsel %vm2280, %v2269, %v2271
      %v2285 = vsel %vm2280, %v2271, %v2273
      %v2286 = vsel %vm2280, %v2273, %v2275
      %v2287 = vsel %vm2280, %v2275, %v2277
      %v2288 = vsel %vm2280, %v2277, %v2279
      %v2290 = vsel %vm269, %v2261, 0
      %v2292 = vsel %vm273, %v2281, 0
      %v2294 = vsel %vm273, %v2282, 0
      %v2296 = vsel %vm273, %v2283, 0
      %v2298 = vsel %vm273, %v2284, 0
      %v2300 = vsel %vm273, %v2285, 0
      %v2302 = vsel %vm273, %v2286, 0
      %v2304 = vsel %vm273, %v2287, 0
      %v2306 = vsel %vm273, %v2288, 0
      %v2308 = vsel %vm273, %v2279, 0
      %2310 = vmatprep.subr.mxu0 0.0
      %2311 = vmatpush1.msra.mxu0 0.0
      %2312 = vmatprep.subr.mxu0 0.0
      %2313 = vmatpush1.msra.mxu0 0.0
      %2314 = vmatprep.subr.mxu0 0.0
      %2315 = vmatpush1.msra.mxu0 0.0
      %2316 = vmatprep.subr.mxu0 0.0
      %2317 = vmatpush1.msra.mxu0 0.0
      %2318 = vmatprep.subr.mxu0 0.0
      %2319 = vmatpush1.msra.mxu0 0.0
      %2320 = vmatprep.subr.mxu0 0.0
      %2321 = vmatpush1.msra.mxu0 0.0
      %2322 = vmatprep.subr.mxu0 0.0
      %2323 = vmatpush1.msra.mxu0 0.0
      %2324 = vmatprep.subr.mxu0 0.0
      %2325 = vmatpush1.msra.mxu0 0.0
      %2326 = vmatprep.subr.mxu0 0.0
      %2327 = vmatpush1.msra.mxu0 0.0
      %2328 = vmatprep.subr.mxu0 0.0
      %2329 = vmatpush1.msra.mxu0 0.0
      %2330 = vmatprep.subr.mxu0 0.0
      %2331 = vmatpush1.msra.mxu0 0.0
      %2332 = vmatprep.subr.mxu0 0.0
      %2333 = vmatpush1.msra.mxu0 0.0
      %2334 = vmatprep.subr.mxu0 0.0
      %2335 = vmatpush1.msra.mxu0 0.0
      %2336 = vmatprep.subr.mxu0 0.0
      %2337 = vmatpush1.msra.mxu0 0.0
      %2338 = vmatprep.subr.mxu0 0.0
      %2339 = vmatpush1.msra.mxu0 0.0
      %2340 = vmatprep.subr.mxu0 %v2294
      %2341 = vmatpush1.msra.mxu0 %v2292
      %2342 = vmatprep.subr.mxu0 0.0
      %2343 = vmatpush2.msra.mxu0 0.0
      %2344 = vmatprep.subr.mxu0 0.0
      %2345 = vmatpush2.msra.mxu0 0.0
      %2346 = vmatprep.subr.mxu0 0.0
      %2347 = vmatpush2.msra.mxu0 0.0
      %2348 = vmatprep.subr.mxu0 0.0
      %2349 = vmatpush2.msra.mxu0 0.0
      %2350 = vmatprep.subr.mxu0 0.0
      %2351 = vmatpush2.msra.mxu0 0.0
      %2352 = vmatprep.subr.mxu0 0.0
      %2353 = vmatpush2.msra.mxu0 0.0
      %2354 = vmatprep.subr.mxu0 0.0
      %2355 = vmatpush2.msra.mxu0 0.0
      %2356 = vmatprep.subr.mxu0 0.0
      %2357 = vmatpush2.msra.mxu0 0.0
      %2358 = vmatprep.subr.mxu0 0.0
      %2359 = vmatpush2.msra.mxu0 0.0
      %2360 = vmatprep.subr.mxu0 0.0
      %2361 = vmatpush2.msra.mxu0 0.0
      %2362 = vmatprep.subr.mxu0 0.0
      %2363 = vmatpush2.msra.mxu0 0.0
      %2364 = vmatprep.subr.mxu0 0.0
      %2365 = vmatpush2.msra.mxu0 0.0
      %2366 = vmatprep.subr.mxu0 0.0
      %2367 = vmatpush2.msra.mxu0 0.0
      %2368 = vmatprep.subr.mxu0 0.0
      %2369 = vmatpush2.msra.mxu0 0.0
      %2370 = vmatprep.subr.mxu0 0.0
      %2371 = vmatpush2.msra.mxu0 0.0
      %2372 = vmatprep.subr.mxu0 0.0
      %2373 = vmatpush2.msra.mxu0 0.0
      %2374 = vmatprep.mubr.f32.mxu0 0.0
      %2375 = vmatmul.mubr.f32.gmra.mxu0 %v2290
      %v2376 = vpop.f32.mrf.mxu0
      %v2377 = vadd.f32 0.0, %v2376
      %v2378 = vpop.f32.mrf.mxu0
      %v2379 = vadd.f32 0.0, %v2378
      %2380 = vdwg.mxu0
      %2381 = vmatprep.subr.mxu0 0.0
      %2382 = vmatpush1.msra.mxu0 0.0
      %2383 = vmatprep.subr.mxu0 0.0
      %2384 = vmatpush1.msra.mxu0 0.0
      %2385 = vmatprep.subr.mxu0 0.0
      %2386 = vmatpush1.msra.mxu0 0.0
      %2387 = vmatprep.subr.mxu0 0.0
      %2388 = vmatpush1.msra.mxu0 0.0
      %2389 = vmatprep.subr.mxu0 0.0
      %2390 = vmatpush1.msra.mxu0 0.0
      %2391 = vmatprep.subr.mxu0 0.0
      %2392 = vmatpush1.msra.mxu0 0.0
      %2393 = vmatprep.subr.mxu0 0.0
      %2394 = vmatpush1.msra.mxu0 0.0
      %2395 = vmatprep.subr.mxu0 0.0
      %2396 = vmatpush1.msra.mxu0 0.0
      %2397 = vmatprep.subr.mxu0 0.0
      %2398 = vmatpush1.msra.mxu0 0.0
      %2399 = vmatprep.subr.mxu0 0.0
      %2400 = vmatpush1.msra.mxu0 0.0
      %2401 = vmatprep.subr.mxu0 0.0
      %2402 = vmatpush1.msra.mxu0 0.0
      %2403 = vmatprep.subr.mxu0 0.0
      %2404 = vmatpush1.msra.mxu0 0.0
      %2405 = vmatprep.subr.mxu0 0.0
      %2406 = vmatpush1.msra.mxu0 0.0
      %2407 = vmatprep.subr.mxu0 0.0
      %2408 = vmatpush1.msra.mxu0 0.0
      %2409 = vmatprep.subr.mxu0 0.0
      %2410 = vmatpush1.msra.mxu0 0.0
      %2411 = vmatprep.subr.mxu0 %v2298
      %2412 = vmatpush1.msra.mxu0 %v2296
      %2413 = vmatprep.subr.mxu0 0.0
      %2414 = vmatpush2.msra.mxu0 0.0
      %2415 = vmatprep.subr.mxu0 0.0
      %2416 = vmatpush2.msra.mxu0 0.0
      %2417 = vmatprep.subr.mxu0 0.0
      %2418 = vmatpush2.msra.mxu0 0.0
      %2419 = vmatprep.subr.mxu0 0.0
      %2420 = vmatpush2.msra.mxu0 0.0
      %2421 = vmatprep.subr.mxu0 0.0
      %2422 = vmatpush2.msra.mxu0 0.0
      %2423 = vmatprep.subr.mxu0 0.0
      %2424 = vmatpush2.msra.mxu0 0.0
      %2425 = vmatprep.subr.mxu0 0.0
      %2426 = vmatpush2.msra.mxu0 0.0
      %2427 = vmatprep.subr.mxu0 0.0
      %2428 = vmatpush2.msra.mxu0 0.0
      %2429 = vmatprep.subr.mxu0 0.0
      %2430 = vmatpush2.msra.mxu0 0.0
      %2431 = vmatprep.subr.mxu0 0.0
      %2432 = vmatpush2.msra.mxu0 0.0
      %2433 = vmatprep.subr.mxu0 0.0
      %2434 = vmatpush2.msra.mxu0 0.0
      %2435 = vmatprep.subr.mxu0 0.0
      %2436 = vmatpush2.msra.mxu0 0.0
      %2437 = vmatprep.subr.mxu0 0.0
      %2438 = vmatpush2.msra.mxu0 0.0
      %2439 = vmatprep.subr.mxu0 0.0
      %2440 = vmatpush2.msra.mxu0 0.0
      %2441 = vmatprep.subr.mxu0 0.0
      %2442 = vmatpush2.msra.mxu0 0.0
      %2443 = vmatprep.subr.mxu0 0.0
      %2444 = vmatpush2.msra.mxu0 0.0
      %2445 = vmatprep.mubr.f32.mxu0 0.0
      %2446 = vmatmul.mubr.f32.gmra.mxu0 %v2290
      %v2447 = vpop.f32.mrf.mxu0
      %v2448 = vadd.f32 0.0, %v2447
      %v2449 = vpop.f32.mrf.mxu0
      %v2450 = vadd.f32 0.0, %v2449
      %2451 = vdwg.mxu0
      %2452 = vmatprep.subr.mxu0 0.0
      %2453 = vmatpush1.msra.mxu0 0.0
      %2454 = vmatprep.subr.mxu0 0.0
      %2455 = vmatpush1.msra.mxu0 0.0
      %2456 = vmatprep.subr.mxu0 0.0
      %2457 = vmatpush1.msra.mxu0 0.0
      %2458 = vmatprep.subr.mxu0 0.0
      %2459 = vmatpush1.msra.mxu0 0.0
      %2460 = vmatprep.subr.mxu0 0.0
      %2461 = vmatpush1.msra.mxu0 0.0
      %2462 = vmatprep.subr.mxu0 0.0
      %2463 = vmatpush1.msra.mxu0 0.0
      %2464 = vmatprep.subr.mxu0 0.0
      %2465 = vmatpush1.msra.mxu0 0.0
      %2466 = vmatprep.subr.mxu0 0.0
      %2467 = vmatpush1.msra.mxu0 0.0
      %2468 = vmatprep.subr.mxu0 0.0
      %2469 = vmatpush1.msra.mxu0 0.0
      %2470 = vmatprep.subr.mxu0 0.0
      %2471 = vmatpush1.msra.mxu0 0.0
      %2472 = vmatprep.subr.mxu0 0.0
      %2473 = vmatpush1.msra.mxu0 0.0
      %2474 = vmatprep.subr.mxu0 0.0
      %2475 = vmatpush1.msra.mxu0 0.0
      %2476 = vmatprep.subr.mxu0 0.0
      %2477 = vmatpush1.msra.mxu0 0.0
      %2478 = vmatprep.subr.mxu0 0.0
      %2479 = vmatpush1.msra.mxu0 0.0
      %2480 = vmatprep.subr.mxu0 0.0
      %2481 = vmatpush1.msra.mxu0 0.0
      %2482 = vmatprep.subr.mxu0 %v2302
      %2483 = vmatpush1.msra.mxu0 %v2300
      %2484 = vmatprep.subr.mxu0 0.0
      %2485 = vmatpush2.msra.mxu0 0.0
      %2486 = vmatprep.subr.mxu0 0.0
      %2487 = vmatpush2.msra.mxu0 0.0
      %2488 = vmatprep.subr.mxu0 0.0
      %2489 = vmatpush2.msra.mxu0 0.0
      %2490 = vmatprep.subr.mxu0 0.0
      %2491 = vmatpush2.msra.mxu0 0.0
      %2492 = vmatprep.subr.mxu0 0.0
      %2493 = vmatpush2.msra.mxu0 0.0
      %2494 = vmatprep.subr.mxu0 0.0
      %2495 = vmatpush2.msra.mxu0 0.0
      %2496 = vmatprep.subr.mxu0 0.0
      %2497 = vmatpush2.msra.mxu0 0.0
      %2498 = vmatprep.subr.mxu0 0.0
      %2499 = vmatpush2.msra.mxu0 0.0
      %2500 = vmatprep.subr.mxu0 0.0
      %2501 = vmatpush2.msra.mxu0 0.0
      %2502 = vmatprep.subr.mxu0 0.0
      %2503 = vmatpush2.msra.mxu0 0.0
      %2504 = vmatprep.subr.mxu0 0.0
      %2505 = vmatpush2.msra.mxu0 0.0
      %2506 = vmatprep.subr.mxu0 0.0
      %2507 = vmatpush2.msra.mxu0 0.0
      %2508 = vmatprep.subr.mxu0 0.0
      %2509 = vmatpush2.msra.mxu0 0.0
      %2510 = vmatprep.subr.mxu0 0.0
      %2511 = vmatpush2.msra.mxu0 0.0
      %2512 = vmatprep.subr.mxu0 0.0
      %2513 = vmatpush2.msra.mxu0 0.0
      %2514 = vmatprep.subr.mxu0 0.0
      %2515 = vmatpush2.msra.mxu0 0.0
      %2516 = vmatprep.mubr.f32.mxu0 0.0
      %2517 = vmatmul.mubr.f32.gmra.mxu0 %v2290
      %v2518 = vpop.f32.mrf.mxu0
      %v2519 = vadd.f32 0.0, %v2518
      %v2520 = vpop.f32.mrf.mxu0
      %v2521 = vadd.f32 0.0, %v2520
      %2522 = vdwg.mxu0
      %2523 = vmatprep.subr.mxu0 0.0
      %2524 = vmatpush1.msra.mxu0 0.0
      %2525 = vmatprep.subr.mxu0 0.0
      %2526 = vmatpush1.msra.mxu0 0.0
      %2527 = vmatprep.subr.mxu0 0.0
      %2528 = vmatpush1.msra.mxu0 0.0
      %2529 = vmatprep.subr.mxu0 0.0
      %2530 = vmatpush1.msra.mxu0 0.0
      %2531 = vmatprep.subr.mxu0 0.0
      %2532 = vmatpush1.msra.mxu0 0.0
      %2533 = vmatprep.subr.mxu0 0.0
      %2534 = vmatpush1.msra.mxu0 0.0
      %2535 = vmatprep.subr.mxu0 0.0
      %2536 = vmatpush1.msra.mxu0 0.0
      %2537 = vmatprep.subr.mxu0 0.0
      %2538 = vmatpush1.msra.mxu0 0.0
      %2539 = vmatprep.subr.mxu0 0.0
      %2540 = vmatpush1.msra.mxu0 0.0
      %2541 = vmatprep.subr.mxu0 0.0
      %2542 = vmatpush1.msra.mxu0 0.0
      %2543 = vmatprep.subr.mxu0 0.0
      %2544 = vmatpush1.msra.mxu0 0.0
      %2545 = vmatprep.subr.mxu0 0.0
      %2546 = vmatpush1.msra.mxu0 0.0
      %2547 = vmatprep.subr.mxu0 0.0
      %2548 = vmatpush1.msra.mxu0 0.0
      %2549 = vmatprep.subr.mxu0 0.0
      %2550 = vmatpush1.msra.mxu0 0.0
      %2551 = vmatprep.subr.mxu0 0.0
      %2552 = vmatpush1.msra.mxu0 0.0
      %2553 = vmatprep.subr.mxu0 %v2306
      %2554 = vmatpush1.msra.mxu0 %v2304
      %2555 = vmatprep.subr.mxu0 0.0
      %2556 = vmatpush2.msra.mxu0 0.0
      %2557 = vmatprep.subr.mxu0 0.0
      %2558 = vmatpush2.msra.mxu0 0.0
      %2559 = vmatprep.subr.mxu0 0.0
      %2560 = vmatpush2.msra.mxu0 0.0
      %2561 = vmatprep.subr.mxu0 0.0
      %2562 = vmatpush2.msra.mxu0 0.0
      %2563 = vmatprep.subr.mxu0 0.0
      %2564 = vmatpush2.msra.mxu0 0.0
      %2565 = vmatprep.subr.mxu0 0.0
      %2566 = vmatpush2.msra.mxu0 0.0
      %2567 = vmatprep.subr.mxu0 0.0
      %2568 = vmatpush2.msra.mxu0 0.0
      %2569 = vmatprep.subr.mxu0 0.0
      %2570 = vmatpush2.msra.mxu0 0.0
      %2571 = vmatprep.subr.mxu0 0.0
      %2572 = vmatpush2.msra.mxu0 0.0
      %2573 = vmatprep.subr.mxu0 0.0
      %2574 = vmatpush2.msra.mxu0 0.0
      %2575 = vmatprep.subr.mxu0 0.0
      %2576 = vmatpush2.msra.mxu0 0.0
      %2577 = vmatprep.subr.mxu0 0.0
      %2578 = vmatpush2.msra.mxu0 0.0
      %2579 = vmatprep.subr.mxu0 0.0
      %2580 = vmatpush2.msra.mxu0 0.0
      %2581 = vmatprep.subr.mxu0 0.0
      %2582 = vmatpush2.msra.mxu0 0.0
      %2583 = vmatprep.subr.mxu0 0.0
      %2584 = vmatpush2.msra.mxu0 0.0
      %2585 = vmatprep.subr.mxu0 0.0
      %2586 = vmatpush2.msra.mxu0 0.0
      %2587 = vmatprep.mubr.f32.mxu0 0.0
      %2588 = vmatmul.mubr.f32.gmra.mxu0 %v2290
      %v2589 = vpop.f32.mrf.mxu0
      %v2590 = vadd.f32 0.0, %v2589
      %v2591 = vpop.f32.mrf.mxu0
      %v2592 = vadd.f32 0.0, %v2591
      %2593 = vdwg.mxu0
      %2594 = vmatprep.subr.mxu0 0.0
      %2595 = vmatpush1.msra.mxu0 0.0
      %2596 = vmatprep.subr.mxu0 0.0
      %2597 = vmatpush1.msra.mxu0 0.0
      %2598 = vmatprep.subr.mxu0 0.0
      %2599 = vmatpush1.msra.mxu0 0.0
      %2600 = vmatprep.subr.mxu0 0.0
      %2601 = vmatpush1.msra.mxu0 0.0
      %2602 = vmatprep.subr.mxu0 0.0
      %2603 = vmatpush1.msra.mxu0 0.0
      %2604 = vmatprep.subr.mxu0 0.0
      %2605 = vmatpush1.msra.mxu0 0.0
      %2606 = vmatprep.subr.mxu0 0.0
      %2607 = vmatpush1.msra.mxu0 0.0
      %2608 = vmatprep.subr.mxu0 0.0
      %2609 = vmatpush1.msra.mxu0 0.0
      %2610 = vmatprep.subr.mxu0 0.0
      %2611 = vmatpush1.msra.mxu0 0.0
      %2612 = vmatprep.subr.mxu0 0.0
      %2613 = vmatpush1.msra.mxu0 0.0
      %2614 = vmatprep.subr.mxu0 0.0
      %2615 = vmatpush1.msra.mxu0 0.0
      %2616 = vmatprep.subr.mxu0 0.0
      %2617 = vmatpush1.msra.mxu0 0.0
      %2618 = vmatprep.subr.mxu0 0.0
      %2619 = vmatpush1.msra.mxu0 0.0
      %2620 = vmatprep.subr.mxu0 0.0
      %2621 = vmatpush1.msra.mxu0 0.0
      %2622 = vmatprep.subr.mxu0 0.0
      %2623 = vmatpush1.msra.mxu0 0.0
      %2624 = vmatprep.subr.mxu0 0.0
      %2625 = vmatpush1.msra.mxu0 %v2308
      %2626 = vmatprep.subr.mxu0 0.0
      %2627 = vmatpush2.msra.mxu0 0.0
      %2628 = vmatprep.subr.mxu0 0.0
      %2629 = vmatpush2.msra.mxu0 0.0
      %2630 = vmatprep.subr.mxu0 0.0
      %2631 = vmatpush2.msra.mxu0 0.0
      %2632 = vmatprep.subr.mxu0 0.0
      %2633 = vmatpush2.msra.mxu0 0.0
      %2634 = vmatprep.subr.mxu0 0.0
      %2635 = vmatpush2.msra.mxu0 0.0
      %2636 = vmatprep.subr.mxu0 0.0
      %2637 = vmatpush2.msra.mxu0 0.0
      %2638 = vmatprep.subr.mxu0 0.0
      %2639 = vmatpush2.msra.mxu0 0.0
      %2640 = vmatprep.subr.mxu0 0.0
      %2641 = vmatpush2.msra.mxu0 0.0
      %2642 = vmatprep.subr.mxu0 0.0
      %2643 = vmatpush2.msra.mxu0 0.0
      %2644 = vmatprep.subr.mxu0 0.0
      %2645 = vmatpush2.msra.mxu0 0.0
      %2646 = vmatprep.subr.mxu0 0.0
      %2647 = vmatpush2.msra.mxu0 0.0
      %2648 = vmatprep.subr.mxu0 0.0
      %2649 = vmatpush2.msra.mxu0 0.0
      %2650 = vmatprep.subr.mxu0 0.0
      %2651 = vmatpush2.msra.mxu0 0.0
      %2652 = vmatprep.subr.mxu0 0.0
      %2653 = vmatpush2.msra.mxu0 0.0
      %2654 = vmatprep.subr.mxu0 0.0
      %2655 = vmatpush2.msra.mxu0 0.0
      %2656 = vmatprep.subr.mxu0 0.0
      %2657 = vmatpush2.msra.mxu0 0.0
      %2658 = vmatprep.mubr.f32.mxu0 0.0
      %2659 = vmatmul.mubr.f32.gmra.mxu0 %v2290
      %v2660 = vpop.f32.mrf.mxu0
      %v2661 = vadd.f32 0.0, %v2660
      %v2662 = vpop.f32.mrf.mxu0
      %2663 = vdwg.mxu0
      %v2664 = vadd.f32 %v2251, %v2377
      %v2665 = vadd.f32 %v2252, %v2379
      %v2666 = vadd.f32 %v2253, %v2448
      %v2667 = vadd.f32 %v2254, %v2450
      %v2668 = vadd.f32 %v2255, %v2519
      %v2669 = vadd.f32 %v2256, %v2521
      %v2670 = vadd.f32 %v2257, %v2590
      %v2671 = vadd.f32 %v2258, %v2592
      %v2672 = vadd.f32 %v2259, %v2661
      %s2673 = scalar_lea.vmem %s1, 48
      %v2674 = vld [vmem:[%s2673] sm:$0xff]
      %v2675 = vcombine.high %v229, %v229
      %2676 = vrot.lane.b32.xlu0 %v225, 60
      %v2677 = vpop.permute.xlu0 %2676
      %2678 = vrot.lane.b32.xlu0 %v238, 60
      %v2679 = vpop.permute.xlu0 %2678
      %2680 = vrot.lane.b32.xlu0 %v226, 60
      %v2681 = vpop.permute.xlu0 %2680
      %2682 = vrot.lane.b32.xlu0 %v239, 60
      %v2683 = vpop.permute.xlu0 %2682
      %2684 = vrot.lane.b32.xlu0 %v227, 60
      %v2685 = vpop.permute.xlu0 %2684
      %2686 = vrot.lane.b32.xlu0 %v240, 60
      %v2687 = vpop.permute.xlu0 %2686
      %2688 = vrot.lane.b32.xlu0 %v228, 60
      %v2689 = vpop.permute.xlu0 %2688
      %2690 = vrot.lane.b32.xlu0 %v241, 60
      %v2691 = vpop.permute.xlu0 %2690
      %2692 = vrot.lane.b32.xlu0 %v229, 60
      %v2693 = vpop.permute.xlu0 %2692
      %2694 = vrot.lane.b32.xlu0 %v2675, 60
      %v2695 = vpop.permute.xlu0 %2694
      %vm2696 = vcmask 490496
      %v2697 = vsel %vm2696, %v2677, %v2679
      %v2698 = vsel %vm2696, %v2679, %v2681
      %v2699 = vsel %vm2696, %v2681, %v2683
      %v2700 = vsel %vm2696, %v2683, %v2685
      %v2701 = vsel %vm2696, %v2685, %v2687
      %v2702 = vsel %vm2696, %v2687, %v2689
      %v2703 = vsel %vm2696, %v2689, %v2691
      %v2704 = vsel %vm2696, %v2691, %v2693
      %v2705 = vsel %vm2696, %v2693, %v2695
      %v2707 = vsel %vm269, %v2674, 0
      %v2709 = vsel %vm273, %v2697, 0
      %v2711 = vsel %vm273, %v2698, 0
      %v2713 = vsel %vm273, %v2699, 0
      %v2715 = vsel %vm273, %v2700, 0
      %v2717 = vsel %vm273, %v2701, 0
      %v2719 = vsel %vm273, %v2702, 0
      %v2721 = vsel %vm273, %v2703, 0
      %v2723 = vsel %vm273, %v2704, 0
      %v2725 = vsel %vm273, %v2705, 0
      %2727 = vmatprep.subr.mxu0 0.0
      %2728 = vmatpush1.msra.mxu0 0.0
      %2729 = vmatprep.subr.mxu0 0.0
      %2730 = vmatpush1.msra.mxu0 0.0
      %2731 = vmatprep.subr.mxu0 0.0
      %2732 = vmatpush1.msra.mxu0 0.0
      %2733 = vmatprep.subr.mxu0 0.0
      %2734 = vmatpush1.msra.mxu0 0.0
      %2735 = vmatprep.subr.mxu0 0.0
      %2736 = vmatpush1.msra.mxu0 0.0
      %2737 = vmatprep.subr.mxu0 0.0
      %2738 = vmatpush1.msra.mxu0 0.0
      %2739 = vmatprep.subr.mxu0 0.0
      %2740 = vmatpush1.msra.mxu0 0.0
      %2741 = vmatprep.subr.mxu0 0.0
      %2742 = vmatpush1.msra.mxu0 0.0
      %2743 = vmatprep.subr.mxu0 0.0
      %2744 = vmatpush1.msra.mxu0 0.0
      %2745 = vmatprep.subr.mxu0 0.0
      %2746 = vmatpush1.msra.mxu0 0.0
      %2747 = vmatprep.subr.mxu0 0.0
      %2748 = vmatpush1.msra.mxu0 0.0
      %2749 = vmatprep.subr.mxu0 0.0
      %2750 = vmatpush1.msra.mxu0 0.0
      %2751 = vmatprep.subr.mxu0 0.0
      %2752 = vmatpush1.msra.mxu0 0.0
      %2753 = vmatprep.subr.mxu0 0.0
      %2754 = vmatpush1.msra.mxu0 0.0
      %2755 = vmatprep.subr.mxu0 0.0
      %2756 = vmatpush1.msra.mxu0 0.0
      %2757 = vmatprep.subr.mxu0 %v2711
      %2758 = vmatpush1.msra.mxu0 %v2709
      %2759 = vmatprep.subr.mxu0 0.0
      %2760 = vmatpush2.msra.mxu0 0.0
      %2761 = vmatprep.subr.mxu0 0.0
      %2762 = vmatpush2.msra.mxu0 0.0
      %2763 = vmatprep.subr.mxu0 0.0
      %2764 = vmatpush2.msra.mxu0 0.0
      %2765 = vmatprep.subr.mxu0 0.0
      %2766 = vmatpush2.msra.mxu0 0.0
      %2767 = vmatprep.subr.mxu0 0.0
      %2768 = vmatpush2.msra.mxu0 0.0
      %2769 = vmatprep.subr.mxu0 0.0
      %2770 = vmatpush2.msra.mxu0 0.0
      %2771 = vmatprep.subr.mxu0 0.0
      %2772 = vmatpush2.msra.mxu0 0.0
      %2773 = vmatprep.subr.mxu0 0.0
      %2774 = vmatpush2.msra.mxu0 0.0
      %2775 = vmatprep.subr.mxu0 0.0
      %2776 = vmatpush2.msra.mxu0 0.0
      %2777 = vmatprep.subr.mxu0 0.0
      %2778 = vmatpush2.msra.mxu0 0.0
      %2779 = vmatprep.subr.mxu0 0.0
      %2780 = vmatpush2.msra.mxu0 0.0
      %2781 = vmatprep.subr.mxu0 0.0
      %2782 = vmatpush2.msra.mxu0 0.0
      %2783 = vmatprep.subr.mxu0 0.0
      %2784 = vmatpush2.msra.mxu0 0.0
      %2785 = vmatprep.subr.mxu0 0.0
      %2786 = vmatpush2.msra.mxu0 0.0
      %2787 = vmatprep.subr.mxu0 0.0
      %2788 = vmatpush2.msra.mxu0 0.0
      %2789 = vmatprep.subr.mxu0 0.0
      %2790 = vmatpush2.msra.mxu0 0.0
      %2791 = vmatprep.mubr.f32.mxu0 0.0
      %2792 = vmatmul.mubr.f32.gmra.mxu0 %v2707
      %v2793 = vpop.f32.mrf.mxu0
      %v2794 = vadd.f32 0.0, %v2793
      %v2795 = vpop.f32.mrf.mxu0
      %v2796 = vadd.f32 0.0, %v2795
      %2797 = vdwg.mxu0
      %2798 = vmatprep.subr.mxu0 0.0
      %2799 = vmatpush1.msra.mxu0 0.0
      %2800 = vmatprep.subr.mxu0 0.0
      %2801 = vmatpush1.msra.mxu0 0.0
      %2802 = vmatprep.subr.mxu0 0.0
      %2803 = vmatpush1.msra.mxu0 0.0
      %2804 = vmatprep.subr.mxu0 0.0
      %2805 = vmatpush1.msra.mxu0 0.0
      %2806 = vmatprep.subr.mxu0 0.0
      %2807 = vmatpush1.msra.mxu0 0.0
      %2808 = vmatprep.subr.mxu0 0.0
      %2809 = vmatpush1.msra.mxu0 0.0
      %2810 = vmatprep.subr.mxu0 0.0
      %2811 = vmatpush1.msra.mxu0 0.0
      %2812 = vmatprep.subr.mxu0 0.0
      %2813 = vmatpush1.msra.mxu0 0.0
      %2814 = vmatprep.subr.mxu0 0.0
      %2815 = vmatpush1.msra.mxu0 0.0
      %2816 = vmatprep.subr.mxu0 0.0
      %2817 = vmatpush1.msra.mxu0 0.0
      %2818 = vmatprep.subr.mxu0 0.0
      %2819 = vmatpush1.msra.mxu0 0.0
      %2820 = vmatprep.subr.mxu0 0.0
      %2821 = vmatpush1.msra.mxu0 0.0
      %2822 = vmatprep.subr.mxu0 0.0
      %2823 = vmatpush1.msra.mxu0 0.0
      %2824 = vmatprep.subr.mxu0 0.0
      %2825 = vmatpush1.msra.mxu0 0.0
      %2826 = vmatprep.subr.mxu0 0.0
      %2827 = vmatpush1.msra.mxu0 0.0
      %2828 = vmatprep.subr.mxu0 %v2715
      %2829 = vmatpush1.msra.mxu0 %v2713
      %2830 = vmatprep.subr.mxu0 0.0
      %2831 = vmatpush2.msra.mxu0 0.0
      %2832 = vmatprep.subr.mxu0 0.0
      %2833 = vmatpush2.msra.mxu0 0.0
      %2834 = vmatprep.subr.mxu0 0.0
      %2835 = vmatpush2.msra.mxu0 0.0
      %2836 = vmatprep.subr.mxu0 0.0
      %2837 = vmatpush2.msra.mxu0 0.0
      %2838 = vmatprep.subr.mxu0 0.0
      %2839 = vmatpush2.msra.mxu0 0.0
      %2840 = vmatprep.subr.mxu0 0.0
      %2841 = vmatpush2.msra.mxu0 0.0
      %2842 = vmatprep.subr.mxu0 0.0
      %2843 = vmatpush2.msra.mxu0 0.0
      %2844 = vmatprep.subr.mxu0 0.0
      %2845 = vmatpush2.msra.mxu0 0.0
      %2846 = vmatprep.subr.mxu0 0.0
      %2847 = vmatpush2.msra.mxu0 0.0
      %2848 = vmatprep.subr.mxu0 0.0
      %2849 = vmatpush2.msra.mxu0 0.0
      %2850 = vmatprep.subr.mxu0 0.0
      %2851 = vmatpush2.msra.mxu0 0.0
      %2852 = vmatprep.subr.mxu0 0.0
      %2853 = vmatpush2.msra.mxu0 0.0
      %2854 = vmatprep.subr.mxu0 0.0
      %2855 = vmatpush2.msra.mxu0 0.0
      %2856 = vmatprep.subr.mxu0 0.0
      %2857 = vmatpush2.msra.mxu0 0.0
      %2858 = vmatprep.subr.mxu0 0.0
      %2859 = vmatpush2.msra.mxu0 0.0
      %2860 = vmatprep.subr.mxu0 0.0
      %2861 = vmatpush2.msra.mxu0 0.0
      %2862 = vmatprep.mubr.f32.mxu0 0.0
      %2863 = vmatmul.mubr.f32.gmra.mxu0 %v2707
      %v2864 = vpop.f32.mrf.mxu0
      %v2865 = vadd.f32 0.0, %v2864
      %v2866 = vpop.f32.mrf.mxu0
      %v2867 = vadd.f32 0.0, %v2866
      %2868 = vdwg.mxu0
      %2869 = vmatprep.subr.mxu0 0.0
      %2870 = vmatpush1.msra.mxu0 0.0
      %2871 = vmatprep.subr.mxu0 0.0
      %2872 = vmatpush1.msra.mxu0 0.0
      %2873 = vmatprep.subr.mxu0 0.0
      %2874 = vmatpush1.msra.mxu0 0.0
      %2875 = vmatprep.subr.mxu0 0.0
      %2876 = vmatpush1.msra.mxu0 0.0
      %2877 = vmatprep.subr.mxu0 0.0
      %2878 = vmatpush1.msra.mxu0 0.0
      %2879 = vmatprep.subr.mxu0 0.0
      %2880 = vmatpush1.msra.mxu0 0.0
      %2881 = vmatprep.subr.mxu0 0.0
      %2882 = vmatpush1.msra.mxu0 0.0
      %2883 = vmatprep.subr.mxu0 0.0
      %2884 = vmatpush1.msra.mxu0 0.0
      %2885 = vmatprep.subr.mxu0 0.0
      %2886 = vmatpush1.msra.mxu0 0.0
      %2887 = vmatprep.subr.mxu0 0.0
      %2888 = vmatpush1.msra.mxu0 0.0
      %2889 = vmatprep.subr.mxu0 0.0
      %2890 = vmatpush1.msra.mxu0 0.0
      %2891 = vmatprep.subr.mxu0 0.0
      %2892 = vmatpush1.msra.mxu0 0.0
      %2893 = vmatprep.subr.mxu0 0.0
      %2894 = vmatpush1.msra.mxu0 0.0
      %2895 = vmatprep.subr.mxu0 0.0
      %2896 = vmatpush1.msra.mxu0 0.0
      %2897 = vmatprep.subr.mxu0 0.0
      %2898 = vmatpush1.msra.mxu0 0.0
      %2899 = vmatprep.subr.mxu0 %v2719
      %2900 = vmatpush1.msra.mxu0 %v2717
      %2901 = vmatprep.subr.mxu0 0.0
      %2902 = vmatpush2.msra.mxu0 0.0
      %2903 = vmatprep.subr.mxu0 0.0
      %2904 = vmatpush2.msra.mxu0 0.0
      %2905 = vmatprep.subr.mxu0 0.0
      %2906 = vmatpush2.msra.mxu0 0.0
      %2907 = vmatprep.subr.mxu0 0.0
      %2908 = vmatpush2.msra.mxu0 0.0
      %2909 = vmatprep.subr.mxu0 0.0
      %2910 = vmatpush2.msra.mxu0 0.0
      %2911 = vmatprep.subr.mxu0 0.0
      %2912 = vmatpush2.msra.mxu0 0.0
      %2913 = vmatprep.subr.mxu0 0.0
      %2914 = vmatpush2.msra.mxu0 0.0
      %2915 = vmatprep.subr.mxu0 0.0
      %2916 = vmatpush2.msra.mxu0 0.0
      %2917 = vmatprep.subr.mxu0 0.0
      %2918 = vmatpush2.msra.mxu0 0.0
      %2919 = vmatprep.subr.mxu0 0.0
      %2920 = vmatpush2.msra.mxu0 0.0
      %2921 = vmatprep.subr.mxu0 0.0
      %2922 = vmatpush2.msra.mxu0 0.0
      %2923 = vmatprep.subr.mxu0 0.0
      %2924 = vmatpush2.msra.mxu0 0.0
      %2925 = vmatprep.subr.mxu0 0.0
      %2926 = vmatpush2.msra.mxu0 0.0
      %2927 = vmatprep.subr.mxu0 0.0
      %2928 = vmatpush2.msra.mxu0 0.0
      %2929 = vmatprep.subr.mxu0 0.0
      %2930 = vmatpush2.msra.mxu0 0.0
      %2931 = vmatprep.subr.mxu0 0.0
      %2932 = vmatpush2.msra.mxu0 0.0
      %2933 = vmatprep.mubr.f32.mxu0 0.0
      %2934 = vmatmul.mubr.f32.gmra.mxu0 %v2707
      %v2935 = vpop.f32.mrf.mxu0
      %v2936 = vadd.f32 0.0, %v2935
      %v2937 = vpop.f32.mrf.mxu0
      %v2938 = vadd.f32 0.0, %v2937
      %2939 = vdwg.mxu0
      %2940 = vmatprep.subr.mxu0 0.0
      %2941 = vmatpush1.msra.mxu0 0.0
      %2942 = vmatprep.subr.mxu0 0.0
      %2943 = vmatpush1.msra.mxu0 0.0
      %2944 = vmatprep.subr.mxu0 0.0
      %2945 = vmatpush1.msra.mxu0 0.0
      %2946 = vmatprep.subr.mxu0 0.0
      %2947 = vmatpush1.msra.mxu0 0.0
      %2948 = vmatprep.subr.mxu0 0.0
      %2949 = vmatpush1.msra.mxu0 0.0
      %2950 = vmatprep.subr.mxu0 0.0
      %2951 = vmatpush1.msra.mxu0 0.0
      %2952 = vmatprep.subr.mxu0 0.0
      %2953 = vmatpush1.msra.mxu0 0.0
      %2954 = vmatprep.subr.mxu0 0.0
      %2955 = vmatpush1.msra.mxu0 0.0
      %2956 = vmatprep.subr.mxu0 0.0
      %2957 = vmatpush1.msra.mxu0 0.0
      %2958 = vmatprep.subr.mxu0 0.0
      %2959 = vmatpush1.msra.mxu0 0.0
      %2960 = vmatprep.subr.mxu0 0.0
      %2961 = vmatpush1.msra.mxu0 0.0
      %2962 = vmatprep.subr.mxu0 0.0
      %2963 = vmatpush1.msra.mxu0 0.0
      %2964 = vmatprep.subr.mxu0 0.0
      %2965 = vmatpush1.msra.mxu0 0.0
      %2966 = vmatprep.subr.mxu0 0.0
      %2967 = vmatpush1.msra.mxu0 0.0
      %2968 = vmatprep.subr.mxu0 0.0
      %2969 = vmatpush1.msra.mxu0 0.0
      %2970 = vmatprep.subr.mxu0 %v2723
      %2971 = vmatpush1.msra.mxu0 %v2721
      %2972 = vmatprep.subr.mxu0 0.0
      %2973 = vmatpush2.msra.mxu0 0.0
      %2974 = vmatprep.subr.mxu0 0.0
      %2975 = vmatpush2.msra.mxu0 0.0
      %2976 = vmatprep.subr.mxu0 0.0
      %2977 = vmatpush2.msra.mxu0 0.0
      %2978 = vmatprep.subr.mxu0 0.0
      %2979 = vmatpush2.msra.mxu0 0.0
      %2980 = vmatprep.subr.mxu0 0.0
      %2981 = vmatpush2.msra.mxu0 0.0
      %2982 = vmatprep.subr.mxu0 0.0
      %2983 = vmatpush2.msra.mxu0 0.0
      %2984 = vmatprep.subr.mxu0 0.0
      %2985 = vmatpush2.msra.mxu0 0.0
      %2986 = vmatprep.subr.mxu0 0.0
      %2987 = vmatpush2.msra.mxu0 0.0
      %2988 = vmatprep.subr.mxu0 0.0
      %2989 = vmatpush2.msra.mxu0 0.0
      %2990 = vmatprep.subr.mxu0 0.0
      %2991 = vmatpush2.msra.mxu0 0.0
      %2992 = vmatprep.subr.mxu0 0.0
      %2993 = vmatpush2.msra.mxu0 0.0
      %2994 = vmatprep.subr.mxu0 0.0
      %2995 = vmatpush2.msra.mxu0 0.0
      %2996 = vmatprep.subr.mxu0 0.0
      %2997 = vmatpush2.msra.mxu0 0.0
      %2998 = vmatprep.subr.mxu0 0.0
      %2999 = vmatpush2.msra.mxu0 0.0
      %3000 = vmatprep.subr.mxu0 0.0
      %3001 = vmatpush2.msra.mxu0 0.0
      %3002 = vmatprep.subr.mxu0 0.0
      %3003 = vmatpush2.msra.mxu0 0.0
      %3004 = vmatprep.mubr.f32.mxu0 0.0
      %3005 = vmatmul.mubr.f32.gmra.mxu0 %v2707
      %v3006 = vpop.f32.mrf.mxu0
      %v3007 = vadd.f32 0.0, %v3006
      %v3008 = vpop.f32.mrf.mxu0
      %v3009 = vadd.f32 0.0, %v3008
      %3010 = vdwg.mxu0
      %3011 = vmatprep.subr.mxu0 0.0
      %3012 = vmatpush1.msra.mxu0 0.0
      %3013 = vmatprep.subr.mxu0 0.0
      %3014 = vmatpush1.msra.mxu0 0.0
      %3015 = vmatprep.subr.mxu0 0.0
      %3016 = vmatpush1.msra.mxu0 0.0
      %3017 = vmatprep.subr.mxu0 0.0
      %3018 = vmatpush1.msra.mxu0 0.0
      %3019 = vmatprep.subr.mxu0 0.0
      %3020 = vmatpush1.msra.mxu0 0.0
      %3021 = vmatprep.subr.mxu0 0.0
      %3022 = vmatpush1.msra.mxu0 0.0
      %3023 = vmatprep.subr.mxu0 0.0
      %3024 = vmatpush1.msra.mxu0 0.0
      %3025 = vmatprep.subr.mxu0 0.0
      %3026 = vmatpush1.msra.mxu0 0.0
      %3027 = vmatprep.subr.mxu0 0.0
      %3028 = vmatpush1.msra.mxu0 0.0
      %3029 = vmatprep.subr.mxu0 0.0
      %3030 = vmatpush1.msra.mxu0 0.0
      %3031 = vmatprep.subr.mxu0 0.0
      %3032 = vmatpush1.msra.mxu0 0.0
      %3033 = vmatprep.subr.mxu0 0.0
      %3034 = vmatpush1.msra.mxu0 0.0
      %3035 = vmatprep.subr.mxu0 0.0
      %3036 = vmatpush1.msra.mxu0 0.0
      %3037 = vmatprep.subr.mxu0 0.0
      %3038 = vmatpush1.msra.mxu0 0.0
      %3039 = vmatprep.subr.mxu0 0.0
      %3040 = vmatpush1.msra.mxu0 0.0
      %3041 = vmatprep.subr.mxu0 0.0
      %3042 = vmatpush1.msra.mxu0 %v2725
      %3043 = vmatprep.subr.mxu0 0.0
      %3044 = vmatpush2.msra.mxu0 0.0
      %3045 = vmatprep.subr.mxu0 0.0
      %3046 = vmatpush2.msra.mxu0 0.0
      %3047 = vmatprep.subr.mxu0 0.0
      %3048 = vmatpush2.msra.mxu0 0.0
      %3049 = vmatprep.subr.mxu0 0.0
      %3050 = vmatpush2.msra.mxu0 0.0
      %3051 = vmatprep.subr.mxu0 0.0
      %3052 = vmatpush2.msra.mxu0 0.0
      %3053 = vmatprep.subr.mxu0 0.0
      %3054 = vmatpush2.msra.mxu0 0.0
      %3055 = vmatprep.subr.mxu0 0.0
      %3056 = vmatpush2.msra.mxu0 0.0
      %3057 = vmatprep.subr.mxu0 0.0
      %3058 = vmatpush2.msra.mxu0 0.0
      %3059 = vmatprep.subr.mxu0 0.0
      %3060 = vmatpush2.msra.mxu0 0.0
      %3061 = vmatprep.subr.mxu0 0.0
      %3062 = vmatpush2.msra.mxu0 0.0
      %3063 = vmatprep.subr.mxu0 0.0
      %3064 = vmatpush2.msra.mxu0 0.0
      %3065 = vmatprep.subr.mxu0 0.0
      %3066 = vmatpush2.msra.mxu0 0.0
      %3067 = vmatprep.subr.mxu0 0.0
      %3068 = vmatpush2.msra.mxu0 0.0
      %3069 = vmatprep.subr.mxu0 0.0
      %3070 = vmatpush2.msra.mxu0 0.0
      %3071 = vmatprep.subr.mxu0 0.0
      %3072 = vmatpush2.msra.mxu0 0.0
      %3073 = vmatprep.subr.mxu0 0.0
      %3074 = vmatpush2.msra.mxu0 0.0
      %3075 = vmatprep.mubr.f32.mxu0 0.0
      %3076 = vmatmul.mubr.f32.gmra.mxu0 %v2707
      %v3077 = vpop.f32.mrf.mxu0
      %v3078 = vadd.f32 0.0, %v3077
      %v3079 = vpop.f32.mrf.mxu0
      %3080 = vdwg.mxu0
      %v3081 = vadd.f32 %v2664, %v2794
      %v3082 = vadd.f32 %v2665, %v2796
      %v3083 = vadd.f32 %v2666, %v2865
      %v3084 = vadd.f32 %v2667, %v2867
      %v3085 = vadd.f32 %v2668, %v2936
      %v3086 = vadd.f32 %v2669, %v2938
      %v3087 = vadd.f32 %v2670, %v3007
      %v3088 = vadd.f32 %v2671, %v3009
      %v3089 = vadd.f32 %v2672, %v3078
      %s3090 = scalar_lea.vmem %s1, 56
      %v3091 = vld [vmem:[%s3090] sm:$0xff]
      %3092 = vrot.lane.b32.xlu0 %v225, 59
      %v3093 = vpop.permute.xlu0 %3092
      %3094 = vrot.lane.b32.xlu0 %v238, 59
      %v3095 = vpop.permute.xlu0 %3094
      %3096 = vrot.lane.b32.xlu0 %v226, 59
      %v3097 = vpop.permute.xlu0 %3096
      %3098 = vrot.lane.b32.xlu0 %v239, 59
      %v3099 = vpop.permute.xlu0 %3098
      %3100 = vrot.lane.b32.xlu0 %v227, 59
      %v3101 = vpop.permute.xlu0 %3100
      %3102 = vrot.lane.b32.xlu0 %v240, 59
      %v3103 = vpop.permute.xlu0 %3102
      %3104 = vrot.lane.b32.xlu0 %v228, 59
      %v3105 = vpop.permute.xlu0 %3104
      %3106 = vrot.lane.b32.xlu0 %v241, 59
      %v3107 = vpop.permute.xlu0 %3106
      %3108 = vrot.lane.b32.xlu0 %v229, 59
      %v3109 = vpop.permute.xlu0 %3108
      %3110 = vrot.lane.b32.xlu0 %v2675, 59
      %v3111 = vpop.permute.xlu0 %3110
      %vm3112 = vcmask 482304
      %v3113 = vsel %vm3112, %v3093, %v3095
      %v3114 = vsel %vm3112, %v3095, %v3097
      %v3115 = vsel %vm3112, %v3097, %v3099
      %v3116 = vsel %vm3112, %v3099, %v3101
      %v3117 = vsel %vm3112, %v3101, %v3103
      %v3118 = vsel %vm3112, %v3103, %v3105
      %v3119 = vsel %vm3112, %v3105, %v3107
      %v3120 = vsel %vm3112, %v3107, %v3109
      %v3121 = vsel %vm3112, %v3109, %v3111
      %v3123 = vsel %vm269, %v3091, 0
      %v3125 = vsel %vm273, %v3113, 0
      %v3127 = vsel %vm273, %v3114, 0
      %v3129 = vsel %vm273, %v3115, 0
      %v3131 = vsel %vm273, %v3116, 0
      %v3133 = vsel %vm273, %v3117, 0
      %v3135 = vsel %vm273, %v3118, 0
      %v3137 = vsel %vm273, %v3119, 0
      %v3139 = vsel %vm273, %v3120, 0
      %v3141 = vsel %vm273, %v3121, 0
      %3143 = vmatprep.subr.mxu0 0.0
      %3144 = vmatpush1.msra.mxu0 0.0
      %3145 = vmatprep.subr.mxu0 0.0
      %3146 = vmatpush1.msra.mxu0 0.0
      %3147 = vmatprep.subr.mxu0 0.0
      %3148 = vmatpush1.msra.mxu0 0.0
      %3149 = vmatprep.subr.mxu0 0.0
      %3150 = vmatpush1.msra.mxu0 0.0
      %3151 = vmatprep.subr.mxu0 0.0
      %3152 = vmatpush1.msra.mxu0 0.0
      %3153 = vmatprep.subr.mxu0 0.0
      %3154 = vmatpush1.msra.mxu0 0.0
      %3155 = vmatprep.subr.mxu0 0.0
      %3156 = vmatpush1.msra.mxu0 0.0
      %3157 = vmatprep.subr.mxu0 0.0
      %3158 = vmatpush1.msra.mxu0 0.0
      %3159 = vmatprep.subr.mxu0 0.0
      %3160 = vmatpush1.msra.mxu0 0.0
      %3161 = vmatprep.subr.mxu0 0.0
      %3162 = vmatpush1.msra.mxu0 0.0
      %3163 = vmatprep.subr.mxu0 0.0
      %3164 = vmatpush1.msra.mxu0 0.0
      %3165 = vmatprep.subr.mxu0 0.0
      %3166 = vmatpush1.msra.mxu0 0.0
      %3167 = vmatprep.subr.mxu0 0.0
      %3168 = vmatpush1.msra.mxu0 0.0
      %3169 = vmatprep.subr.mxu0 0.0
      %3170 = vmatpush1.msra.mxu0 0.0
      %3171 = vmatprep.subr.mxu0 0.0
      %3172 = vmatpush1.msra.mxu0 0.0
      %3173 = vmatprep.subr.mxu0 %v3127
      %3174 = vmatpush1.msra.mxu0 %v3125
      %3175 = vmatprep.subr.mxu0 0.0
      %3176 = vmatpush2.msra.mxu0 0.0
      %3177 = vmatprep.subr.mxu0 0.0
      %3178 = vmatpush2.msra.mxu0 0.0
      %3179 = vmatprep.subr.mxu0 0.0
      %3180 = vmatpush2.msra.mxu0 0.0
      %3181 = vmatprep.subr.mxu0 0.0
      %3182 = vmatpush2.msra.mxu0 0.0
      %3183 = vmatprep.subr.mxu0 0.0
      %3184 = vmatpush2.msra.mxu0 0.0
      %3185 = vmatprep.subr.mxu0 0.0
      %3186 = vmatpush2.msra.mxu0 0.0
      %3187 = vmatprep.subr.mxu0 0.0
      %3188 = vmatpush2.msra.mxu0 0.0
      %3189 = vmatprep.subr.mxu0 0.0
      %3190 = vmatpush2.msra.mxu0 0.0
      %3191 = vmatprep.subr.mxu0 0.0
      %3192 = vmatpush2.msra.mxu0 0.0
      %3193 = vmatprep.subr.mxu0 0.0
      %3194 = vmatpush2.msra.mxu0 0.0
      %3195 = vmatprep.subr.mxu0 0.0
      %3196 = vmatpush2.msra.mxu0 0.0
      %3197 = vmatprep.subr.mxu0 0.0
      %3198 = vmatpush2.msra.mxu0 0.0
      %3199 = vmatprep.subr.mxu0 0.0
      %3200 = vmatpush2.msra.mxu0 0.0
      %3201 = vmatprep.subr.mxu0 0.0
      %3202 = vmatpush2.msra.mxu0 0.0
      %3203 = vmatprep.subr.mxu0 0.0
      %3204 = vmatpush2.msra.mxu0 0.0
      %3205 = vmatprep.subr.mxu0 0.0
      %3206 = vmatpush2.msra.mxu0 0.0
      %3207 = vmatprep.mubr.f32.mxu0 0.0
      %3208 = vmatmul.mubr.f32.gmra.mxu0 %v3123
      %v3209 = vpop.f32.mrf.mxu0
      %v3210 = vadd.f32 0.0, %v3209
      %v3211 = vpop.f32.mrf.mxu0
      %v3212 = vadd.f32 0.0, %v3211
      %3213 = vdwg.mxu0
      %3214 = vmatprep.subr.mxu0 0.0
      %3215 = vmatpush1.msra.mxu0 0.0
      %3216 = vmatprep.subr.mxu0 0.0
      %3217 = vmatpush1.msra.mxu0 0.0
      %3218 = vmatprep.subr.mxu0 0.0
      %3219 = vmatpush1.msra.mxu0 0.0
      %3220 = vmatprep.subr.mxu0 0.0
      %3221 = vmatpush1.msra.mxu0 0.0
      %3222 = vmatprep.subr.mxu0 0.0
      %3223 = vmatpush1.msra.mxu0 0.0
      %3224 = vmatprep.subr.mxu0 0.0
      %3225 = vmatpush1.msra.mxu0 0.0
      %3226 = vmatprep.subr.mxu0 0.0
      %3227 = vmatpush1.msra.mxu0 0.0
      %3228 = vmatprep.subr.mxu0 0.0
      %3229 = vmatpush1.msra.mxu0 0.0
      %3230 = vmatprep.subr.mxu0 0.0
      %3231 = vmatpush1.msra.mxu0 0.0
      %3232 = vmatprep.subr.mxu0 0.0
      %3233 = vmatpush1.msra.mxu0 0.0
      %3234 = vmatprep.subr.mxu0 0.0
      %3235 = vmatpush1.msra.mxu0 0.0
      %3236 = vmatprep.subr.mxu0 0.0
      %3237 = vmatpush1.msra.mxu0 0.0
      %3238 = vmatprep.subr.mxu0 0.0
      %3239 = vmatpush1.msra.mxu0 0.0
      %3240 = vmatprep.subr.mxu0 0.0
      %3241 = vmatpush1.msra.mxu0 0.0
      %3242 = vmatprep.subr.mxu0 0.0
      %3243 = vmatpush1.msra.mxu0 0.0
      %3244 = vmatprep.subr.mxu0 %v3131
      %3245 = vmatpush1.msra.mxu0 %v3129
      %3246 = vmatprep.subr.mxu0 0.0
      %3247 = vmatpush2.msra.mxu0 0.0
      %3248 = vmatprep.subr.mxu0 0.0
      %3249 = vmatpush2.msra.mxu0 0.0
      %3250 = vmatprep.subr.mxu0 0.0
      %3251 = vmatpush2.msra.mxu0 0.0
      %3252 = vmatprep.subr.mxu0 0.0
      %3253 = vmatpush2.msra.mxu0 0.0
      %3254 = vmatprep.subr.mxu0 0.0
      %3255 = vmatpush2.msra.mxu0 0.0
      %3256 = vmatprep.subr.mxu0 0.0
      %3257 = vmatpush2.msra.mxu0 0.0
      %3258 = vmatprep.subr.mxu0 0.0
      %3259 = vmatpush2.msra.mxu0 0.0
      %3260 = vmatprep.subr.mxu0 0.0
      %3261 = vmatpush2.msra.mxu0 0.0
      %3262 = vmatprep.subr.mxu0 0.0
      %3263 = vmatpush2.msra.mxu0 0.0
      %3264 = vmatprep.subr.mxu0 0.0
      %3265 = vmatpush2.msra.mxu0 0.0
      %3266 = vmatprep.subr.mxu0 0.0
      %3267 = vmatpush2.msra.mxu0 0.0
      %3268 = vmatprep.subr.mxu0 0.0
      %3269 = vmatpush2.msra.mxu0 0.0
      %3270 = vmatprep.subr.mxu0 0.0
      %3271 = vmatpush2.msra.mxu0 0.0
      %3272 = vmatprep.subr.mxu0 0.0
      %3273 = vmatpush2.msra.mxu0 0.0
      %3274 = vmatprep.subr.mxu0 0.0
      %3275 = vmatpush2.msra.mxu0 0.0
      %3276 = vmatprep.subr.mxu0 0.0
      %3277 = vmatpush2.msra.mxu0 0.0
      %3278 = vmatprep.mubr.f32.mxu0 0.0
      %3279 = vmatmul.mubr.f32.gmra.mxu0 %v3123
      %v3280 = vpop.f32.mrf.mxu0
      %v3281 = vadd.f32 0.0, %v3280
      %v3282 = vpop.f32.mrf.mxu0
      %v3283 = vadd.f32 0.0, %v3282
      %3284 = vdwg.mxu0
      %3285 = vmatprep.subr.mxu0 0.0
      %3286 = vmatpush1.msra.mxu0 0.0
      %3287 = vmatprep.subr.mxu0 0.0
      %3288 = vmatpush1.msra.mxu0 0.0
      %3289 = vmatprep.subr.mxu0 0.0
      %3290 = vmatpush1.msra.mxu0 0.0
      %3291 = vmatprep.subr.mxu0 0.0
      %3292 = vmatpush1.msra.mxu0 0.0
      %3293 = vmatprep.subr.mxu0 0.0
      %3294 = vmatpush1.msra.mxu0 0.0
      %3295 = vmatprep.subr.mxu0 0.0
      %3296 = vmatpush1.msra.mxu0 0.0
      %3297 = vmatprep.subr.mxu0 0.0
      %3298 = vmatpush1.msra.mxu0 0.0
      %3299 = vmatprep.subr.mxu0 0.0
      %3300 = vmatpush1.msra.mxu0 0.0
      %3301 = vmatprep.subr.mxu0 0.0
      %3302 = vmatpush1.msra.mxu0 0.0
      %3303 = vmatprep.subr.mxu0 0.0
      %3304 = vmatpush1.msra.mxu0 0.0
      %3305 = vmatprep.subr.mxu0 0.0
      %3306 = vmatpush1.msra.mxu0 0.0
      %3307 = vmatprep.subr.mxu0 0.0
      %3308 = vmatpush1.msra.mxu0 0.0
      %3309 = vmatprep.subr.mxu0 0.0
      %3310 = vmatpush1.msra.mxu0 0.0
      %3311 = vmatprep.subr.mxu0 0.0
      %3312 = vmatpush1.msra.mxu0 0.0
      %3313 = vmatprep.subr.mxu0 0.0
      %3314 = vmatpush1.msra.mxu0 0.0
      %3315 = vmatprep.subr.mxu0 %v3135
      %3316 = vmatpush1.msra.mxu0 %v3133
      %3317 = vmatprep.subr.mxu0 0.0
      %3318 = vmatpush2.msra.mxu0 0.0
      %3319 = vmatprep.subr.mxu0 0.0
      %3320 = vmatpush2.msra.mxu0 0.0
      %3321 = vmatprep.subr.mxu0 0.0
      %3322 = vmatpush2.msra.mxu0 0.0
      %3323 = vmatprep.subr.mxu0 0.0
      %3324 = vmatpush2.msra.mxu0 0.0
      %3325 = vmatprep.subr.mxu0 0.0
      %3326 = vmatpush2.msra.mxu0 0.0
      %3327 = vmatprep.subr.mxu0 0.0
      %3328 = vmatpush2.msra.mxu0 0.0
      %3329 = vmatprep.subr.mxu0 0.0
      %3330 = vmatpush2.msra.mxu0 0.0
      %3331 = vmatprep.subr.mxu0 0.0
      %3332 = vmatpush2.msra.mxu0 0.0
      %3333 = vmatprep.subr.mxu0 0.0
      %3334 = vmatpush2.msra.mxu0 0.0
      %3335 = vmatprep.subr.mxu0 0.0
      %3336 = vmatpush2.msra.mxu0 0.0
      %3337 = vmatprep.subr.mxu0 0.0
      %3338 = vmatpush2.msra.mxu0 0.0
      %3339 = vmatprep.subr.mxu0 0.0
      %3340 = vmatpush2.msra.mxu0 0.0
      %3341 = vmatprep.subr.mxu0 0.0
      %3342 = vmatpush2.msra.mxu0 0.0
      %3343 = vmatprep.subr.mxu0 0.0
      %3344 = vmatpush2.msra.mxu0 0.0
      %3345 = vmatprep.subr.mxu0 0.0
      %3346 = vmatpush2.msra.mxu0 0.0
      %3347 = vmatprep.subr.mxu0 0.0
      %3348 = vmatpush2.msra.mxu0 0.0
      %3349 = vmatprep.mubr.f32.mxu0 0.0
      %3350 = vmatmul.mubr.f32.gmra.mxu0 %v3123
      %v3351 = vpop.f32.mrf.mxu0
      %v3352 = vadd.f32 0.0, %v3351
      %v3353 = vpop.f32.mrf.mxu0
      %v3354 = vadd.f32 0.0, %v3353
      %3355 = vdwg.mxu0
      %3356 = vmatprep.subr.mxu0 0.0
      %3357 = vmatpush1.msra.mxu0 0.0
      %3358 = vmatprep.subr.mxu0 0.0
      %3359 = vmatpush1.msra.mxu0 0.0
      %3360 = vmatprep.subr.mxu0 0.0
      %3361 = vmatpush1.msra.mxu0 0.0
      %3362 = vmatprep.subr.mxu0 0.0
      %3363 = vmatpush1.msra.mxu0 0.0
      %3364 = vmatprep.subr.mxu0 0.0
      %3365 = vmatpush1.msra.mxu0 0.0
      %3366 = vmatprep.subr.mxu0 0.0
      %3367 = vmatpush1.msra.mxu0 0.0
      %3368 = vmatprep.subr.mxu0 0.0
      %3369 = vmatpush1.msra.mxu0 0.0
      %3370 = vmatprep.subr.mxu0 0.0
      %3371 = vmatpush1.msra.mxu0 0.0
      %3372 = vmatprep.subr.mxu0 0.0
      %3373 = vmatpush1.msra.mxu0 0.0
      %3374 = vmatprep.subr.mxu0 0.0
      %3375 = vmatpush1.msra.mxu0 0.0
      %3376 = vmatprep.subr.mxu0 0.0
      %3377 = vmatpush1.msra.mxu0 0.0
      %3378 = vmatprep.subr.mxu0 0.0
      %3379 = vmatpush1.msra.mxu0 0.0
      %3380 = vmatprep.subr.mxu0 0.0
      %3381 = vmatpush1.msra.mxu0 0.0
      %3382 = vmatprep.subr.mxu0 0.0
      %3383 = vmatpush1.msra.mxu0 0.0
      %3384 = vmatprep.subr.mxu0 0.0
      %3385 = vmatpush1.msra.mxu0 0.0
      %3386 = vmatprep.subr.mxu0 %v3139
      %3387 = vmatpush1.msra.mxu0 %v3137
      %3388 = vmatprep.subr.mxu0 0.0
      %3389 = vmatpush2.msra.mxu0 0.0
      %3390 = vmatprep.subr.mxu0 0.0
      %3391 = vmatpush2.msra.mxu0 0.0
      %3392 = vmatprep.subr.mxu0 0.0
      %3393 = vmatpush2.msra.mxu0 0.0
      %3394 = vmatprep.subr.mxu0 0.0
      %3395 = vmatpush2.msra.mxu0 0.0
      %3396 = vmatprep.subr.mxu0 0.0
      %3397 = vmatpush2.msra.mxu0 0.0
      %3398 = vmatprep.subr.mxu0 0.0
      %3399 = vmatpush2.msra.mxu0 0.0
      %3400 = vmatprep.subr.mxu0 0.0
      %3401 = vmatpush2.msra.mxu0 0.0
      %3402 = vmatprep.subr.mxu0 0.0
      %3403 = vmatpush2.msra.mxu0 0.0
      %3404 = vmatprep.subr.mxu0 0.0
      %3405 = vmatpush2.msra.mxu0 0.0
      %3406 = vmatprep.subr.mxu0 0.0
      %3407 = vmatpush2.msra.mxu0 0.0
      %3408 = vmatprep.subr.mxu0 0.0
      %3409 = vmatpush2.msra.mxu0 0.0
      %3410 = vmatprep.subr.mxu0 0.0
      %3411 = vmatpush2.msra.mxu0 0.0
      %3412 = vmatprep.subr.mxu0 0.0
      %3413 = vmatpush2.msra.mxu0 0.0
      %3414 = vmatprep.subr.mxu0 0.0
      %3415 = vmatpush2.msra.mxu0 0.0
      %3416 = vmatprep.subr.mxu0 0.0
      %3417 = vmatpush2.msra.mxu0 0.0
      %3418 = vmatprep.subr.mxu0 0.0
      %3419 = vmatpush2.msra.mxu0 0.0
      %3420 = vmatprep.mubr.f32.mxu0 0.0
      %3421 = vmatmul.mubr.f32.gmra.mxu0 %v3123
      %v3422 = vpop.f32.mrf.mxu0
      %v3423 = vadd.f32 0.0, %v3422
      %v3424 = vpop.f32.mrf.mxu0
      %v3425 = vadd.f32 0.0, %v3424
      %3426 = vdwg.mxu0
      %3427 = vmatprep.subr.mxu0 0.0
      %3428 = vmatpush1.msra.mxu0 0.0
      %3429 = vmatprep.subr.mxu0 0.0
      %3430 = vmatpush1.msra.mxu0 0.0
      %3431 = vmatprep.subr.mxu0 0.0
      %3432 = vmatpush1.msra.mxu0 0.0
      %3433 = vmatprep.subr.mxu0 0.0
      %3434 = vmatpush1.msra.mxu0 0.0
      %3435 = vmatprep.subr.mxu0 0.0
      %3436 = vmatpush1.msra.mxu0 0.0
      %3437 = vmatprep.subr.mxu0 0.0
      %3438 = vmatpush1.msra.mxu0 0.0
      %3439 = vmatprep.subr.mxu0 0.0
      %3440 = vmatpush1.msra.mxu0 0.0
      %3441 = vmatprep.subr.mxu0 0.0
      %3442 = vmatpush1.msra.mxu0 0.0
      %3443 = vmatprep.subr.mxu0 0.0
      %3444 = vmatpush1.msra.mxu0 0.0
      %3445 = vmatprep.subr.mxu0 0.0
      %3446 = vmatpush1.msra.mxu0 0.0
      %3447 = vmatprep.subr.mxu0 0.0
      %3448 = vmatpush1.msra.mxu0 0.0
      %3449 = vmatprep.subr.mxu0 0.0
      %3450 = vmatpush1.msra.mxu0 0.0
      %3451 = vmatprep.subr.mxu0 0.0
      %3452 = vmatpush1.msra.mxu0 0.0
      %3453 = vmatprep.subr.mxu0 0.0
      %3454 = vmatpush1.msra.mxu0 0.0
      %3455 = vmatprep.subr.mxu0 0.0
      %3456 = vmatpush1.msra.mxu0 0.0
      %3457 = vmatprep.subr.mxu0 0.0
      %3458 = vmatpush1.msra.mxu0 %v3141
      %3459 = vmatprep.subr.mxu0 0.0
      %3460 = vmatpush2.msra.mxu0 0.0
      %3461 = vmatprep.subr.mxu0 0.0
      %3462 = vmatpush2.msra.mxu0 0.0
      %3463 = vmatprep.subr.mxu0 0.0
      %3464 = vmatpush2.msra.mxu0 0.0
      %3465 = vmatprep.subr.mxu0 0.0
      %3466 = vmatpush2.msra.mxu0 0.0
      %3467 = vmatprep.subr.mxu0 0.0
      %3468 = vmatpush2.msra.mxu0 0.0
      %3469 = vmatprep.subr.mxu0 0.0
      %3470 = vmatpush2.msra.mxu0 0.0
      %3471 = vmatprep.subr.mxu0 0.0
      %3472 = vmatpush2.msra.mxu0 0.0
      %3473 = vmatprep.subr.mxu0 0.0
      %3474 = vmatpush2.msra.mxu0 0.0
      %3475 = vmatprep.subr.mxu0 0.0
      %3476 = vmatpush2.msra.mxu0 0.0
      %3477 = vmatprep.subr.mxu0 0.0
      %3478 = vmatpush2.msra.mxu0 0.0
      %3479 = vmatprep.subr.mxu0 0.0
      %3480 = vmatpush2.msra.mxu0 0.0
      %3481 = vmatprep.subr.mxu0 0.0
      %3482 = vmatpush2.msra.mxu0 0.0
      %3483 = vmatprep.subr.mxu0 0.0
      %3484 = vmatpush2.msra.mxu0 0.0
      %3485 = vmatprep.subr.mxu0 0.0
      %3486 = vmatpush2.msra.mxu0 0.0
      %3487 = vmatprep.subr.mxu0 0.0
      %3488 = vmatpush2.msra.mxu0 0.0
      %3489 = vmatprep.subr.mxu0 0.0
      %3490 = vmatpush2.msra.mxu0 0.0
      %3491 = vmatprep.mubr.f32.mxu0 0.0
      %3492 = vmatmul.mubr.f32.gmra.mxu0 %v3123
      %v3493 = vpop.f32.mrf.mxu0
      %v3494 = vadd.f32 0.0, %v3493
      %v3495 = vpop.f32.mrf.mxu0
      %3496 = vdwg.mxu0
      %v3497 = vadd.f32 %v3081, %v3210
      %v3498 = vadd.f32 %v3082, %v3212
      %v3499 = vadd.f32 %v3083, %v3281
      %v3500 = vadd.f32 %v3084, %v3283
      %v3501 = vadd.f32 %v3085, %v3352
      %v3502 = vadd.f32 %v3086, %v3354
      %v3503 = vadd.f32 %v3087, %v3423
      %v3504 = vadd.f32 %v3088, %v3425
      %v3505 = vadd.f32 %v3089, %v3494
      %s3506 = scalar_lea.vmem %s1, 64
      %v3507 = vld [vmem:[%s3506] sm:$0xff]
      %3508 = vrot.lane.b32.xlu0 %v225, 58
      %v3509 = vpop.permute.xlu0 %3508
      %3510 = vrot.lane.b32.xlu0 %v238, 58
      %v3511 = vpop.permute.xlu0 %3510
      %3512 = vrot.lane.b32.xlu0 %v226, 58
      %v3513 = vpop.permute.xlu0 %3512
      %3514 = vrot.lane.b32.xlu0 %v239, 58
      %v3515 = vpop.permute.xlu0 %3514
      %3516 = vrot.lane.b32.xlu0 %v227, 58
      %v3517 = vpop.permute.xlu0 %3516
      %3518 = vrot.lane.b32.xlu0 %v240, 58
      %v3519 = vpop.permute.xlu0 %3518
      %3520 = vrot.lane.b32.xlu0 %v228, 58
      %v3521 = vpop.permute.xlu0 %3520
      %3522 = vrot.lane.b32.xlu0 %v241, 58
      %v3523 = vpop.permute.xlu0 %3522
      %3524 = vrot.lane.b32.xlu0 %v229, 58
      %v3525 = vpop.permute.xlu0 %3524
      %3526 = vrot.lane.b32.xlu0 %v2675, 58
      %v3527 = vpop.permute.xlu0 %3526
      %vm3528 = vcmask 474112
      %v3529 = vsel %vm3528, %v3509, %v3511
      %v3530 = vsel %vm3528, %v3511, %v3513
      %v3531 = vsel %vm3528, %v3513, %v3515
      %v3532 = vsel %vm3528, %v3515, %v3517
      %v3533 = vsel %vm3528, %v3517, %v3519
      %v3534 = vsel %vm3528, %v3519, %v3521
      %v3535 = vsel %vm3528, %v3521, %v3523
      %v3536 = vsel %vm3528, %v3523, %v3525
      %v3537 = vsel %vm3528, %v3525, %v3527
      %v3539 = vsel %vm269, %v3507, 0
      %v3541 = vsel %vm273, %v3529, 0
      %v3543 = vsel %vm273, %v3530, 0
      %v3545 = vsel %vm273, %v3531, 0
      %v3547 = vsel %vm273, %v3532, 0
      %v3549 = vsel %vm273, %v3533, 0
      %v3551 = vsel %vm273, %v3534, 0
      %v3553 = vsel %vm273, %v3535, 0
      %v3555 = vsel %vm273, %v3536, 0
      %v3557 = vsel %vm273, %v3537, 0
      %3559 = vmatprep.subr.mxu0 0.0
      %3560 = vmatpush1.msra.mxu0 0.0
      %3561 = vmatprep.subr.mxu0 0.0
      %3562 = vmatpush1.msra.mxu0 0.0
      %3563 = vmatprep.subr.mxu0 0.0
      %3564 = vmatpush1.msra.mxu0 0.0
      %3565 = vmatprep.subr.mxu0 0.0
      %3566 = vmatpush1.msra.mxu0 0.0
      %3567 = vmatprep.subr.mxu0 0.0
      %3568 = vmatpush1.msra.mxu0 0.0
      %3569 = vmatprep.subr.mxu0 0.0
      %3570 = vmatpush1.msra.mxu0 0.0
      %3571 = vmatprep.subr.mxu0 0.0
      %3572 = vmatpush1.msra.mxu0 0.0
      %3573 = vmatprep.subr.mxu0 0.0
      %3574 = vmatpush1.msra.mxu0 0.0
      %3575 = vmatprep.subr.mxu0 0.0
      %3576 = vmatpush1.msra.mxu0 0.0
      %3577 = vmatprep.subr.mxu0 0.0
      %3578 = vmatpush1.msra.mxu0 0.0
      %3579 = vmatprep.subr.mxu0 0.0
      %3580 = vmatpush1.msra.mxu0 0.0
      %3581 = vmatprep.subr.mxu0 0.0
      %3582 = vmatpush1.msra.mxu0 0.0
      %3583 = vmatprep.subr.mxu0 0.0
      %3584 = vmatpush1.msra.mxu0 0.0
      %3585 = vmatprep.subr.mxu0 0.0
      %3586 = vmatpush1.msra.mxu0 0.0
      %3587 = vmatprep.subr.mxu0 0.0
      %3588 = vmatpush1.msra.mxu0 0.0
      %3589 = vmatprep.subr.mxu0 %v3543
      %3590 = vmatpush1.msra.mxu0 %v3541
      %3591 = vmatprep.subr.mxu0 0.0
      %3592 = vmatpush2.msra.mxu0 0.0
      %3593 = vmatprep.subr.mxu0 0.0
      %3594 = vmatpush2.msra.mxu0 0.0
      %3595 = vmatprep.subr.mxu0 0.0
      %3596 = vmatpush2.msra.mxu0 0.0
      %3597 = vmatprep.subr.mxu0 0.0
      %3598 = vmatpush2.msra.mxu0 0.0
      %3599 = vmatprep.subr.mxu0 0.0
      %3600 = vmatpush2.msra.mxu0 0.0
      %3601 = vmatprep.subr.mxu0 0.0
      %3602 = vmatpush2.msra.mxu0 0.0
      %3603 = vmatprep.subr.mxu0 0.0
      %3604 = vmatpush2.msra.mxu0 0.0
      %3605 = vmatprep.subr.mxu0 0.0
      %3606 = vmatpush2.msra.mxu0 0.0
      %3607 = vmatprep.subr.mxu0 0.0
      %3608 = vmatpush2.msra.mxu0 0.0
      %3609 = vmatprep.subr.mxu0 0.0
      %3610 = vmatpush2.msra.mxu0 0.0
      %3611 = vmatprep.subr.mxu0 0.0
      %3612 = vmatpush2.msra.mxu0 0.0
      %3613 = vmatprep.subr.mxu0 0.0
      %3614 = vmatpush2.msra.mxu0 0.0
      %3615 = vmatprep.subr.mxu0 0.0
      %3616 = vmatpush2.msra.mxu0 0.0
      %3617 = vmatprep.subr.mxu0 0.0
      %3618 = vmatpush2.msra.mxu0 0.0
      %3619 = vmatprep.subr.mxu0 0.0
      %3620 = vmatpush2.msra.mxu0 0.0
      %3621 = vmatprep.subr.mxu0 0.0
      %3622 = vmatpush2.msra.mxu0 0.0
      %3623 = vmatprep.mubr.f32.mxu0 0.0
      %3624 = vmatmul.mubr.f32.gmra.mxu0 %v3539
      %v3625 = vpop.f32.mrf.mxu0
      %v3626 = vadd.f32 0.0, %v3625
      %v3627 = vpop.f32.mrf.mxu0
      %v3628 = vadd.f32 0.0, %v3627
      %3629 = vdwg.mxu0
      %3630 = vmatprep.subr.mxu0 0.0
      %3631 = vmatpush1.msra.mxu0 0.0
      %3632 = vmatprep.subr.mxu0 0.0
      %3633 = vmatpush1.msra.mxu0 0.0
      %3634 = vmatprep.subr.mxu0 0.0
      %3635 = vmatpush1.msra.mxu0 0.0
      %3636 = vmatprep.subr.mxu0 0.0
      %3637 = vmatpush1.msra.mxu0 0.0
      %3638 = vmatprep.subr.mxu0 0.0
      %3639 = vmatpush1.msra.mxu0 0.0
      %3640 = vmatprep.subr.mxu0 0.0
      %3641 = vmatpush1.msra.mxu0 0.0
      %3642 = vmatprep.subr.mxu0 0.0
      %3643 = vmatpush1.msra.mxu0 0.0
      %3644 = vmatprep.subr.mxu0 0.0
      %3645 = vmatpush1.msra.mxu0 0.0
      %3646 = vmatprep.subr.mxu0 0.0
      %3647 = vmatpush1.msra.mxu0 0.0
      %3648 = vmatprep.subr.mxu0 0.0
      %3649 = vmatpush1.msra.mxu0 0.0
      %3650 = vmatprep.subr.mxu0 0.0
      %3651 = vmatpush1.msra.mxu0 0.0
      %3652 = vmatprep.subr.mxu0 0.0
      %3653 = vmatpush1.msra.mxu0 0.0
      %3654 = vmatprep.subr.mxu0 0.0
      %3655 = vmatpush1.msra.mxu0 0.0
      %3656 = vmatprep.subr.mxu0 0.0
      %3657 = vmatpush1.msra.mxu0 0.0
      %3658 = vmatprep.subr.mxu0 0.0
      %3659 = vmatpush1.msra.mxu0 0.0
      %3660 = vmatprep.subr.mxu0 %v3547
      %3661 = vmatpush1.msra.mxu0 %v3545
      %3662 = vmatprep.subr.mxu0 0.0
      %3663 = vmatpush2.msra.mxu0 0.0
      %3664 = vmatprep.subr.mxu0 0.0
      %3665 = vmatpush2.msra.mxu0 0.0
      %3666 = vmatprep.subr.mxu0 0.0
      %3667 = vmatpush2.msra.mxu0 0.0
      %3668 = vmatprep.subr.mxu0 0.0
      %3669 = vmatpush2.msra.mxu0 0.0
      %3670 = vmatprep.subr.mxu0 0.0
      %3671 = vmatpush2.msra.mxu0 0.0
      %3672 = vmatprep.subr.mxu0 0.0
      %3673 = vmatpush2.msra.mxu0 0.0
      %3674 = vmatprep.subr.mxu0 0.0
      %3675 = vmatpush2.msra.mxu0 0.0
      %3676 = vmatprep.subr.mxu0 0.0
      %3677 = vmatpush2.msra.mxu0 0.0
      %3678 = vmatprep.subr.mxu0 0.0
      %3679 = vmatpush2.msra.mxu0 0.0
      %3680 = vmatprep.subr.mxu0 0.0
      %3681 = vmatpush2.msra.mxu0 0.0
      %3682 = vmatprep.subr.mxu0 0.0
      %3683 = vmatpush2.msra.mxu0 0.0
      %3684 = vmatprep.subr.mxu0 0.0
      %3685 = vmatpush2.msra.mxu0 0.0
      %3686 = vmatprep.subr.mxu0 0.0
      %3687 = vmatpush2.msra.mxu0 0.0
      %3688 = vmatprep.subr.mxu0 0.0
      %3689 = vmatpush2.msra.mxu0 0.0
      %3690 = vmatprep.subr.mxu0 0.0
      %3691 = vmatpush2.msra.mxu0 0.0
      %3692 = vmatprep.subr.mxu0 0.0
      %3693 = vmatpush2.msra.mxu0 0.0
      %3694 = vmatprep.mubr.f32.mxu0 0.0
      %3695 = vmatmul.mubr.f32.gmra.mxu0 %v3539
      %v3696 = vpop.f32.mrf.mxu0
      %v3697 = vadd.f32 0.0, %v3696
      %v3698 = vpop.f32.mrf.mxu0
      %v3699 = vadd.f32 0.0, %v3698
      %3700 = vdwg.mxu0
      %3701 = vmatprep.subr.mxu0 0.0
      %3702 = vmatpush1.msra.mxu0 0.0
      %3703 = vmatprep.subr.mxu0 0.0
      %3704 = vmatpush1.msra.mxu0 0.0
      %3705 = vmatprep.subr.mxu0 0.0
      %3706 = vmatpush1.msra.mxu0 0.0
      %3707 = vmatprep.subr.mxu0 0.0
      %3708 = vmatpush1.msra.mxu0 0.0
      %3709 = vmatprep.subr.mxu0 0.0
      %3710 = vmatpush1.msra.mxu0 0.0
      %3711 = vmatprep.subr.mxu0 0.0
      %3712 = vmatpush1.msra.mxu0 0.0
      %3713 = vmatprep.subr.mxu0 0.0
      %3714 = vmatpush1.msra.mxu0 0.0
      %3715 = vmatprep.subr.mxu0 0.0
      %3716 = vmatpush1.msra.mxu0 0.0
      %3717 = vmatprep.subr.mxu0 0.0
      %3718 = vmatpush1.msra.mxu0 0.0
      %3719 = vmatprep.subr.mxu0 0.0
      %3720 = vmatpush1.msra.mxu0 0.0
      %3721 = vmatprep.subr.mxu0 0.0
      %3722 = vmatpush1.msra.mxu0 0.0
      %3723 = vmatprep.subr.mxu0 0.0
      %3724 = vmatpush1.msra.mxu0 0.0
      %3725 = vmatprep.subr.mxu0 0.0
      %3726 = vmatpush1.msra.mxu0 0.0
      %3727 = vmatprep.subr.mxu0 0.0
      %3728 = vmatpush1.msra.mxu0 0.0
      %3729 = vmatprep.subr.mxu0 0.0
      %3730 = vmatpush1.msra.mxu0 0.0
      %3731 = vmatprep.subr.mxu0 %v3551
      %3732 = vmatpush1.msra.mxu0 %v3549
      %3733 = vmatprep.subr.mxu0 0.0
      %3734 = vmatpush2.msra.mxu0 0.0
      %3735 = vmatprep.subr.mxu0 0.0
      %3736 = vmatpush2.msra.mxu0 0.0
      %3737 = vmatprep.subr.mxu0 0.0
      %3738 = vmatpush2.msra.mxu0 0.0
      %3739 = vmatprep.subr.mxu0 0.0
      %3740 = vmatpush2.msra.mxu0 0.0
      %3741 = vmatprep.subr.mxu0 0.0
      %3742 = vmatpush2.msra.mxu0 0.0
      %3743 = vmatprep.subr.mxu0 0.0
      %3744 = vmatpush2.msra.mxu0 0.0
      %3745 = vmatprep.subr.mxu0 0.0
      %3746 = vmatpush2.msra.mxu0 0.0
      %3747 = vmatprep.subr.mxu0 0.0
      %3748 = vmatpush2.msra.mxu0 0.0
      %3749 = vmatprep.subr.mxu0 0.0
      %3750 = vmatpush2.msra.mxu0 0.0
      %3751 = vmatprep.subr.mxu0 0.0
      %3752 = vmatpush2.msra.mxu0 0.0
      %3753 = vmatprep.subr.mxu0 0.0
      %3754 = vmatpush2.msra.mxu0 0.0
      %3755 = vmatprep.subr.mxu0 0.0
      %3756 = vmatpush2.msra.mxu0 0.0
      %3757 = vmatprep.subr.mxu0 0.0
      %3758 = vmatpush2.msra.mxu0 0.0
      %3759 = vmatprep.subr.mxu0 0.0
      %3760 = vmatpush2.msra.mxu0 0.0
      %3761 = vmatprep.subr.mxu0 0.0
      %3762 = vmatpush2.msra.mxu0 0.0
      %3763 = vmatprep.subr.mxu0 0.0
      %3764 = vmatpush2.msra.mxu0 0.0
      %3765 = vmatprep.mubr.f32.mxu0 0.0
      %3766 = vmatmul.mubr.f32.gmra.mxu0 %v3539
      %v3767 = vpop.f32.mrf.mxu0
      %v3768 = vadd.f32 0.0, %v3767
      %v3769 = vpop.f32.mrf.mxu0
      %v3770 = vadd.f32 0.0, %v3769
      %3771 = vdwg.mxu0
      %3772 = vmatprep.subr.mxu0 0.0
      %3773 = vmatpush1.msra.mxu0 0.0
      %3774 = vmatprep.subr.mxu0 0.0
      %3775 = vmatpush1.msra.mxu0 0.0
      %3776 = vmatprep.subr.mxu0 0.0
      %3777 = vmatpush1.msra.mxu0 0.0
      %3778 = vmatprep.subr.mxu0 0.0
      %3779 = vmatpush1.msra.mxu0 0.0
      %3780 = vmatprep.subr.mxu0 0.0
      %3781 = vmatpush1.msra.mxu0 0.0
      %3782 = vmatprep.subr.mxu0 0.0
      %3783 = vmatpush1.msra.mxu0 0.0
      %3784 = vmatprep.subr.mxu0 0.0
      %3785 = vmatpush1.msra.mxu0 0.0
      %3786 = vmatprep.subr.mxu0 0.0
      %3787 = vmatpush1.msra.mxu0 0.0
      %3788 = vmatprep.subr.mxu0 0.0
      %3789 = vmatpush1.msra.mxu0 0.0
      %3790 = vmatprep.subr.mxu0 0.0
      %3791 = vmatpush1.msra.mxu0 0.0
      %3792 = vmatprep.subr.mxu0 0.0
      %3793 = vmatpush1.msra.mxu0 0.0
      %3794 = vmatprep.subr.mxu0 0.0
      %3795 = vmatpush1.msra.mxu0 0.0
      %3796 = vmatprep.subr.mxu0 0.0
      %3797 = vmatpush1.msra.mxu0 0.0
      %3798 = vmatprep.subr.mxu0 0.0
      %3799 = vmatpush1.msra.mxu0 0.0
      %3800 = vmatprep.subr.mxu0 0.0
      %3801 = vmatpush1.msra.mxu0 0.0
      %3802 = vmatprep.subr.mxu0 %v3555
      %3803 = vmatpush1.msra.mxu0 %v3553
      %3804 = vmatprep.subr.mxu0 0.0
      %3805 = vmatpush2.msra.mxu0 0.0
      %3806 = vmatprep.subr.mxu0 0.0
      %3807 = vmatpush2.msra.mxu0 0.0
      %3808 = vmatprep.subr.mxu0 0.0
      %3809 = vmatpush2.msra.mxu0 0.0
      %3810 = vmatprep.subr.mxu0 0.0
      %3811 = vmatpush2.msra.mxu0 0.0
      %3812 = vmatprep.subr.mxu0 0.0
      %3813 = vmatpush2.msra.mxu0 0.0
      %3814 = vmatprep.subr.mxu0 0.0
      %3815 = vmatpush2.msra.mxu0 0.0
      %3816 = vmatprep.subr.mxu0 0.0
      %3817 = vmatpush2.msra.mxu0 0.0
      %3818 = vmatprep.subr.mxu0 0.0
      %3819 = vmatpush2.msra.mxu0 0.0
      %3820 = vmatprep.subr.mxu0 0.0
      %3821 = vmatpush2.msra.mxu0 0.0
      %3822 = vmatprep.subr.mxu0 0.0
      %3823 = vmatpush2.msra.mxu0 0.0
      %3824 = vmatprep.subr.mxu0 0.0
      %3825 = vmatpush2.msra.mxu0 0.0
      %3826 = vmatprep.subr.mxu0 0.0
      %3827 = vmatpush2.msra.mxu0 0.0
      %3828 = vmatprep.subr.mxu0 0.0
      %3829 = vmatpush2.msra.mxu0 0.0
      %3830 = vmatprep.subr.mxu0 0.0
      %3831 = vmatpush2.msra.mxu0 0.0
      %3832 = vmatprep.subr.mxu0 0.0
      %3833 = vmatpush2.msra.mxu0 0.0
      %3834 = vmatprep.subr.mxu0 0.0
      %3835 = vmatpush2.msra.mxu0 0.0
      %3836 = vmatprep.mubr.f32.mxu0 0.0
      %3837 = vmatmul.mubr.f32.gmra.mxu0 %v3539
      %v3838 = vpop.f32.mrf.mxu0
      %v3839 = vadd.f32 0.0, %v3838
      %v3840 = vpop.f32.mrf.mxu0
      %v3841 = vadd.f32 0.0, %v3840
      %3842 = vdwg.mxu0
      %3843 = vmatprep.subr.mxu0 0.0
      %3844 = vmatpush1.msra.mxu0 0.0
      %3845 = vmatprep.subr.mxu0 0.0
      %3846 = vmatpush1.msra.mxu0 0.0
      %3847 = vmatprep.subr.mxu0 0.0
      %3848 = vmatpush1.msra.mxu0 0.0
      %3849 = vmatprep.subr.mxu0 0.0
      %3850 = vmatpush1.msra.mxu0 0.0
      %3851 = vmatprep.subr.mxu0 0.0
      %3852 = vmatpush1.msra.mxu0 0.0
      %3853 = vmatprep.subr.mxu0 0.0
      %3854 = vmatpush1.msra.mxu0 0.0
      %3855 = vmatprep.subr.mxu0 0.0
      %3856 = vmatpush1.msra.mxu0 0.0
      %3857 = vmatprep.subr.mxu0 0.0
      %3858 = vmatpush1.msra.mxu0 0.0
      %3859 = vmatprep.subr.mxu0 0.0
      %3860 = vmatpush1.msra.mxu0 0.0
      %3861 = vmatprep.subr.mxu0 0.0
      %3862 = vmatpush1.msra.mxu0 0.0
      %3863 = vmatprep.subr.mxu0 0.0
      %3864 = vmatpush1.msra.mxu0 0.0
      %3865 = vmatprep.subr.mxu0 0.0
      %3866 = vmatpush1.msra.mxu0 0.0
      %3867 = vmatprep.subr.mxu0 0.0
      %3868 = vmatpush1.msra.mxu0 0.0
      %3869 = vmatprep.subr.mxu0 0.0
      %3870 = vmatpush1.msra.mxu0 0.0
      %3871 = vmatprep.subr.mxu0 0.0
      %3872 = vmatpush1.msra.mxu0 0.0
      %3873 = vmatprep.subr.mxu0 0.0
      %3874 = vmatpush1.msra.mxu0 %v3557
      %3875 = vmatprep.subr.mxu0 0.0
      %3876 = vmatpush2.msra.mxu0 0.0
      %3877 = vmatprep.subr.mxu0 0.0
      %3878 = vmatpush2.msra.mxu0 0.0
      %3879 = vmatprep.subr.mxu0 0.0
      %3880 = vmatpush2.msra.mxu0 0.0
      %3881 = vmatprep.subr.mxu0 0.0
      %3882 = vmatpush2.msra.mxu0 0.0
      %3883 = vmatprep.subr.mxu0 0.0
      %3884 = vmatpush2.msra.mxu0 0.0
      %3885 = vmatprep.subr.mxu0 0.0
      %3886 = vmatpush2.msra.mxu0 0.0
      %3887 = vmatprep.subr.mxu0 0.0
      %3888 = vmatpush2.msra.mxu0 0.0
      %3889 = vmatprep.subr.mxu0 0.0
      %3890 = vmatpush2.msra.mxu0 0.0
      %3891 = vmatprep.subr.mxu0 0.0
      %3892 = vmatpush2.msra.mxu0 0.0
      %3893 = vmatprep.subr.mxu0 0.0
      %3894 = vmatpush2.msra.mxu0 0.0
      %3895 = vmatprep.subr.mxu0 0.0
      %3896 = vmatpush2.msra.mxu0 0.0
      %3897 = vmatprep.subr.mxu0 0.0
      %3898 = vmatpush2.msra.mxu0 0.0
      %3899 = vmatprep.subr.mxu0 0.0
      %3900 = vmatpush2.msra.mxu0 0.0
      %3901 = vmatprep.subr.mxu0 0.0
      %3902 = vmatpush2.msra.mxu0 0.0
      %3903 = vmatprep.subr.mxu0 0.0
      %3904 = vmatpush2.msra.mxu0 0.0
      %3905 = vmatprep.subr.mxu0 0.0
      %3906 = vmatpush2.msra.mxu0 0.0
      %3907 = vmatprep.mubr.f32.mxu0 0.0
      %3908 = vmatmul.mubr.f32.gmra.mxu0 %v3539
      %v3909 = vpop.f32.mrf.mxu0
      %v3910 = vadd.f32 0.0, %v3909
      %v3911 = vpop.f32.mrf.mxu0
      %3912 = vdwg.mxu0
      %v3913 = vadd.f32 %v3497, %v3626
      %v3914 = vadd.f32 %v3498, %v3628
      %v3915 = vadd.f32 %v3499, %v3697
      %v3916 = vadd.f32 %v3500, %v3699
      %v3917 = vadd.f32 %v3501, %v3768
      %v3918 = vadd.f32 %v3502, %v3770
      %v3919 = vadd.f32 %v3503, %v3839
      %v3920 = vadd.f32 %v3504, %v3841
      %v3921 = vadd.f32 %v3505, %v3910
      %v3922 = vld [vmem:[%s2] sm:$0xff]
      %3924 = vset.pattern.permute.xlu0 0
      %3925 = vperm.xlu0 %3924, %v3922
      %v3926 = vpop.permute.xlu0 %3925
      %v3928 = vadd.f32 %v3913, %v3926
      %v3929 = vadd.f32 %v3914, %v3926
      %v3930 = vadd.f32 %v3915, %v3926
      %v3931 = vadd.f32 %v3916, %v3926
      %v3932 = vadd.f32 %v3917, %v3926
      %v3933 = vadd.f32 %v3918, %v3926
      %v3934 = vadd.f32 %v3919, %v3926
      %v3935 = vadd.f32 %v3920, %v3926
      %v3936 = vadd.f32 %v3921, %v3926
      %v3937 = vmax.f32 %v3928, 0.0
      %v3938 = vmax.f32 %v3929, 0.0
      %v3939 = vmax.f32 %v3930, 0.0
      %v3940 = vmax.f32 %v3931, 0.0
      %v3941 = vmax.f32 %v3932, 0.0
      %v3942 = vmax.f32 %v3933, 0.0
      %v3943 = vmax.f32 %v3934, 0.0
      %v3944 = vmax.f32 %v3935, 0.0
      %v3945 = vmax.f32 %v3936, 0.0
      %v3946 = vlaneseq
      %v3947 = vand.u32 %v3946, 127
      %v3948 = vadd.s32 %v3947, 128
      %v3949 = vadd.s32 %v3947, 256
      %v3950 = vadd.s32 %v3947, 384
      %v3951 = vadd.s32 %v3947, 512
      %v3952 = vadd.s32 %v3947, 640
      %v3953 = vadd.s32 %v3947, 768
      %v3954 = vadd.s32 %v3947, 896
      %v3955 = vadd.s32 %v3947, 1024
      %vm3956 = vcmp.lt.s32.totalorder %v3947, 0
      %v3957 = vsub.s32 0, %v3947
      %v3958 = vsel %vm3956, %v3957, %v3947
      %v3959 = vmul.u32.u64.compose %v3958, 4042322161
      %v3960 = vextract.low.u32 %v3959
      %v3961 = vextract.high.u32 %v3959
      %v3962 = vshrl.u32 %v3961, 5
      %v3963 = vmul.u32 %v3962, 34
      %v3964 = vsub.s32 %v3958, %v3963
      %v3965 = vsub.s32 0, %v3964
      %v3966 = vsel %vm3956, %v3965, %v3964
      %vm3967 = vcmp.lt.s32.totalorder %v3948, 0
      %v3968 = vsub.s32 0, %v3948
      %v3969 = vsel %vm3967, %v3968, %v3948
      %v3970 = vmul.u32.u64.compose %v3969, 4042322161
      %v3971 = vextract.low.u32 %v3970
      %v3972 = vextract.high.u32 %v3970
      %v3973 = vshrl.u32 %v3972, 5
      %v3974 = vmul.u32 %v3973, 34
      %v3975 = vsub.s32 %v3969, %v3974
      %v3976 = vsub.s32 0, %v3975
      %v3977 = vsel %vm3967, %v3976, %v3975
      %vm3978 = vcmp.lt.s32.totalorder %v3949, 0
      %v3979 = vsub.s32 0, %v3949
      %v3980 = vsel %vm3978, %v3979, %v3949
      %v3981 = vmul.u32.u64.compose %v3980, 4042322161
      %v3982 = vextract.low.u32 %v3981
      %v3983 = vextract.high.u32 %v3981
      %v3984 = vshrl.u32 %v3983, 5
      %v3985 = vmul.u32 %v3984, 34
      %v3986 = vsub.s32 %v3980, %v3985
      %v3987 = vsub.s32 0, %v3986
      %v3988 = vsel %vm3978, %v3987, %v3986
      %vm3989 = vcmp.lt.s32.totalorder %v3950, 0
      %v3990 = vsub.s32 0, %v3950
      %v3991 = vsel %vm3989, %v3990, %v3950
      %v3992 = vmul.u32.u64.compose %v3991, 4042322161
      %v3993 = vextract.low.u32 %v3992
      %v3994 = vextract.high.u32 %v3992
      %v3995 = vshrl.u32 %v3994, 5
      %v3996 = vmul.u32 %v3995, 34
      %v3997 = vsub.s32 %v3991, %v3996
      %v3998 = vsub.s32 0, %v3997
      %v3999 = vsel %vm3989, %v3998, %v3997
      %vm4000 = vcmp.lt.s32.totalorder %v3951, 0
      %v4001 = vsub.s32 0, %v3951
      %v4002 = vsel %vm4000, %v4001, %v3951
      %v4003 = vmul.u32.u64.compose %v4002, 4042322161
      %v4004 = vextract.low.u32 %v4003
      %v4005 = vextract.high.u32 %v4003
      %v4006 = vshrl.u32 %v4005, 5
      %v4007 = vmul.u32 %v4006, 34
      %v4008 = vsub.s32 %v4002, %v4007
      %v4009 = vsub.s32 0, %v4008
      %v4010 = vsel %vm4000, %v4009, %v4008
      %vm4011 = vcmp.lt.s32.totalorder %v3952, 0
      %v4012 = vsub.s32 0, %v3952
      %v4013 = vsel %vm4011, %v4012, %v3952
      %v4014 = vmul.u32.u64.compose %v4013, 4042322161
      %v4015 = vextract.low.u32 %v4014
      %v4016 = vextract.high.u32 %v4014
      %v4017 = vshrl.u32 %v4016, 5
      %v4018 = vmul.u32 %v4017, 34
      %v4019 = vsub.s32 %v4013, %v4018
      %v4020 = vsub.s32 0, %v4019
      %v4021 = vsel %vm4011, %v4020, %v4019
      %vm4022 = vcmp.lt.s32.totalorder %v3953, 0
      %v4023 = vsub.s32 0, %v3953
      %v4024 = vsel %vm4022, %v4023, %v3953
      %v4025 = vmul.u32.u64.compose %v4024, 4042322161
      %v4026 = vextract.low.u32 %v4025
      %v4027 = vextract.high.u32 %v4025
      %v4028 = vshrl.u32 %v4027, 5
      %v4029 = vmul.u32 %v4028, 34
      %v4030 = vsub.s32 %v4024, %v4029
      %v4031 = vsub.s32 0, %v4030
      %v4032 = vsel %vm4022, %v4031, %v4030
      %vm4033 = vcmp.lt.s32.totalorder %v3954, 0
      %v4034 = vsub.s32 0, %v3954
      %v4035 = vsel %vm4033, %v4034, %v3954
      %v4036 = vmul.u32.u64.compose %v4035, 4042322161
      %v4037 = vextract.low.u32 %v4036
      %v4038 = vextract.high.u32 %v4036
      %v4039 = vshrl.u32 %v4038, 5
      %v4040 = vmul.u32 %v4039, 34
      %v4041 = vsub.s32 %v4035, %v4040
      %v4042 = vsub.s32 0, %v4041
      %v4043 = vsel %vm4033, %v4042, %v4041
      %vm4044 = vcmp.lt.s32.totalorder %v3955, 0
      %v4045 = vsub.s32 0, %v3955
      %v4046 = vsel %vm4044, %v4045, %v3955
      %v4047 = vmul.u32.u64.compose %v4046, 4042322161
      %v4048 = vextract.low.u32 %v4047
      %v4049 = vextract.high.u32 %v4047
      %v4050 = vshrl.u32 %v4049, 5
      %v4051 = vmul.u32 %v4050, 34
      %v4052 = vsub.s32 %v4046, %v4051
      %v4053 = vsub.s32 0, %v4052
      %v4054 = vsel %vm4044, %v4053, %v4052
      %vm4055 = vcmp.ne.s32.totalorder %v3966, 0
      %vm4056 = vcmp.ne.s32.totalorder %v3977, 0
      %vm4057 = vcmp.ne.s32.totalorder %v3988, 0
      %vm4058 = vcmp.ne.s32.totalorder %v3999, 0
      %vm4059 = vcmp.ne.s32.totalorder %v4010, 0
      %vm4060 = vcmp.ne.s32.totalorder %v4021, 0
      %vm4061 = vcmp.ne.s32.totalorder %v4032, 0
      %vm4062 = vcmp.ne.s32.totalorder %v4043, 0
      %vm4063 = vcmp.ne.s32.totalorder %v4054, 0
      %vm4064 = vcmp.lt.s32.totalorder %v3966, 0
      %vm4065 = vcmp.lt.s32.totalorder %v3977, 0
      %vm4066 = vcmp.lt.s32.totalorder %v3988, 0
      %vm4067 = vcmp.lt.s32.totalorder %v3999, 0
      %vm4068 = vcmp.lt.s32.totalorder %v4010, 0
      %vm4069 = vcmp.lt.s32.totalorder %v4021, 0
      %vm4070 = vcmp.lt.s32.totalorder %v4032, 0
      %vm4071 = vcmp.lt.s32.totalorder %v4043, 0
      %vm4072 = vcmp.lt.s32.totalorder %v4054, 0
      %vm4073 = vmand %vm4064, %vm4055
      %vm4074 = vmand %vm4065, %vm4056
      %vm4075 = vmand %vm4066, %vm4057
      %vm4076 = vmand %vm4067, %vm4058
      %vm4077 = vmand %vm4068, %vm4059
      %vm4078 = vmand %vm4069, %vm4060
      %vm4079 = vmand %vm4070, %vm4061
      %vm4080 = vmand %vm4071, %vm4062
      %vm4081 = vmand %vm4072, %vm4063
      %v4082 = vadd.s32 %v3966, 34
      %v4083 = vadd.s32 %v3977, 34
      %v4084 = vadd.s32 %v3988, 34
      %v4085 = vadd.s32 %v3999, 34
      %v4086 = vadd.s32 %v4010, 34
      %v4087 = vadd.s32 %v4021, 34
      %v4088 = vadd.s32 %v4032, 34
      %v4089 = vadd.s32 %v4043, 34
      %v4090 = vadd.s32 %v4054, 34
      %v4091 = vsel %vm4073, %v4082, %v3966
      %v4092 = vsel %vm4074, %v4083, %v3977
      %v4093 = vsel %vm4075, %v4084, %v3988
      %v4094 = vsel %vm4076, %v4085, %v3999
      %v4095 = vsel %vm4077, %v4086, %v4010
      %v4096 = vsel %vm4078, %v4087, %v4021
      %v4097 = vsel %vm4079, %v4088, %v4032
      %v4098 = vsel %vm4080, %v4089, %v4043
      %v4099 = vsel %vm4081, %v4090, %v4054
      %vm4100 = vcmp.lt.s32.totalorder %v4091, 32
      %vm4101 = vcmp.lt.s32.totalorder %v4092, 32
      %vm4102 = vcmp.lt.s32.totalorder %v4093, 32
      %vm4103 = vcmp.lt.s32.totalorder %v4094, 32
      %vm4104 = vcmp.lt.s32.totalorder %v4095, 32
      %vm4105 = vcmp.lt.s32.totalorder %v4096, 32
      %vm4106 = vcmp.lt.s32.totalorder %v4097, 32
      %vm4107 = vcmp.lt.s32.totalorder %v4098, 32
      %vm4108 = vcmp.lt.s32.totalorder %v4099, 32
      %v4109 = vsel %vm4100, 1, 0
      %v4110 = vsel %vm4101, 1, 0
      %v4111 = vsel %vm4102, 1, 0
      %v4112 = vsel %vm4103, 1, 0
      %v4113 = vsel %vm4104, 1, 0
      %v4114 = vsel %vm4105, 1, 0
      %v4115 = vsel %vm4106, 1, 0
      %v4116 = vsel %vm4107, 1, 0
      %v4117 = vsel %vm4108, 1, 0
      %vm4118 = vcmp.eq.s32.totalorder %v4109, 1
      %vm4119 = vcmp.eq.s32.totalorder %v4110, 1
      %vm4120 = vcmp.eq.s32.totalorder %v4111, 1
      %vm4121 = vcmp.eq.s32.totalorder %v4112, 1
      %vm4122 = vcmp.eq.s32.totalorder %v4113, 1
      %vm4123 = vcmp.eq.s32.totalorder %v4114, 1
      %vm4124 = vcmp.eq.s32.totalorder %v4115, 1
      %vm4125 = vcmp.eq.s32.totalorder %v4116, 1
      %vm4126 = vcmp.eq.s32.totalorder %v4117, 1
      %v4127 = vsel %vm4118, %v3937, 0.0
      %v4128 = vsel %vm4119, %v3938, 0.0
      %v4129 = vsel %vm4120, %v3939, 0.0
      %v4130 = vsel %vm4121, %v3940, 0.0
      %v4131 = vsel %vm4122, %v3941, 0.0
      %v4132 = vsel %vm4123, %v3942, 0.0
      %v4133 = vsel %vm4124, %v3943, 0.0
      %v4134 = vsel %vm4125, %v3944, 0.0
      %v4135 = vsel %vm4126, %v3945, 0.0
      %4136 = vst [vmem:[#allocation2] sm:$0xff] 0.0
      %4137 = vst [vmem:[#allocation2 + $0x8] sm:$0xff] 0.0
      %4138 = vst [vmem:[#allocation2 + $0x10] sm:$0xff] 0.0
      %4139 = vst [vmem:[#allocation2 + $0x18] sm:$0xff] 0.0
      %4140 = vst [vmem:[#allocation2 + $0x20] sm:$0xff] 0.0
      %4141 = vst [vmem:[#allocation2 + $0x28] sm:$0xff] 0.0
      %4142 = vst [vmem:[#allocation2 + $0x30] sm:$0xff] 0.0
      %4143 = vst [vmem:[#allocation2 + $0x38] sm:$0xff] 0.0
      %4144 = vst [vmem:[#allocation2 + $0x40] sm:$0xff] 0.0
      %vm4145 = vcmask 809984
      %4146 = vst.msk [vmem:[#allocation2 + $0x48] sm:$0xff] %vm4145, 0.0
      %4147 = vst [vmem:[#allocation2 + $0x8] sm:$0xff] %v4127
      %4148 = vst [vmem:[#allocation2 + $0x10] sm:$0xff] %v4128
      %4149 = vst [vmem:[#allocation2 + $0x18] sm:$0xff] %v4129
      %4150 = vst [vmem:[#allocation2 + $0x20] sm:$0xff] %v4130
      %4151 = vst [vmem:[#allocation2 + $0x28] sm:$0xff] %v4131
      %4152 = vst [vmem:[#allocation2 + $0x30] sm:$0xff] %v4132
      %4153 = vst [vmem:[#allocation2 + $0x38] sm:$0xff] %v4133
      %4154 = vst [vmem:[#allocation2 + $0x40] sm:$0xff] %v4134
      %vm4155 = vcmask 523264
      %4156 = vst.msk [vmem:[#allocation2 + $0x48] sm:$0xff] %vm4155, %v4135
      %v4157 = vld [vmem:[#allocation2] sm:$0xff]
      %v4158 = vld [vmem:[#allocation2 + $0x8] sm:$0xff]
      %v4159 = vld [vmem:[#allocation2 + $0x10] sm:$0xff]
      %v4160 = vld [vmem:[#allocation2 + $0x18] sm:$0xff]
      %v4161 = vld [vmem:[#allocation2 + $0x20] sm:$0xff]
      %v4162 = vld [vmem:[#allocation2 + $0x28] sm:$0xff]
      %v4163 = vld [vmem:[#allocation2 + $0x30] sm:$0xff]
      %v4164 = vld [vmem:[#allocation2 + $0x38] sm:$0xff]
      %v4165 = vld [vmem:[#allocation2 + $0x40] sm:$0xff]
      %v4166 = vld [vmem:[#allocation2 + $0x48] sm:$0xff]
      %v4167 = vld [vmem:[%s3] sm:$0xff]
      %s4168 = scalar_lea.vmem %s3, 8
      %v4169 = vld [vmem:[%s4168] sm:$0xff]
      %4180 = vrot.lane.b32.xlu0 %v4157, 34
      %v4181 = vpop.permute.xlu0 %4180
      %4182 = vrot.lane.b32.xlu0 %v4158, 34
      %v4183 = vpop.permute.xlu0 %4182
      %4184 = vrot.lane.b32.xlu0 %v4159, 34
      %v4185 = vpop.permute.xlu0 %4184
      %4186 = vrot.lane.b32.xlu0 %v4160, 34
      %v4187 = vpop.permute.xlu0 %4186
      %4188 = vrot.lane.b32.xlu0 %v4161, 34
      %v4189 = vpop.permute.xlu0 %4188
      %4190 = vrot.lane.b32.xlu0 %v4162, 34
      %v4191 = vpop.permute.xlu0 %4190
      %4192 = vrot.lane.b32.xlu0 %v4163, 34
      %v4193 = vpop.permute.xlu0 %4192
      %4194 = vrot.lane.b32.xlu0 %v4164, 34
      %v4195 = vpop.permute.xlu0 %4194
      %4196 = vrot.lane.b32.xlu0 %v4165, 34
      %v4197 = vpop.permute.xlu0 %4196
      %4198 = vrot.lane.b32.xlu0 %v4166, 34
      %v4199 = vpop.permute.xlu0 %4198
      %vm4200 = vcmask 277504
      %v4201 = vsel %vm4200, %v4181, %v4183
      %v4202 = vsel %vm4200, %v4183, %v4185
      %v4203 = vsel %vm4200, %v4185, %v4187
      %v4204 = vsel %vm4200, %v4187, %v4189
      %v4205 = vsel %vm4200, %v4189, %v4191
      %v4206 = vsel %vm4200, %v4191, %v4193
      %v4207 = vsel %vm4200, %v4193, %v4195
      %v4208 = vsel %vm4200, %v4195, %v4197
      %v4209 = vsel %vm4200, %v4197, %v4199
      %vm4219 = vcmask 64512
      %v4221 = vsel %vm4219, %v4169, 0
      %4223 = vmatprep.subr.mxu0 0.0
      %4224 = vmatpush1.msra.mxu0 0.0
      %4225 = vmatprep.subr.mxu0 0.0
      %4226 = vmatpush1.msra.mxu0 0.0
      %4227 = vmatprep.subr.mxu0 0.0
      %4228 = vmatpush1.msra.mxu0 0.0
      %4229 = vmatprep.subr.mxu0 0.0
      %4230 = vmatpush1.msra.mxu0 0.0
      %4231 = vmatprep.subr.mxu0 0.0
      %4232 = vmatpush1.msra.mxu0 0.0
      %4233 = vmatprep.subr.mxu0 0.0
      %4234 = vmatpush1.msra.mxu0 0.0
      %4235 = vmatprep.subr.mxu0 0.0
      %4236 = vmatpush1.msra.mxu0 0.0
      %4237 = vmatprep.subr.mxu0 0.0
      %4238 = vmatpush1.msra.mxu0 0.0
      %4239 = vmatprep.subr.mxu0 0.0
      %4240 = vmatpush1.msra.mxu0 0.0
      %4241 = vmatprep.subr.mxu0 0.0
      %4242 = vmatpush1.msra.mxu0 0.0
      %4243 = vmatprep.subr.mxu0 0.0
      %4244 = vmatpush1.msra.mxu0 0.0
      %4245 = vmatprep.subr.mxu0 0.0
      %4246 = vmatpush1.msra.mxu0 0.0
      %4247 = vmatprep.subr.mxu0 0.0
      %4248 = vmatpush1.msra.mxu0 0.0
      %4249 = vmatprep.subr.mxu0 0.0
      %4250 = vmatpush1.msra.mxu0 0.0
      %4251 = vmatprep.subr.mxu0 0.0
      %4252 = vmatpush1.msra.mxu0 0.0
      %4253 = vmatprep.subr.mxu0 %v4202
      %4254 = vmatpush1.msra.mxu0 %v4201
      %4255 = vmatprep.subr.mxu0 0.0
      %4256 = vmatpush2.msra.mxu0 0.0
      %4257 = vmatprep.subr.mxu0 0.0
      %4258 = vmatpush2.msra.mxu0 0.0
      %4259 = vmatprep.subr.mxu0 0.0
      %4260 = vmatpush2.msra.mxu0 0.0
      %4261 = vmatprep.subr.mxu0 0.0
      %4262 = vmatpush2.msra.mxu0 0.0
      %4263 = vmatprep.subr.mxu0 0.0
      %4264 = vmatpush2.msra.mxu0 0.0
      %4265 = vmatprep.subr.mxu0 0.0
      %4266 = vmatpush2.msra.mxu0 0.0
      %4267 = vmatprep.subr.mxu0 0.0
      %4268 = vmatpush2.msra.mxu0 0.0
      %4269 = vmatprep.subr.mxu0 0.0
      %4270 = vmatpush2.msra.mxu0 0.0
      %4271 = vmatprep.subr.mxu0 0.0
      %4272 = vmatpush2.msra.mxu0 0.0
      %4273 = vmatprep.subr.mxu0 0.0
      %4274 = vmatpush2.msra.mxu0 0.0
      %4275 = vmatprep.subr.mxu0 0.0
      %4276 = vmatpush2.msra.mxu0 0.0
      %4277 = vmatprep.subr.mxu0 0.0
      %4278 = vmatpush2.msra.mxu0 0.0
      %4279 = vmatprep.subr.mxu0 0.0
      %4280 = vmatpush2.msra.mxu0 0.0
      %4281 = vmatprep.subr.mxu0 0.0
      %4282 = vmatpush2.msra.mxu0 0.0
      %4283 = vmatprep.subr.mxu0 0.0
      %4284 = vmatpush2.msra.mxu0 0.0
      %4285 = vmatprep.subr.mxu0 0.0
      %4286 = vmatpush2.msra.mxu0 0.0
      %4287 = vmatprep.mubr.f32.mxu0 0.0
      %4288 = vmatmul.mubr.f32.gmra.mxu0 %v4221
      %v4289 = vpop.f32.mrf.mxu0
      %v4290 = vadd.f32 0.0, %v4289
      %v4291 = vpop.f32.mrf.mxu0
      %v4292 = vadd.f32 0.0, %v4291
      %4293 = vdwg.mxu0
      %4294 = vmatprep.subr.mxu0 0.0
      %4295 = vmatpush1.msra.mxu0 0.0
      %4296 = vmatprep.subr.mxu0 0.0
      %4297 = vmatpush1.msra.mxu0 0.0
      %4298 = vmatprep.subr.mxu0 0.0
      %4299 = vmatpush1.msra.mxu0 0.0
      %4300 = vmatprep.subr.mxu0 0.0
      %4301 = vmatpush1.msra.mxu0 0.0
      %4302 = vmatprep.subr.mxu0 0.0
      %4303 = vmatpush1.msra.mxu0 0.0
      %4304 = vmatprep.subr.mxu0 0.0
      %4305 = vmatpush1.msra.mxu0 0.0
      %4306 = vmatprep.subr.mxu0 0.0
      %4307 = vmatpush1.msra.mxu0 0.0
      %4308 = vmatprep.subr.mxu0 0.0
      %4309 = vmatpush1.msra.mxu0 0.0
      %4310 = vmatprep.subr.mxu0 0.0
      %4311 = vmatpush1.msra.mxu0 0.0
      %4312 = vmatprep.subr.mxu0 0.0
      %4313 = vmatpush1.msra.mxu0 0.0
      %4314 = vmatprep.subr.mxu0 0.0
      %4315 = vmatpush1.msra.mxu0 0.0
      %4316 = vmatprep.subr.mxu0 0.0
      %4317 = vmatpush1.msra.mxu0 0.0
      %4318 = vmatprep.subr.mxu0 0.0
      %4319 = vmatpush1.msra.mxu0 0.0
      %4320 = vmatprep.subr.mxu0 0.0
      %4321 = vmatpush1.msra.mxu0 0.0
      %4322 = vmatprep.subr.mxu0 0.0
      %4323 = vmatpush1.msra.mxu0 0.0
      %4324 = vmatprep.subr.mxu0 %v4204
      %4325 = vmatpush1.msra.mxu0 %v4203
      %4326 = vmatprep.subr.mxu0 0.0
      %4327 = vmatpush2.msra.mxu0 0.0
      %4328 = vmatprep.subr.mxu0 0.0
      %4329 = vmatpush2.msra.mxu0 0.0
      %4330 = vmatprep.subr.mxu0 0.0
      %4331 = vmatpush2.msra.mxu0 0.0
      %4332 = vmatprep.subr.mxu0 0.0
      %4333 = vmatpush2.msra.mxu0 0.0
      %4334 = vmatprep.subr.mxu0 0.0
      %4335 = vmatpush2.msra.mxu0 0.0
      %4336 = vmatprep.subr.mxu0 0.0
      %4337 = vmatpush2.msra.mxu0 0.0
      %4338 = vmatprep.subr.mxu0 0.0
      %4339 = vmatpush2.msra.mxu0 0.0
      %4340 = vmatprep.subr.mxu0 0.0
      %4341 = vmatpush2.msra.mxu0 0.0
      %4342 = vmatprep.subr.mxu0 0.0
      %4343 = vmatpush2.msra.mxu0 0.0
      %4344 = vmatprep.subr.mxu0 0.0
      %4345 = vmatpush2.msra.mxu0 0.0
      %4346 = vmatprep.subr.mxu0 0.0
      %4347 = vmatpush2.msra.mxu0 0.0
      %4348 = vmatprep.subr.mxu0 0.0
      %4349 = vmatpush2.msra.mxu0 0.0
      %4350 = vmatprep.subr.mxu0 0.0
      %4351 = vmatpush2.msra.mxu0 0.0
      %4352 = vmatprep.subr.mxu0 0.0
      %4353 = vmatpush2.msra.mxu0 0.0
      %4354 = vmatprep.subr.mxu0 0.0
      %4355 = vmatpush2.msra.mxu0 0.0
      %4356 = vmatprep.subr.mxu0 0.0
      %4357 = vmatpush2.msra.mxu0 0.0
      %4358 = vmatprep.mubr.f32.mxu0 0.0
      %4359 = vmatmul.mubr.f32.gmra.mxu0 %v4221
      %v4360 = vpop.f32.mrf.mxu0
      %v4361 = vadd.f32 0.0, %v4360
      %v4362 = vpop.f32.mrf.mxu0
      %v4363 = vadd.f32 0.0, %v4362
      %4364 = vdwg.mxu0
      %4365 = vmatprep.subr.mxu0 0.0
      %4366 = vmatpush1.msra.mxu0 0.0
      %4367 = vmatprep.subr.mxu0 0.0
      %4368 = vmatpush1.msra.mxu0 0.0
      %4369 = vmatprep.subr.mxu0 0.0
      %4370 = vmatpush1.msra.mxu0 0.0
      %4371 = vmatprep.subr.mxu0 0.0
      %4372 = vmatpush1.msra.mxu0 0.0
      %4373 = vmatprep.subr.mxu0 0.0
      %4374 = vmatpush1.msra.mxu0 0.0
      %4375 = vmatprep.subr.mxu0 0.0
      %4376 = vmatpush1.msra.mxu0 0.0
      %4377 = vmatprep.subr.mxu0 0.0
      %4378 = vmatpush1.msra.mxu0 0.0
      %4379 = vmatprep.subr.mxu0 0.0
      %4380 = vmatpush1.msra.mxu0 0.0
      %4381 = vmatprep.subr.mxu0 0.0
      %4382 = vmatpush1.msra.mxu0 0.0
      %4383 = vmatprep.subr.mxu0 0.0
      %4384 = vmatpush1.msra.mxu0 0.0
      %4385 = vmatprep.subr.mxu0 0.0
      %4386 = vmatpush1.msra.mxu0 0.0
      %4387 = vmatprep.subr.mxu0 0.0
      %4388 = vmatpush1.msra.mxu0 0.0
      %4389 = vmatprep.subr.mxu0 0.0
      %4390 = vmatpush1.msra.mxu0 0.0
      %4391 = vmatprep.subr.mxu0 0.0
      %4392 = vmatpush1.msra.mxu0 0.0
      %4393 = vmatprep.subr.mxu0 0.0
      %4394 = vmatpush1.msra.mxu0 0.0
      %4395 = vmatprep.subr.mxu0 %v4206
      %4396 = vmatpush1.msra.mxu0 %v4205
      %4397 = vmatprep.subr.mxu0 0.0
      %4398 = vmatpush2.msra.mxu0 0.0
      %4399 = vmatprep.subr.mxu0 0.0
      %4400 = vmatpush2.msra.mxu0 0.0
      %4401 = vmatprep.subr.mxu0 0.0
      %4402 = vmatpush2.msra.mxu0 0.0
      %4403 = vmatprep.subr.mxu0 0.0
      %4404 = vmatpush2.msra.mxu0 0.0
      %4405 = vmatprep.subr.mxu0 0.0
      %4406 = vmatpush2.msra.mxu0 0.0
      %4407 = vmatprep.subr.mxu0 0.0
      %4408 = vmatpush2.msra.mxu0 0.0
      %4409 = vmatprep.subr.mxu0 0.0
      %4410 = vmatpush2.msra.mxu0 0.0
      %4411 = vmatprep.subr.mxu0 0.0
      %4412 = vmatpush2.msra.mxu0 0.0
      %4413 = vmatprep.subr.mxu0 0.0
      %4414 = vmatpush2.msra.mxu0 0.0
      %4415 = vmatprep.subr.mxu0 0.0
      %4416 = vmatpush2.msra.mxu0 0.0
      %4417 = vmatprep.subr.mxu0 0.0
      %4418 = vmatpush2.msra.mxu0 0.0
      %4419 = vmatprep.subr.mxu0 0.0
      %4420 = vmatpush2.msra.mxu0 0.0
      %4421 = vmatprep.subr.mxu0 0.0
      %4422 = vmatpush2.msra.mxu0 0.0
      %4423 = vmatprep.subr.mxu0 0.0
      %4424 = vmatpush2.msra.mxu0 0.0
      %4425 = vmatprep.subr.mxu0 0.0
      %4426 = vmatpush2.msra.mxu0 0.0
      %4427 = vmatprep.subr.mxu0 0.0
      %4428 = vmatpush2.msra.mxu0 0.0
      %4429 = vmatprep.mubr.f32.mxu0 0.0
      %4430 = vmatmul.mubr.f32.gmra.mxu0 %v4221
      %v4431 = vpop.f32.mrf.mxu0
      %v4432 = vadd.f32 0.0, %v4431
      %v4433 = vpop.f32.mrf.mxu0
      %v4434 = vadd.f32 0.0, %v4433
      %4435 = vdwg.mxu0
      %4436 = vmatprep.subr.mxu0 0.0
      %4437 = vmatpush1.msra.mxu0 0.0
      %4438 = vmatprep.subr.mxu0 0.0
      %4439 = vmatpush1.msra.mxu0 0.0
      %4440 = vmatprep.subr.mxu0 0.0
      %4441 = vmatpush1.msra.mxu0 0.0
      %4442 = vmatprep.subr.mxu0 0.0
      %4443 = vmatpush1.msra.mxu0 0.0
      %4444 = vmatprep.subr.mxu0 0.0
      %4445 = vmatpush1.msra.mxu0 0.0
      %4446 = vmatprep.subr.mxu0 0.0
      %4447 = vmatpush1.msra.mxu0 0.0
      %4448 = vmatprep.subr.mxu0 0.0
      %4449 = vmatpush1.msra.mxu0 0.0
      %4450 = vmatprep.subr.mxu0 0.0
      %4451 = vmatpush1.msra.mxu0 0.0
      %4452 = vmatprep.subr.mxu0 0.0
      %4453 = vmatpush1.msra.mxu0 0.0
      %4454 = vmatprep.subr.mxu0 0.0
      %4455 = vmatpush1.msra.mxu0 0.0
      %4456 = vmatprep.subr.mxu0 0.0
      %4457 = vmatpush1.msra.mxu0 0.0
      %4458 = vmatprep.subr.mxu0 0.0
      %4459 = vmatpush1.msra.mxu0 0.0
      %4460 = vmatprep.subr.mxu0 0.0
      %4461 = vmatpush1.msra.mxu0 0.0
      %4462 = vmatprep.subr.mxu0 0.0
      %4463 = vmatpush1.msra.mxu0 0.0
      %4464 = vmatprep.subr.mxu0 0.0
      %4465 = vmatpush1.msra.mxu0 0.0
      %4466 = vmatprep.subr.mxu0 %v4208
      %4467 = vmatpush1.msra.mxu0 %v4207
      %4468 = vmatprep.subr.mxu0 0.0
      %4469 = vmatpush2.msra.mxu0 0.0
      %4470 = vmatprep.subr.mxu0 0.0
      %4471 = vmatpush2.msra.mxu0 0.0
      %4472 = vmatprep.subr.mxu0 0.0
      %4473 = vmatpush2.msra.mxu0 0.0
      %4474 = vmatprep.subr.mxu0 0.0
      %4475 = vmatpush2.msra.mxu0 0.0
      %4476 = vmatprep.subr.mxu0 0.0
      %4477 = vmatpush2.msra.mxu0 0.0
      %4478 = vmatprep.subr.mxu0 0.0
      %4479 = vmatpush2.msra.mxu0 0.0
      %4480 = vmatprep.subr.mxu0 0.0
      %4481 = vmatpush2.msra.mxu0 0.0
      %4482 = vmatprep.subr.mxu0 0.0
      %4483 = vmatpush2.msra.mxu0 0.0
      %4484 = vmatprep.subr.mxu0 0.0
      %4485 = vmatpush2.msra.mxu0 0.0
      %4486 = vmatprep.subr.mxu0 0.0
      %4487 = vmatpush2.msra.mxu0 0.0
      %4488 = vmatprep.subr.mxu0 0.0
      %4489 = vmatpush2.msra.mxu0 0.0
      %4490 = vmatprep.subr.mxu0 0.0
      %4491 = vmatpush2.msra.mxu0 0.0
      %4492 = vmatprep.subr.mxu0 0.0
      %4493 = vmatpush2.msra.mxu0 0.0
      %4494 = vmatprep.subr.mxu0 0.0
      %4495 = vmatpush2.msra.mxu0 0.0
      %4496 = vmatprep.subr.mxu0 0.0
      %4497 = vmatpush2.msra.mxu0 0.0
      %4498 = vmatprep.subr.mxu0 0.0
      %4499 = vmatpush2.msra.mxu0 0.0
      %4500 = vmatprep.mubr.f32.mxu0 0.0
      %4501 = vmatmul.mubr.f32.gmra.mxu0 %v4221
      %v4502 = vpop.f32.mrf.mxu0
      %v4503 = vadd.f32 0.0, %v4502
      %v4504 = vpop.f32.mrf.mxu0
      %v4505 = vadd.f32 0.0, %v4504
      %4506 = vdwg.mxu0
      %4507 = vmatprep.subr.mxu0 0.0
      %4508 = vmatpush1.msra.mxu0 0.0
      %4509 = vmatprep.subr.mxu0 0.0
      %4510 = vmatpush1.msra.mxu0 0.0
      %4511 = vmatprep.subr.mxu0 0.0
      %4512 = vmatpush1.msra.mxu0 0.0
      %4513 = vmatprep.subr.mxu0 0.0
      %4514 = vmatpush1.msra.mxu0 0.0
      %4515 = vmatprep.subr.mxu0 0.0
      %4516 = vmatpush1.msra.mxu0 0.0
      %4517 = vmatprep.subr.mxu0 0.0
      %4518 = vmatpush1.msra.mxu0 0.0
      %4519 = vmatprep.subr.mxu0 0.0
      %4520 = vmatpush1.msra.mxu0 0.0
      %4521 = vmatprep.subr.mxu0 0.0
      %4522 = vmatpush1.msra.mxu0 0.0
      %4523 = vmatprep.subr.mxu0 0.0
      %4524 = vmatpush1.msra.mxu0 0.0
      %4525 = vmatprep.subr.mxu0 0.0
      %4526 = vmatpush1.msra.mxu0 0.0
      %4527 = vmatprep.subr.mxu0 0.0
      %4528 = vmatpush1.msra.mxu0 0.0
      %4529 = vmatprep.subr.mxu0 0.0
      %4530 = vmatpush1.msra.mxu0 0.0
      %4531 = vmatprep.subr.mxu0 0.0
      %4532 = vmatpush1.msra.mxu0 0.0
      %4533 = vmatprep.subr.mxu0 0.0
      %4534 = vmatpush1.msra.mxu0 0.0
      %4535 = vmatprep.subr.mxu0 0.0
      %4536 = vmatpush1.msra.mxu0 0.0
      %4537 = vmatprep.subr.mxu0 0.0
      %4538 = vmatpush1.msra.mxu0 %v4209
      %4539 = vmatprep.subr.mxu0 0.0
      %4540 = vmatpush2.msra.mxu0 0.0
      %4541 = vmatprep.subr.mxu0 0.0
      %4542 = vmatpush2.msra.mxu0 0.0
      %4543 = vmatprep.subr.mxu0 0.0
      %4544 = vmatpush2.msra.mxu0 0.0
      %4545 = vmatprep.subr.mxu0 0.0
      %4546 = vmatpush2.msra.mxu0 0.0
      %4547 = vmatprep.subr.mxu0 0.0
      %4548 = vmatpush2.msra.mxu0 0.0
      %4549 = vmatprep.subr.mxu0 0.0
      %4550 = vmatpush2.msra.mxu0 0.0
      %4551 = vmatprep.subr.mxu0 0.0
      %4552 = vmatpush2.msra.mxu0 0.0
      %4553 = vmatprep.subr.mxu0 0.0
      %4554 = vmatpush2.msra.mxu0 0.0
      %4555 = vmatprep.subr.mxu0 0.0
      %4556 = vmatpush2.msra.mxu0 0.0
      %4557 = vmatprep.subr.mxu0 0.0
      %4558 = vmatpush2.msra.mxu0 0.0
      %4559 = vmatprep.subr.mxu0 0.0
      %4560 = vmatpush2.msra.mxu0 0.0
      %4561 = vmatprep.subr.mxu0 0.0
      %4562 = vmatpush2.msra.mxu0 0.0
      %4563 = vmatprep.subr.mxu0 0.0
      %4564 = vmatpush2.msra.mxu0 0.0
      %4565 = vmatprep.subr.mxu0 0.0
      %4566 = vmatpush2.msra.mxu0 0.0
      %4567 = vmatprep.subr.mxu0 0.0
      %4568 = vmatpush2.msra.mxu0 0.0
      %4569 = vmatprep.subr.mxu0 0.0
      %4570 = vmatpush2.msra.mxu0 0.0
      %4571 = vmatprep.mubr.f32.mxu0 0.0
      %4572 = vmatmul.mubr.f32.gmra.mxu0 %v4221
      %v4573 = vpop.f32.mrf.mxu0
      %v4574 = vadd.f32 0.0, %v4573
      %v4575 = vpop.f32.mrf.mxu0
      %4576 = vdwg.mxu0
      %4577 = vrot.lane.b32.xlu0 %v4157, 35
      %v4578 = vpop.permute.xlu0 %4577
      %4579 = vrot.lane.b32.xlu0 %v4158, 35
      %v4580 = vpop.permute.xlu0 %4579
      %4581 = vrot.lane.b32.xlu0 %v4159, 35
      %v4582 = vpop.permute.xlu0 %4581
      %4583 = vrot.lane.b32.xlu0 %v4160, 35
      %v4584 = vpop.permute.xlu0 %4583
      %4585 = vrot.lane.b32.xlu0 %v4161, 35
      %v4586 = vpop.permute.xlu0 %4585
      %4587 = vrot.lane.b32.xlu0 %v4162, 35
      %v4588 = vpop.permute.xlu0 %4587
      %4589 = vrot.lane.b32.xlu0 %v4163, 35
      %v4590 = vpop.permute.xlu0 %4589
      %4591 = vrot.lane.b32.xlu0 %v4164, 35
      %v4592 = vpop.permute.xlu0 %4591
      %4593 = vrot.lane.b32.xlu0 %v4165, 35
      %v4594 = vpop.permute.xlu0 %4593
      %4595 = vrot.lane.b32.xlu0 %v4166, 35
      %v4596 = vpop.permute.xlu0 %4595
      %vm4597 = vcmask 285696
      %v4598 = vsel %vm4597, %v4578, %v4580
      %v4599 = vsel %vm4597, %v4580, %v4582
      %v4600 = vsel %vm4597, %v4582, %v4584
      %v4601 = vsel %vm4597, %v4584, %v4586
      %v4602 = vsel %vm4597, %v4586, %v4588
      %v4603 = vsel %vm4597, %v4588, %v4590
      %v4604 = vsel %vm4597, %v4590, %v4592
      %v4605 = vsel %vm4597, %v4592, %v4594
      %v4606 = vsel %vm4597, %v4594, %v4596
      %v4617 = vsel %vm4219, %v4167, 0
      %4619 = vmatprep.subr.mxu0 0.0
      %4620 = vmatpush1.msra.mxu0 0.0
      %4621 = vmatprep.subr.mxu0 0.0
      %4622 = vmatpush1.msra.mxu0 0.0
      %4623 = vmatprep.subr.mxu0 0.0
      %4624 = vmatpush1.msra.mxu0 0.0
      %4625 = vmatprep.subr.mxu0 0.0
      %4626 = vmatpush1.msra.mxu0 0.0
      %4627 = vmatprep.subr.mxu0 0.0
      %4628 = vmatpush1.msra.mxu0 0.0
      %4629 = vmatprep.subr.mxu0 0.0
      %4630 = vmatpush1.msra.mxu0 0.0
      %4631 = vmatprep.subr.mxu0 0.0
      %4632 = vmatpush1.msra.mxu0 0.0
      %4633 = vmatprep.subr.mxu0 0.0
      %4634 = vmatpush1.msra.mxu0 0.0
      %4635 = vmatprep.subr.mxu0 0.0
      %4636 = vmatpush1.msra.mxu0 0.0
      %4637 = vmatprep.subr.mxu0 0.0
      %4638 = vmatpush1.msra.mxu0 0.0
      %4639 = vmatprep.subr.mxu0 0.0
      %4640 = vmatpush1.msra.mxu0 0.0
      %4641 = vmatprep.subr.mxu0 0.0
      %4642 = vmatpush1.msra.mxu0 0.0
      %4643 = vmatprep.subr.mxu0 0.0
      %4644 = vmatpush1.msra.mxu0 0.0
      %4645 = vmatprep.subr.mxu0 0.0
      %4646 = vmatpush1.msra.mxu0 0.0
      %4647 = vmatprep.subr.mxu0 0.0
      %4648 = vmatpush1.msra.mxu0 0.0
      %4649 = vmatprep.subr.mxu0 %v4599
      %4650 = vmatpush1.msra.mxu0 %v4598
      %4651 = vmatprep.subr.mxu0 0.0
      %4652 = vmatpush2.msra.mxu0 0.0
      %4653 = vmatprep.subr.mxu0 0.0
      %4654 = vmatpush2.msra.mxu0 0.0
      %4655 = vmatprep.subr.mxu0 0.0
      %4656 = vmatpush2.msra.mxu0 0.0
      %4657 = vmatprep.subr.mxu0 0.0
      %4658 = vmatpush2.msra.mxu0 0.0
      %4659 = vmatprep.subr.mxu0 0.0
      %4660 = vmatpush2.msra.mxu0 0.0
      %4661 = vmatprep.subr.mxu0 0.0
      %4662 = vmatpush2.msra.mxu0 0.0
      %4663 = vmatprep.subr.mxu0 0.0
      %4664 = vmatpush2.msra.mxu0 0.0
      %4665 = vmatprep.subr.mxu0 0.0
      %4666 = vmatpush2.msra.mxu0 0.0
      %4667 = vmatprep.subr.mxu0 0.0
      %4668 = vmatpush2.msra.mxu0 0.0
      %4669 = vmatprep.subr.mxu0 0.0
      %4670 = vmatpush2.msra.mxu0 0.0
      %4671 = vmatprep.subr.mxu0 0.0
      %4672 = vmatpush2.msra.mxu0 0.0
      %4673 = vmatprep.subr.mxu0 0.0
      %4674 = vmatpush2.msra.mxu0 0.0
      %4675 = vmatprep.subr.mxu0 0.0
      %4676 = vmatpush2.msra.mxu0 0.0
      %4677 = vmatprep.subr.mxu0 0.0
      %4678 = vmatpush2.msra.mxu0 0.0
      %4679 = vmatprep.subr.mxu0 0.0
      %4680 = vmatpush2.msra.mxu0 0.0
      %4681 = vmatprep.subr.mxu0 0.0
      %4682 = vmatpush2.msra.mxu0 0.0
      %4683 = vmatprep.mubr.f32.mxu0 0.0
      %4684 = vmatmul.mubr.f32.gmra.mxu0 %v4617
      %v4685 = vpop.f32.mrf.mxu0
      %v4686 = vadd.f32 %v4290, %v4685
      %v4687 = vpop.f32.mrf.mxu0
      %v4688 = vadd.f32 %v4292, %v4687
      %4689 = vdwg.mxu0
      %4690 = vmatprep.subr.mxu0 0.0
      %4691 = vmatpush1.msra.mxu0 0.0
      %4692 = vmatprep.subr.mxu0 0.0
      %4693 = vmatpush1.msra.mxu0 0.0
      %4694 = vmatprep.subr.mxu0 0.0
      %4695 = vmatpush1.msra.mxu0 0.0
      %4696 = vmatprep.subr.mxu0 0.0
      %4697 = vmatpush1.msra.mxu0 0.0
      %4698 = vmatprep.subr.mxu0 0.0
      %4699 = vmatpush1.msra.mxu0 0.0
      %4700 = vmatprep.subr.mxu0 0.0
      %4701 = vmatpush1.msra.mxu0 0.0
      %4702 = vmatprep.subr.mxu0 0.0
      %4703 = vmatpush1.msra.mxu0 0.0
      %4704 = vmatprep.subr.mxu0 0.0
      %4705 = vmatpush1.msra.mxu0 0.0
      %4706 = vmatprep.subr.mxu0 0.0
      %4707 = vmatpush1.msra.mxu0 0.0
      %4708 = vmatprep.subr.mxu0 0.0
      %4709 = vmatpush1.msra.mxu0 0.0
      %4710 = vmatprep.subr.mxu0 0.0
      %4711 = vmatpush1.msra.mxu0 0.0
      %4712 = vmatprep.subr.mxu0 0.0
      %4713 = vmatpush1.msra.mxu0 0.0
      %4714 = vmatprep.subr.mxu0 0.0
      %4715 = vmatpush1.msra.mxu0 0.0
      %4716 = vmatprep.subr.mxu0 0.0
      %4717 = vmatpush1.msra.mxu0 0.0
      %4718 = vmatprep.subr.mxu0 0.0
      %4719 = vmatpush1.msra.mxu0 0.0
      %4720 = vmatprep.subr.mxu0 %v4601
      %4721 = vmatpush1.msra.mxu0 %v4600
      %4722 = vmatprep.subr.mxu0 0.0
      %4723 = vmatpush2.msra.mxu0 0.0
      %4724 = vmatprep.subr.mxu0 0.0
      %4725 = vmatpush2.msra.mxu0 0.0
      %4726 = vmatprep.subr.mxu0 0.0
      %4727 = vmatpush2.msra.mxu0 0.0
      %4728 = vmatprep.subr.mxu0 0.0
      %4729 = vmatpush2.msra.mxu0 0.0
      %4730 = vmatprep.subr.mxu0 0.0
      %4731 = vmatpush2.msra.mxu0 0.0
      %4732 = vmatprep.subr.mxu0 0.0
      %4733 = vmatpush2.msra.mxu0 0.0
      %4734 = vmatprep.subr.mxu0 0.0
      %4735 = vmatpush2.msra.mxu0 0.0
      %4736 = vmatprep.subr.mxu0 0.0
      %4737 = vmatpush2.msra.mxu0 0.0
      %4738 = vmatprep.subr.mxu0 0.0
      %4739 = vmatpush2.msra.mxu0 0.0
      %4740 = vmatprep.subr.mxu0 0.0
      %4741 = vmatpush2.msra.mxu0 0.0
      %4742 = vmatprep.subr.mxu0 0.0
      %4743 = vmatpush2.msra.mxu0 0.0
      %4744 = vmatprep.subr.mxu0 0.0
      %4745 = vmatpush2.msra.mxu0 0.0
      %4746 = vmatprep.subr.mxu0 0.0
      %4747 = vmatpush2.msra.mxu0 0.0
      %4748 = vmatprep.subr.mxu0 0.0
      %4749 = vmatpush2.msra.mxu0 0.0
      %4750 = vmatprep.subr.mxu0 0.0
      %4751 = vmatpush2.msra.mxu0 0.0
      %4752 = vmatprep.subr.mxu0 0.0
      %4753 = vmatpush2.msra.mxu0 0.0
      %4754 = vmatprep.mubr.f32.mxu0 0.0
      %4755 = vmatmul.mubr.f32.gmra.mxu0 %v4617
      %v4756 = vpop.f32.mrf.mxu0
      %v4757 = vadd.f32 %v4361, %v4756
      %v4758 = vpop.f32.mrf.mxu0
      %v4759 = vadd.f32 %v4363, %v4758
      %4760 = vdwg.mxu0
      %4761 = vmatprep.subr.mxu0 0.0
      %4762 = vmatpush1.msra.mxu0 0.0
      %4763 = vmatprep.subr.mxu0 0.0
      %4764 = vmatpush1.msra.mxu0 0.0
      %4765 = vmatprep.subr.mxu0 0.0
      %4766 = vmatpush1.msra.mxu0 0.0
      %4767 = vmatprep.subr.mxu0 0.0
      %4768 = vmatpush1.msra.mxu0 0.0
      %4769 = vmatprep.subr.mxu0 0.0
      %4770 = vmatpush1.msra.mxu0 0.0
      %4771 = vmatprep.subr.mxu0 0.0
      %4772 = vmatpush1.msra.mxu0 0.0
      %4773 = vmatprep.subr.mxu0 0.0
      %4774 = vmatpush1.msra.mxu0 0.0
      %4775 = vmatprep.subr.mxu0 0.0
      %4776 = vmatpush1.msra.mxu0 0.0
      %4777 = vmatprep.subr.mxu0 0.0
      %4778 = vmatpush1.msra.mxu0 0.0
      %4779 = vmatprep.subr.mxu0 0.0
      %4780 = vmatpush1.msra.mxu0 0.0
      %4781 = vmatprep.subr.mxu0 0.0
      %4782 = vmatpush1.msra.mxu0 0.0
      %4783 = vmatprep.subr.mxu0 0.0
      %4784 = vmatpush1.msra.mxu0 0.0
      %4785 = vmatprep.subr.mxu0 0.0
      %4786 = vmatpush1.msra.mxu0 0.0
      %4787 = vmatprep.subr.mxu0 0.0
      %4788 = vmatpush1.msra.mxu0 0.0
      %4789 = vmatprep.subr.mxu0 0.0
      %4790 = vmatpush1.msra.mxu0 0.0
      %4791 = vmatprep.subr.mxu0 %v4603
      %4792 = vmatpush1.msra.mxu0 %v4602
      %4793 = vmatprep.subr.mxu0 0.0
      %4794 = vmatpush2.msra.mxu0 0.0
      %4795 = vmatprep.subr.mxu0 0.0
      %4796 = vmatpush2.msra.mxu0 0.0
      %4797 = vmatprep.subr.mxu0 0.0
      %4798 = vmatpush2.msra.mxu0 0.0
      %4799 = vmatprep.subr.mxu0 0.0
      %4800 = vmatpush2.msra.mxu0 0.0
      %4801 = vmatprep.subr.mxu0 0.0
      %4802 = vmatpush2.msra.mxu0 0.0
      %4803 = vmatprep.subr.mxu0 0.0
      %4804 = vmatpush2.msra.mxu0 0.0
      %4805 = vmatprep.subr.mxu0 0.0
      %4806 = vmatpush2.msra.mxu0 0.0
      %4807 = vmatprep.subr.mxu0 0.0
      %4808 = vmatpush2.msra.mxu0 0.0
      %4809 = vmatprep.subr.mxu0 0.0
      %4810 = vmatpush2.msra.mxu0 0.0
      %4811 = vmatprep.subr.mxu0 0.0
      %4812 = vmatpush2.msra.mxu0 0.0
      %4813 = vmatprep.subr.mxu0 0.0
      %4814 = vmatpush2.msra.mxu0 0.0
      %4815 = vmatprep.subr.mxu0 0.0
      %4816 = vmatpush2.msra.mxu0 0.0
      %4817 = vmatprep.subr.mxu0 0.0
      %4818 = vmatpush2.msra.mxu0 0.0
      %4819 = vmatprep.subr.mxu0 0.0
      %4820 = vmatpush2.msra.mxu0 0.0
      %4821 = vmatprep.subr.mxu0 0.0
      %4822 = vmatpush2.msra.mxu0 0.0
      %4823 = vmatprep.subr.mxu0 0.0
      %4824 = vmatpush2.msra.mxu0 0.0
      %4825 = vmatprep.mubr.f32.mxu0 0.0
      %4826 = vmatmul.mubr.f32.gmra.mxu0 %v4617
      %v4827 = vpop.f32.mrf.mxu0
      %v4828 = vadd.f32 %v4432, %v4827
      %v4829 = vpop.f32.mrf.mxu0
      %v4830 = vadd.f32 %v4434, %v4829
      %4831 = vdwg.mxu0
      %4832 = vmatprep.subr.mxu0 0.0
      %4833 = vmatpush1.msra.mxu0 0.0
      %4834 = vmatprep.subr.mxu0 0.0
      %4835 = vmatpush1.msra.mxu0 0.0
      %4836 = vmatprep.subr.mxu0 0.0
      %4837 = vmatpush1.msra.mxu0 0.0
      %4838 = vmatprep.subr.mxu0 0.0
      %4839 = vmatpush1.msra.mxu0 0.0
      %4840 = vmatprep.subr.mxu0 0.0
      %4841 = vmatpush1.msra.mxu0 0.0
      %4842 = vmatprep.subr.mxu0 0.0
      %4843 = vmatpush1.msra.mxu0 0.0
      %4844 = vmatprep.subr.mxu0 0.0
      %4845 = vmatpush1.msra.mxu0 0.0
      %4846 = vmatprep.subr.mxu0 0.0
      %4847 = vmatpush1.msra.mxu0 0.0
      %4848 = vmatprep.subr.mxu0 0.0
      %4849 = vmatpush1.msra.mxu0 0.0
      %4850 = vmatprep.subr.mxu0 0.0
      %4851 = vmatpush1.msra.mxu0 0.0
      %4852 = vmatprep.subr.mxu0 0.0
      %4853 = vmatpush1.msra.mxu0 0.0
      %4854 = vmatprep.subr.mxu0 0.0
      %4855 = vmatpush1.msra.mxu0 0.0
      %4856 = vmatprep.subr.mxu0 0.0
      %4857 = vmatpush1.msra.mxu0 0.0
      %4858 = vmatprep.subr.mxu0 0.0
      %4859 = vmatpush1.msra.mxu0 0.0
      %4860 = vmatprep.subr.mxu0 0.0
      %4861 = vmatpush1.msra.mxu0 0.0
      %4862 = vmatprep.subr.mxu0 %v4605
      %4863 = vmatpush1.msra.mxu0 %v4604
      %4864 = vmatprep.subr.mxu0 0.0
      %4865 = vmatpush2.msra.mxu0 0.0
      %4866 = vmatprep.subr.mxu0 0.0
      %4867 = vmatpush2.msra.mxu0 0.0
      %4868 = vmatprep.subr.mxu0 0.0
      %4869 = vmatpush2.msra.mxu0 0.0
      %4870 = vmatprep.subr.mxu0 0.0
      %4871 = vmatpush2.msra.mxu0 0.0
      %4872 = vmatprep.subr.mxu0 0.0
      %4873 = vmatpush2.msra.mxu0 0.0
      %4874 = vmatprep.subr.mxu0 0.0
      %4875 = vmatpush2.msra.mxu0 0.0
      %4876 = vmatprep.subr.mxu0 0.0
      %4877 = vmatpush2.msra.mxu0 0.0
      %4878 = vmatprep.subr.mxu0 0.0
      %4879 = vmatpush2.msra.mxu0 0.0
      %4880 = vmatprep.subr.mxu0 0.0
      %4881 = vmatpush2.msra.mxu0 0.0
      %4882 = vmatprep.subr.mxu0 0.0
      %4883 = vmatpush2.msra.mxu0 0.0
      %4884 = vmatprep.subr.mxu0 0.0
      %4885 = vmatpush2.msra.mxu0 0.0
      %4886 = vmatprep.subr.mxu0 0.0
      %4887 = vmatpush2.msra.mxu0 0.0
      %4888 = vmatprep.subr.mxu0 0.0
      %4889 = vmatpush2.msra.mxu0 0.0
      %4890 = vmatprep.subr.mxu0 0.0
      %4891 = vmatpush2.msra.mxu0 0.0
      %4892 = vmatprep.subr.mxu0 0.0
      %4893 = vmatpush2.msra.mxu0 0.0
      %4894 = vmatprep.subr.mxu0 0.0
      %4895 = vmatpush2.msra.mxu0 0.0
      %4896 = vmatprep.mubr.f32.mxu0 0.0
      %4897 = vmatmul.mubr.f32.gmra.mxu0 %v4617
      %v4898 = vpop.f32.mrf.mxu0
      %v4899 = vadd.f32 %v4503, %v4898
      %v4900 = vpop.f32.mrf.mxu0
      %v4901 = vadd.f32 %v4505, %v4900
      %4902 = vdwg.mxu0
      %4903 = vmatprep.subr.mxu0 0.0
      %4904 = vmatpush1.msra.mxu0 0.0
      %4905 = vmatprep.subr.mxu0 0.0
      %4906 = vmatpush1.msra.mxu0 0.0
      %4907 = vmatprep.subr.mxu0 0.0
      %4908 = vmatpush1.msra.mxu0 0.0
      %4909 = vmatprep.subr.mxu0 0.0
      %4910 = vmatpush1.msra.mxu0 0.0
      %4911 = vmatprep.subr.mxu0 0.0
      %4912 = vmatpush1.msra.mxu0 0.0
      %4913 = vmatprep.subr.mxu0 0.0
      %4914 = vmatpush1.msra.mxu0 0.0
      %4915 = vmatprep.subr.mxu0 0.0
      %4916 = vmatpush1.msra.mxu0 0.0
      %4917 = vmatprep.subr.mxu0 0.0
      %4918 = vmatpush1.msra.mxu0 0.0
      %4919 = vmatprep.subr.mxu0 0.0
      %4920 = vmatpush1.msra.mxu0 0.0
      %4921 = vmatprep.subr.mxu0 0.0
      %4922 = vmatpush1.msra.mxu0 0.0
      %4923 = vmatprep.subr.mxu0 0.0
      %4924 = vmatpush1.msra.mxu0 0.0
      %4925 = vmatprep.subr.mxu0 0.0
      %4926 = vmatpush1.msra.mxu0 0.0
      %4927 = vmatprep.subr.mxu0 0.0
      %4928 = vmatpush1.msra.mxu0 0.0
      %4929 = vmatprep.subr.mxu0 0.0
      %4930 = vmatpush1.msra.mxu0 0.0
      %4931 = vmatprep.subr.mxu0 0.0
      %4932 = vmatpush1.msra.mxu0 0.0
      %4933 = vmatprep.subr.mxu0 0.0
      %4934 = vmatpush1.msra.mxu0 %v4606
      %4935 = vmatprep.subr.mxu0 0.0
      %4936 = vmatpush2.msra.mxu0 0.0
      %4937 = vmatprep.subr.mxu0 0.0
      %4938 = vmatpush2.msra.mxu0 0.0
      %4939 = vmatprep.subr.mxu0 0.0
      %4940 = vmatpush2.msra.mxu0 0.0
      %4941 = vmatprep.subr.mxu0 0.0
      %4942 = vmatpush2.msra.mxu0 0.0
      %4943 = vmatprep.subr.mxu0 0.0
      %4944 = vmatpush2.msra.mxu0 0.0
      %4945 = vmatprep.subr.mxu0 0.0
      %4946 = vmatpush2.msra.mxu0 0.0
      %4947 = vmatprep.subr.mxu0 0.0
      %4948 = vmatpush2.msra.mxu0 0.0
      %4949 = vmatprep.subr.mxu0 0.0
      %4950 = vmatpush2.msra.mxu0 0.0
      %4951 = vmatprep.subr.mxu0 0.0
      %4952 = vmatpush2.msra.mxu0 0.0
      %4953 = vmatprep.subr.mxu0 0.0
      %4954 = vmatpush2.msra.mxu0 0.0
      %4955 = vmatprep.subr.mxu0 0.0
      %4956 = vmatpush2.msra.mxu0 0.0
      %4957 = vmatprep.subr.mxu0 0.0
      %4958 = vmatpush2.msra.mxu0 0.0
      %4959 = vmatprep.subr.mxu0 0.0
      %4960 = vmatpush2.msra.mxu0 0.0
      %4961 = vmatprep.subr.mxu0 0.0
      %4962 = vmatpush2.msra.mxu0 0.0
      %4963 = vmatprep.subr.mxu0 0.0
      %4964 = vmatpush2.msra.mxu0 0.0
      %4965 = vmatprep.subr.mxu0 0.0
      %4966 = vmatpush2.msra.mxu0 0.0
      %4967 = vmatprep.mubr.f32.mxu0 0.0
      %4968 = vmatmul.mubr.f32.gmra.mxu0 %v4617
      %v4969 = vpop.f32.mrf.mxu0
      %v4970 = vadd.f32 %v4574, %v4969
      %v4971 = vpop.f32.mrf.mxu0
      %4972 = vdwg.mxu0
      %s4973 = scalar_lea.vmem %s3, 16
      %v4974 = vld [vmem:[%s4973] sm:$0xff]
      %4975 = vrot.lane.b32.xlu0 %v4157, 33
      %v4976 = vpop.permute.xlu0 %4975
      %4977 = vrot.lane.b32.xlu0 %v4158, 33
      %v4978 = vpop.permute.xlu0 %4977
      %4979 = vrot.lane.b32.xlu0 %v4159, 33
      %v4980 = vpop.permute.xlu0 %4979
      %4981 = vrot.lane.b32.xlu0 %v4160, 33
      %v4982 = vpop.permute.xlu0 %4981
      %4983 = vrot.lane.b32.xlu0 %v4161, 33
      %v4984 = vpop.permute.xlu0 %4983
      %4985 = vrot.lane.b32.xlu0 %v4162, 33
      %v4986 = vpop.permute.xlu0 %4985
      %4987 = vrot.lane.b32.xlu0 %v4163, 33
      %v4988 = vpop.permute.xlu0 %4987
      %4989 = vrot.lane.b32.xlu0 %v4164, 33
      %v4990 = vpop.permute.xlu0 %4989
      %4991 = vrot.lane.b32.xlu0 %v4165, 33
      %v4992 = vpop.permute.xlu0 %4991
      %4993 = vrot.lane.b32.xlu0 %v4166, 33
      %v4994 = vpop.permute.xlu0 %4993
      %vm4995 = vcmask 269312
      %v4996 = vsel %vm4995, %v4976, %v4978
      %v4997 = vsel %vm4995, %v4978, %v4980
      %v4998 = vsel %vm4995, %v4980, %v4982
      %v4999 = vsel %vm4995, %v4982, %v4984
      %v5000 = vsel %vm4995, %v4984, %v4986
      %v5001 = vsel %vm4995, %v4986, %v4988
      %v5002 = vsel %vm4995, %v4988, %v4990
      %v5003 = vsel %vm4995, %v4990, %v4992
      %v5004 = vsel %vm4995, %v4992, %v4994
      %v5015 = vsel %vm4219, %v4974, 0
      %5017 = vmatprep.subr.mxu0 0.0
      %5018 = vmatpush1.msra.mxu0 0.0
      %5019 = vmatprep.subr.mxu0 0.0
      %5020 = vmatpush1.msra.mxu0 0.0
      %5021 = vmatprep.subr.mxu0 0.0
      %5022 = vmatpush1.msra.mxu0 0.0
      %5023 = vmatprep.subr.mxu0 0.0
      %5024 = vmatpush1.msra.mxu0 0.0
      %5025 = vmatprep.subr.mxu0 0.0
      %5026 = vmatpush1.msra.mxu0 0.0
      %5027 = vmatprep.subr.mxu0 0.0
      %5028 = vmatpush1.msra.mxu0 0.0
      %5029 = vmatprep.subr.mxu0 0.0
      %5030 = vmatpush1.msra.mxu0 0.0
      %5031 = vmatprep.subr.mxu0 0.0
      %5032 = vmatpush1.msra.mxu0 0.0
      %5033 = vmatprep.subr.mxu0 0.0
      %5034 = vmatpush1.msra.mxu0 0.0
      %5035 = vmatprep.subr.mxu0 0.0
      %5036 = vmatpush1.msra.mxu0 0.0
      %5037 = vmatprep.subr.mxu0 0.0
      %5038 = vmatpush1.msra.mxu0 0.0
      %5039 = vmatprep.subr.mxu0 0.0
      %5040 = vmatpush1.msra.mxu0 0.0
      %5041 = vmatprep.subr.mxu0 0.0
      %5042 = vmatpush1.msra.mxu0 0.0
      %5043 = vmatprep.subr.mxu0 0.0
      %5044 = vmatpush1.msra.mxu0 0.0
      %5045 = vmatprep.subr.mxu0 0.0
      %5046 = vmatpush1.msra.mxu0 0.0
      %5047 = vmatprep.subr.mxu0 %v4997
      %5048 = vmatpush1.msra.mxu0 %v4996
      %5049 = vmatprep.subr.mxu0 0.0
      %5050 = vmatpush2.msra.mxu0 0.0
      %5051 = vmatprep.subr.mxu0 0.0
      %5052 = vmatpush2.msra.mxu0 0.0
      %5053 = vmatprep.subr.mxu0 0.0
      %5054 = vmatpush2.msra.mxu0 0.0
      %5055 = vmatprep.subr.mxu0 0.0
      %5056 = vmatpush2.msra.mxu0 0.0
      %5057 = vmatprep.subr.mxu0 0.0
      %5058 = vmatpush2.msra.mxu0 0.0
      %5059 = vmatprep.subr.mxu0 0.0
      %5060 = vmatpush2.msra.mxu0 0.0
      %5061 = vmatprep.subr.mxu0 0.0
      %5062 = vmatpush2.msra.mxu0 0.0
      %5063 = vmatprep.subr.mxu0 0.0
      %5064 = vmatpush2.msra.mxu0 0.0
      %5065 = vmatprep.subr.mxu0 0.0
      %5066 = vmatpush2.msra.mxu0 0.0
      %5067 = vmatprep.subr.mxu0 0.0
      %5068 = vmatpush2.msra.mxu0 0.0
      %5069 = vmatprep.subr.mxu0 0.0
      %5070 = vmatpush2.msra.mxu0 0.0
      %5071 = vmatprep.subr.mxu0 0.0
      %5072 = vmatpush2.msra.mxu0 0.0
      %5073 = vmatprep.subr.mxu0 0.0
      %5074 = vmatpush2.msra.mxu0 0.0
      %5075 = vmatprep.subr.mxu0 0.0
      %5076 = vmatpush2.msra.mxu0 0.0
      %5077 = vmatprep.subr.mxu0 0.0
      %5078 = vmatpush2.msra.mxu0 0.0
      %5079 = vmatprep.subr.mxu0 0.0
      %5080 = vmatpush2.msra.mxu0 0.0
      %5081 = vmatprep.mubr.f32.mxu0 0.0
      %5082 = vmatmul.mubr.f32.gmra.mxu0 %v5015
      %v5083 = vpop.f32.mrf.mxu0
      %v5084 = vadd.f32 0.0, %v5083
      %v5085 = vpop.f32.mrf.mxu0
      %v5086 = vadd.f32 0.0, %v5085
      %5087 = vdwg.mxu0
      %5088 = vmatprep.subr.mxu0 0.0
      %5089 = vmatpush1.msra.mxu0 0.0
      %5090 = vmatprep.subr.mxu0 0.0
      %5091 = vmatpush1.msra.mxu0 0.0
      %5092 = vmatprep.subr.mxu0 0.0
      %5093 = vmatpush1.msra.mxu0 0.0
      %5094 = vmatprep.subr.mxu0 0.0
      %5095 = vmatpush1.msra.mxu0 0.0
      %5096 = vmatprep.subr.mxu0 0.0
      %5097 = vmatpush1.msra.mxu0 0.0
      %5098 = vmatprep.subr.mxu0 0.0
      %5099 = vmatpush1.msra.mxu0 0.0
      %5100 = vmatprep.subr.mxu0 0.0
      %5101 = vmatpush1.msra.mxu0 0.0
      %5102 = vmatprep.subr.mxu0 0.0
      %5103 = vmatpush1.msra.mxu0 0.0
      %5104 = vmatprep.subr.mxu0 0.0
      %5105 = vmatpush1.msra.mxu0 0.0
      %5106 = vmatprep.subr.mxu0 0.0
      %5107 = vmatpush1.msra.mxu0 0.0
      %5108 = vmatprep.subr.mxu0 0.0
      %5109 = vmatpush1.msra.mxu0 0.0
      %5110 = vmatprep.subr.mxu0 0.0
      %5111 = vmatpush1.msra.mxu0 0.0
      %5112 = vmatprep.subr.mxu0 0.0
      %5113 = vmatpush1.msra.mxu0 0.0
      %5114 = vmatprep.subr.mxu0 0.0
      %5115 = vmatpush1.msra.mxu0 0.0
      %5116 = vmatprep.subr.mxu0 0.0
      %5117 = vmatpush1.msra.mxu0 0.0
      %5118 = vmatprep.subr.mxu0 %v4999
      %5119 = vmatpush1.msra.mxu0 %v4998
      %5120 = vmatprep.subr.mxu0 0.0
      %5121 = vmatpush2.msra.mxu0 0.0
      %5122 = vmatprep.subr.mxu0 0.0
      %5123 = vmatpush2.msra.mxu0 0.0
      %5124 = vmatprep.subr.mxu0 0.0
      %5125 = vmatpush2.msra.mxu0 0.0
      %5126 = vmatprep.subr.mxu0 0.0
      %5127 = vmatpush2.msra.mxu0 0.0
      %5128 = vmatprep.subr.mxu0 0.0
      %5129 = vmatpush2.msra.mxu0 0.0
      %5130 = vmatprep.subr.mxu0 0.0
      %5131 = vmatpush2.msra.mxu0 0.0
      %5132 = vmatprep.subr.mxu0 0.0
      %5133 = vmatpush2.msra.mxu0 0.0
      %5134 = vmatprep.subr.mxu0 0.0
      %5135 = vmatpush2.msra.mxu0 0.0
      %5136 = vmatprep.subr.mxu0 0.0
      %5137 = vmatpush2.msra.mxu0 0.0
      %5138 = vmatprep.subr.mxu0 0.0
      %5139 = vmatpush2.msra.mxu0 0.0
      %5140 = vmatprep.subr.mxu0 0.0
      %5141 = vmatpush2.msra.mxu0 0.0
      %5142 = vmatprep.subr.mxu0 0.0
      %5143 = vmatpush2.msra.mxu0 0.0
      %5144 = vmatprep.subr.mxu0 0.0
      %5145 = vmatpush2.msra.mxu0 0.0
      %5146 = vmatprep.subr.mxu0 0.0
      %5147 = vmatpush2.msra.mxu0 0.0
      %5148 = vmatprep.subr.mxu0 0.0
      %5149 = vmatpush2.msra.mxu0 0.0
      %5150 = vmatprep.subr.mxu0 0.0
      %5151 = vmatpush2.msra.mxu0 0.0
      %5152 = vmatprep.mubr.f32.mxu0 0.0
      %5153 = vmatmul.mubr.f32.gmra.mxu0 %v5015
      %v5154 = vpop.f32.mrf.mxu0
      %v5155 = vadd.f32 0.0, %v5154
      %v5156 = vpop.f32.mrf.mxu0
      %v5157 = vadd.f32 0.0, %v5156
      %5158 = vdwg.mxu0
      %5159 = vmatprep.subr.mxu0 0.0
      %5160 = vmatpush1.msra.mxu0 0.0
      %5161 = vmatprep.subr.mxu0 0.0
      %5162 = vmatpush1.msra.mxu0 0.0
      %5163 = vmatprep.subr.mxu0 0.0
      %5164 = vmatpush1.msra.mxu0 0.0
      %5165 = vmatprep.subr.mxu0 0.0
      %5166 = vmatpush1.msra.mxu0 0.0
      %5167 = vmatprep.subr.mxu0 0.0
      %5168 = vmatpush1.msra.mxu0 0.0
      %5169 = vmatprep.subr.mxu0 0.0
      %5170 = vmatpush1.msra.mxu0 0.0
      %5171 = vmatprep.subr.mxu0 0.0
      %5172 = vmatpush1.msra.mxu0 0.0
      %5173 = vmatprep.subr.mxu0 0.0
      %5174 = vmatpush1.msra.mxu0 0.0
      %5175 = vmatprep.subr.mxu0 0.0
      %5176 = vmatpush1.msra.mxu0 0.0
      %5177 = vmatprep.subr.mxu0 0.0
      %5178 = vmatpush1.msra.mxu0 0.0
      %5179 = vmatprep.subr.mxu0 0.0
      %5180 = vmatpush1.msra.mxu0 0.0
      %5181 = vmatprep.subr.mxu0 0.0
      %5182 = vmatpush1.msra.mxu0 0.0
      %5183 = vmatprep.subr.mxu0 0.0
      %5184 = vmatpush1.msra.mxu0 0.0
      %5185 = vmatprep.subr.mxu0 0.0
      %5186 = vmatpush1.msra.mxu0 0.0
      %5187 = vmatprep.subr.mxu0 0.0
      %5188 = vmatpush1.msra.mxu0 0.0
      %5189 = vmatprep.subr.mxu0 %v5001
      %5190 = vmatpush1.msra.mxu0 %v5000
      %5191 = vmatprep.subr.mxu0 0.0
      %5192 = vmatpush2.msra.mxu0 0.0
      %5193 = vmatprep.subr.mxu0 0.0
      %5194 = vmatpush2.msra.mxu0 0.0
      %5195 = vmatprep.subr.mxu0 0.0
      %5196 = vmatpush2.msra.mxu0 0.0
      %5197 = vmatprep.subr.mxu0 0.0
      %5198 = vmatpush2.msra.mxu0 0.0
      %5199 = vmatprep.subr.mxu0 0.0
      %5200 = vmatpush2.msra.mxu0 0.0
      %5201 = vmatprep.subr.mxu0 0.0
      %5202 = vmatpush2.msra.mxu0 0.0
      %5203 = vmatprep.subr.mxu0 0.0
      %5204 = vmatpush2.msra.mxu0 0.0
      %5205 = vmatprep.subr.mxu0 0.0
      %5206 = vmatpush2.msra.mxu0 0.0
      %5207 = vmatprep.subr.mxu0 0.0
      %5208 = vmatpush2.msra.mxu0 0.0
      %5209 = vmatprep.subr.mxu0 0.0
      %5210 = vmatpush2.msra.mxu0 0.0
      %5211 = vmatprep.subr.mxu0 0.0
      %5212 = vmatpush2.msra.mxu0 0.0
      %5213 = vmatprep.subr.mxu0 0.0
      %5214 = vmatpush2.msra.mxu0 0.0
      %5215 = vmatprep.subr.mxu0 0.0
      %5216 = vmatpush2.msra.mxu0 0.0
      %5217 = vmatprep.subr.mxu0 0.0
      %5218 = vmatpush2.msra.mxu0 0.0
      %5219 = vmatprep.subr.mxu0 0.0
      %5220 = vmatpush2.msra.mxu0 0.0
      %5221 = vmatprep.subr.mxu0 0.0
      %5222 = vmatpush2.msra.mxu0 0.0
      %5223 = vmatprep.mubr.f32.mxu0 0.0
      %5224 = vmatmul.mubr.f32.gmra.mxu0 %v5015
      %v5225 = vpop.f32.mrf.mxu0
      %v5226 = vadd.f32 0.0, %v5225
      %v5227 = vpop.f32.mrf.mxu0
      %v5228 = vadd.f32 0.0, %v5227
      %5229 = vdwg.mxu0
      %5230 = vmatprep.subr.mxu0 0.0
      %5231 = vmatpush1.msra.mxu0 0.0
      %5232 = vmatprep.subr.mxu0 0.0
      %5233 = vmatpush1.msra.mxu0 0.0
      %5234 = vmatprep.subr.mxu0 0.0
      %5235 = vmatpush1.msra.mxu0 0.0
      %5236 = vmatprep.subr.mxu0 0.0
      %5237 = vmatpush1.msra.mxu0 0.0
      %5238 = vmatprep.subr.mxu0 0.0
      %5239 = vmatpush1.msra.mxu0 0.0
      %5240 = vmatprep.subr.mxu0 0.0
      %5241 = vmatpush1.msra.mxu0 0.0
      %5242 = vmatprep.subr.mxu0 0.0
      %5243 = vmatpush1.msra.mxu0 0.0
      %5244 = vmatprep.subr.mxu0 0.0
      %5245 = vmatpush1.msra.mxu0 0.0
      %5246 = vmatprep.subr.mxu0 0.0
      %5247 = vmatpush1.msra.mxu0 0.0
      %5248 = vmatprep.subr.mxu0 0.0
      %5249 = vmatpush1.msra.mxu0 0.0
      %5250 = vmatprep.subr.mxu0 0.0
      %5251 = vmatpush1.msra.mxu0 0.0
      %5252 = vmatprep.subr.mxu0 0.0
      %5253 = vmatpush1.msra.mxu0 0.0
      %5254 = vmatprep.subr.mxu0 0.0
      %5255 = vmatpush1.msra.mxu0 0.0
      %5256 = vmatprep.subr.mxu0 0.0
      %5257 = vmatpush1.msra.mxu0 0.0
      %5258 = vmatprep.subr.mxu0 0.0
      %5259 = vmatpush1.msra.mxu0 0.0
      %5260 = vmatprep.subr.mxu0 %v5003
      %5261 = vmatpush1.msra.mxu0 %v5002
      %5262 = vmatprep.subr.mxu0 0.0
      %5263 = vmatpush2.msra.mxu0 0.0
      %5264 = vmatprep.subr.mxu0 0.0
      %5265 = vmatpush2.msra.mxu0 0.0
      %5266 = vmatprep.subr.mxu0 0.0
      %5267 = vmatpush2.msra.mxu0 0.0
      %5268 = vmatprep.subr.mxu0 0.0
      %5269 = vmatpush2.msra.mxu0 0.0
      %5270 = vmatprep.subr.mxu0 0.0
      %5271 = vmatpush2.msra.mxu0 0.0
      %5272 = vmatprep.subr.mxu0 0.0
      %5273 = vmatpush2.msra.mxu0 0.0
      %5274 = vmatprep.subr.mxu0 0.0
      %5275 = vmatpush2.msra.mxu0 0.0
      %5276 = vmatprep.subr.mxu0 0.0
      %5277 = vmatpush2.msra.mxu0 0.0
      %5278 = vmatprep.subr.mxu0 0.0
      %5279 = vmatpush2.msra.mxu0 0.0
      %5280 = vmatprep.subr.mxu0 0.0
      %5281 = vmatpush2.msra.mxu0 0.0
      %5282 = vmatprep.subr.mxu0 0.0
      %5283 = vmatpush2.msra.mxu0 0.0
      %5284 = vmatprep.subr.mxu0 0.0
      %5285 = vmatpush2.msra.mxu0 0.0
      %5286 = vmatprep.subr.mxu0 0.0
      %5287 = vmatpush2.msra.mxu0 0.0
      %5288 = vmatprep.subr.mxu0 0.0
      %5289 = vmatpush2.msra.mxu0 0.0
      %5290 = vmatprep.subr.mxu0 0.0
      %5291 = vmatpush2.msra.mxu0 0.0
      %5292 = vmatprep.subr.mxu0 0.0
      %5293 = vmatpush2.msra.mxu0 0.0
      %5294 = vmatprep.mubr.f32.mxu0 0.0
      %5295 = vmatmul.mubr.f32.gmra.mxu0 %v5015
      %v5296 = vpop.f32.mrf.mxu0
      %v5297 = vadd.f32 0.0, %v5296
      %v5298 = vpop.f32.mrf.mxu0
      %v5299 = vadd.f32 0.0, %v5298
      %5300 = vdwg.mxu0
      %5301 = vmatprep.subr.mxu0 0.0
      %5302 = vmatpush1.msra.mxu0 0.0
      %5303 = vmatprep.subr.mxu0 0.0
      %5304 = vmatpush1.msra.mxu0 0.0
      %5305 = vmatprep.subr.mxu0 0.0
      %5306 = vmatpush1.msra.mxu0 0.0
      %5307 = vmatprep.subr.mxu0 0.0
      %5308 = vmatpush1.msra.mxu0 0.0
      %5309 = vmatprep.subr.mxu0 0.0
      %5310 = vmatpush1.msra.mxu0 0.0
      %5311 = vmatprep.subr.mxu0 0.0
      %5312 = vmatpush1.msra.mxu0 0.0
      %5313 = vmatprep.subr.mxu0 0.0
      %5314 = vmatpush1.msra.mxu0 0.0
      %5315 = vmatprep.subr.mxu0 0.0
      %5316 = vmatpush1.msra.mxu0 0.0
      %5317 = vmatprep.subr.mxu0 0.0
      %5318 = vmatpush1.msra.mxu0 0.0
      %5319 = vmatprep.subr.mxu0 0.0
      %5320 = vmatpush1.msra.mxu0 0.0
      %5321 = vmatprep.subr.mxu0 0.0
      %5322 = vmatpush1.msra.mxu0 0.0
      %5323 = vmatprep.subr.mxu0 0.0
      %5324 = vmatpush1.msra.mxu0 0.0
      %5325 = vmatprep.subr.mxu0 0.0
      %5326 = vmatpush1.msra.mxu0 0.0
      %5327 = vmatprep.subr.mxu0 0.0
      %5328 = vmatpush1.msra.mxu0 0.0
      %5329 = vmatprep.subr.mxu0 0.0
      %5330 = vmatpush1.msra.mxu0 0.0
      %5331 = vmatprep.subr.mxu0 0.0
      %5332 = vmatpush1.msra.mxu0 %v5004
      %5333 = vmatprep.subr.mxu0 0.0
      %5334 = vmatpush2.msra.mxu0 0.0
      %5335 = vmatprep.subr.mxu0 0.0
      %5336 = vmatpush2.msra.mxu0 0.0
      %5337 = vmatprep.subr.mxu0 0.0
      %5338 = vmatpush2.msra.mxu0 0.0
      %5339 = vmatprep.subr.mxu0 0.0
      %5340 = vmatpush2.msra.mxu0 0.0
      %5341 = vmatprep.subr.mxu0 0.0
      %5342 = vmatpush2.msra.mxu0 0.0
      %5343 = vmatprep.subr.mxu0 0.0
      %5344 = vmatpush2.msra.mxu0 0.0
      %5345 = vmatprep.subr.mxu0 0.0
      %5346 = vmatpush2.msra.mxu0 0.0
      %5347 = vmatprep.subr.mxu0 0.0
      %5348 = vmatpush2.msra.mxu0 0.0
      %5349 = vmatprep.subr.mxu0 0.0
      %5350 = vmatpush2.msra.mxu0 0.0
      %5351 = vmatprep.subr.mxu0 0.0
      %5352 = vmatpush2.msra.mxu0 0.0
      %5353 = vmatprep.subr.mxu0 0.0
      %5354 = vmatpush2.msra.mxu0 0.0
      %5355 = vmatprep.subr.mxu0 0.0
      %5356 = vmatpush2.msra.mxu0 0.0
      %5357 = vmatprep.subr.mxu0 0.0
      %5358 = vmatpush2.msra.mxu0 0.0
      %5359 = vmatprep.subr.mxu0 0.0
      %5360 = vmatpush2.msra.mxu0 0.0
      %5361 = vmatprep.subr.mxu0 0.0
      %5362 = vmatpush2.msra.mxu0 0.0
      %5363 = vmatprep.subr.mxu0 0.0
      %5364 = vmatpush2.msra.mxu0 0.0
      %5365 = vmatprep.mubr.f32.mxu0 0.0
      %5366 = vmatmul.mubr.f32.gmra.mxu0 %v5015
      %v5367 = vpop.f32.mrf.mxu0
      %v5368 = vadd.f32 0.0, %v5367
      %v5369 = vpop.f32.mrf.mxu0
      %5370 = vdwg.mxu0
      %v5371 = vadd.f32 %v4686, %v5084
      %v5372 = vadd.f32 %v4688, %v5086
      %v5373 = vadd.f32 %v4757, %v5155
      %v5374 = vadd.f32 %v4759, %v5157
      %v5375 = vadd.f32 %v4828, %v5226
      %v5376 = vadd.f32 %v4830, %v5228
      %v5377 = vadd.f32 %v4899, %v5297
      %v5378 = vadd.f32 %v4901, %v5299
      %v5379 = vadd.f32 %v4970, %v5368
      %s5380 = scalar_lea.vmem %s3, 24
      %v5381 = vld [vmem:[%s5380] sm:$0xff]
      %5382 = vrot.lane.b32.xlu0 %v4157, 1
      %v5383 = vpop.permute.xlu0 %5382
      %5384 = vrot.lane.b32.xlu0 %v4158, 1
      %v5385 = vpop.permute.xlu0 %5384
      %5386 = vrot.lane.b32.xlu0 %v4159, 1
      %v5387 = vpop.permute.xlu0 %5386
      %5388 = vrot.lane.b32.xlu0 %v4160, 1
      %v5389 = vpop.permute.xlu0 %5388
      %5390 = vrot.lane.b32.xlu0 %v4161, 1
      %v5391 = vpop.permute.xlu0 %5390
      %5392 = vrot.lane.b32.xlu0 %v4162, 1
      %v5393 = vpop.permute.xlu0 %5392
      %5394 = vrot.lane.b32.xlu0 %v4163, 1
      %v5395 = vpop.permute.xlu0 %5394
      %5396 = vrot.lane.b32.xlu0 %v4164, 1
      %v5397 = vpop.permute.xlu0 %5396
      %5398 = vrot.lane.b32.xlu0 %v4165, 1
      %v5399 = vpop.permute.xlu0 %5398
      %5400 = vrot.lane.b32.xlu0 %v4166, 1
      %v5401 = vpop.permute.xlu0 %5400
      %vm5402 = vcmask 7168
      %v5403 = vsel %vm5402, %v5383, %v5385
      %v5404 = vsel %vm5402, %v5385, %v5387
      %v5405 = vsel %vm5402, %v5387, %v5389
      %v5406 = vsel %vm5402, %v5389, %v5391
      %v5407 = vsel %vm5402, %v5391, %v5393
      %v5408 = vsel %vm5402, %v5393, %v5395
      %v5409 = vsel %vm5402, %v5395, %v5397
      %v5410 = vsel %vm5402, %v5397, %v5399
      %v5411 = vsel %vm5402, %v5399, %v5401
      %v5422 = vsel %vm4219, %v5381, 0
      %5424 = vmatprep.subr.mxu0 0.0
      %5425 = vmatpush1.msra.mxu0 0.0
      %5426 = vmatprep.subr.mxu0 0.0
      %5427 = vmatpush1.msra.mxu0 0.0
      %5428 = vmatprep.subr.mxu0 0.0
      %5429 = vmatpush1.msra.mxu0 0.0
      %5430 = vmatprep.subr.mxu0 0.0
      %5431 = vmatpush1.msra.mxu0 0.0
      %5432 = vmatprep.subr.mxu0 0.0
      %5433 = vmatpush1.msra.mxu0 0.0
      %5434 = vmatprep.subr.mxu0 0.0
      %5435 = vmatpush1.msra.mxu0 0.0
      %5436 = vmatprep.subr.mxu0 0.0
      %5437 = vmatpush1.msra.mxu0 0.0
      %5438 = vmatprep.subr.mxu0 0.0
      %5439 = vmatpush1.msra.mxu0 0.0
      %5440 = vmatprep.subr.mxu0 0.0
      %5441 = vmatpush1.msra.mxu0 0.0
      %5442 = vmatprep.subr.mxu0 0.0
      %5443 = vmatpush1.msra.mxu0 0.0
      %5444 = vmatprep.subr.mxu0 0.0
      %5445 = vmatpush1.msra.mxu0 0.0
      %5446 = vmatprep.subr.mxu0 0.0
      %5447 = vmatpush1.msra.mxu0 0.0
      %5448 = vmatprep.subr.mxu0 0.0
      %5449 = vmatpush1.msra.mxu0 0.0
      %5450 = vmatprep.subr.mxu0 0.0
      %5451 = vmatpush1.msra.mxu0 0.0
      %5452 = vmatprep.subr.mxu0 0.0
      %5453 = vmatpush1.msra.mxu0 0.0
      %5454 = vmatprep.subr.mxu0 %v5404
      %5455 = vmatpush1.msra.mxu0 %v5403
      %5456 = vmatprep.subr.mxu0 0.0
      %5457 = vmatpush2.msra.mxu0 0.0
      %5458 = vmatprep.subr.mxu0 0.0
      %5459 = vmatpush2.msra.mxu0 0.0
      %5460 = vmatprep.subr.mxu0 0.0
      %5461 = vmatpush2.msra.mxu0 0.0
      %5462 = vmatprep.subr.mxu0 0.0
      %5463 = vmatpush2.msra.mxu0 0.0
      %5464 = vmatprep.subr.mxu0 0.0
      %5465 = vmatpush2.msra.mxu0 0.0
      %5466 = vmatprep.subr.mxu0 0.0
      %5467 = vmatpush2.msra.mxu0 0.0
      %5468 = vmatprep.subr.mxu0 0.0
      %5469 = vmatpush2.msra.mxu0 0.0
      %5470 = vmatprep.subr.mxu0 0.0
      %5471 = vmatpush2.msra.mxu0 0.0
      %5472 = vmatprep.subr.mxu0 0.0
      %5473 = vmatpush2.msra.mxu0 0.0
      %5474 = vmatprep.subr.mxu0 0.0
      %5475 = vmatpush2.msra.mxu0 0.0
      %5476 = vmatprep.subr.mxu0 0.0
      %5477 = vmatpush2.msra.mxu0 0.0
      %5478 = vmatprep.subr.mxu0 0.0
      %5479 = vmatpush2.msra.mxu0 0.0
      %5480 = vmatprep.subr.mxu0 0.0
      %5481 = vmatpush2.msra.mxu0 0.0
      %5482 = vmatprep.subr.mxu0 0.0
      %5483 = vmatpush2.msra.mxu0 0.0
      %5484 = vmatprep.subr.mxu0 0.0
      %5485 = vmatpush2.msra.mxu0 0.0
      %5486 = vmatprep.subr.mxu0 0.0
      %5487 = vmatpush2.msra.mxu0 0.0
      %5488 = vmatprep.mubr.f32.mxu0 0.0
      %5489 = vmatmul.mubr.f32.gmra.mxu0 %v5422
      %v5490 = vpop.f32.mrf.mxu0
      %v5491 = vadd.f32 0.0, %v5490
      %v5492 = vpop.f32.mrf.mxu0
      %v5493 = vadd.f32 0.0, %v5492
      %5494 = vdwg.mxu0
      %5495 = vmatprep.subr.mxu0 0.0
      %5496 = vmatpush1.msra.mxu0 0.0
      %5497 = vmatprep.subr.mxu0 0.0
      %5498 = vmatpush1.msra.mxu0 0.0
      %5499 = vmatprep.subr.mxu0 0.0
      %5500 = vmatpush1.msra.mxu0 0.0
      %5501 = vmatprep.subr.mxu0 0.0
      %5502 = vmatpush1.msra.mxu0 0.0
      %5503 = vmatprep.subr.mxu0 0.0
      %5504 = vmatpush1.msra.mxu0 0.0
      %5505 = vmatprep.subr.mxu0 0.0
      %5506 = vmatpush1.msra.mxu0 0.0
      %5507 = vmatprep.subr.mxu0 0.0
      %5508 = vmatpush1.msra.mxu0 0.0
      %5509 = vmatprep.subr.mxu0 0.0
      %5510 = vmatpush1.msra.mxu0 0.0
      %5511 = vmatprep.subr.mxu0 0.0
      %5512 = vmatpush1.msra.mxu0 0.0
      %5513 = vmatprep.subr.mxu0 0.0
      %5514 = vmatpush1.msra.mxu0 0.0
      %5515 = vmatprep.subr.mxu0 0.0
      %5516 = vmatpush1.msra.mxu0 0.0
      %5517 = vmatprep.subr.mxu0 0.0
      %5518 = vmatpush1.msra.mxu0 0.0
      %5519 = vmatprep.subr.mxu0 0.0
      %5520 = vmatpush1.msra.mxu0 0.0
      %5521 = vmatprep.subr.mxu0 0.0
      %5522 = vmatpush1.msra.mxu0 0.0
      %5523 = vmatprep.subr.mxu0 0.0
      %5524 = vmatpush1.msra.mxu0 0.0
      %5525 = vmatprep.subr.mxu0 %v5406
      %5526 = vmatpush1.msra.mxu0 %v5405
      %5527 = vmatprep.subr.mxu0 0.0
      %5528 = vmatpush2.msra.mxu0 0.0
      %5529 = vmatprep.subr.mxu0 0.0
      %5530 = vmatpush2.msra.mxu0 0.0
      %5531 = vmatprep.subr.mxu0 0.0
      %5532 = vmatpush2.msra.mxu0 0.0
      %5533 = vmatprep.subr.mxu0 0.0
      %5534 = vmatpush2.msra.mxu0 0.0
      %5535 = vmatprep.subr.mxu0 0.0
      %5536 = vmatpush2.msra.mxu0 0.0
      %5537 = vmatprep.subr.mxu0 0.0
      %5538 = vmatpush2.msra.mxu0 0.0
      %5539 = vmatprep.subr.mxu0 0.0
      %5540 = vmatpush2.msra.mxu0 0.0
      %5541 = vmatprep.subr.mxu0 0.0
      %5542 = vmatpush2.msra.mxu0 0.0
      %5543 = vmatprep.subr.mxu0 0.0
      %5544 = vmatpush2.msra.mxu0 0.0
      %5545 = vmatprep.subr.mxu0 0.0
      %5546 = vmatpush2.msra.mxu0 0.0
      %5547 = vmatprep.subr.mxu0 0.0
      %5548 = vmatpush2.msra.mxu0 0.0
      %5549 = vmatprep.subr.mxu0 0.0
      %5550 = vmatpush2.msra.mxu0 0.0
      %5551 = vmatprep.subr.mxu0 0.0
      %5552 = vmatpush2.msra.mxu0 0.0
      %5553 = vmatprep.subr.mxu0 0.0
      %5554 = vmatpush2.msra.mxu0 0.0
      %5555 = vmatprep.subr.mxu0 0.0
      %5556 = vmatpush2.msra.mxu0 0.0
      %5557 = vmatprep.subr.mxu0 0.0
      %5558 = vmatpush2.msra.mxu0 0.0
      %5559 = vmatprep.mubr.f32.mxu0 0.0
      %5560 = vmatmul.mubr.f32.gmra.mxu0 %v5422
      %v5561 = vpop.f32.mrf.mxu0
      %v5562 = vadd.f32 0.0, %v5561
      %v5563 = vpop.f32.mrf.mxu0
      %v5564 = vadd.f32 0.0, %v5563
      %5565 = vdwg.mxu0
      %5566 = vmatprep.subr.mxu0 0.0
      %5567 = vmatpush1.msra.mxu0 0.0
      %5568 = vmatprep.subr.mxu0 0.0
      %5569 = vmatpush1.msra.mxu0 0.0
      %5570 = vmatprep.subr.mxu0 0.0
      %5571 = vmatpush1.msra.mxu0 0.0
      %5572 = vmatprep.subr.mxu0 0.0
      %5573 = vmatpush1.msra.mxu0 0.0
      %5574 = vmatprep.subr.mxu0 0.0
      %5575 = vmatpush1.msra.mxu0 0.0
      %5576 = vmatprep.subr.mxu0 0.0
      %5577 = vmatpush1.msra.mxu0 0.0
      %5578 = vmatprep.subr.mxu0 0.0
      %5579 = vmatpush1.msra.mxu0 0.0
      %5580 = vmatprep.subr.mxu0 0.0
      %5581 = vmatpush1.msra.mxu0 0.0
      %5582 = vmatprep.subr.mxu0 0.0
      %5583 = vmatpush1.msra.mxu0 0.0
      %5584 = vmatprep.subr.mxu0 0.0
      %5585 = vmatpush1.msra.mxu0 0.0
      %5586 = vmatprep.subr.mxu0 0.0
      %5587 = vmatpush1.msra.mxu0 0.0
      %5588 = vmatprep.subr.mxu0 0.0
      %5589 = vmatpush1.msra.mxu0 0.0
      %5590 = vmatprep.subr.mxu0 0.0
      %5591 = vmatpush1.msra.mxu0 0.0
      %5592 = vmatprep.subr.mxu0 0.0
      %5593 = vmatpush1.msra.mxu0 0.0
      %5594 = vmatprep.subr.mxu0 0.0
      %5595 = vmatpush1.msra.mxu0 0.0
      %5596 = vmatprep.subr.mxu0 %v5408
      %5597 = vmatpush1.msra.mxu0 %v5407
      %5598 = vmatprep.subr.mxu0 0.0
      %5599 = vmatpush2.msra.mxu0 0.0
      %5600 = vmatprep.subr.mxu0 0.0
      %5601 = vmatpush2.msra.mxu0 0.0
      %5602 = vmatprep.subr.mxu0 0.0
      %5603 = vmatpush2.msra.mxu0 0.0
      %5604 = vmatprep.subr.mxu0 0.0
      %5605 = vmatpush2.msra.mxu0 0.0
      %5606 = vmatprep.subr.mxu0 0.0
      %5607 = vmatpush2.msra.mxu0 0.0
      %5608 = vmatprep.subr.mxu0 0.0
      %5609 = vmatpush2.msra.mxu0 0.0
      %5610 = vmatprep.subr.mxu0 0.0
      %5611 = vmatpush2.msra.mxu0 0.0
      %5612 = vmatprep.subr.mxu0 0.0
      %5613 = vmatpush2.msra.mxu0 0.0
      %5614 = vmatprep.subr.mxu0 0.0
      %5615 = vmatpush2.msra.mxu0 0.0
      %5616 = vmatprep.subr.mxu0 0.0
      %5617 = vmatpush2.msra.mxu0 0.0
      %5618 = vmatprep.subr.mxu0 0.0
      %5619 = vmatpush2.msra.mxu0 0.0
      %5620 = vmatprep.subr.mxu0 0.0
      %5621 = vmatpush2.msra.mxu0 0.0
      %5622 = vmatprep.subr.mxu0 0.0
      %5623 = vmatpush2.msra.mxu0 0.0
      %5624 = vmatprep.subr.mxu0 0.0
      %5625 = vmatpush2.msra.mxu0 0.0
      %5626 = vmatprep.subr.mxu0 0.0
      %5627 = vmatpush2.msra.mxu0 0.0
      %5628 = vmatprep.subr.mxu0 0.0
      %5629 = vmatpush2.msra.mxu0 0.0
      %5630 = vmatprep.mubr.f32.mxu0 0.0
      %5631 = vmatmul.mubr.f32.gmra.mxu0 %v5422
      %v5632 = vpop.f32.mrf.mxu0
      %v5633 = vadd.f32 0.0, %v5632
      %v5634 = vpop.f32.mrf.mxu0
      %v5635 = vadd.f32 0.0, %v5634
      %5636 = vdwg.mxu0
      %5637 = vmatprep.subr.mxu0 0.0
      %5638 = vmatpush1.msra.mxu0 0.0
      %5639 = vmatprep.subr.mxu0 0.0
      %5640 = vmatpush1.msra.mxu0 0.0
      %5641 = vmatprep.subr.mxu0 0.0
      %5642 = vmatpush1.msra.mxu0 0.0
      %5643 = vmatprep.subr.mxu0 0.0
      %5644 = vmatpush1.msra.mxu0 0.0
      %5645 = vmatprep.subr.mxu0 0.0
      %5646 = vmatpush1.msra.mxu0 0.0
      %5647 = vmatprep.subr.mxu0 0.0
      %5648 = vmatpush1.msra.mxu0 0.0
      %5649 = vmatprep.subr.mxu0 0.0
      %5650 = vmatpush1.msra.mxu0 0.0
      %5651 = vmatprep.subr.mxu0 0.0
      %5652 = vmatpush1.msra.mxu0 0.0
      %5653 = vmatprep.subr.mxu0 0.0
      %5654 = vmatpush1.msra.mxu0 0.0
      %5655 = vmatprep.subr.mxu0 0.0
      %5656 = vmatpush1.msra.mxu0 0.0
      %5657 = vmatprep.subr.mxu0 0.0
      %5658 = vmatpush1.msra.mxu0 0.0
      %5659 = vmatprep.subr.mxu0 0.0
      %5660 = vmatpush1.msra.mxu0 0.0
      %5661 = vmatprep.subr.mxu0 0.0
      %5662 = vmatpush1.msra.mxu0 0.0
      %5663 = vmatprep.subr.mxu0 0.0
      %5664 = vmatpush1.msra.mxu0 0.0
      %5665 = vmatprep.subr.mxu0 0.0
      %5666 = vmatpush1.msra.mxu0 0.0
      %5667 = vmatprep.subr.mxu0 %v5410
      %5668 = vmatpush1.msra.mxu0 %v5409
      %5669 = vmatprep.subr.mxu0 0.0
      %5670 = vmatpush2.msra.mxu0 0.0
      %5671 = vmatprep.subr.mxu0 0.0
      %5672 = vmatpush2.msra.mxu0 0.0
      %5673 = vmatprep.subr.mxu0 0.0
      %5674 = vmatpush2.msra.mxu0 0.0
      %5675 = vmatprep.subr.mxu0 0.0
      %5676 = vmatpush2.msra.mxu0 0.0
      %5677 = vmatprep.subr.mxu0 0.0
      %5678 = vmatpush2.msra.mxu0 0.0
      %5679 = vmatprep.subr.mxu0 0.0
      %5680 = vmatpush2.msra.mxu0 0.0
      %5681 = vmatprep.subr.mxu0 0.0
      %5682 = vmatpush2.msra.mxu0 0.0
      %5683 = vmatprep.subr.mxu0 0.0
      %5684 = vmatpush2.msra.mxu0 0.0
      %5685 = vmatprep.subr.mxu0 0.0
      %5686 = vmatpush2.msra.mxu0 0.0
      %5687 = vmatprep.subr.mxu0 0.0
      %5688 = vmatpush2.msra.mxu0 0.0
      %5689 = vmatprep.subr.mxu0 0.0
      %5690 = vmatpush2.msra.mxu0 0.0
      %5691 = vmatprep.subr.mxu0 0.0
      %5692 = vmatpush2.msra.mxu0 0.0
      %5693 = vmatprep.subr.mxu0 0.0
      %5694 = vmatpush2.msra.mxu0 0.0
      %5695 = vmatprep.subr.mxu0 0.0
      %5696 = vmatpush2.msra.mxu0 0.0
      %5697 = vmatprep.subr.mxu0 0.0
      %5698 = vmatpush2.msra.mxu0 0.0
      %5699 = vmatprep.subr.mxu0 0.0
      %5700 = vmatpush2.msra.mxu0 0.0
      %5701 = vmatprep.mubr.f32.mxu0 0.0
      %5702 = vmatmul.mubr.f32.gmra.mxu0 %v5422
      %v5703 = vpop.f32.mrf.mxu0
      %v5704 = vadd.f32 0.0, %v5703
      %v5705 = vpop.f32.mrf.mxu0
      %v5706 = vadd.f32 0.0, %v5705
      %5707 = vdwg.mxu0
      %5708 = vmatprep.subr.mxu0 0.0
      %5709 = vmatpush1.msra.mxu0 0.0
      %5710 = vmatprep.subr.mxu0 0.0
      %5711 = vmatpush1.msra.mxu0 0.0
      %5712 = vmatprep.subr.mxu0 0.0
      %5713 = vmatpush1.msra.mxu0 0.0
      %5714 = vmatprep.subr.mxu0 0.0
      %5715 = vmatpush1.msra.mxu0 0.0
      %5716 = vmatprep.subr.mxu0 0.0
      %5717 = vmatpush1.msra.mxu0 0.0
      %5718 = vmatprep.subr.mxu0 0.0
      %5719 = vmatpush1.msra.mxu0 0.0
      %5720 = vmatprep.subr.mxu0 0.0
      %5721 = vmatpush1.msra.mxu0 0.0
      %5722 = vmatprep.subr.mxu0 0.0
      %5723 = vmatpush1.msra.mxu0 0.0
      %5724 = vmatprep.subr.mxu0 0.0
      %5725 = vmatpush1.msra.mxu0 0.0
      %5726 = vmatprep.subr.mxu0 0.0
      %5727 = vmatpush1.msra.mxu0 0.0
      %5728 = vmatprep.subr.mxu0 0.0
      %5729 = vmatpush1.msra.mxu0 0.0
      %5730 = vmatprep.subr.mxu0 0.0
      %5731 = vmatpush1.msra.mxu0 0.0
      %5732 = vmatprep.subr.mxu0 0.0
      %5733 = vmatpush1.msra.mxu0 0.0
      %5734 = vmatprep.subr.mxu0 0.0
      %5735 = vmatpush1.msra.mxu0 0.0
      %5736 = vmatprep.subr.mxu0 0.0
      %5737 = vmatpush1.msra.mxu0 0.0
      %5738 = vmatprep.subr.mxu0 0.0
      %5739 = vmatpush1.msra.mxu0 %v5411
      %5740 = vmatprep.subr.mxu0 0.0
      %5741 = vmatpush2.msra.mxu0 0.0
      %5742 = vmatprep.subr.mxu0 0.0
      %5743 = vmatpush2.msra.mxu0 0.0
      %5744 = vmatprep.subr.mxu0 0.0
      %5745 = vmatpush2.msra.mxu0 0.0
      %5746 = vmatprep.subr.mxu0 0.0
      %5747 = vmatpush2.msra.mxu0 0.0
      %5748 = vmatprep.subr.mxu0 0.0
      %5749 = vmatpush2.msra.mxu0 0.0
      %5750 = vmatprep.subr.mxu0 0.0
      %5751 = vmatpush2.msra.mxu0 0.0
      %5752 = vmatprep.subr.mxu0 0.0
      %5753 = vmatpush2.msra.mxu0 0.0
      %5754 = vmatprep.subr.mxu0 0.0
      %5755 = vmatpush2.msra.mxu0 0.0
      %5756 = vmatprep.subr.mxu0 0.0
      %5757 = vmatpush2.msra.mxu0 0.0
      %5758 = vmatprep.subr.mxu0 0.0
      %5759 = vmatpush2.msra.mxu0 0.0
      %5760 = vmatprep.subr.mxu0 0.0
      %5761 = vmatpush2.msra.mxu0 0.0
      %5762 = vmatprep.subr.mxu0 0.0
      %5763 = vmatpush2.msra.mxu0 0.0
      %5764 = vmatprep.subr.mxu0 0.0
      %5765 = vmatpush2.msra.mxu0 0.0
      %5766 = vmatprep.subr.mxu0 0.0
      %5767 = vmatpush2.msra.mxu0 0.0
      %5768 = vmatprep.subr.mxu0 0.0
      %5769 = vmatpush2.msra.mxu0 0.0
      %5770 = vmatprep.subr.mxu0 0.0
      %5771 = vmatpush2.msra.mxu0 0.0
      %5772 = vmatprep.mubr.f32.mxu0 0.0
      %5773 = vmatmul.mubr.f32.gmra.mxu0 %v5422
      %v5774 = vpop.f32.mrf.mxu0
      %v5775 = vadd.f32 0.0, %v5774
      %v5776 = vpop.f32.mrf.mxu0
      %5777 = vdwg.mxu0
      %v5778 = vadd.f32 %v5371, %v5491
      %v5779 = vadd.f32 %v5372, %v5493
      %v5780 = vadd.f32 %v5373, %v5562
      %v5781 = vadd.f32 %v5374, %v5564
      %v5782 = vadd.f32 %v5375, %v5633
      %v5783 = vadd.f32 %v5376, %v5635
      %v5784 = vadd.f32 %v5377, %v5704
      %v5785 = vadd.f32 %v5378, %v5706
      %v5786 = vadd.f32 %v5379, %v5775
      %s5787 = scalar_lea.vmem %s3, 32
      %v5788 = vld [vmem:[%s5787] sm:$0xff]
      %v5790 = vsel %vm4219, %v5788, 0
      %5792 = vmatprep.subr.mxu0 0.0
      %5793 = vmatpush1.msra.mxu0 0.0
      %5794 = vmatprep.subr.mxu0 0.0
      %5795 = vmatpush1.msra.mxu0 0.0
      %5796 = vmatprep.subr.mxu0 0.0
      %5797 = vmatpush1.msra.mxu0 0.0
      %5798 = vmatprep.subr.mxu0 0.0
      %5799 = vmatpush1.msra.mxu0 0.0
      %5800 = vmatprep.subr.mxu0 0.0
      %5801 = vmatpush1.msra.mxu0 0.0
      %5802 = vmatprep.subr.mxu0 0.0
      %5803 = vmatpush1.msra.mxu0 0.0
      %5804 = vmatprep.subr.mxu0 0.0
      %5805 = vmatpush1.msra.mxu0 0.0
      %5806 = vmatprep.subr.mxu0 0.0
      %5807 = vmatpush1.msra.mxu0 0.0
      %5808 = vmatprep.subr.mxu0 0.0
      %5809 = vmatpush1.msra.mxu0 0.0
      %5810 = vmatprep.subr.mxu0 0.0
      %5811 = vmatpush1.msra.mxu0 0.0
      %5812 = vmatprep.subr.mxu0 0.0
      %5813 = vmatpush1.msra.mxu0 0.0
      %5814 = vmatprep.subr.mxu0 0.0
      %5815 = vmatpush1.msra.mxu0 0.0
      %5816 = vmatprep.subr.mxu0 0.0
      %5817 = vmatpush1.msra.mxu0 0.0
      %5818 = vmatprep.subr.mxu0 0.0
      %5819 = vmatpush1.msra.mxu0 0.0
      %5820 = vmatprep.subr.mxu0 0.0
      %5821 = vmatpush1.msra.mxu0 0.0
      %5822 = vmatprep.subr.mxu0 %v4159
      %5823 = vmatpush1.msra.mxu0 %v4158
      %5824 = vmatprep.subr.mxu0 0.0
      %5825 = vmatpush2.msra.mxu0 0.0
      %5826 = vmatprep.subr.mxu0 0.0
      %5827 = vmatpush2.msra.mxu0 0.0
      %5828 = vmatprep.subr.mxu0 0.0
      %5829 = vmatpush2.msra.mxu0 0.0
      %5830 = vmatprep.subr.mxu0 0.0
      %5831 = vmatpush2.msra.mxu0 0.0
      %5832 = vmatprep.subr.mxu0 0.0
      %5833 = vmatpush2.msra.mxu0 0.0
      %5834 = vmatprep.subr.mxu0 0.0
      %5835 = vmatpush2.msra.mxu0 0.0
      %5836 = vmatprep.subr.mxu0 0.0
      %5837 = vmatpush2.msra.mxu0 0.0
      %5838 = vmatprep.subr.mxu0 0.0
      %5839 = vmatpush2.msra.mxu0 0.0
      %5840 = vmatprep.subr.mxu0 0.0
      %5841 = vmatpush2.msra.mxu0 0.0
      %5842 = vmatprep.subr.mxu0 0.0
      %5843 = vmatpush2.msra.mxu0 0.0
      %5844 = vmatprep.subr.mxu0 0.0
      %5845 = vmatpush2.msra.mxu0 0.0
      %5846 = vmatprep.subr.mxu0 0.0
      %5847 = vmatpush2.msra.mxu0 0.0
      %5848 = vmatprep.subr.mxu0 0.0
      %5849 = vmatpush2.msra.mxu0 0.0
      %5850 = vmatprep.subr.mxu0 0.0
      %5851 = vmatpush2.msra.mxu0 0.0
      %5852 = vmatprep.subr.mxu0 0.0
      %5853 = vmatpush2.msra.mxu0 0.0
      %5854 = vmatprep.subr.mxu0 0.0
      %5855 = vmatpush2.msra.mxu0 0.0
      %5856 = vmatprep.mubr.f32.mxu0 0.0
      %5857 = vmatmul.mubr.f32.gmra.mxu0 %v5790
      %v5858 = vpop.f32.mrf.mxu0
      %v5859 = vadd.f32 0.0, %v5858
      %v5860 = vpop.f32.mrf.mxu0
      %v5861 = vadd.f32 0.0, %v5860
      %5862 = vdwg.mxu0
      %5863 = vmatprep.subr.mxu0 0.0
      %5864 = vmatpush1.msra.mxu0 0.0
      %5865 = vmatprep.subr.mxu0 0.0
      %5866 = vmatpush1.msra.mxu0 0.0
      %5867 = vmatprep.subr.mxu0 0.0
      %5868 = vmatpush1.msra.mxu0 0.0
      %5869 = vmatprep.subr.mxu0 0.0
      %5870 = vmatpush1.msra.mxu0 0.0
      %5871 = vmatprep.subr.mxu0 0.0
      %5872 = vmatpush1.msra.mxu0 0.0
      %5873 = vmatprep.subr.mxu0 0.0
      %5874 = vmatpush1.msra.mxu0 0.0
      %5875 = vmatprep.subr.mxu0 0.0
      %5876 = vmatpush1.msra.mxu0 0.0
      %5877 = vmatprep.subr.mxu0 0.0
      %5878 = vmatpush1.msra.mxu0 0.0
      %5879 = vmatprep.subr.mxu0 0.0
      %5880 = vmatpush1.msra.mxu0 0.0
      %5881 = vmatprep.subr.mxu0 0.0
      %5882 = vmatpush1.msra.mxu0 0.0
      %5883 = vmatprep.subr.mxu0 0.0
      %5884 = vmatpush1.msra.mxu0 0.0
      %5885 = vmatprep.subr.mxu0 0.0
      %5886 = vmatpush1.msra.mxu0 0.0
      %5887 = vmatprep.subr.mxu0 0.0
      %5888 = vmatpush1.msra.mxu0 0.0
      %5889 = vmatprep.subr.mxu0 0.0
      %5890 = vmatpush1.msra.mxu0 0.0
      %5891 = vmatprep.subr.mxu0 0.0
      %5892 = vmatpush1.msra.mxu0 0.0
      %5893 = vmatprep.subr.mxu0 %v4161
      %5894 = vmatpush1.msra.mxu0 %v4160
      %5895 = vmatprep.subr.mxu0 0.0
      %5896 = vmatpush2.msra.mxu0 0.0
      %5897 = vmatprep.subr.mxu0 0.0
      %5898 = vmatpush2.msra.mxu0 0.0
      %5899 = vmatprep.subr.mxu0 0.0
      %5900 = vmatpush2.msra.mxu0 0.0
      %5901 = vmatprep.subr.mxu0 0.0
      %5902 = vmatpush2.msra.mxu0 0.0
      %5903 = vmatprep.subr.mxu0 0.0
      %5904 = vmatpush2.msra.mxu0 0.0
      %5905 = vmatprep.subr.mxu0 0.0
      %5906 = vmatpush2.msra.mxu0 0.0
      %5907 = vmatprep.subr.mxu0 0.0
      %5908 = vmatpush2.msra.mxu0 0.0
      %5909 = vmatprep.subr.mxu0 0.0
      %5910 = vmatpush2.msra.mxu0 0.0
      %5911 = vmatprep.subr.mxu0 0.0
      %5912 = vmatpush2.msra.mxu0 0.0
      %5913 = vmatprep.subr.mxu0 0.0
      %5914 = vmatpush2.msra.mxu0 0.0
      %5915 = vmatprep.subr.mxu0 0.0
      %5916 = vmatpush2.msra.mxu0 0.0
      %5917 = vmatprep.subr.mxu0 0.0
      %5918 = vmatpush2.msra.mxu0 0.0
      %5919 = vmatprep.subr.mxu0 0.0
      %5920 = vmatpush2.msra.mxu0 0.0
      %5921 = vmatprep.subr.mxu0 0.0
      %5922 = vmatpush2.msra.mxu0 0.0
      %5923 = vmatprep.subr.mxu0 0.0
      %5924 = vmatpush2.msra.mxu0 0.0
      %5925 = vmatprep.subr.mxu0 0.0
      %5926 = vmatpush2.msra.mxu0 0.0
      %5927 = vmatprep.mubr.f32.mxu0 0.0
      %5928 = vmatmul.mubr.f32.gmra.mxu0 %v5790
      %v5929 = vpop.f32.mrf.mxu0
      %v5930 = vadd.f32 0.0, %v5929
      %v5931 = vpop.f32.mrf.mxu0
      %v5932 = vadd.f32 0.0, %v5931
      %5933 = vdwg.mxu0
      %5934 = vmatprep.subr.mxu0 0.0
      %5935 = vmatpush1.msra.mxu0 0.0
      %5936 = vmatprep.subr.mxu0 0.0
      %5937 = vmatpush1.msra.mxu0 0.0
      %5938 = vmatprep.subr.mxu0 0.0
      %5939 = vmatpush1.msra.mxu0 0.0
      %5940 = vmatprep.subr.mxu0 0.0
      %5941 = vmatpush1.msra.mxu0 0.0
      %5942 = vmatprep.subr.mxu0 0.0
      %5943 = vmatpush1.msra.mxu0 0.0
      %5944 = vmatprep.subr.mxu0 0.0
      %5945 = vmatpush1.msra.mxu0 0.0
      %5946 = vmatprep.subr.mxu0 0.0
      %5947 = vmatpush1.msra.mxu0 0.0
      %5948 = vmatprep.subr.mxu0 0.0
      %5949 = vmatpush1.msra.mxu0 0.0
      %5950 = vmatprep.subr.mxu0 0.0
      %5951 = vmatpush1.msra.mxu0 0.0
      %5952 = vmatprep.subr.mxu0 0.0
      %5953 = vmatpush1.msra.mxu0 0.0
      %5954 = vmatprep.subr.mxu0 0.0
      %5955 = vmatpush1.msra.mxu0 0.0
      %5956 = vmatprep.subr.mxu0 0.0
      %5957 = vmatpush1.msra.mxu0 0.0
      %5958 = vmatprep.subr.mxu0 0.0
      %5959 = vmatpush1.msra.mxu0 0.0
      %5960 = vmatprep.subr.mxu0 0.0
      %5961 = vmatpush1.msra.mxu0 0.0
      %5962 = vmatprep.subr.mxu0 0.0
      %5963 = vmatpush1.msra.mxu0 0.0
      %5964 = vmatprep.subr.mxu0 %v4163
      %5965 = vmatpush1.msra.mxu0 %v4162
      %5966 = vmatprep.subr.mxu0 0.0
      %5967 = vmatpush2.msra.mxu0 0.0
      %5968 = vmatprep.subr.mxu0 0.0
      %5969 = vmatpush2.msra.mxu0 0.0
      %5970 = vmatprep.subr.mxu0 0.0
      %5971 = vmatpush2.msra.mxu0 0.0
      %5972 = vmatprep.subr.mxu0 0.0
      %5973 = vmatpush2.msra.mxu0 0.0
      %5974 = vmatprep.subr.mxu0 0.0
      %5975 = vmatpush2.msra.mxu0 0.0
      %5976 = vmatprep.subr.mxu0 0.0
      %5977 = vmatpush2.msra.mxu0 0.0
      %5978 = vmatprep.subr.mxu0 0.0
      %5979 = vmatpush2.msra.mxu0 0.0
      %5980 = vmatprep.subr.mxu0 0.0
      %5981 = vmatpush2.msra.mxu0 0.0
      %5982 = vmatprep.subr.mxu0 0.0
      %5983 = vmatpush2.msra.mxu0 0.0
      %5984 = vmatprep.subr.mxu0 0.0
      %5985 = vmatpush2.msra.mxu0 0.0
      %5986 = vmatprep.subr.mxu0 0.0
      %5987 = vmatpush2.msra.mxu0 0.0
      %5988 = vmatprep.subr.mxu0 0.0
      %5989 = vmatpush2.msra.mxu0 0.0
      %5990 = vmatprep.subr.mxu0 0.0
      %5991 = vmatpush2.msra.mxu0 0.0
      %5992 = vmatprep.subr.mxu0 0.0
      %5993 = vmatpush2.msra.mxu0 0.0
      %5994 = vmatprep.subr.mxu0 0.0
      %5995 = vmatpush2.msra.mxu0 0.0
      %5996 = vmatprep.subr.mxu0 0.0
      %5997 = vmatpush2.msra.mxu0 0.0
      %5998 = vmatprep.mubr.f32.mxu0 0.0
      %5999 = vmatmul.mubr.f32.gmra.mxu0 %v5790
      %v6000 = vpop.f32.mrf.mxu0
      %v6001 = vadd.f32 0.0, %v6000
      %v6002 = vpop.f32.mrf.mxu0
      %v6003 = vadd.f32 0.0, %v6002
      %6004 = vdwg.mxu0
      %6005 = vmatprep.subr.mxu0 0.0
      %6006 = vmatpush1.msra.mxu0 0.0
      %6007 = vmatprep.subr.mxu0 0.0
      %6008 = vmatpush1.msra.mxu0 0.0
      %6009 = vmatprep.subr.mxu0 0.0
      %6010 = vmatpush1.msra.mxu0 0.0
      %6011 = vmatprep.subr.mxu0 0.0
      %6012 = vmatpush1.msra.mxu0 0.0
      %6013 = vmatprep.subr.mxu0 0.0
      %6014 = vmatpush1.msra.mxu0 0.0
      %6015 = vmatprep.subr.mxu0 0.0
      %6016 = vmatpush1.msra.mxu0 0.0
      %6017 = vmatprep.subr.mxu0 0.0
      %6018 = vmatpush1.msra.mxu0 0.0
      %6019 = vmatprep.subr.mxu0 0.0
      %6020 = vmatpush1.msra.mxu0 0.0
      %6021 = vmatprep.subr.mxu0 0.0
      %6022 = vmatpush1.msra.mxu0 0.0
      %6023 = vmatprep.subr.mxu0 0.0
      %6024 = vmatpush1.msra.mxu0 0.0
      %6025 = vmatprep.subr.mxu0 0.0
      %6026 = vmatpush1.msra.mxu0 0.0
      %6027 = vmatprep.subr.mxu0 0.0
      %6028 = vmatpush1.msra.mxu0 0.0
      %6029 = vmatprep.subr.mxu0 0.0
      %6030 = vmatpush1.msra.mxu0 0.0
      %6031 = vmatprep.subr.mxu0 0.0
      %6032 = vmatpush1.msra.mxu0 0.0
      %6033 = vmatprep.subr.mxu0 0.0
      %6034 = vmatpush1.msra.mxu0 0.0
      %6035 = vmatprep.subr.mxu0 %v4165
      %6036 = vmatpush1.msra.mxu0 %v4164
      %6037 = vmatprep.subr.mxu0 0.0
      %6038 = vmatpush2.msra.mxu0 0.0
      %6039 = vmatprep.subr.mxu0 0.0
      %6040 = vmatpush2.msra.mxu0 0.0
      %6041 = vmatprep.subr.mxu0 0.0
      %6042 = vmatpush2.msra.mxu0 0.0
      %6043 = vmatprep.subr.mxu0 0.0
      %6044 = vmatpush2.msra.mxu0 0.0
      %6045 = vmatprep.subr.mxu0 0.0
      %6046 = vmatpush2.msra.mxu0 0.0
      %6047 = vmatprep.subr.mxu0 0.0
      %6048 = vmatpush2.msra.mxu0 0.0
      %6049 = vmatprep.subr.mxu0 0.0
      %6050 = vmatpush2.msra.mxu0 0.0
      %6051 = vmatprep.subr.mxu0 0.0
      %6052 = vmatpush2.msra.mxu0 0.0
      %6053 = vmatprep.subr.mxu0 0.0
      %6054 = vmatpush2.msra.mxu0 0.0
      %6055 = vmatprep.subr.mxu0 0.0
      %6056 = vmatpush2.msra.mxu0 0.0
      %6057 = vmatprep.subr.mxu0 0.0
      %6058 = vmatpush2.msra.mxu0 0.0
      %6059 = vmatprep.subr.mxu0 0.0
      %6060 = vmatpush2.msra.mxu0 0.0
      %6061 = vmatprep.subr.mxu0 0.0
      %6062 = vmatpush2.msra.mxu0 0.0
      %6063 = vmatprep.subr.mxu0 0.0
      %6064 = vmatpush2.msra.mxu0 0.0
      %6065 = vmatprep.subr.mxu0 0.0
      %6066 = vmatpush2.msra.mxu0 0.0
      %6067 = vmatprep.subr.mxu0 0.0
      %6068 = vmatpush2.msra.mxu0 0.0
      %6069 = vmatprep.mubr.f32.mxu0 0.0
      %6070 = vmatmul.mubr.f32.gmra.mxu0 %v5790
      %v6071 = vpop.f32.mrf.mxu0
      %v6072 = vadd.f32 0.0, %v6071
      %v6073 = vpop.f32.mrf.mxu0
      %v6074 = vadd.f32 0.0, %v6073
      %6075 = vdwg.mxu0
      %6076 = vmatprep.subr.mxu0 0.0
      %6077 = vmatpush1.msra.mxu0 0.0
      %6078 = vmatprep.subr.mxu0 0.0
      %6079 = vmatpush1.msra.mxu0 0.0
      %6080 = vmatprep.subr.mxu0 0.0
      %6081 = vmatpush1.msra.mxu0 0.0
      %6082 = vmatprep.subr.mxu0 0.0
      %6083 = vmatpush1.msra.mxu0 0.0
      %6084 = vmatprep.subr.mxu0 0.0
      %6085 = vmatpush1.msra.mxu0 0.0
      %6086 = vmatprep.subr.mxu0 0.0
      %6087 = vmatpush1.msra.mxu0 0.0
      %6088 = vmatprep.subr.mxu0 0.0
      %6089 = vmatpush1.msra.mxu0 0.0
      %6090 = vmatprep.subr.mxu0 0.0
      %6091 = vmatpush1.msra.mxu0 0.0
      %6092 = vmatprep.subr.mxu0 0.0
      %6093 = vmatpush1.msra.mxu0 0.0
      %6094 = vmatprep.subr.mxu0 0.0
      %6095 = vmatpush1.msra.mxu0 0.0
      %6096 = vmatprep.subr.mxu0 0.0
      %6097 = vmatpush1.msra.mxu0 0.0
      %6098 = vmatprep.subr.mxu0 0.0
      %6099 = vmatpush1.msra.mxu0 0.0
      %6100 = vmatprep.subr.mxu0 0.0
      %6101 = vmatpush1.msra.mxu0 0.0
      %6102 = vmatprep.subr.mxu0 0.0
      %6103 = vmatpush1.msra.mxu0 0.0
      %6104 = vmatprep.subr.mxu0 0.0
      %6105 = vmatpush1.msra.mxu0 0.0
      %6106 = vmatprep.subr.mxu0 0.0
      %6107 = vmatpush1.msra.mxu0 %v4166
      %6108 = vmatprep.subr.mxu0 0.0
      %6109 = vmatpush2.msra.mxu0 0.0
      %6110 = vmatprep.subr.mxu0 0.0
      %6111 = vmatpush2.msra.mxu0 0.0
      %6112 = vmatprep.subr.mxu0 0.0
      %6113 = vmatpush2.msra.mxu0 0.0
      %6114 = vmatprep.subr.mxu0 0.0
      %6115 = vmatpush2.msra.mxu0 0.0
      %6116 = vmatprep.subr.mxu0 0.0
      %6117 = vmatpush2.msra.mxu0 0.0
      %6118 = vmatprep.subr.mxu0 0.0
      %6119 = vmatpush2.msra.mxu0 0.0
      %6120 = vmatprep.subr.mxu0 0.0
      %6121 = vmatpush2.msra.mxu0 0.0
      %6122 = vmatprep.subr.mxu0 0.0
      %6123 = vmatpush2.msra.mxu0 0.0
      %6124 = vmatprep.subr.mxu0 0.0
      %6125 = vmatpush2.msra.mxu0 0.0
      %6126 = vmatprep.subr.mxu0 0.0
      %6127 = vmatpush2.msra.mxu0 0.0
      %6128 = vmatprep.subr.mxu0 0.0
      %6129 = vmatpush2.msra.mxu0 0.0
      %6130 = vmatprep.subr.mxu0 0.0
      %6131 = vmatpush2.msra.mxu0 0.0
      %6132 = vmatprep.subr.mxu0 0.0
      %6133 = vmatpush2.msra.mxu0 0.0
      %6134 = vmatprep.subr.mxu0 0.0
      %6135 = vmatpush2.msra.mxu0 0.0
      %6136 = vmatprep.subr.mxu0 0.0
      %6137 = vmatpush2.msra.mxu0 0.0
      %6138 = vmatprep.subr.mxu0 0.0
      %6139 = vmatpush2.msra.mxu0 0.0
      %6140 = vmatprep.mubr.f32.mxu0 0.0
      %6141 = vmatmul.mubr.f32.gmra.mxu0 %v5790
      %v6142 = vpop.f32.mrf.mxu0
      %v6143 = vadd.f32 0.0, %v6142
      %v6144 = vpop.f32.mrf.mxu0
      %6145 = vdwg.mxu0
      %v6146 = vadd.f32 %v5778, %v5859
      %v6147 = vadd.f32 %v5779, %v5861
      %v6148 = vadd.f32 %v5780, %v5930
      %v6149 = vadd.f32 %v5781, %v5932
      %v6150 = vadd.f32 %v5782, %v6001
      %v6151 = vadd.f32 %v5783, %v6003
      %v6152 = vadd.f32 %v5784, %v6072
      %v6153 = vadd.f32 %v5785, %v6074
      %v6154 = vadd.f32 %v5786, %v6143
      %s6155 = scalar_lea.vmem %s3, 40
      %v6156 = vld [vmem:[%s6155] sm:$0xff]
      %6157 = vrot.lane.b32.xlu0 %v4158, 127
      %v6158 = vpop.permute.xlu0 %6157
      %6159 = vrot.lane.b32.xlu0 %v4159, 127
      %v6160 = vpop.permute.xlu0 %6159
      %6161 = vrot.lane.b32.xlu0 %v4160, 127
      %v6162 = vpop.permute.xlu0 %6161
      %6163 = vrot.lane.b32.xlu0 %v4161, 127
      %v6164 = vpop.permute.xlu0 %6163
      %6165 = vrot.lane.b32.xlu0 %v4162, 127
      %v6166 = vpop.permute.xlu0 %6165
      %6167 = vrot.lane.b32.xlu0 %v4163, 127
      %v6168 = vpop.permute.xlu0 %6167
      %6169 = vrot.lane.b32.xlu0 %v4164, 127
      %v6170 = vpop.permute.xlu0 %6169
      %6171 = vrot.lane.b32.xlu0 %v4165, 127
      %v6172 = vpop.permute.xlu0 %6171
      %6173 = vrot.lane.b32.xlu0 %v4166, 127
      %v6174 = vpop.permute.xlu0 %6173
      %v6175 = vsel %vm260, %v6158, %v6160
      %v6176 = vsel %vm260, %v6160, %v6162
      %v6177 = vsel %vm260, %v6162, %v6164
      %v6178 = vsel %vm260, %v6164, %v6166
      %v6179 = vsel %vm260, %v6166, %v6168
      %v6180 = vsel %vm260, %v6168, %v6170
      %v6181 = vsel %vm260, %v6170, %v6172
      %v6182 = vsel %vm260, %v6172, %v6174
      %v6193 = vsel %vm4219, %v6156, 0
      %6195 = vmatprep.subr.mxu0 0.0
      %6196 = vmatpush1.msra.mxu0 0.0
      %6197 = vmatprep.subr.mxu0 0.0
      %6198 = vmatpush1.msra.mxu0 0.0
      %6199 = vmatprep.subr.mxu0 0.0
      %6200 = vmatpush1.msra.mxu0 0.0
      %6201 = vmatprep.subr.mxu0 0.0
      %6202 = vmatpush1.msra.mxu0 0.0
      %6203 = vmatprep.subr.mxu0 0.0
      %6204 = vmatpush1.msra.mxu0 0.0
      %6205 = vmatprep.subr.mxu0 0.0
      %6206 = vmatpush1.msra.mxu0 0.0
      %6207 = vmatprep.subr.mxu0 0.0
      %6208 = vmatpush1.msra.mxu0 0.0
      %6209 = vmatprep.subr.mxu0 0.0
      %6210 = vmatpush1.msra.mxu0 0.0
      %6211 = vmatprep.subr.mxu0 0.0
      %6212 = vmatpush1.msra.mxu0 0.0
      %6213 = vmatprep.subr.mxu0 0.0
      %6214 = vmatpush1.msra.mxu0 0.0
      %6215 = vmatprep.subr.mxu0 0.0
      %6216 = vmatpush1.msra.mxu0 0.0
      %6217 = vmatprep.subr.mxu0 0.0
      %6218 = vmatpush1.msra.mxu0 0.0
      %6219 = vmatprep.subr.mxu0 0.0
      %6220 = vmatpush1.msra.mxu0 0.0
      %6221 = vmatprep.subr.mxu0 0.0
      %6222 = vmatpush1.msra.mxu0 0.0
      %6223 = vmatprep.subr.mxu0 0.0
      %6224 = vmatpush1.msra.mxu0 0.0
      %6225 = vmatprep.subr.mxu0 %v6176
      %6226 = vmatpush1.msra.mxu0 %v6175
      %6227 = vmatprep.subr.mxu0 0.0
      %6228 = vmatpush2.msra.mxu0 0.0
      %6229 = vmatprep.subr.mxu0 0.0
      %6230 = vmatpush2.msra.mxu0 0.0
      %6231 = vmatprep.subr.mxu0 0.0
      %6232 = vmatpush2.msra.mxu0 0.0
      %6233 = vmatprep.subr.mxu0 0.0
      %6234 = vmatpush2.msra.mxu0 0.0
      %6235 = vmatprep.subr.mxu0 0.0
      %6236 = vmatpush2.msra.mxu0 0.0
      %6237 = vmatprep.subr.mxu0 0.0
      %6238 = vmatpush2.msra.mxu0 0.0
      %6239 = vmatprep.subr.mxu0 0.0
      %6240 = vmatpush2.msra.mxu0 0.0
      %6241 = vmatprep.subr.mxu0 0.0
      %6242 = vmatpush2.msra.mxu0 0.0
      %6243 = vmatprep.subr.mxu0 0.0
      %6244 = vmatpush2.msra.mxu0 0.0
      %6245 = vmatprep.subr.mxu0 0.0
      %6246 = vmatpush2.msra.mxu0 0.0
      %6247 = vmatprep.subr.mxu0 0.0
      %6248 = vmatpush2.msra.mxu0 0.0
      %6249 = vmatprep.subr.mxu0 0.0
      %6250 = vmatpush2.msra.mxu0 0.0
      %6251 = vmatprep.subr.mxu0 0.0
      %6252 = vmatpush2.msra.mxu0 0.0
      %6253 = vmatprep.subr.mxu0 0.0
      %6254 = vmatpush2.msra.mxu0 0.0
      %6255 = vmatprep.subr.mxu0 0.0
      %6256 = vmatpush2.msra.mxu0 0.0
      %6257 = vmatprep.subr.mxu0 0.0
      %6258 = vmatpush2.msra.mxu0 0.0
      %6259 = vmatprep.mubr.f32.mxu0 0.0
      %6260 = vmatmul.mubr.f32.gmra.mxu0 %v6193
      %v6261 = vpop.f32.mrf.mxu0
      %v6262 = vadd.f32 0.0, %v6261
      %v6263 = vpop.f32.mrf.mxu0
      %v6264 = vadd.f32 0.0, %v6263
      %6265 = vdwg.mxu0
      %6266 = vmatprep.subr.mxu0 0.0
      %6267 = vmatpush1.msra.mxu0 0.0
      %6268 = vmatprep.subr.mxu0 0.0
      %6269 = vmatpush1.msra.mxu0 0.0
      %6270 = vmatprep.subr.mxu0 0.0
      %6271 = vmatpush1.msra.mxu0 0.0
      %6272 = vmatprep.subr.mxu0 0.0
      %6273 = vmatpush1.msra.mxu0 0.0
      %6274 = vmatprep.subr.mxu0 0.0
      %6275 = vmatpush1.msra.mxu0 0.0
      %6276 = vmatprep.subr.mxu0 0.0
      %6277 = vmatpush1.msra.mxu0 0.0
      %6278 = vmatprep.subr.mxu0 0.0
      %6279 = vmatpush1.msra.mxu0 0.0
      %6280 = vmatprep.subr.mxu0 0.0
      %6281 = vmatpush1.msra.mxu0 0.0
      %6282 = vmatprep.subr.mxu0 0.0
      %6283 = vmatpush1.msra.mxu0 0.0
      %6284 = vmatprep.subr.mxu0 0.0
      %6285 = vmatpush1.msra.mxu0 0.0
      %6286 = vmatprep.subr.mxu0 0.0
      %6287 = vmatpush1.msra.mxu0 0.0
      %6288 = vmatprep.subr.mxu0 0.0
      %6289 = vmatpush1.msra.mxu0 0.0
      %6290 = vmatprep.subr.mxu0 0.0
      %6291 = vmatpush1.msra.mxu0 0.0
      %6292 = vmatprep.subr.mxu0 0.0
      %6293 = vmatpush1.msra.mxu0 0.0
      %6294 = vmatprep.subr.mxu0 0.0
      %6295 = vmatpush1.msra.mxu0 0.0
      %6296 = vmatprep.subr.mxu0 %v6178
      %6297 = vmatpush1.msra.mxu0 %v6177
      %6298 = vmatprep.subr.mxu0 0.0
      %6299 = vmatpush2.msra.mxu0 0.0
      %6300 = vmatprep.subr.mxu0 0.0
      %6301 = vmatpush2.msra.mxu0 0.0
      %6302 = vmatprep.subr.mxu0 0.0
      %6303 = vmatpush2.msra.mxu0 0.0
      %6304 = vmatprep.subr.mxu0 0.0
      %6305 = vmatpush2.msra.mxu0 0.0
      %6306 = vmatprep.subr.mxu0 0.0
      %6307 = vmatpush2.msra.mxu0 0.0
      %6308 = vmatprep.subr.mxu0 0.0
      %6309 = vmatpush2.msra.mxu0 0.0
      %6310 = vmatprep.subr.mxu0 0.0
      %6311 = vmatpush2.msra.mxu0 0.0
      %6312 = vmatprep.subr.mxu0 0.0
      %6313 = vmatpush2.msra.mxu0 0.0
      %6314 = vmatprep.subr.mxu0 0.0
      %6315 = vmatpush2.msra.mxu0 0.0
      %6316 = vmatprep.subr.mxu0 0.0
      %6317 = vmatpush2.msra.mxu0 0.0
      %6318 = vmatprep.subr.mxu0 0.0
      %6319 = vmatpush2.msra.mxu0 0.0
      %6320 = vmatprep.subr.mxu0 0.0
      %6321 = vmatpush2.msra.mxu0 0.0
      %6322 = vmatprep.subr.mxu0 0.0
      %6323 = vmatpush2.msra.mxu0 0.0
      %6324 = vmatprep.subr.mxu0 0.0
      %6325 = vmatpush2.msra.mxu0 0.0
      %6326 = vmatprep.subr.mxu0 0.0
      %6327 = vmatpush2.msra.mxu0 0.0
      %6328 = vmatprep.subr.mxu0 0.0
      %6329 = vmatpush2.msra.mxu0 0.0
      %6330 = vmatprep.mubr.f32.mxu0 0.0
      %6331 = vmatmul.mubr.f32.gmra.mxu0 %v6193
      %v6332 = vpop.f32.mrf.mxu0
      %v6333 = vadd.f32 0.0, %v6332
      %v6334 = vpop.f32.mrf.mxu0
      %v6335 = vadd.f32 0.0, %v6334
      %6336 = vdwg.mxu0
      %6337 = vmatprep.subr.mxu0 0.0
      %6338 = vmatpush1.msra.mxu0 0.0
      %6339 = vmatprep.subr.mxu0 0.0
      %6340 = vmatpush1.msra.mxu0 0.0
      %6341 = vmatprep.subr.mxu0 0.0
      %6342 = vmatpush1.msra.mxu0 0.0
      %6343 = vmatprep.subr.mxu0 0.0
      %6344 = vmatpush1.msra.mxu0 0.0
      %6345 = vmatprep.subr.mxu0 0.0
      %6346 = vmatpush1.msra.mxu0 0.0
      %6347 = vmatprep.subr.mxu0 0.0
      %6348 = vmatpush1.msra.mxu0 0.0
      %6349 = vmatprep.subr.mxu0 0.0
      %6350 = vmatpush1.msra.mxu0 0.0
      %6351 = vmatprep.subr.mxu0 0.0
      %6352 = vmatpush1.msra.mxu0 0.0
      %6353 = vmatprep.subr.mxu0 0.0
      %6354 = vmatpush1.msra.mxu0 0.0
      %6355 = vmatprep.subr.mxu0 0.0
      %6356 = vmatpush1.msra.mxu0 0.0
      %6357 = vmatprep.subr.mxu0 0.0
      %6358 = vmatpush1.msra.mxu0 0.0
      %6359 = vmatprep.subr.mxu0 0.0
      %6360 = vmatpush1.msra.mxu0 0.0
      %6361 = vmatprep.subr.mxu0 0.0
      %6362 = vmatpush1.msra.mxu0 0.0
      %6363 = vmatprep.subr.mxu0 0.0
      %6364 = vmatpush1.msra.mxu0 0.0
      %6365 = vmatprep.subr.mxu0 0.0
      %6366 = vmatpush1.msra.mxu0 0.0
      %6367 = vmatprep.subr.mxu0 %v6180
      %6368 = vmatpush1.msra.mxu0 %v6179
      %6369 = vmatprep.subr.mxu0 0.0
      %6370 = vmatpush2.msra.mxu0 0.0
      %6371 = vmatprep.subr.mxu0 0.0
      %6372 = vmatpush2.msra.mxu0 0.0
      %6373 = vmatprep.subr.mxu0 0.0
      %6374 = vmatpush2.msra.mxu0 0.0
      %6375 = vmatprep.subr.mxu0 0.0
      %6376 = vmatpush2.msra.mxu0 0.0
      %6377 = vmatprep.subr.mxu0 0.0
      %6378 = vmatpush2.msra.mxu0 0.0
      %6379 = vmatprep.subr.mxu0 0.0
      %6380 = vmatpush2.msra.mxu0 0.0
      %6381 = vmatprep.subr.mxu0 0.0
      %6382 = vmatpush2.msra.mxu0 0.0
      %6383 = vmatprep.subr.mxu0 0.0
      %6384 = vmatpush2.msra.mxu0 0.0
      %6385 = vmatprep.subr.mxu0 0.0
      %6386 = vmatpush2.msra.mxu0 0.0
      %6387 = vmatprep.subr.mxu0 0.0
      %6388 = vmatpush2.msra.mxu0 0.0
      %6389 = vmatprep.subr.mxu0 0.0
      %6390 = vmatpush2.msra.mxu0 0.0
      %6391 = vmatprep.subr.mxu0 0.0
      %6392 = vmatpush2.msra.mxu0 0.0
      %6393 = vmatprep.subr.mxu0 0.0
      %6394 = vmatpush2.msra.mxu0 0.0
      %6395 = vmatprep.subr.mxu0 0.0
      %6396 = vmatpush2.msra.mxu0 0.0
      %6397 = vmatprep.subr.mxu0 0.0
      %6398 = vmatpush2.msra.mxu0 0.0
      %6399 = vmatprep.subr.mxu0 0.0
      %6400 = vmatpush2.msra.mxu0 0.0
      %6401 = vmatprep.mubr.f32.mxu0 0.0
      %6402 = vmatmul.mubr.f32.gmra.mxu0 %v6193
      %v6403 = vpop.f32.mrf.mxu0
      %v6404 = vadd.f32 0.0, %v6403
      %v6405 = vpop.f32.mrf.mxu0
      %v6406 = vadd.f32 0.0, %v6405
      %6407 = vdwg.mxu0
      %6408 = vmatprep.subr.mxu0 0.0
      %6409 = vmatpush1.msra.mxu0 0.0
      %6410 = vmatprep.subr.mxu0 0.0
      %6411 = vmatpush1.msra.mxu0 0.0
      %6412 = vmatprep.subr.mxu0 0.0
      %6413 = vmatpush1.msra.mxu0 0.0
      %6414 = vmatprep.subr.mxu0 0.0
      %6415 = vmatpush1.msra.mxu0 0.0
      %6416 = vmatprep.subr.mxu0 0.0
      %6417 = vmatpush1.msra.mxu0 0.0
      %6418 = vmatprep.subr.mxu0 0.0
      %6419 = vmatpush1.msra.mxu0 0.0
      %6420 = vmatprep.subr.mxu0 0.0
      %6421 = vmatpush1.msra.mxu0 0.0
      %6422 = vmatprep.subr.mxu0 0.0
      %6423 = vmatpush1.msra.mxu0 0.0
      %6424 = vmatprep.subr.mxu0 0.0
      %6425 = vmatpush1.msra.mxu0 0.0
      %6426 = vmatprep.subr.mxu0 0.0
      %6427 = vmatpush1.msra.mxu0 0.0
      %6428 = vmatprep.subr.mxu0 0.0
      %6429 = vmatpush1.msra.mxu0 0.0
      %6430 = vmatprep.subr.mxu0 0.0
      %6431 = vmatpush1.msra.mxu0 0.0
      %6432 = vmatprep.subr.mxu0 0.0
      %6433 = vmatpush1.msra.mxu0 0.0
      %6434 = vmatprep.subr.mxu0 0.0
      %6435 = vmatpush1.msra.mxu0 0.0
      %6436 = vmatprep.subr.mxu0 0.0
      %6437 = vmatpush1.msra.mxu0 0.0
      %6438 = vmatprep.subr.mxu0 %v6182
      %6439 = vmatpush1.msra.mxu0 %v6181
      %6440 = vmatprep.subr.mxu0 0.0
      %6441 = vmatpush2.msra.mxu0 0.0
      %6442 = vmatprep.subr.mxu0 0.0
      %6443 = vmatpush2.msra.mxu0 0.0
      %6444 = vmatprep.subr.mxu0 0.0
      %6445 = vmatpush2.msra.mxu0 0.0
      %6446 = vmatprep.subr.mxu0 0.0
      %6447 = vmatpush2.msra.mxu0 0.0
      %6448 = vmatprep.subr.mxu0 0.0
      %6449 = vmatpush2.msra.mxu0 0.0
      %6450 = vmatprep.subr.mxu0 0.0
      %6451 = vmatpush2.msra.mxu0 0.0
      %6452 = vmatprep.subr.mxu0 0.0
      %6453 = vmatpush2.msra.mxu0 0.0
      %6454 = vmatprep.subr.mxu0 0.0
      %6455 = vmatpush2.msra.mxu0 0.0
      %6456 = vmatprep.subr.mxu0 0.0
      %6457 = vmatpush2.msra.mxu0 0.0
      %6458 = vmatprep.subr.mxu0 0.0
      %6459 = vmatpush2.msra.mxu0 0.0
      %6460 = vmatprep.subr.mxu0 0.0
      %6461 = vmatpush2.msra.mxu0 0.0
      %6462 = vmatprep.subr.mxu0 0.0
      %6463 = vmatpush2.msra.mxu0 0.0
      %6464 = vmatprep.subr.mxu0 0.0
      %6465 = vmatpush2.msra.mxu0 0.0
      %6466 = vmatprep.subr.mxu0 0.0
      %6467 = vmatpush2.msra.mxu0 0.0
      %6468 = vmatprep.subr.mxu0 0.0
      %6469 = vmatpush2.msra.mxu0 0.0
      %6470 = vmatprep.subr.mxu0 0.0
      %6471 = vmatpush2.msra.mxu0 0.0
      %6472 = vmatprep.mubr.f32.mxu0 0.0
      %6473 = vmatmul.mubr.f32.gmra.mxu0 %v6193
      %v6474 = vpop.f32.mrf.mxu0
      %v6475 = vadd.f32 0.0, %v6474
      %v6476 = vpop.f32.mrf.mxu0
      %v6477 = vadd.f32 0.0, %v6476
      %6478 = vdwg.mxu0
      %6479 = vmatprep.subr.mxu0 0.0
      %6480 = vmatpush1.msra.mxu0 0.0
      %6481 = vmatprep.subr.mxu0 0.0
      %6482 = vmatpush1.msra.mxu0 0.0
      %6483 = vmatprep.subr.mxu0 0.0
      %6484 = vmatpush1.msra.mxu0 0.0
      %6485 = vmatprep.subr.mxu0 0.0
      %6486 = vmatpush1.msra.mxu0 0.0
      %6487 = vmatprep.subr.mxu0 0.0
      %6488 = vmatpush1.msra.mxu0 0.0
      %6489 = vmatprep.subr.mxu0 0.0
      %6490 = vmatpush1.msra.mxu0 0.0
      %6491 = vmatprep.subr.mxu0 0.0
      %6492 = vmatpush1.msra.mxu0 0.0
      %6493 = vmatprep.subr.mxu0 0.0
      %6494 = vmatpush1.msra.mxu0 0.0
      %6495 = vmatprep.subr.mxu0 0.0
      %6496 = vmatpush1.msra.mxu0 0.0
      %6497 = vmatprep.subr.mxu0 0.0
      %6498 = vmatpush1.msra.mxu0 0.0
      %6499 = vmatprep.subr.mxu0 0.0
      %6500 = vmatpush1.msra.mxu0 0.0
      %6501 = vmatprep.subr.mxu0 0.0
      %6502 = vmatpush1.msra.mxu0 0.0
      %6503 = vmatprep.subr.mxu0 0.0
      %6504 = vmatpush1.msra.mxu0 0.0
      %6505 = vmatprep.subr.mxu0 0.0
      %6506 = vmatpush1.msra.mxu0 0.0
      %6507 = vmatprep.subr.mxu0 0.0
      %6508 = vmatpush1.msra.mxu0 0.0
      %6509 = vmatprep.subr.mxu0 0.0
      %6510 = vmatpush1.msra.mxu0 %v6174
      %6511 = vmatprep.subr.mxu0 0.0
      %6512 = vmatpush2.msra.mxu0 0.0
      %6513 = vmatprep.subr.mxu0 0.0
      %6514 = vmatpush2.msra.mxu0 0.0
      %6515 = vmatprep.subr.mxu0 0.0
      %6516 = vmatpush2.msra.mxu0 0.0
      %6517 = vmatprep.subr.mxu0 0.0
      %6518 = vmatpush2.msra.mxu0 0.0
      %6519 = vmatprep.subr.mxu0 0.0
      %6520 = vmatpush2.msra.mxu0 0.0
      %6521 = vmatprep.subr.mxu0 0.0
      %6522 = vmatpush2.msra.mxu0 0.0
      %6523 = vmatprep.subr.mxu0 0.0
      %6524 = vmatpush2.msra.mxu0 0.0
      %6525 = vmatprep.subr.mxu0 0.0
      %6526 = vmatpush2.msra.mxu0 0.0
      %6527 = vmatprep.subr.mxu0 0.0
      %6528 = vmatpush2.msra.mxu0 0.0
      %6529 = vmatprep.subr.mxu0 0.0
      %6530 = vmatpush2.msra.mxu0 0.0
      %6531 = vmatprep.subr.mxu0 0.0
      %6532 = vmatpush2.msra.mxu0 0.0
      %6533 = vmatprep.subr.mxu0 0.0
      %6534 = vmatpush2.msra.mxu0 0.0
      %6535 = vmatprep.subr.mxu0 0.0
      %6536 = vmatpush2.msra.mxu0 0.0
      %6537 = vmatprep.subr.mxu0 0.0
      %6538 = vmatpush2.msra.mxu0 0.0
      %6539 = vmatprep.subr.mxu0 0.0
      %6540 = vmatpush2.msra.mxu0 0.0
      %6541 = vmatprep.subr.mxu0 0.0
      %6542 = vmatpush2.msra.mxu0 0.0
      %6543 = vmatprep.mubr.f32.mxu0 0.0
      %6544 = vmatmul.mubr.f32.gmra.mxu0 %v6193
      %v6545 = vpop.f32.mrf.mxu0
      %v6546 = vadd.f32 0.0, %v6545
      %v6547 = vpop.f32.mrf.mxu0
      %6548 = vdwg.mxu0
      %v6549 = vadd.f32 %v6146, %v6262
      %v6550 = vadd.f32 %v6147, %v6264
      %v6551 = vadd.f32 %v6148, %v6333
      %v6552 = vadd.f32 %v6149, %v6335
      %v6553 = vadd.f32 %v6150, %v6404
      %v6554 = vadd.f32 %v6151, %v6406
      %v6555 = vadd.f32 %v6152, %v6475
      %v6556 = vadd.f32 %v6153, %v6477
      %v6557 = vadd.f32 %v6154, %v6546
      %s6558 = scalar_lea.vmem %s3, 48
      %v6559 = vld [vmem:[%s6558] sm:$0xff]
      %6560 = vrot.lane.b32.xlu0 %v4158, 95
      %v6561 = vpop.permute.xlu0 %6560
      %6562 = vrot.lane.b32.xlu0 %v4159, 95
      %v6563 = vpop.permute.xlu0 %6562
      %6564 = vrot.lane.b32.xlu0 %v4160, 95
      %v6565 = vpop.permute.xlu0 %6564
      %6566 = vrot.lane.b32.xlu0 %v4161, 95
      %v6567 = vpop.permute.xlu0 %6566
      %6568 = vrot.lane.b32.xlu0 %v4162, 95
      %v6569 = vpop.permute.xlu0 %6568
      %6570 = vrot.lane.b32.xlu0 %v4163, 95
      %v6571 = vpop.permute.xlu0 %6570
      %6572 = vrot.lane.b32.xlu0 %v4164, 95
      %v6573 = vpop.permute.xlu0 %6572
      %6574 = vrot.lane.b32.xlu0 %v4165, 95
      %v6575 = vpop.permute.xlu0 %6574
      %6576 = vrot.lane.b32.xlu0 %v4166, 95
      %v6577 = vpop.permute.xlu0 %6576
      %vm6578 = vcmask 777216
      %v6579 = vsel %vm6578, %v6561, %v6563
      %v6580 = vsel %vm6578, %v6563, %v6565
      %v6581 = vsel %vm6578, %v6565, %v6567
      %v6582 = vsel %vm6578, %v6567, %v6569
      %v6583 = vsel %vm6578, %v6569, %v6571
      %v6584 = vsel %vm6578, %v6571, %v6573
      %v6585 = vsel %vm6578, %v6573, %v6575
      %v6586 = vsel %vm6578, %v6575, %v6577
      %v6597 = vsel %vm4219, %v6559, 0
      %6599 = vmatprep.subr.mxu0 0.0
      %6600 = vmatpush1.msra.mxu0 0.0
      %6601 = vmatprep.subr.mxu0 0.0
      %6602 = vmatpush1.msra.mxu0 0.0
      %6603 = vmatprep.subr.mxu0 0.0
      %6604 = vmatpush1.msra.mxu0 0.0
      %6605 = vmatprep.subr.mxu0 0.0
      %6606 = vmatpush1.msra.mxu0 0.0
      %6607 = vmatprep.subr.mxu0 0.0
      %6608 = vmatpush1.msra.mxu0 0.0
      %6609 = vmatprep.subr.mxu0 0.0
      %6610 = vmatpush1.msra.mxu0 0.0
      %6611 = vmatprep.subr.mxu0 0.0
      %6612 = vmatpush1.msra.mxu0 0.0
      %6613 = vmatprep.subr.mxu0 0.0
      %6614 = vmatpush1.msra.mxu0 0.0
      %6615 = vmatprep.subr.mxu0 0.0
      %6616 = vmatpush1.msra.mxu0 0.0
      %6617 = vmatprep.subr.mxu0 0.0
      %6618 = vmatpush1.msra.mxu0 0.0
      %6619 = vmatprep.subr.mxu0 0.0
      %6620 = vmatpush1.msra.mxu0 0.0
      %6621 = vmatprep.subr.mxu0 0.0
      %6622 = vmatpush1.msra.mxu0 0.0
      %6623 = vmatprep.subr.mxu0 0.0
      %6624 = vmatpush1.msra.mxu0 0.0
      %6625 = vmatprep.subr.mxu0 0.0
      %6626 = vmatpush1.msra.mxu0 0.0
      %6627 = vmatprep.subr.mxu0 0.0
      %6628 = vmatpush1.msra.mxu0 0.0
      %6629 = vmatprep.subr.mxu0 %v6580
      %6630 = vmatpush1.msra.mxu0 %v6579
      %6631 = vmatprep.subr.mxu0 0.0
      %6632 = vmatpush2.msra.mxu0 0.0
      %6633 = vmatprep.subr.mxu0 0.0
      %6634 = vmatpush2.msra.mxu0 0.0
      %6635 = vmatprep.subr.mxu0 0.0
      %6636 = vmatpush2.msra.mxu0 0.0
      %6637 = vmatprep.subr.mxu0 0.0
      %6638 = vmatpush2.msra.mxu0 0.0
      %6639 = vmatprep.subr.mxu0 0.0
      %6640 = vmatpush2.msra.mxu0 0.0
      %6641 = vmatprep.subr.mxu0 0.0
      %6642 = vmatpush2.msra.mxu0 0.0
      %6643 = vmatprep.subr.mxu0 0.0
      %6644 = vmatpush2.msra.mxu0 0.0
      %6645 = vmatprep.subr.mxu0 0.0
      %6646 = vmatpush2.msra.mxu0 0.0
      %6647 = vmatprep.subr.mxu0 0.0
      %6648 = vmatpush2.msra.mxu0 0.0
      %6649 = vmatprep.subr.mxu0 0.0
      %6650 = vmatpush2.msra.mxu0 0.0
      %6651 = vmatprep.subr.mxu0 0.0
      %6652 = vmatpush2.msra.mxu0 0.0
      %6653 = vmatprep.subr.mxu0 0.0
      %6654 = vmatpush2.msra.mxu0 0.0
      %6655 = vmatprep.subr.mxu0 0.0
      %6656 = vmatpush2.msra.mxu0 0.0
      %6657 = vmatprep.subr.mxu0 0.0
      %6658 = vmatpush2.msra.mxu0 0.0
      %6659 = vmatprep.subr.mxu0 0.0
      %6660 = vmatpush2.msra.mxu0 0.0
      %6661 = vmatprep.subr.mxu0 0.0
      %6662 = vmatpush2.msra.mxu0 0.0
      %6663 = vmatprep.mubr.f32.mxu0 0.0
      %6664 = vmatmul.mubr.f32.gmra.mxu0 %v6597
      %v6665 = vpop.f32.mrf.mxu0
      %v6666 = vadd.f32 0.0, %v6665
      %v6667 = vpop.f32.mrf.mxu0
      %v6668 = vadd.f32 0.0, %v6667
      %6669 = vdwg.mxu0
      %6670 = vmatprep.subr.mxu0 0.0
      %6671 = vmatpush1.msra.mxu0 0.0
      %6672 = vmatprep.subr.mxu0 0.0
      %6673 = vmatpush1.msra.mxu0 0.0
      %6674 = vmatprep.subr.mxu0 0.0
      %6675 = vmatpush1.msra.mxu0 0.0
      %6676 = vmatprep.subr.mxu0 0.0
      %6677 = vmatpush1.msra.mxu0 0.0
      %6678 = vmatprep.subr.mxu0 0.0
      %6679 = vmatpush1.msra.mxu0 0.0
      %6680 = vmatprep.subr.mxu0 0.0
      %6681 = vmatpush1.msra.mxu0 0.0
      %6682 = vmatprep.subr.mxu0 0.0
      %6683 = vmatpush1.msra.mxu0 0.0
      %6684 = vmatprep.subr.mxu0 0.0
      %6685 = vmatpush1.msra.mxu0 0.0
      %6686 = vmatprep.subr.mxu0 0.0
      %6687 = vmatpush1.msra.mxu0 0.0
      %6688 = vmatprep.subr.mxu0 0.0
      %6689 = vmatpush1.msra.mxu0 0.0
      %6690 = vmatprep.subr.mxu0 0.0
      %6691 = vmatpush1.msra.mxu0 0.0
      %6692 = vmatprep.subr.mxu0 0.0
      %6693 = vmatpush1.msra.mxu0 0.0
      %6694 = vmatprep.subr.mxu0 0.0
      %6695 = vmatpush1.msra.mxu0 0.0
      %6696 = vmatprep.subr.mxu0 0.0
      %6697 = vmatpush1.msra.mxu0 0.0
      %6698 = vmatprep.subr.mxu0 0.0
      %6699 = vmatpush1.msra.mxu0 0.0
      %6700 = vmatprep.subr.mxu0 %v6582
      %6701 = vmatpush1.msra.mxu0 %v6581
      %6702 = vmatprep.subr.mxu0 0.0
      %6703 = vmatpush2.msra.mxu0 0.0
      %6704 = vmatprep.subr.mxu0 0.0
      %6705 = vmatpush2.msra.mxu0 0.0
      %6706 = vmatprep.subr.mxu0 0.0
      %6707 = vmatpush2.msra.mxu0 0.0
      %6708 = vmatprep.subr.mxu0 0.0
      %6709 = vmatpush2.msra.mxu0 0.0
      %6710 = vmatprep.subr.mxu0 0.0
      %6711 = vmatpush2.msra.mxu0 0.0
      %6712 = vmatprep.subr.mxu0 0.0
      %6713 = vmatpush2.msra.mxu0 0.0
      %6714 = vmatprep.subr.mxu0 0.0
      %6715 = vmatpush2.msra.mxu0 0.0
      %6716 = vmatprep.subr.mxu0 0.0
      %6717 = vmatpush2.msra.mxu0 0.0
      %6718 = vmatprep.subr.mxu0 0.0
      %6719 = vmatpush2.msra.mxu0 0.0
      %6720 = vmatprep.subr.mxu0 0.0
      %6721 = vmatpush2.msra.mxu0 0.0
      %6722 = vmatprep.subr.mxu0 0.0
      %6723 = vmatpush2.msra.mxu0 0.0
      %6724 = vmatprep.subr.mxu0 0.0
      %6725 = vmatpush2.msra.mxu0 0.0
      %6726 = vmatprep.subr.mxu0 0.0
      %6727 = vmatpush2.msra.mxu0 0.0
      %6728 = vmatprep.subr.mxu0 0.0
      %6729 = vmatpush2.msra.mxu0 0.0
      %6730 = vmatprep.subr.mxu0 0.0
      %6731 = vmatpush2.msra.mxu0 0.0
      %6732 = vmatprep.subr.mxu0 0.0
      %6733 = vmatpush2.msra.mxu0 0.0
      %6734 = vmatprep.mubr.f32.mxu0 0.0
      %6735 = vmatmul.mubr.f32.gmra.mxu0 %v6597
      %v6736 = vpop.f32.mrf.mxu0
      %v6737 = vadd.f32 0.0, %v6736
      %v6738 = vpop.f32.mrf.mxu0
      %v6739 = vadd.f32 0.0, %v6738
      %6740 = vdwg.mxu0
      %6741 = vmatprep.subr.mxu0 0.0
      %6742 = vmatpush1.msra.mxu0 0.0
      %6743 = vmatprep.subr.mxu0 0.0
      %6744 = vmatpush1.msra.mxu0 0.0
      %6745 = vmatprep.subr.mxu0 0.0
      %6746 = vmatpush1.msra.mxu0 0.0
      %6747 = vmatprep.subr.mxu0 0.0
      %6748 = vmatpush1.msra.mxu0 0.0
      %6749 = vmatprep.subr.mxu0 0.0
      %6750 = vmatpush1.msra.mxu0 0.0
      %6751 = vmatprep.subr.mxu0 0.0
      %6752 = vmatpush1.msra.mxu0 0.0
      %6753 = vmatprep.subr.mxu0 0.0
      %6754 = vmatpush1.msra.mxu0 0.0
      %6755 = vmatprep.subr.mxu0 0.0
      %6756 = vmatpush1.msra.mxu0 0.0
      %6757 = vmatprep.subr.mxu0 0.0
      %6758 = vmatpush1.msra.mxu0 0.0
      %6759 = vmatprep.subr.mxu0 0.0
      %6760 = vmatpush1.msra.mxu0 0.0
      %6761 = vmatprep.subr.mxu0 0.0
      %6762 = vmatpush1.msra.mxu0 0.0
      %6763 = vmatprep.subr.mxu0 0.0
      %6764 = vmatpush1.msra.mxu0 0.0
      %6765 = vmatprep.subr.mxu0 0.0
      %6766 = vmatpush1.msra.mxu0 0.0
      %6767 = vmatprep.subr.mxu0 0.0
      %6768 = vmatpush1.msra.mxu0 0.0
      %6769 = vmatprep.subr.mxu0 0.0
      %6770 = vmatpush1.msra.mxu0 0.0
      %6771 = vmatprep.subr.mxu0 %v6584
      %6772 = vmatpush1.msra.mxu0 %v6583
      %6773 = vmatprep.subr.mxu0 0.0
      %6774 = vmatpush2.msra.mxu0 0.0
      %6775 = vmatprep.subr.mxu0 0.0
      %6776 = vmatpush2.msra.mxu0 0.0
      %6777 = vmatprep.subr.mxu0 0.0
      %6778 = vmatpush2.msra.mxu0 0.0
      %6779 = vmatprep.subr.mxu0 0.0
      %6780 = vmatpush2.msra.mxu0 0.0
      %6781 = vmatprep.subr.mxu0 0.0
      %6782 = vmatpush2.msra.mxu0 0.0
      %6783 = vmatprep.subr.mxu0 0.0
      %6784 = vmatpush2.msra.mxu0 0.0
      %6785 = vmatprep.subr.mxu0 0.0
      %6786 = vmatpush2.msra.mxu0 0.0
      %6787 = vmatprep.subr.mxu0 0.0
      %6788 = vmatpush2.msra.mxu0 0.0
      %6789 = vmatprep.subr.mxu0 0.0
      %6790 = vmatpush2.msra.mxu0 0.0
      %6791 = vmatprep.subr.mxu0 0.0
      %6792 = vmatpush2.msra.mxu0 0.0
      %6793 = vmatprep.subr.mxu0 0.0
      %6794 = vmatpush2.msra.mxu0 0.0
      %6795 = vmatprep.subr.mxu0 0.0
      %6796 = vmatpush2.msra.mxu0 0.0
      %6797 = vmatprep.subr.mxu0 0.0
      %6798 = vmatpush2.msra.mxu0 0.0
      %6799 = vmatprep.subr.mxu0 0.0
      %6800 = vmatpush2.msra.mxu0 0.0
      %6801 = vmatprep.subr.mxu0 0.0
      %6802 = vmatpush2.msra.mxu0 0.0
      %6803 = vmatprep.subr.mxu0 0.0
      %6804 = vmatpush2.msra.mxu0 0.0
      %6805 = vmatprep.mubr.f32.mxu0 0.0
      %6806 = vmatmul.mubr.f32.gmra.mxu0 %v6597
      %v6807 = vpop.f32.mrf.mxu0
      %v6808 = vadd.f32 0.0, %v6807
      %v6809 = vpop.f32.mrf.mxu0
      %v6810 = vadd.f32 0.0, %v6809
      %6811 = vdwg.mxu0
      %6812 = vmatprep.subr.mxu0 0.0
      %6813 = vmatpush1.msra.mxu0 0.0
      %6814 = vmatprep.subr.mxu0 0.0
      %6815 = vmatpush1.msra.mxu0 0.0
      %6816 = vmatprep.subr.mxu0 0.0
      %6817 = vmatpush1.msra.mxu0 0.0
      %6818 = vmatprep.subr.mxu0 0.0
      %6819 = vmatpush1.msra.mxu0 0.0
      %6820 = vmatprep.subr.mxu0 0.0
      %6821 = vmatpush1.msra.mxu0 0.0
      %6822 = vmatprep.subr.mxu0 0.0
      %6823 = vmatpush1.msra.mxu0 0.0
      %6824 = vmatprep.subr.mxu0 0.0
      %6825 = vmatpush1.msra.mxu0 0.0
      %6826 = vmatprep.subr.mxu0 0.0
      %6827 = vmatpush1.msra.mxu0 0.0
      %6828 = vmatprep.subr.mxu0 0.0
      %6829 = vmatpush1.msra.mxu0 0.0
      %6830 = vmatprep.subr.mxu0 0.0
      %6831 = vmatpush1.msra.mxu0 0.0
      %6832 = vmatprep.subr.mxu0 0.0
      %6833 = vmatpush1.msra.mxu0 0.0
      %6834 = vmatprep.subr.mxu0 0.0
      %6835 = vmatpush1.msra.mxu0 0.0
      %6836 = vmatprep.subr.mxu0 0.0
      %6837 = vmatpush1.msra.mxu0 0.0
      %6838 = vmatprep.subr.mxu0 0.0
      %6839 = vmatpush1.msra.mxu0 0.0
      %6840 = vmatprep.subr.mxu0 0.0
      %6841 = vmatpush1.msra.mxu0 0.0
      %6842 = vmatprep.subr.mxu0 %v6586
      %6843 = vmatpush1.msra.mxu0 %v6585
      %6844 = vmatprep.subr.mxu0 0.0
      %6845 = vmatpush2.msra.mxu0 0.0
      %6846 = vmatprep.subr.mxu0 0.0
      %6847 = vmatpush2.msra.mxu0 0.0
      %6848 = vmatprep.subr.mxu0 0.0
      %6849 = vmatpush2.msra.mxu0 0.0
      %6850 = vmatprep.subr.mxu0 0.0
      %6851 = vmatpush2.msra.mxu0 0.0
      %6852 = vmatprep.subr.mxu0 0.0
      %6853 = vmatpush2.msra.mxu0 0.0
      %6854 = vmatprep.subr.mxu0 0.0
      %6855 = vmatpush2.msra.mxu0 0.0
      %6856 = vmatprep.subr.mxu0 0.0
      %6857 = vmatpush2.msra.mxu0 0.0
      %6858 = vmatprep.subr.mxu0 0.0
      %6859 = vmatpush2.msra.mxu0 0.0
      %6860 = vmatprep.subr.mxu0 0.0
      %6861 = vmatpush2.msra.mxu0 0.0
      %6862 = vmatprep.subr.mxu0 0.0
      %6863 = vmatpush2.msra.mxu0 0.0
      %6864 = vmatprep.subr.mxu0 0.0
      %6865 = vmatpush2.msra.mxu0 0.0
      %6866 = vmatprep.subr.mxu0 0.0
      %6867 = vmatpush2.msra.mxu0 0.0
      %6868 = vmatprep.subr.mxu0 0.0
      %6869 = vmatpush2.msra.mxu0 0.0
      %6870 = vmatprep.subr.mxu0 0.0
      %6871 = vmatpush2.msra.mxu0 0.0
      %6872 = vmatprep.subr.mxu0 0.0
      %6873 = vmatpush2.msra.mxu0 0.0
      %6874 = vmatprep.subr.mxu0 0.0
      %6875 = vmatpush2.msra.mxu0 0.0
      %6876 = vmatprep.mubr.f32.mxu0 0.0
      %6877 = vmatmul.mubr.f32.gmra.mxu0 %v6597
      %v6878 = vpop.f32.mrf.mxu0
      %v6879 = vadd.f32 0.0, %v6878
      %v6880 = vpop.f32.mrf.mxu0
      %v6881 = vadd.f32 0.0, %v6880
      %6882 = vdwg.mxu0
      %6883 = vmatprep.subr.mxu0 0.0
      %6884 = vmatpush1.msra.mxu0 0.0
      %6885 = vmatprep.subr.mxu0 0.0
      %6886 = vmatpush1.msra.mxu0 0.0
      %6887 = vmatprep.subr.mxu0 0.0
      %6888 = vmatpush1.msra.mxu0 0.0
      %6889 = vmatprep.subr.mxu0 0.0
      %6890 = vmatpush1.msra.mxu0 0.0
      %6891 = vmatprep.subr.mxu0 0.0
      %6892 = vmatpush1.msra.mxu0 0.0
      %6893 = vmatprep.subr.mxu0 0.0
      %6894 = vmatpush1.msra.mxu0 0.0
      %6895 = vmatprep.subr.mxu0 0.0
      %6896 = vmatpush1.msra.mxu0 0.0
      %6897 = vmatprep.subr.mxu0 0.0
      %6898 = vmatpush1.msra.mxu0 0.0
      %6899 = vmatprep.subr.mxu0 0.0
      %6900 = vmatpush1.msra.mxu0 0.0
      %6901 = vmatprep.subr.mxu0 0.0
      %6902 = vmatpush1.msra.mxu0 0.0
      %6903 = vmatprep.subr.mxu0 0.0
      %6904 = vmatpush1.msra.mxu0 0.0
      %6905 = vmatprep.subr.mxu0 0.0
      %6906 = vmatpush1.msra.mxu0 0.0
      %6907 = vmatprep.subr.mxu0 0.0
      %6908 = vmatpush1.msra.mxu0 0.0
      %6909 = vmatprep.subr.mxu0 0.0
      %6910 = vmatpush1.msra.mxu0 0.0
      %6911 = vmatprep.subr.mxu0 0.0
      %6912 = vmatpush1.msra.mxu0 0.0
      %6913 = vmatprep.subr.mxu0 0.0
      %6914 = vmatpush1.msra.mxu0 %v6577
      %6915 = vmatprep.subr.mxu0 0.0
      %6916 = vmatpush2.msra.mxu0 0.0
      %6917 = vmatprep.subr.mxu0 0.0
      %6918 = vmatpush2.msra.mxu0 0.0
      %6919 = vmatprep.subr.mxu0 0.0
      %6920 = vmatpush2.msra.mxu0 0.0
      %6921 = vmatprep.subr.mxu0 0.0
      %6922 = vmatpush2.msra.mxu0 0.0
      %6923 = vmatprep.subr.mxu0 0.0
      %6924 = vmatpush2.msra.mxu0 0.0
      %6925 = vmatprep.subr.mxu0 0.0
      %6926 = vmatpush2.msra.mxu0 0.0
      %6927 = vmatprep.subr.mxu0 0.0
      %6928 = vmatpush2.msra.mxu0 0.0
      %6929 = vmatprep.subr.mxu0 0.0
      %6930 = vmatpush2.msra.mxu0 0.0
      %6931 = vmatprep.subr.mxu0 0.0
      %6932 = vmatpush2.msra.mxu0 0.0
      %6933 = vmatprep.subr.mxu0 0.0
      %6934 = vmatpush2.msra.mxu0 0.0
      %6935 = vmatprep.subr.mxu0 0.0
      %6936 = vmatpush2.msra.mxu0 0.0
      %6937 = vmatprep.subr.mxu0 0.0
      %6938 = vmatpush2.msra.mxu0 0.0
      %6939 = vmatprep.subr.mxu0 0.0
      %6940 = vmatpush2.msra.mxu0 0.0
      %6941 = vmatprep.subr.mxu0 0.0
      %6942 = vmatpush2.msra.mxu0 0.0
      %6943 = vmatprep.subr.mxu0 0.0
      %6944 = vmatpush2.msra.mxu0 0.0
      %6945 = vmatprep.subr.mxu0 0.0
      %6946 = vmatpush2.msra.mxu0 0.0
      %6947 = vmatprep.mubr.f32.mxu0 0.0
      %6948 = vmatmul.mubr.f32.gmra.mxu0 %v6597
      %v6949 = vpop.f32.mrf.mxu0
      %v6950 = vadd.f32 0.0, %v6949
      %v6951 = vpop.f32.mrf.mxu0
      %6952 = vdwg.mxu0
      %v6953 = vadd.f32 %v6549, %v6666
      %v6954 = vadd.f32 %v6550, %v6668
      %v6955 = vadd.f32 %v6551, %v6737
      %v6956 = vadd.f32 %v6552, %v6739
      %v6957 = vadd.f32 %v6553, %v6808
      %v6958 = vadd.f32 %v6554, %v6810
      %v6959 = vadd.f32 %v6555, %v6879
      %v6960 = vadd.f32 %v6556, %v6881
      %v6961 = vadd.f32 %v6557, %v6950
      %s6962 = scalar_lea.vmem %s3, 56
      %v6963 = vld [vmem:[%s6962] sm:$0xff]
      %6964 = vrot.lane.b32.xlu0 %v4158, 94
      %v6965 = vpop.permute.xlu0 %6964
      %6966 = vrot.lane.b32.xlu0 %v4159, 94
      %v6967 = vpop.permute.xlu0 %6966
      %6968 = vrot.lane.b32.xlu0 %v4160, 94
      %v6969 = vpop.permute.xlu0 %6968
      %6970 = vrot.lane.b32.xlu0 %v4161, 94
      %v6971 = vpop.permute.xlu0 %6970
      %6972 = vrot.lane.b32.xlu0 %v4162, 94
      %v6973 = vpop.permute.xlu0 %6972
      %6974 = vrot.lane.b32.xlu0 %v4163, 94
      %v6975 = vpop.permute.xlu0 %6974
      %6976 = vrot.lane.b32.xlu0 %v4164, 94
      %v6977 = vpop.permute.xlu0 %6976
      %6978 = vrot.lane.b32.xlu0 %v4165, 94
      %v6979 = vpop.permute.xlu0 %6978
      %6980 = vrot.lane.b32.xlu0 %v4166, 94
      %v6981 = vpop.permute.xlu0 %6980
      %v6982 = vsel %vm1454, %v6965, %v6967
      %v6983 = vsel %vm1454, %v6967, %v6969
      %v6984 = vsel %vm1454, %v6969, %v6971
      %v6985 = vsel %vm1454, %v6971, %v6973
      %v6986 = vsel %vm1454, %v6973, %v6975
      %v6987 = vsel %vm1454, %v6975, %v6977
      %v6988 = vsel %vm1454, %v6977, %v6979
      %v6989 = vsel %vm1454, %v6979, %v6981
      %v7000 = vsel %vm4219, %v6963, 0
      %7002 = vmatprep.subr.mxu0 0.0
      %7003 = vmatpush1.msra.mxu0 0.0
      %7004 = vmatprep.subr.mxu0 0.0
      %7005 = vmatpush1.msra.mxu0 0.0
      %7006 = vmatprep.subr.mxu0 0.0
      %7007 = vmatpush1.msra.mxu0 0.0
      %7008 = vmatprep.subr.mxu0 0.0
      %7009 = vmatpush1.msra.mxu0 0.0
      %7010 = vmatprep.subr.mxu0 0.0
      %7011 = vmatpush1.msra.mxu0 0.0
      %7012 = vmatprep.subr.mxu0 0.0
      %7013 = vmatpush1.msra.mxu0 0.0
      %7014 = vmatprep.subr.mxu0 0.0
      %7015 = vmatpush1.msra.mxu0 0.0
      %7016 = vmatprep.subr.mxu0 0.0
      %7017 = vmatpush1.msra.mxu0 0.0
      %7018 = vmatprep.subr.mxu0 0.0
      %7019 = vmatpush1.msra.mxu0 0.0
      %7020 = vmatprep.subr.mxu0 0.0
      %7021 = vmatpush1.msra.mxu0 0.0
      %7022 = vmatprep.subr.mxu0 0.0
      %7023 = vmatpush1.msra.mxu0 0.0
      %7024 = vmatprep.subr.mxu0 0.0
      %7025 = vmatpush1.msra.mxu0 0.0
      %7026 = vmatprep.subr.mxu0 0.0
      %7027 = vmatpush1.msra.mxu0 0.0
      %7028 = vmatprep.subr.mxu0 0.0
      %7029 = vmatpush1.msra.mxu0 0.0
      %7030 = vmatprep.subr.mxu0 0.0
      %7031 = vmatpush1.msra.mxu0 0.0
      %7032 = vmatprep.subr.mxu0 %v6983
      %7033 = vmatpush1.msra.mxu0 %v6982
      %7034 = vmatprep.subr.mxu0 0.0
      %7035 = vmatpush2.msra.mxu0 0.0
      %7036 = vmatprep.subr.mxu0 0.0
      %7037 = vmatpush2.msra.mxu0 0.0
      %7038 = vmatprep.subr.mxu0 0.0
      %7039 = vmatpush2.msra.mxu0 0.0
      %7040 = vmatprep.subr.mxu0 0.0
      %7041 = vmatpush2.msra.mxu0 0.0
      %7042 = vmatprep.subr.mxu0 0.0
      %7043 = vmatpush2.msra.mxu0 0.0
      %7044 = vmatprep.subr.mxu0 0.0
      %7045 = vmatpush2.msra.mxu0 0.0
      %7046 = vmatprep.subr.mxu0 0.0
      %7047 = vmatpush2.msra.mxu0 0.0
      %7048 = vmatprep.subr.mxu0 0.0
      %7049 = vmatpush2.msra.mxu0 0.0
      %7050 = vmatprep.subr.mxu0 0.0
      %7051 = vmatpush2.msra.mxu0 0.0
      %7052 = vmatprep.subr.mxu0 0.0
      %7053 = vmatpush2.msra.mxu0 0.0
      %7054 = vmatprep.subr.mxu0 0.0
      %7055 = vmatpush2.msra.mxu0 0.0
      %7056 = vmatprep.subr.mxu0 0.0
      %7057 = vmatpush2.msra.mxu0 0.0
      %7058 = vmatprep.subr.mxu0 0.0
      %7059 = vmatpush2.msra.mxu0 0.0
      %7060 = vmatprep.subr.mxu0 0.0
      %7061 = vmatpush2.msra.mxu0 0.0
      %7062 = vmatprep.subr.mxu0 0.0
      %7063 = vmatpush2.msra.mxu0 0.0
      %7064 = vmatprep.subr.mxu0 0.0
      %7065 = vmatpush2.msra.mxu0 0.0
      %7066 = vmatprep.mubr.f32.mxu0 0.0
      %7067 = vmatmul.mubr.f32.gmra.mxu0 %v7000
      %v7068 = vpop.f32.mrf.mxu0
      %v7069 = vadd.f32 0.0, %v7068
      %v7070 = vpop.f32.mrf.mxu0
      %v7071 = vadd.f32 0.0, %v7070
      %7072 = vdwg.mxu0
      %7073 = vmatprep.subr.mxu0 0.0
      %7074 = vmatpush1.msra.mxu0 0.0
      %7075 = vmatprep.subr.mxu0 0.0
      %7076 = vmatpush1.msra.mxu0 0.0
      %7077 = vmatprep.subr.mxu0 0.0
      %7078 = vmatpush1.msra.mxu0 0.0
      %7079 = vmatprep.subr.mxu0 0.0
      %7080 = vmatpush1.msra.mxu0 0.0
      %7081 = vmatprep.subr.mxu0 0.0
      %7082 = vmatpush1.msra.mxu0 0.0
      %7083 = vmatprep.subr.mxu0 0.0
      %7084 = vmatpush1.msra.mxu0 0.0
      %7085 = vmatprep.subr.mxu0 0.0
      %7086 = vmatpush1.msra.mxu0 0.0
      %7087 = vmatprep.subr.mxu0 0.0
      %7088 = vmatpush1.msra.mxu0 0.0
      %7089 = vmatprep.subr.mxu0 0.0
      %7090 = vmatpush1.msra.mxu0 0.0
      %7091 = vmatprep.subr.mxu0 0.0
      %7092 = vmatpush1.msra.mxu0 0.0
      %7093 = vmatprep.subr.mxu0 0.0
      %7094 = vmatpush1.msra.mxu0 0.0
      %7095 = vmatprep.subr.mxu0 0.0
      %7096 = vmatpush1.msra.mxu0 0.0
      %7097 = vmatprep.subr.mxu0 0.0
      %7098 = vmatpush1.msra.mxu0 0.0
      %7099 = vmatprep.subr.mxu0 0.0
      %7100 = vmatpush1.msra.mxu0 0.0
      %7101 = vmatprep.subr.mxu0 0.0
      %7102 = vmatpush1.msra.mxu0 0.0
      %7103 = vmatprep.subr.mxu0 %v6985
      %7104 = vmatpush1.msra.mxu0 %v6984
      %7105 = vmatprep.subr.mxu0 0.0
      %7106 = vmatpush2.msra.mxu0 0.0
      %7107 = vmatprep.subr.mxu0 0.0
      %7108 = vmatpush2.msra.mxu0 0.0
      %7109 = vmatprep.subr.mxu0 0.0
      %7110 = vmatpush2.msra.mxu0 0.0
      %7111 = vmatprep.subr.mxu0 0.0
      %7112 = vmatpush2.msra.mxu0 0.0
      %7113 = vmatprep.subr.mxu0 0.0
      %7114 = vmatpush2.msra.mxu0 0.0
      %7115 = vmatprep.subr.mxu0 0.0
      %7116 = vmatpush2.msra.mxu0 0.0
      %7117 = vmatprep.subr.mxu0 0.0
      %7118 = vmatpush2.msra.mxu0 0.0
      %7119 = vmatprep.subr.mxu0 0.0
      %7120 = vmatpush2.msra.mxu0 0.0
      %7121 = vmatprep.subr.mxu0 0.0
      %7122 = vmatpush2.msra.mxu0 0.0
      %7123 = vmatprep.subr.mxu0 0.0
      %7124 = vmatpush2.msra.mxu0 0.0
      %7125 = vmatprep.subr.mxu0 0.0
      %7126 = vmatpush2.msra.mxu0 0.0
      %7127 = vmatprep.subr.mxu0 0.0
      %7128 = vmatpush2.msra.mxu0 0.0
      %7129 = vmatprep.subr.mxu0 0.0
      %7130 = vmatpush2.msra.mxu0 0.0
      %7131 = vmatprep.subr.mxu0 0.0
      %7132 = vmatpush2.msra.mxu0 0.0
      %7133 = vmatprep.subr.mxu0 0.0
      %7134 = vmatpush2.msra.mxu0 0.0
      %7135 = vmatprep.subr.mxu0 0.0
      %7136 = vmatpush2.msra.mxu0 0.0
      %7137 = vmatprep.mubr.f32.mxu0 0.0
      %7138 = vmatmul.mubr.f32.gmra.mxu0 %v7000
      %v7139 = vpop.f32.mrf.mxu0
      %v7140 = vadd.f32 0.0, %v7139
      %v7141 = vpop.f32.mrf.mxu0
      %v7142 = vadd.f32 0.0, %v7141
      %7143 = vdwg.mxu0
      %7144 = vmatprep.subr.mxu0 0.0
      %7145 = vmatpush1.msra.mxu0 0.0
      %7146 = vmatprep.subr.mxu0 0.0
      %7147 = vmatpush1.msra.mxu0 0.0
      %7148 = vmatprep.subr.mxu0 0.0
      %7149 = vmatpush1.msra.mxu0 0.0
      %7150 = vmatprep.subr.mxu0 0.0
      %7151 = vmatpush1.msra.mxu0 0.0
      %7152 = vmatprep.subr.mxu0 0.0
      %7153 = vmatpush1.msra.mxu0 0.0
      %7154 = vmatprep.subr.mxu0 0.0
      %7155 = vmatpush1.msra.mxu0 0.0
      %7156 = vmatprep.subr.mxu0 0.0
      %7157 = vmatpush1.msra.mxu0 0.0
      %7158 = vmatprep.subr.mxu0 0.0
      %7159 = vmatpush1.msra.mxu0 0.0
      %7160 = vmatprep.subr.mxu0 0.0
      %7161 = vmatpush1.msra.mxu0 0.0
      %7162 = vmatprep.subr.mxu0 0.0
      %7163 = vmatpush1.msra.mxu0 0.0
      %7164 = vmatprep.subr.mxu0 0.0
      %7165 = vmatpush1.msra.mxu0 0.0
      %7166 = vmatprep.subr.mxu0 0.0
      %7167 = vmatpush1.msra.mxu0 0.0
      %7168 = vmatprep.subr.mxu0 0.0
      %7169 = vmatpush1.msra.mxu0 0.0
      %7170 = vmatprep.subr.mxu0 0.0
      %7171 = vmatpush1.msra.mxu0 0.0
      %7172 = vmatprep.subr.mxu0 0.0
      %7173 = vmatpush1.msra.mxu0 0.0
      %7174 = vmatprep.subr.mxu0 %v6987
      %7175 = vmatpush1.msra.mxu0 %v6986
      %7176 = vmatprep.subr.mxu0 0.0
      %7177 = vmatpush2.msra.mxu0 0.0
      %7178 = vmatprep.subr.mxu0 0.0
      %7179 = vmatpush2.msra.mxu0 0.0
      %7180 = vmatprep.subr.mxu0 0.0
      %7181 = vmatpush2.msra.mxu0 0.0
      %7182 = vmatprep.subr.mxu0 0.0
      %7183 = vmatpush2.msra.mxu0 0.0
      %7184 = vmatprep.subr.mxu0 0.0
      %7185 = vmatpush2.msra.mxu0 0.0
      %7186 = vmatprep.subr.mxu0 0.0
      %7187 = vmatpush2.msra.mxu0 0.0
      %7188 = vmatprep.subr.mxu0 0.0
      %7189 = vmatpush2.msra.mxu0 0.0
      %7190 = vmatprep.subr.mxu0 0.0
      %7191 = vmatpush2.msra.mxu0 0.0
      %7192 = vmatprep.subr.mxu0 0.0
      %7193 = vmatpush2.msra.mxu0 0.0
      %7194 = vmatprep.subr.mxu0 0.0
      %7195 = vmatpush2.msra.mxu0 0.0
      %7196 = vmatprep.subr.mxu0 0.0
      %7197 = vmatpush2.msra.mxu0 0.0
      %7198 = vmatprep.subr.mxu0 0.0
      %7199 = vmatpush2.msra.mxu0 0.0
      %7200 = vmatprep.subr.mxu0 0.0
      %7201 = vmatpush2.msra.mxu0 0.0
      %7202 = vmatprep.subr.mxu0 0.0
      %7203 = vmatpush2.msra.mxu0 0.0
      %7204 = vmatprep.subr.mxu0 0.0
      %7205 = vmatpush2.msra.mxu0 0.0
      %7206 = vmatprep.subr.mxu0 0.0
      %7207 = vmatpush2.msra.mxu0 0.0
      %7208 = vmatprep.mubr.f32.mxu0 0.0
      %7209 = vmatmul.mubr.f32.gmra.mxu0 %v7000
      %v7210 = vpop.f32.mrf.mxu0
      %v7211 = vadd.f32 0.0, %v7210
      %v7212 = vpop.f32.mrf.mxu0
      %v7213 = vadd.f32 0.0, %v7212
      %7214 = vdwg.mxu0
      %7215 = vmatprep.subr.mxu0 0.0
      %7216 = vmatpush1.msra.mxu0 0.0
      %7217 = vmatprep.subr.mxu0 0.0
      %7218 = vmatpush1.msra.mxu0 0.0
      %7219 = vmatprep.subr.mxu0 0.0
      %7220 = vmatpush1.msra.mxu0 0.0
      %7221 = vmatprep.subr.mxu0 0.0
      %7222 = vmatpush1.msra.mxu0 0.0
      %7223 = vmatprep.subr.mxu0 0.0
      %7224 = vmatpush1.msra.mxu0 0.0
      %7225 = vmatprep.subr.mxu0 0.0
      %7226 = vmatpush1.msra.mxu0 0.0
      %7227 = vmatprep.subr.mxu0 0.0
      %7228 = vmatpush1.msra.mxu0 0.0
      %7229 = vmatprep.subr.mxu0 0.0
      %7230 = vmatpush1.msra.mxu0 0.0
      %7231 = vmatprep.subr.mxu0 0.0
      %7232 = vmatpush1.msra.mxu0 0.0
      %7233 = vmatprep.subr.mxu0 0.0
      %7234 = vmatpush1.msra.mxu0 0.0
      %7235 = vmatprep.subr.mxu0 0.0
      %7236 = vmatpush1.msra.mxu0 0.0
      %7237 = vmatprep.subr.mxu0 0.0
      %7238 = vmatpush1.msra.mxu0 0.0
      %7239 = vmatprep.subr.mxu0 0.0
      %7240 = vmatpush1.msra.mxu0 0.0
      %7241 = vmatprep.subr.mxu0 0.0
      %7242 = vmatpush1.msra.mxu0 0.0
      %7243 = vmatprep.subr.mxu0 0.0
      %7244 = vmatpush1.msra.mxu0 0.0
      %7245 = vmatprep.subr.mxu0 %v6989
      %7246 = vmatpush1.msra.mxu0 %v6988
      %7247 = vmatprep.subr.mxu0 0.0
      %7248 = vmatpush2.msra.mxu0 0.0
      %7249 = vmatprep.subr.mxu0 0.0
      %7250 = vmatpush2.msra.mxu0 0.0
      %7251 = vmatprep.subr.mxu0 0.0
      %7252 = vmatpush2.msra.mxu0 0.0
      %7253 = vmatprep.subr.mxu0 0.0
      %7254 = vmatpush2.msra.mxu0 0.0
      %7255 = vmatprep.subr.mxu0 0.0
      %7256 = vmatpush2.msra.mxu0 0.0
      %7257 = vmatprep.subr.mxu0 0.0
      %7258 = vmatpush2.msra.mxu0 0.0
      %7259 = vmatprep.subr.mxu0 0.0
      %7260 = vmatpush2.msra.mxu0 0.0
      %7261 = vmatprep.subr.mxu0 0.0
      %7262 = vmatpush2.msra.mxu0 0.0
      %7263 = vmatprep.subr.mxu0 0.0
      %7264 = vmatpush2.msra.mxu0 0.0
      %7265 = vmatprep.subr.mxu0 0.0
      %7266 = vmatpush2.msra.mxu0 0.0
      %7267 = vmatprep.subr.mxu0 0.0
      %7268 = vmatpush2.msra.mxu0 0.0
      %7269 = vmatprep.subr.mxu0 0.0
      %7270 = vmatpush2.msra.mxu0 0.0
      %7271 = vmatprep.subr.mxu0 0.0
      %7272 = vmatpush2.msra.mxu0 0.0
      %7273 = vmatprep.subr.mxu0 0.0
      %7274 = vmatpush2.msra.mxu0 0.0
      %7275 = vmatprep.subr.mxu0 0.0
      %7276 = vmatpush2.msra.mxu0 0.0
      %7277 = vmatprep.subr.mxu0 0.0
      %7278 = vmatpush2.msra.mxu0 0.0
      %7279 = vmatprep.mubr.f32.mxu0 0.0
      %7280 = vmatmul.mubr.f32.gmra.mxu0 %v7000
      %v7281 = vpop.f32.mrf.mxu0
      %v7282 = vadd.f32 0.0, %v7281
      %v7283 = vpop.f32.mrf.mxu0
      %v7284 = vadd.f32 0.0, %v7283
      %7285 = vdwg.mxu0
      %7286 = vmatprep.subr.mxu0 0.0
      %7287 = vmatpush1.msra.mxu0 0.0
      %7288 = vmatprep.subr.mxu0 0.0
      %7289 = vmatpush1.msra.mxu0 0.0
      %7290 = vmatprep.subr.mxu0 0.0
      %7291 = vmatpush1.msra.mxu0 0.0
      %7292 = vmatprep.subr.mxu0 0.0
      %7293 = vmatpush1.msra.mxu0 0.0
      %7294 = vmatprep.subr.mxu0 0.0
      %7295 = vmatpush1.msra.mxu0 0.0
      %7296 = vmatprep.subr.mxu0 0.0
      %7297 = vmatpush1.msra.mxu0 0.0
      %7298 = vmatprep.subr.mxu0 0.0
      %7299 = vmatpush1.msra.mxu0 0.0
      %7300 = vmatprep.subr.mxu0 0.0
      %7301 = vmatpush1.msra.mxu0 0.0
      %7302 = vmatprep.subr.mxu0 0.0
      %7303 = vmatpush1.msra.mxu0 0.0
      %7304 = vmatprep.subr.mxu0 0.0
      %7305 = vmatpush1.msra.mxu0 0.0
      %7306 = vmatprep.subr.mxu0 0.0
      %7307 = vmatpush1.msra.mxu0 0.0
      %7308 = vmatprep.subr.mxu0 0.0
      %7309 = vmatpush1.msra.mxu0 0.0
      %7310 = vmatprep.subr.mxu0 0.0
      %7311 = vmatpush1.msra.mxu0 0.0
      %7312 = vmatprep.subr.mxu0 0.0
      %7313 = vmatpush1.msra.mxu0 0.0
      %7314 = vmatprep.subr.mxu0 0.0
      %7315 = vmatpush1.msra.mxu0 0.0
      %7316 = vmatprep.subr.mxu0 0.0
      %7317 = vmatpush1.msra.mxu0 %v6981
      %7318 = vmatprep.subr.mxu0 0.0
      %7319 = vmatpush2.msra.mxu0 0.0
      %7320 = vmatprep.subr.mxu0 0.0
      %7321 = vmatpush2.msra.mxu0 0.0
      %7322 = vmatprep.subr.mxu0 0.0
      %7323 = vmatpush2.msra.mxu0 0.0
      %7324 = vmatprep.subr.mxu0 0.0
      %7325 = vmatpush2.msra.mxu0 0.0
      %7326 = vmatprep.subr.mxu0 0.0
      %7327 = vmatpush2.msra.mxu0 0.0
      %7328 = vmatprep.subr.mxu0 0.0
      %7329 = vmatpush2.msra.mxu0 0.0
      %7330 = vmatprep.subr.mxu0 0.0
      %7331 = vmatpush2.msra.mxu0 0.0
      %7332 = vmatprep.subr.mxu0 0.0
      %7333 = vmatpush2.msra.mxu0 0.0
      %7334 = vmatprep.subr.mxu0 0.0
      %7335 = vmatpush2.msra.mxu0 0.0
      %7336 = vmatprep.subr.mxu0 0.0
      %7337 = vmatpush2.msra.mxu0 0.0
      %7338 = vmatprep.subr.mxu0 0.0
      %7339 = vmatpush2.msra.mxu0 0.0
      %7340 = vmatprep.subr.mxu0 0.0
      %7341 = vmatpush2.msra.mxu0 0.0
      %7342 = vmatprep.subr.mxu0 0.0
      %7343 = vmatpush2.msra.mxu0 0.0
      %7344 = vmatprep.subr.mxu0 0.0
      %7345 = vmatpush2.msra.mxu0 0.0
      %7346 = vmatprep.subr.mxu0 0.0
      %7347 = vmatpush2.msra.mxu0 0.0
      %7348 = vmatprep.subr.mxu0 0.0
      %7349 = vmatpush2.msra.mxu0 0.0
      %7350 = vmatprep.mubr.f32.mxu0 0.0
      %7351 = vmatmul.mubr.f32.gmra.mxu0 %v7000
      %v7352 = vpop.f32.mrf.mxu0
      %v7353 = vadd.f32 0.0, %v7352
      %v7354 = vpop.f32.mrf.mxu0
      %7355 = vdwg.mxu0
      %v7356 = vadd.f32 %v6953, %v7069
      %v7357 = vadd.f32 %v6954, %v7071
      %v7358 = vadd.f32 %v6955, %v7140
      %v7359 = vadd.f32 %v6956, %v7142
      %v7360 = vadd.f32 %v6957, %v7211
      %v7361 = vadd.f32 %v6958, %v7213
      %v7362 = vadd.f32 %v6959, %v7282
      %v7363 = vadd.f32 %v6960, %v7284
      %v7364 = vadd.f32 %v6961, %v7353
      %s7365 = scalar_lea.vmem %s3, 64
      %v7366 = vld [vmem:[%s7365] sm:$0xff]
      %7367 = vrot.lane.b32.xlu0 %v4158, 93
      %v7368 = vpop.permute.xlu0 %7367
      %7369 = vrot.lane.b32.xlu0 %v4159, 93
      %v7370 = vpop.permute.xlu0 %7369
      %7371 = vrot.lane.b32.xlu0 %v4160, 93
      %v7372 = vpop.permute.xlu0 %7371
      %7373 = vrot.lane.b32.xlu0 %v4161, 93
      %v7374 = vpop.permute.xlu0 %7373
      %7375 = vrot.lane.b32.xlu0 %v4162, 93
      %v7376 = vpop.permute.xlu0 %7375
      %7377 = vrot.lane.b32.xlu0 %v4163, 93
      %v7378 = vpop.permute.xlu0 %7377
      %7379 = vrot.lane.b32.xlu0 %v4164, 93
      %v7380 = vpop.permute.xlu0 %7379
      %7381 = vrot.lane.b32.xlu0 %v4165, 93
      %v7382 = vpop.permute.xlu0 %7381
      %7383 = vrot.lane.b32.xlu0 %v4166, 93
      %v7384 = vpop.permute.xlu0 %7383
      %v7385 = vsel %vm1867, %v7368, %v7370
      %v7386 = vsel %vm1867, %v7370, %v7372
      %v7387 = vsel %vm1867, %v7372, %v7374
      %v7388 = vsel %vm1867, %v7374, %v7376
      %v7389 = vsel %vm1867, %v7376, %v7378
      %v7390 = vsel %vm1867, %v7378, %v7380
      %v7391 = vsel %vm1867, %v7380, %v7382
      %v7392 = vsel %vm1867, %v7382, %v7384
      %v7403 = vsel %vm4219, %v7366, 0
      %7405 = vmatprep.subr.mxu0 0.0
      %7406 = vmatpush1.msra.mxu0 0.0
      %7407 = vmatprep.subr.mxu0 0.0
      %7408 = vmatpush1.msra.mxu0 0.0
      %7409 = vmatprep.subr.mxu0 0.0
      %7410 = vmatpush1.msra.mxu0 0.0
      %7411 = vmatprep.subr.mxu0 0.0
      %7412 = vmatpush1.msra.mxu0 0.0
      %7413 = vmatprep.subr.mxu0 0.0
      %7414 = vmatpush1.msra.mxu0 0.0
      %7415 = vmatprep.subr.mxu0 0.0
      %7416 = vmatpush1.msra.mxu0 0.0
      %7417 = vmatprep.subr.mxu0 0.0
      %7418 = vmatpush1.msra.mxu0 0.0
      %7419 = vmatprep.subr.mxu0 0.0
      %7420 = vmatpush1.msra.mxu0 0.0
      %7421 = vmatprep.subr.mxu0 0.0
      %7422 = vmatpush1.msra.mxu0 0.0
      %7423 = vmatprep.subr.mxu0 0.0
      %7424 = vmatpush1.msra.mxu0 0.0
      %7425 = vmatprep.subr.mxu0 0.0
      %7426 = vmatpush1.msra.mxu0 0.0
      %7427 = vmatprep.subr.mxu0 0.0
      %7428 = vmatpush1.msra.mxu0 0.0
      %7429 = vmatprep.subr.mxu0 0.0
      %7430 = vmatpush1.msra.mxu0 0.0
      %7431 = vmatprep.subr.mxu0 0.0
      %7432 = vmatpush1.msra.mxu0 0.0
      %7433 = vmatprep.subr.mxu0 0.0
      %7434 = vmatpush1.msra.mxu0 0.0
      %7435 = vmatprep.subr.mxu0 %v7386
      %7436 = vmatpush1.msra.mxu0 %v7385
      %7437 = vmatprep.subr.mxu0 0.0
      %7438 = vmatpush2.msra.mxu0 0.0
      %7439 = vmatprep.subr.mxu0 0.0
      %7440 = vmatpush2.msra.mxu0 0.0
      %7441 = vmatprep.subr.mxu0 0.0
      %7442 = vmatpush2.msra.mxu0 0.0
      %7443 = vmatprep.subr.mxu0 0.0
      %7444 = vmatpush2.msra.mxu0 0.0
      %7445 = vmatprep.subr.mxu0 0.0
      %7446 = vmatpush2.msra.mxu0 0.0
      %7447 = vmatprep.subr.mxu0 0.0
      %7448 = vmatpush2.msra.mxu0 0.0
      %7449 = vmatprep.subr.mxu0 0.0
      %7450 = vmatpush2.msra.mxu0 0.0
      %7451 = vmatprep.subr.mxu0 0.0
      %7452 = vmatpush2.msra.mxu0 0.0
      %7453 = vmatprep.subr.mxu0 0.0
      %7454 = vmatpush2.msra.mxu0 0.0
      %7455 = vmatprep.subr.mxu0 0.0
      %7456 = vmatpush2.msra.mxu0 0.0
      %7457 = vmatprep.subr.mxu0 0.0
      %7458 = vmatpush2.msra.mxu0 0.0
      %7459 = vmatprep.subr.mxu0 0.0
      %7460 = vmatpush2.msra.mxu0 0.0
      %7461 = vmatprep.subr.mxu0 0.0
      %7462 = vmatpush2.msra.mxu0 0.0
      %7463 = vmatprep.subr.mxu0 0.0
      %7464 = vmatpush2.msra.mxu0 0.0
      %7465 = vmatprep.subr.mxu0 0.0
      %7466 = vmatpush2.msra.mxu0 0.0
      %7467 = vmatprep.subr.mxu0 0.0
      %7468 = vmatpush2.msra.mxu0 0.0
      %7469 = vmatprep.mubr.f32.mxu0 0.0
      %7470 = vmatmul.mubr.f32.gmra.mxu0 %v7403
      %v7471 = vpop.f32.mrf.mxu0
      %v7472 = vadd.f32 0.0, %v7471
      %v7473 = vpop.f32.mrf.mxu0
      %v7474 = vadd.f32 0.0, %v7473
      %7475 = vdwg.mxu0
      %7476 = vmatprep.subr.mxu0 0.0
      %7477 = vmatpush1.msra.mxu0 0.0
      %7478 = vmatprep.subr.mxu0 0.0
      %7479 = vmatpush1.msra.mxu0 0.0
      %7480 = vmatprep.subr.mxu0 0.0
      %7481 = vmatpush1.msra.mxu0 0.0
      %7482 = vmatprep.subr.mxu0 0.0
      %7483 = vmatpush1.msra.mxu0 0.0
      %7484 = vmatprep.subr.mxu0 0.0
      %7485 = vmatpush1.msra.mxu0 0.0
      %7486 = vmatprep.subr.mxu0 0.0
      %7487 = vmatpush1.msra.mxu0 0.0
      %7488 = vmatprep.subr.mxu0 0.0
      %7489 = vmatpush1.msra.mxu0 0.0
      %7490 = vmatprep.subr.mxu0 0.0
      %7491 = vmatpush1.msra.mxu0 0.0
      %7492 = vmatprep.subr.mxu0 0.0
      %7493 = vmatpush1.msra.mxu0 0.0
      %7494 = vmatprep.subr.mxu0 0.0
      %7495 = vmatpush1.msra.mxu0 0.0
      %7496 = vmatprep.subr.mxu0 0.0
      %7497 = vmatpush1.msra.mxu0 0.0
      %7498 = vmatprep.subr.mxu0 0.0
      %7499 = vmatpush1.msra.mxu0 0.0
      %7500 = vmatprep.subr.mxu0 0.0
      %7501 = vmatpush1.msra.mxu0 0.0
      %7502 = vmatprep.subr.mxu0 0.0
      %7503 = vmatpush1.msra.mxu0 0.0
      %7504 = vmatprep.subr.mxu0 0.0
      %7505 = vmatpush1.msra.mxu0 0.0
      %7506 = vmatprep.subr.mxu0 %v7388
      %7507 = vmatpush1.msra.mxu0 %v7387
      %7508 = vmatprep.subr.mxu0 0.0
      %7509 = vmatpush2.msra.mxu0 0.0
      %7510 = vmatprep.subr.mxu0 0.0
      %7511 = vmatpush2.msra.mxu0 0.0
      %7512 = vmatprep.subr.mxu0 0.0
      %7513 = vmatpush2.msra.mxu0 0.0
      %7514 = vmatprep.subr.mxu0 0.0
      %7515 = vmatpush2.msra.mxu0 0.0
      %7516 = vmatprep.subr.mxu0 0.0
      %7517 = vmatpush2.msra.mxu0 0.0
      %7518 = vmatprep.subr.mxu0 0.0
      %7519 = vmatpush2.msra.mxu0 0.0
      %7520 = vmatprep.subr.mxu0 0.0
      %7521 = vmatpush2.msra.mxu0 0.0
      %7522 = vmatprep.subr.mxu0 0.0
      %7523 = vmatpush2.msra.mxu0 0.0
      %7524 = vmatprep.subr.mxu0 0.0
      %7525 = vmatpush2.msra.mxu0 0.0
      %7526 = vmatprep.subr.mxu0 0.0
      %7527 = vmatpush2.msra.mxu0 0.0
      %7528 = vmatprep.subr.mxu0 0.0
      %7529 = vmatpush2.msra.mxu0 0.0
      %7530 = vmatprep.subr.mxu0 0.0
      %7531 = vmatpush2.msra.mxu0 0.0
      %7532 = vmatprep.subr.mxu0 0.0
      %7533 = vmatpush2.msra.mxu0 0.0
      %7534 = vmatprep.subr.mxu0 0.0
      %7535 = vmatpush2.msra.mxu0 0.0
      %7536 = vmatprep.subr.mxu0 0.0
      %7537 = vmatpush2.msra.mxu0 0.0
      %7538 = vmatprep.subr.mxu0 0.0
      %7539 = vmatpush2.msra.mxu0 0.0
      %7540 = vmatprep.mubr.f32.mxu0 0.0
      %7541 = vmatmul.mubr.f32.gmra.mxu0 %v7403
      %v7542 = vpop.f32.mrf.mxu0
      %v7543 = vadd.f32 0.0, %v7542
      %v7544 = vpop.f32.mrf.mxu0
      %v7545 = vadd.f32 0.0, %v7544
      %7546 = vdwg.mxu0
      %7547 = vmatprep.subr.mxu0 0.0
      %7548 = vmatpush1.msra.mxu0 0.0
      %7549 = vmatprep.subr.mxu0 0.0
      %7550 = vmatpush1.msra.mxu0 0.0
      %7551 = vmatprep.subr.mxu0 0.0
      %7552 = vmatpush1.msra.mxu0 0.0
      %7553 = vmatprep.subr.mxu0 0.0
      %7554 = vmatpush1.msra.mxu0 0.0
      %7555 = vmatprep.subr.mxu0 0.0
      %7556 = vmatpush1.msra.mxu0 0.0
      %7557 = vmatprep.subr.mxu0 0.0
      %7558 = vmatpush1.msra.mxu0 0.0
      %7559 = vmatprep.subr.mxu0 0.0
      %7560 = vmatpush1.msra.mxu0 0.0
      %7561 = vmatprep.subr.mxu0 0.0
      %7562 = vmatpush1.msra.mxu0 0.0
      %7563 = vmatprep.subr.mxu0 0.0
      %7564 = vmatpush1.msra.mxu0 0.0
      %7565 = vmatprep.subr.mxu0 0.0
      %7566 = vmatpush1.msra.mxu0 0.0
      %7567 = vmatprep.subr.mxu0 0.0
      %7568 = vmatpush1.msra.mxu0 0.0
      %7569 = vmatprep.subr.mxu0 0.0
      %7570 = vmatpush1.msra.mxu0 0.0
      %7571 = vmatprep.subr.mxu0 0.0
      %7572 = vmatpush1.msra.mxu0 0.0
      %7573 = vmatprep.subr.mxu0 0.0
      %7574 = vmatpush1.msra.mxu0 0.0
      %7575 = vmatprep.subr.mxu0 0.0
      %7576 = vmatpush1.msra.mxu0 0.0
      %7577 = vmatprep.subr.mxu0 %v7390
      %7578 = vmatpush1.msra.mxu0 %v7389
      %7579 = vmatprep.subr.mxu0 0.0
      %7580 = vmatpush2.msra.mxu0 0.0
      %7581 = vmatprep.subr.mxu0 0.0
      %7582 = vmatpush2.msra.mxu0 0.0
      %7583 = vmatprep.subr.mxu0 0.0
      %7584 = vmatpush2.msra.mxu0 0.0
      %7585 = vmatprep.subr.mxu0 0.0
      %7586 = vmatpush2.msra.mxu0 0.0
      %7587 = vmatprep.subr.mxu0 0.0
      %7588 = vmatpush2.msra.mxu0 0.0
      %7589 = vmatprep.subr.mxu0 0.0
      %7590 = vmatpush2.msra.mxu0 0.0
      %7591 = vmatprep.subr.mxu0 0.0
      %7592 = vmatpush2.msra.mxu0 0.0
      %7593 = vmatprep.subr.mxu0 0.0
      %7594 = vmatpush2.msra.mxu0 0.0
      %7595 = vmatprep.subr.mxu0 0.0
      %7596 = vmatpush2.msra.mxu0 0.0
      %7597 = vmatprep.subr.mxu0 0.0
      %7598 = vmatpush2.msra.mxu0 0.0
      %7599 = vmatprep.subr.mxu0 0.0
      %7600 = vmatpush2.msra.mxu0 0.0
      %7601 = vmatprep.subr.mxu0 0.0
      %7602 = vmatpush2.msra.mxu0 0.0
      %7603 = vmatprep.subr.mxu0 0.0
      %7604 = vmatpush2.msra.mxu0 0.0
      %7605 = vmatprep.subr.mxu0 0.0
      %7606 = vmatpush2.msra.mxu0 0.0
      %7607 = vmatprep.subr.mxu0 0.0
      %7608 = vmatpush2.msra.mxu0 0.0
      %7609 = vmatprep.subr.mxu0 0.0
      %7610 = vmatpush2.msra.mxu0 0.0
      %7611 = vmatprep.mubr.f32.mxu0 0.0
      %7612 = vmatmul.mubr.f32.gmra.mxu0 %v7403
      %v7613 = vpop.f32.mrf.mxu0
      %v7614 = vadd.f32 0.0, %v7613
      %v7615 = vpop.f32.mrf.mxu0
      %v7616 = vadd.f32 0.0, %v7615
      %7617 = vdwg.mxu0
      %7618 = vmatprep.subr.mxu0 0.0
      %7619 = vmatpush1.msra.mxu0 0.0
      %7620 = vmatprep.subr.mxu0 0.0
      %7621 = vmatpush1.msra.mxu0 0.0
      %7622 = vmatprep.subr.mxu0 0.0
      %7623 = vmatpush1.msra.mxu0 0.0
      %7624 = vmatprep.subr.mxu0 0.0
      %7625 = vmatpush1.msra.mxu0 0.0
      %7626 = vmatprep.subr.mxu0 0.0
      %7627 = vmatpush1.msra.mxu0 0.0
      %7628 = vmatprep.subr.mxu0 0.0
      %7629 = vmatpush1.msra.mxu0 0.0
      %7630 = vmatprep.subr.mxu0 0.0
      %7631 = vmatpush1.msra.mxu0 0.0
      %7632 = vmatprep.subr.mxu0 0.0
      %7633 = vmatpush1.msra.mxu0 0.0
      %7634 = vmatprep.subr.mxu0 0.0
      %7635 = vmatpush1.msra.mxu0 0.0
      %7636 = vmatprep.subr.mxu0 0.0
      %7637 = vmatpush1.msra.mxu0 0.0
      %7638 = vmatprep.subr.mxu0 0.0
      %7639 = vmatpush1.msra.mxu0 0.0
      %7640 = vmatprep.subr.mxu0 0.0
      %7641 = vmatpush1.msra.mxu0 0.0
      %7642 = vmatprep.subr.mxu0 0.0
      %7643 = vmatpush1.msra.mxu0 0.0
      %7644 = vmatprep.subr.mxu0 0.0
      %7645 = vmatpush1.msra.mxu0 0.0
      %7646 = vmatprep.subr.mxu0 0.0
      %7647 = vmatpush1.msra.mxu0 0.0
      %7648 = vmatprep.subr.mxu0 %v7392
      %7649 = vmatpush1.msra.mxu0 %v7391
      %7650 = vmatprep.subr.mxu0 0.0
      %7651 = vmatpush2.msra.mxu0 0.0
      %7652 = vmatprep.subr.mxu0 0.0
      %7653 = vmatpush2.msra.mxu0 0.0
      %7654 = vmatprep.subr.mxu0 0.0
      %7655 = vmatpush2.msra.mxu0 0.0
      %7656 = vmatprep.subr.mxu0 0.0
      %7657 = vmatpush2.msra.mxu0 0.0
      %7658 = vmatprep.subr.mxu0 0.0
      %7659 = vmatpush2.msra.mxu0 0.0
      %7660 = vmatprep.subr.mxu0 0.0
      %7661 = vmatpush2.msra.mxu0 0.0
      %7662 = vmatprep.subr.mxu0 0.0
      %7663 = vmatpush2.msra.mxu0 0.0
      %7664 = vmatprep.subr.mxu0 0.0
      %7665 = vmatpush2.msra.mxu0 0.0
      %7666 = vmatprep.subr.mxu0 0.0
      %7667 = vmatpush2.msra.mxu0 0.0
      %7668 = vmatprep.subr.mxu0 0.0
      %7669 = vmatpush2.msra.mxu0 0.0
      %7670 = vmatprep.subr.mxu0 0.0
      %7671 = vmatpush2.msra.mxu0 0.0
      %7672 = vmatprep.subr.mxu0 0.0
      %7673 = vmatpush2.msra.mxu0 0.0
      %7674 = vmatprep.subr.mxu0 0.0
      %7675 = vmatpush2.msra.mxu0 0.0
      %7676 = vmatprep.subr.mxu0 0.0
      %7677 = vmatpush2.msra.mxu0 0.0
      %7678 = vmatprep.subr.mxu0 0.0
      %7679 = vmatpush2.msra.mxu0 0.0
      %7680 = vmatprep.subr.mxu0 0.0
      %7681 = vmatpush2.msra.mxu0 0.0
      %7682 = vmatprep.mubr.f32.mxu0 0.0
      %7683 = vmatmul.mubr.f32.gmra.mxu0 %v7403
      %v7684 = vpop.f32.mrf.mxu0
      %v7685 = vadd.f32 0.0, %v7684
      %v7686 = vpop.f32.mrf.mxu0
      %v7687 = vadd.f32 0.0, %v7686
      %7688 = vdwg.mxu0
      %7689 = vmatprep.subr.mxu0 0.0
      %7690 = vmatpush1.msra.mxu0 0.0
      %7691 = vmatprep.subr.mxu0 0.0
      %7692 = vmatpush1.msra.mxu0 0.0
      %7693 = vmatprep.subr.mxu0 0.0
      %7694 = vmatpush1.msra.mxu0 0.0
      %7695 = vmatprep.subr.mxu0 0.0
      %7696 = vmatpush1.msra.mxu0 0.0
      %7697 = vmatprep.subr.mxu0 0.0
      %7698 = vmatpush1.msra.mxu0 0.0
      %7699 = vmatprep.subr.mxu0 0.0
      %7700 = vmatpush1.msra.mxu0 0.0
      %7701 = vmatprep.subr.mxu0 0.0
      %7702 = vmatpush1.msra.mxu0 0.0
      %7703 = vmatprep.subr.mxu0 0.0
      %7704 = vmatpush1.msra.mxu0 0.0
      %7705 = vmatprep.subr.mxu0 0.0
      %7706 = vmatpush1.msra.mxu0 0.0
      %7707 = vmatprep.subr.mxu0 0.0
      %7708 = vmatpush1.msra.mxu0 0.0
      %7709 = vmatprep.subr.mxu0 0.0
      %7710 = vmatpush1.msra.mxu0 0.0
      %7711 = vmatprep.subr.mxu0 0.0
      %7712 = vmatpush1.msra.mxu0 0.0
      %7713 = vmatprep.subr.mxu0 0.0
      %7714 = vmatpush1.msra.mxu0 0.0
      %7715 = vmatprep.subr.mxu0 0.0
      %7716 = vmatpush1.msra.mxu0 0.0
      %7717 = vmatprep.subr.mxu0 0.0
      %7718 = vmatpush1.msra.mxu0 0.0
      %7719 = vmatprep.subr.mxu0 0.0
      %7720 = vmatpush1.msra.mxu0 %v7384
      %7721 = vmatprep.subr.mxu0 0.0
      %7722 = vmatpush2.msra.mxu0 0.0
      %7723 = vmatprep.subr.mxu0 0.0
      %7724 = vmatpush2.msra.mxu0 0.0
      %7725 = vmatprep.subr.mxu0 0.0
      %7726 = vmatpush2.msra.mxu0 0.0
      %7727 = vmatprep.subr.mxu0 0.0
      %7728 = vmatpush2.msra.mxu0 0.0
      %7729 = vmatprep.subr.mxu0 0.0
      %7730 = vmatpush2.msra.mxu0 0.0
      %7731 = vmatprep.subr.mxu0 0.0
      %7732 = vmatpush2.msra.mxu0 0.0
      %7733 = vmatprep.subr.mxu0 0.0
      %7734 = vmatpush2.msra.mxu0 0.0
      %7735 = vmatprep.subr.mxu0 0.0
      %7736 = vmatpush2.msra.mxu0 0.0
      %7737 = vmatprep.subr.mxu0 0.0
      %7738 = vmatpush2.msra.mxu0 0.0
      %7739 = vmatprep.subr.mxu0 0.0
      %7740 = vmatpush2.msra.mxu0 0.0
      %7741 = vmatprep.subr.mxu0 0.0
      %7742 = vmatpush2.msra.mxu0 0.0
      %7743 = vmatprep.subr.mxu0 0.0
      %7744 = vmatpush2.msra.mxu0 0.0
      %7745 = vmatprep.subr.mxu0 0.0
      %7746 = vmatpush2.msra.mxu0 0.0
      %7747 = vmatprep.subr.mxu0 0.0
      %7748 = vmatpush2.msra.mxu0 0.0
      %7749 = vmatprep.subr.mxu0 0.0
      %7750 = vmatpush2.msra.mxu0 0.0
      %7751 = vmatprep.subr.mxu0 0.0
      %7752 = vmatpush2.msra.mxu0 0.0
      %7753 = vmatprep.mubr.f32.mxu0 0.0
      %7754 = vmatmul.mubr.f32.gmra.mxu0 %v7403
      %v7755 = vpop.f32.mrf.mxu0
      %v7756 = vadd.f32 0.0, %v7755
      %v7757 = vpop.f32.mrf.mxu0
      %7758 = vdwg.mxu0
      %v7759 = vadd.f32 %v7356, %v7472
      %v7760 = vadd.f32 %v7357, %v7474
      %v7761 = vadd.f32 %v7358, %v7543
      %v7762 = vadd.f32 %v7359, %v7545
      %v7763 = vadd.f32 %v7360, %v7614
      %v7764 = vadd.f32 %v7361, %v7616
      %v7765 = vadd.f32 %v7362, %v7685
      %v7766 = vadd.f32 %v7363, %v7687
      %v7767 = vadd.f32 %v7364, %v7756
      %v7768 = vld [vmem:[%s4] sm:$0xff]
      %7770 = vset.pattern.permute.xlu0 0
      %7771 = vperm.xlu0 %7770, %v7768
      %v7772 = vpop.permute.xlu0 %7771
      %v7774 = vadd.f32 %v7759, %v7772
      %v7775 = vadd.f32 %v7760, %v7772
      %v7776 = vadd.f32 %v7761, %v7772
      %v7777 = vadd.f32 %v7762, %v7772
      %v7778 = vadd.f32 %v7763, %v7772
      %v7779 = vadd.f32 %v7764, %v7772
      %v7780 = vadd.f32 %v7765, %v7772
      %v7781 = vadd.f32 %v7766, %v7772
      %v7782 = vadd.f32 %v7767, %v7772
      %7783 = vst [vmem:[%s224] sm:$0xff] %v7774
      %7784 = vst [vmem:[%s224 + $0x8] sm:$0xff] %v7775
      %7785 = vst [vmem:[%s224 + $0x10] sm:$0xff] %v7776
      %7786 = vst [vmem:[%s224 + $0x18] sm:$0xff] %v7777
      %7787 = vst [vmem:[%s224 + $0x20] sm:$0xff] %v7778
      %7788 = vst [vmem:[%s224 + $0x28] sm:$0xff] %v7779
      %7789 = vst [vmem:[%s224 + $0x30] sm:$0xff] %v7780
      %7790 = vst [vmem:[%s224 + $0x38] sm:$0xff] %v7781
      %7791 = vst.msk [vmem:[%s224 + $0x40] sm:$0xff] %vm4155, %v7782
      %p7792 = scmp.lt.s32.totalorder %s16, 1
      %s7793 = scalar_select %p7792, %s16, 1
      %s7794 = smul.addr %s7793, 9
      %s7795 = smul.addr %s7794, 8
      %s7796 = scalar_lea.vmem %s5, %s7795
      // Predicated region
      $region41: #{basic_deconv_block.1} parent=39 // pred_check
        %p7797 = pneg %p144
      $region42: #{basic_deconv_block.1} parent=39 // pred_check_branch
        %7799 = sbr.rel (%p7797) target = $region44
      $region43: #{basic_deconv_block.1} parent=39 // pred_region
        _
      $region44: #{basic_deconv_block.1} parent=39 // pred_fallthru
        _
    $region40: #{basic_deconv_block.1} parent=5 // pred_fallthru
      _
    %p7800 = scmp.le.s32.totalorder 2, %s11
    // Predicated region
    $region45: #{basic_deconv_block.1} parent=5 // pred_check
      %p7801 = pneg %p7800
    $region46: #{basic_deconv_block.1} parent=5 // pred_check_branch
      %7803 = sbr.rel (%p7801) target = $region48
    $region47: #{basic_deconv_block.1} parent=5 // pred_region
      %s7804 = ssub.s32 %s11, 2
      // Predicated region
      $region49: #{basic_deconv_block.1} parent=47 // pred_check
        %p7805 = pneg %p150
      $region50: #{basic_deconv_block.1} parent=47 // pred_check_branch
        %7807 = sbr.rel (%p7805) target = $region52
      $region51: #{basic_deconv_block.1} parent=47 // pred_region
        %p7808 = scmp.lt.s32.totalorder %s17, 1
        %s7809 = scalar_select %p7808, %s17, 1
        %s7810 = smul.addr %s7809, 9
        %s7811 = smul.addr %s7810, 8
        %s7812 = scalar_lea.vmem %s5, %s7811
      $region52: #{basic_deconv_block.1} parent=47 // pred_fallthru
        _
    $region48: #{basic_deconv_block.1} parent=5 // pred_fallthru
      _
  $region6: #{basic_deconv_block.1} parent=0 // loop_footer
    %s15 = sadd.s32 1, %s11
  $region7: #{basic_deconv_block.1} parent=0 // loop_footer_branch
    %10 = sbr.rel target = $region3
  $region8: #{basic_deconv_block.1} parent=0 // loop_exit
    _

</llo_original>
